<compile_context>
chip_gen: v7x
topology: tpu7x:2x2x1
jax: 0.10.0
libtpu: 0.0.40
codegen_flags: <defaults>
</compile_context>

<pallas_src>
import jax
import jax.numpy as jnp
from jax.experimental import pallas as pl
from jax.experimental.pallas import tpu as pltpu

D_MEANS = 3
D_SCALES = 3
D_ROT = 4
D_OPAC = 1
SH_DEGREE = 3
D_VIEW = 3
D_SH = (SH_DEGREE + 1) ** 2          # 16
V = 2                                # two views

OFF_ROT = D_SCALES                   # 3
OFF_OPAC = OFF_ROT + D_ROT           # 7
OFF_SH = OFF_OPAC + D_OPAC           # 8
OFF_GS = OFF_SH + D_VIEW * D_SH      # 56

_BIG = 1e30


def _largest_divisor(n, limit, step):
    """Largest multiple-of-`step` divisor of n that is <= limit (None if none)."""
    best = None
    d = step
    top = min(n, limit)
    while d <= top:
        if n % d == 0:
            best = d
        d += step
    return best


# ---------------------------------------------------------------------------
# Kernel 1: distCUDA2 replacement -- mean squared distance to the 3 nearest
# neighbours (excluding self), then sqrt(clamp_min(., 1e-7)).
#
# Grid = (B, query_tiles, key_chunks); the key-chunk axis is "arbitrary" and
# carries VMEM-scratch running minima, so the resident key footprint is one
# (KC, 8) block (bounded, independent of NV).  d^2 is produced by a single
# (KC,8)@(8,TQ) MXU matmul of augmented operands; the VPU only does
# clamp + the 5-op sorted-triple insert (+ the self mask in ONE chunk).
# ---------------------------------------------------------------------------
def knn_mean_dist(pts):
    """pts: (B, NV, 3) f32 -> (B, 1, NV) sqrt(mean of 3-NN squared distances)."""
    B, NV, _ = pts.shape
    # TODO(synk): pad NV (= V*H*W) up to a multiple of 128 for exotic H*W.
    assert NV % 128 == 0, "V*H*W must be a multiple of 128"
    tq_cap = 512 if B >= 2 else max(128, NV // 2)      # keep >=2 grid steps (megacore)
    TQ = _largest_divisor(NV, tq_cap, 128) or NV       # query tile (lanes)
    KC = 256 if NV % 256 == 0 else 128                 # key chunk (power of two)
    NQ = NV // TQ
    NCH = NV // KC

    # Augmented operands so d^2 = |k|^2 + |q|^2 - 2 k.q falls out of ONE matmul.
    sq = jnp.sum(pts * pts, axis=-1, keepdims=True)                       # (B, NV, 1)
    keys_aug = jnp.concatenate(
        [pts, sq, jnp.ones_like(sq), jnp.zeros((B, NV, 3), pts.dtype)], axis=-1)   # (B, NV, 8)
    pts_t = jnp.transpose(pts, (0, 2, 1))                                 # (B, 3, NV)
    sq_t = jnp.transpose(sq, (0, 2, 1))                                   # (B, 1, NV)
    q_aug = jnp.concatenate(
        [-2.0 * pts_t, jnp.ones_like(sq_t), sq_t, jnp.zeros((B, 3, NV), pts.dtype)],
        axis=1)                                                           # (B, 8, NV)

    def kernel(k_ref, q_ref, o_ref, m1, m2, m3):
        c = pl.program_id(2)
        nch = pl.num_programs(2)

        @pl.when(c == 0)
        def _():
            init = jnp.full((KC, TQ), _BIG, jnp.float32)
            m1[...] = init
            m2[...] = init
            m3[...] = init

        # Squared distances on the (otherwise idle) MXU.
        d2 = jnp.dot(k_ref[...], q_ref[...], preferred_element_type=jnp.float32)
        d2 = jnp.maximum(d2, 0.0)          # cancellation can give tiny negatives

        q_start = pl.program_id(1) * TQ
        k_start = c * KC
        overlap = jnp.logical_and(k_start < q_start + TQ, q_start < k_start + KC)

        def insert(d):
            a, b_, c_ = m1[...], m2[...], m3[...]
            m1[...] = jnp.minimum(a, d)
            m2[...] = jnp.minimum(b_, jnp.maximum(a, d))
            m3[...] = jnp.minimum(c_, jnp.maximum(b_, d))

        @pl.when(overlap)                  # self-exclusion only in the diagonal chunk
        def _():
            sub = jax.lax.broadcasted_iota(jnp.int32, (KC, TQ), 0)
            lane = jax.lax.broadcasted_iota(jnp.int32, (KC, TQ), 1)
            insert(jnp.where(k_start + sub == q_start + lane, _BIG, d2))

        @pl.when(jnp.logical_not(overlap))
        def _():
            insert(d2)

        @pl.when(c == nch - 1)
        def _():
            # Tree-merge the KC per-slot sorted triples down to one triple per lane.
            # (Union of per-slot top-3 provably contains the global top-3; the
            #  streaming 5-op insert keeps an exact sorted top-3 at every step.)
            r = KC
            while r > 1:
                h = r // 2
                a1, a2, a3 = m1[0:h, :], m2[0:h, :], m3[0:h, :]
                for d in (m1[h:r, :], m2[h:r, :], m3[h:r, :]):
                    a1n = jnp.minimum(a1, d)
                    a2n = jnp.minimum(a2, jnp.maximum(a1, d))
                    a3n = jnp.minimum(a3, jnp.maximum(a2, d))
                    a1, a2, a3 = a1n, a2n, a3n
                m1[0:h, :] = a1
                m2[0:h, :] = a2
                m3[0:h, :] = a3
                r = h
            mean_sq = (m1[0:1, :] + m2[0:1, :] + m3[0:1, :]) * (1.0 / 3.0)
            o_ref[...] = jnp.sqrt(jnp.maximum(mean_sq, 1e-7))     # lane-dense (1, TQ)

    return pl.pallas_call(
        kernel,
        out_shape=jax.ShapeDtypeStruct((B, 1, NV), jnp.float32),
        grid=(B, NQ, NCH),
        in_specs=[
            pl.BlockSpec((None, KC, 8), lambda b, q, c: (b, c, 0)),    # key chunks (streamed)
            pl.BlockSpec((None, 8, TQ), lambda b, q, c: (b, 0, q)),    # query tile (resident)
        ],
        out_specs=pl.BlockSpec((None, 1, TQ), lambda b, q, c: (b, 0, q)),
        scratch_shapes=[pltpu.VMEM((KC, TQ), jnp.float32)] * 3,
        compiler_params=pltpu.CompilerParams(
            dimension_semantics=("parallel", "parallel", "arbitrary")),
    )(keys_aug, q_aug)


# ---------------------------------------------------------------------------
# Kernel 2: fused gaussian_proj Linear + activations + dist scaling +
# median clamp + covariance, in a gaussians-on-lanes layout.
# One (73, TM) sublane slab per tile: [scales(3)|rot(4)|opac(1)|sh(48)|gs|cov9].
# ---------------------------------------------------------------------------
def gaussian_proj_finalize(feat_t, w_t, b_col, mask_col, lseg_t, dist_row, med,
                           *, batch, nv, d_gs):
    _, d_in, _ = feat_t.shape
    at = w_t.shape[0]                       # d_attr padded to a multiple of 8
    d_attr = OFF_GS + d_gs
    out_rows = d_attr + 9
    tm_cap = 2048 if batch >= 2 else max(128, nv // 2)   # keep >=2 grid steps
    TM = _largest_divisor(nv, tm_cap, 128) or nv
    NVB = nv // TM

    def kernel(feat_ref, w_ref, b_ref, mask_ref, lseg_ref, dist_ref, med_ref,
               out_ref):
        med_b = med_ref[pl.program_id(0)]                     # per-batch scalar (SMEM)
        # (d_attr, d_in) @ (d_in, TM): gaussians on the lane axis.
        attr = jnp.dot(w_ref[...], feat_ref[...],
                       preferred_element_type=jnp.float32) + b_ref[...]
        dist = dist_ref[...]                                  # (1, TM)

        # scale_activation = exp ; * knn dist ; clamp to [0.1, 3.0] * median
        scales = jnp.exp(attr[0:OFF_ROT, :]) * dist           # (3, TM)
        scales = jnp.clip(scales, 0.1 * med_b, 3.0 * med_b)

        # rotation_activation = F.normalize (p=2, eps=1e-12)
        rot = attr[OFF_ROT:OFF_OPAC, :]                       # (4, TM)
        q_w, q_x, q_y, q_z = rot[0:1], rot[1:2], rot[2:3], rot[3:4]
        nrm = jnp.sqrt(q_w * q_w + q_x * q_x + q_y * q_y + q_z * q_z)
        inv = 1.0 / jnp.maximum(nrm, 1e-12)
        rotn = rot * inv
        qw, qx, qy, qz = q_w * inv, q_x * inv, q_y * inv, q_z * inv

        # opacity_activation = sigmoid
        opac = jax.nn.sigmoid(attr[OFF_OPAC:OFF_SH, :])       # (1, TM)
        # sh_coeffs * sh_mask[None, :, None]  (flat (c d) layout, c=16, d=3)
        sh = attr[OFF_SH:OFF_GS, :] * mask_ref[...]           # (48, TM)
        # gs_feats + lseg residual
        gs = attr[OFF_GS:OFF_GS + d_gs, :] + lseg_ref[...]    # (d_gs, TM)

        # build_covariance: Cov = R diag(s^2) R^T, quaternion (w, x, y, z)
        r00 = 1.0 - 2.0 * (qy * qy + qz * qz)
        r01 = 2.0 * (qx * qy - qw * qz)
        r02 = 2.0 * (qx * qz + qw * qy)
        r10 = 2.0 * (qx * qy + qw * qz)
        r11 = 1.0 - 2.0 * (qx * qx + qz * qz)
        r12 = 2.0 * (qy * qz - qw * qx)
        r20 = 2.0 * (qx * qz - qw * qy)
        r21 = 2.0 * (qy * qz + qw * qx)
        r22 = 1.0 - 2.0 * (qx * qx + qy * qy)
        sx = scales[0:1, :] * scales[0:1, :]
        sy = scales[1:2, :] * scales[1:2, :]
        sz = scales[2:3, :] * scales[2:3, :]
        c00 = r00 * r00 * sx + r01 * r01 * sy + r02 * r02 * sz
        c01 = r00 * r10 * sx + r01 * r11 * sy + r02 * r12 * sz
        c02 = r00 * r20 * sx + r01 * r21 * sy + r02 * r22 * sz
        c11 = r10 * r10 * sx + r11 * r11 * sy + r12 * r12 * sz
        c12 = r10 * r20 * sx + r11 * r21 * sy + r12 * r22 * sz
        c22 = r20 * r20 * sx + r21 * r21 * sy + r22 * r22 * sz
        cov = jnp.concatenate(
            [c00, c01, c02, c01, c11, c12, c02, c12, c22], axis=0)   # (9, TM)

        # Full-lane-width row stores; no zero padding written anywhere.
        out_ref[0:OFF_ROT, :] = scales
        out_ref[OFF_ROT:OFF_OPAC, :] = rotn
        out_ref[OFF_OPAC:OFF_SH, :] = opac
        out_ref[OFF_SH:OFF_GS, :] = sh
        out_ref[OFF_GS:OFF_GS + d_gs, :] = gs
        out_ref[d_attr:d_attr + 9, :] = cov

    return pl.pallas_call(
        kernel,
        out_shape=jax.ShapeDtypeStruct((batch, out_rows, nv), jnp.float32),
        grid=(batch, NVB),
        in_specs=[
            pl.BlockSpec((None, d_in, TM), lambda b, j: (b, 0, j)),   # feat^T tile
            pl.BlockSpec((at, d_in), lambda b, j: (0, 0)),            # W^T (resident)
            pl.BlockSpec((at, 1), lambda b, j: (0, 0)),               # bias column
            pl.BlockSpec((D_VIEW * D_SH, 1), lambda b, j: (0, 0)),    # sh mask column
            pl.BlockSpec((None, d_gs, TM), lambda b, j: (b, 0, j)),   # lseg^T tile
            pl.BlockSpec((None, 1, TM), lambda b, j: (b, 0, j)),      # knn dist (lane-dense)
            pl.BlockSpec(memory_space=pltpu.MemorySpace.SMEM),        # (B,) medians
        ],
        out_specs=pl.BlockSpec((None, out_rows, TM), lambda b, j: (b, 0, j)),
        compiler_params=pltpu.CompilerParams(
            dimension_semantics=("parallel", "parallel")),
    )(feat_t, w_t, b_col, mask_col, lseg_t, dist_row, med)


# ---------------------------------------------------------------------------
# Module wrapper
# ---------------------------------------------------------------------------
def init_params(key, d_pt_feat=64, d_gs_feats=8):
    d_attr = D_SCALES + D_ROT + D_OPAC + D_VIEW * D_SH + d_gs_feats
    k1, k2 = jax.random.split(key)
    # nn.Linear default init: U(-1/sqrt(fan_in), 1/sqrt(fan_in))
    lim = 1.0 / (d_pt_feat ** 0.5)
    w = jax.random.uniform(k1, (d_pt_feat, d_attr), jnp.float32, -lim, lim)
    b = jax.random.uniform(k2, (d_attr,), jnp.float32, -lim, lim)
    sh_mask = jnp.ones((D_SH,), jnp.float32)
    for deg in range(1, SH_DEGREE + 1):
        sh_mask = sh_mask.at[deg ** 2:(deg + 1) ** 2].set(0.5 * 0.25 ** deg)
    return {'w': w, 'b': b, 'sh_mask': sh_mask}


def gaussian_head_forward(params, point_transformer_output, lseg_res_feature,
                          d_gs_feats):
    B, H, W, _ = point_transformer_output['shape']
    NV = V * H * W
    N = B * NV
    # TODO(synk): pad NV up to a multiple of 128 for exotic H*W.
    assert NV % 128 == 0

    scene_scale = point_transformer_output['scale']
    scene_center = point_transformer_output['center']
    coord = point_transformer_output['coord']               # (N, 3), (b v h w) order
    feat = point_transformer_output['feat']                  # (N, d_pt_feat)
    d_in = feat.shape[1]
    # 'color' only feeds the rgb_residual branch, which is disabled here.

    # means = normalized_means * scale + center (the rearranges in the
    # reference cancel out on the flat (b v h w) layout)
    means_flat = coord * scene_scale + scene_center           # (N, 3)
    means_b = means_flat.reshape(B, NV, 3)                    # 'b (v h w) c'

    # --- Pallas: streaming exact 3-NN mean distance per batch ---
    dist_row = knn_mean_dist(means_b)                         # (B, 1, NV), lane-dense
    all_dist = dist_row[:, 0, :]
    # torch.median returns the lower of the two middle elements
    # TODO(synk): replace the full sort by a selection kernel for large NV.
    med = jnp.sort(all_dist, axis=-1)[:, (NV - 1) // 2].astype(jnp.float32)   # (B,)

    # --- operand layout for the transposed (gaussians-on-lanes) kernel ---
    feat_t = jnp.transpose(feat.reshape(B, NV, d_in), (0, 2, 1))       # (B, d_in, NV)
    # lseg: '(v b) c h w' -> (B, c, v h w)
    lseg = lseg_res_feature.reshape(V, B, d_gs_feats, H, W)
    lseg_t = jnp.transpose(lseg, (1, 2, 0, 3, 4)).reshape(B, d_gs_feats, NV)

    d_attr = OFF_GS + d_gs_feats
    at = ((d_attr + 7) // 8) * 8
    w_t = jnp.pad(jnp.transpose(params['w']), ((0, at - d_attr), (0, 0)))  # (at, d_in)
    b_col = jnp.pad(params['b'], (0, at - d_attr)).reshape(at, 1)
    mask_col = jnp.repeat(params['sh_mask'], D_VIEW).reshape(D_VIEW * D_SH, 1)

    # --- Pallas: fused projection + activations + clamp + covariance ---
    slab = gaussian_proj_finalize(feat_t, w_t, b_col, mask_col, lseg_t,
                                  dist_row, med,
                                  batch=B, nv=NV, d_gs=d_gs_feats)      # (B, 73, NV)

    def rows(a, b):
        return jnp.transpose(slab[:, a:b, :], (0, 2, 1))                # (B, NV, b-a)

    scales_f = rows(0, OFF_ROT)
    rot = rows(OFF_ROT, OFF_OPAC)
    opac = rows(OFF_OPAC, OFF_SH)
    sh = rows(OFF_SH, OFF_GS).reshape(B, NV, D_SH, D_VIEW)
    gs = rows(OFF_GS, d_attr)
    covs = rows(d_attr, d_attr + 9).reshape(B, NV, 3, 3)

    def split_views(arr):                 # (B, NV, ...) -> per-view (B, H, W, ...)
        arr = arr.reshape((B, V, H, W) + arr.shape[2:])
        return arr[:, 0], arr[:, 1]

    outs = {
        'scales': scales_f,
        'rotations': rot,
        'covs': covs,
        'opacities': opac,
        'sh_coeffs': sh,
        'means': means_b,
        'gs_feats': gs,
    }
    pred1 = {}
    pred2 = {}
    for k, v in outs.items():
        a, b_ = split_views(v)
        pred1[k] = a
        pred2[k] = b_
    return pred1, pred2


if __name__ == "__main__":
    key = jax.random.PRNGKey(0)
    B, H, W = 2, 16, 16
    d_pt_feat, d_gs_feats = 64, 8
    N = B * V * H * W  # 1024 points total

    params = init_params(key, d_pt_feat, d_gs_feats)
    ks = jax.random.split(key, 5)
    coord = jax.random.normal(ks[0], (N, 3), jnp.float32)
    color = jax.random.uniform(ks[1], (N, 3), jnp.float32) * 2.0 - 1.0
    feat = jax.random.normal(ks[2], (N, d_pt_feat), jnp.float32)
    lseg_res_feature = jax.random.normal(ks[3], (V * B, d_gs_feats, H, W),
                                         jnp.float32)

    point_transformer_output = {
        'scale': jnp.float32(2.0),
        'center': jnp.array([0.1, -0.2, 0.3], jnp.float32),
        'shape': (B, H, W, 3),
        'coord': coord,
        'color': color,
        'feat': feat,
    }

    pred1, pred2 = gaussian_head_forward(params, point_transformer_output,
                                         lseg_res_feature, d_gs_feats)
    jax.block_until_ready((pred1, pred2))

    assert pred1['scales'].shape == (B, H, W, 3)
    assert pred1['rotations'].shape == (B, H, W, 4)
    assert pred1['covs'].shape == (B, H, W, 3, 3)
    assert pred1['opacities'].shape == (B, H, W, 1)
    assert pred1['sh_coeffs'].shape == (B, H, W, D_SH, D_VIEW)
    assert pred1['means'].shape == (B, H, W, 3)
    assert pred1['gs_feats'].shape == (B, H, W, d_gs_feats)
    assert pred2['covs'].shape == (B, H, W, 3, 3)
    print("KERNEL_OK")
</pallas_src>

<mosaic_0001>
module attributes {stable_mosaic.version = 11 : i64} {
  func.func @kernel(%arg0: i32, %arg1: i32, %arg2: i32, %arg3: memref<1x256x8xf32, #tpu.memory_space<vmem>>, %arg4: memref<1x8x512xf32, #tpu.memory_space<vmem>>, %arg5: memref<1x1x512xf32, #tpu.memory_space<vmem>>, %arg6: memref<256x512xf32, #tpu.memory_space<vmem>>, %arg7: memref<256x512xf32, #tpu.memory_space<vmem>>, %arg8: memref<256x512xf32, #tpu.memory_space<vmem>>) attributes {dimension_semantics = [#tpu.dimension_semantics<parallel>, #tpu.dimension_semantics<parallel>, #tpu.dimension_semantics<arbitrary>], iteration_bounds = array<i64: 2, 1, 2>, scalar_prefetch = 0 : i64, scratch_operands = 3 : i64, tpu.core_type = #tpu.core_type<tc>, window_params = [{transform_indices = @transform_0, window_bounds = array<i64: 1, 256, 8>}, {transform_indices = @transform_1, window_bounds = array<i64: 1, 8, 512>}, {transform_indices = @transform_2, window_bounds = array<i64: 1, 1, 512>}]} {
    %c0_i32 = arith.constant 0 : i32
    %0 = arith.cmpi eq, %arg2, %c0_i32 : i32
    %1 = arith.extui %0 : i1 to i32
    %c0_i32_0 = arith.constant 0 : i32
    %2 = arith.cmpi ne, %1, %c0_i32_0 : i32
    scf.if %2 {
      %cst_12 = arith.constant 1.000000e+30 : f32
      %25 = vector.broadcast %cst_12 : f32 to vector<256x512xf32>
      %c0_13 = arith.constant 0 : index
      %c0_14 = arith.constant 0 : index
      %26 = vector.load %arg6[%c0_13, %c0_14] : memref<256x512xf32, #tpu.memory_space<vmem>>, vector<256x512xf32>
      tpu.vector_store %arg6[%c0_13, %c0_14], %25 {strides = array<i32>} : memref<256x512xf32, #tpu.memory_space<vmem>>, vector<256x512xf32>,
      %c0_15 = arith.constant 0 : index
      %c0_16 = arith.constant 0 : index
      %27 = vector.load %arg7[%c0_15, %c0_16] : memref<256x512xf32, #tpu.memory_space<vmem>>, vector<256x512xf32>
      tpu.vector_store %arg7[%c0_15, %c0_16], %25 {strides = array<i32>} : memref<256x512xf32, #tpu.memory_space<vmem>>, vector<256x512xf32>,
      %c0_17 = arith.constant 0 : index
      %c0_18 = arith.constant 0 : index
      %28 = vector.load %arg8[%c0_17, %c0_18] : memref<256x512xf32, #tpu.memory_space<vmem>>, vector<256x512xf32>
      tpu.vector_store %arg8[%c0_17, %c0_18], %25 {strides = array<i32>} : memref<256x512xf32, #tpu.memory_space<vmem>>, vector<256x512xf32>,
    } else {
    }
    %c0 = arith.constant 0 : index
    %c0_1 = arith.constant 0 : index
    %c0_2 = arith.constant 0 : index
    %3 = vector.load %arg3[%c0, %c0_1, %c0_2] : memref<1x256x8xf32, #tpu.memory_space<vmem>>, vector<1x256x8xf32>
    %4 = vector.shape_cast %3 : vector<1x256x8xf32> to vector<256x8xf32>
    %c0_3 = arith.constant 0 : index
    %c0_4 = arith.constant 0 : index
    %c0_5 = arith.constant 0 : index
    %5 = vector.load %arg4[%c0_3, %c0_4, %c0_5] : memref<1x8x512xf32, #tpu.memory_space<vmem>>, vector<1x8x512xf32>
    %6 = vector.shape_cast %5 : vector<1x8x512xf32> to vector<8x512xf32>
    %cst = arith.constant dense<0.000000e+00> : vector<256x512xf32>
    %7 = tpu.matmul %4, %6, %cst {dimension_numbers = #tpu.dot_dimension_numbers<[1], [0], [0], [1], [0, 0, 1, 1], [], []>} : vector<256x8xf32>, vector<8x512xf32>, vector<256x512xf32> -> vector<256x512xf32>
    %cst_6 = arith.constant 0.000000e+00 : f32
    %8 = vector.broadcast %cst_6 : f32 to vector<256x512xf32>
    %9 = arith.maximumf %7, %8 : vector<256x512xf32>
    %c512_i32 = arith.constant 512 : i32
    %10 = arith.muli %arg1, %c512_i32 : i32
    %c256_i32 = arith.constant 256 : i32
    %11 = arith.muli %arg2, %c256_i32 : i32
    %c512_i32_7 = arith.constant 512 : i32
    %12 = arith.addi %10, %c512_i32_7 : i32
    %13 = arith.cmpi slt, %11, %12 : i32
    %c256_i32_8 = arith.constant 256 : i32
    %14 = arith.addi %11, %c256_i32_8 : i32
    %15 = arith.cmpi slt, %10, %14 : i32
    %16 = arith.andi %13, %15 : i1
    %17 = arith.extui %16 : i1 to i32
    %c0_i32_9 = arith.constant 0 : i32
    %18 = arith.cmpi ne, %17, %c0_i32_9 : i32
    scf.if %18 {
      %25 = tpu.iota {dimensions = array<i32: 0>} : vector<256x512xi32>
      %26 = tpu.iota {dimensions = array<i32: 1>} : vector<256x512xi32>
      %27 = vector.broadcast %11 : i32 to vector<256x512xi32>
      %28 = arith.addi %27, %25 : vector<256x512xi32>
      %29 = vector.broadcast %10 : i32 to vector<256x512xi32>
      %30 = arith.addi %29, %26 : vector<256x512xi32>
      %31 = arith.cmpi eq, %28, %30 : vector<256x512xi32>
      %cst_12 = arith.constant 1.000000e+30 : f32
      %32 = vector.broadcast %cst_12 : f32 to vector<256x512xf32>
      %33 = arith.select %31, %32, %9 : vector<256x512xi1>, vector<256x512xf32>
      %c0_13 = arith.constant 0 : index
      %c0_14 = arith.constant 0 : index
      %34 = vector.load %arg6[%c0_13, %c0_14] : memref<256x512xf32, #tpu.memory_space<vmem>>, vector<256x512xf32>
      %c0_15 = arith.constant 0 : index
      %c0_16 = arith.constant 0 : index
      %35 = vector.load %arg7[%c0_15, %c0_16] : memref<256x512xf32, #tpu.memory_space<vmem>>, vector<256x512xf32>
      %c0_17 = arith.constant 0 : index
      %c0_18 = arith.constant 0 : index
      %36 = vector.load %arg8[%c0_17, %c0_18] : memref<256x512xf32, #tpu.memory_space<vmem>>, vector<256x512xf32>
      %37 = arith.minimumf %34, %33 : vector<256x512xf32>
      %c0_19 = arith.constant 0 : index
      %c0_20 = arith.constant 0 : index
      %38 = vector.load %arg6[%c0_19, %c0_20] : memref<256x512xf32, #tpu.memory_space<vmem>>, vector<256x512xf32>
      tpu.vector_store %arg6[%c0_19, %c0_20], %37 {strides = array<i32>} : memref<256x512xf32, #tpu.memory_space<vmem>>, vector<256x512xf32>,
      %39 = arith.maximumf %34, %33 : vector<256x512xf32>
      %40 = arith.minimumf %35, %39 : vector<256x512xf32>
      %c0_21 = arith.constant 0 : index
      %c0_22 = arith.constant 0 : index
      %41 = vector.load %arg7[%c0_21, %c0_22] : memref<256x512xf32, #tpu.memory_space<vmem>>, vector<256x512xf32>
      tpu.vector_store %arg7[%c0_21, %c0_22], %40 {strides = array<i32>} : memref<256x512xf32, #tpu.memory_space<vmem>>, vector<256x512xf32>,
      %42 = arith.maximumf %35, %33 : vector<256x512xf32>
      %43 = arith.minimumf %36, %42 : vector<256x512xf32>
      %c0_23 = arith.constant 0 : index
      %c0_24 = arith.constant 0 : index
      %44 = vector.load %arg8[%c0_23, %c0_24] : memref<256x512xf32, #tpu.memory_space<vmem>>, vector<256x512xf32>
      tpu.vector_store %arg8[%c0_23, %c0_24], %43 {strides = array<i32>} : memref<256x512xf32, #tpu.memory_space<vmem>>, vector<256x512xf32>,
    } else {
    }
    %true = arith.constant true
    %19 = arith.xori %16, %true : i1
    %20 = arith.extui %19 : i1 to i32
    %c0_i32_10 = arith.constant 0 : i32
    %21 = arith.cmpi ne, %20, %c0_i32_10 : i32
    scf.if %21 {
      %c0_12 = arith.constant 0 : index
      %c0_13 = arith.constant 0 : index
      %25 = vector.load %arg6[%c0_12, %c0_13] : memref<256x512xf32, #tpu.memory_space<vmem>>, vector<256x512xf32>
      %c0_14 = arith.constant 0 : index
      %c0_15 = arith.constant 0 : index
      %26 = vector.load %arg7[%c0_14, %c0_15] : memref<256x512xf32, #tpu.memory_space<vmem>>, vector<256x512xf32>
      %c0_16 = arith.constant 0 : index
      %c0_17 = arith.constant 0 : index
      %27 = vector.load %arg8[%c0_16, %c0_17] : memref<256x512xf32, #tpu.memory_space<vmem>>, vector<256x512xf32>
      %28 = arith.minimumf %25, %9 : vector<256x512xf32>
      %c0_18 = arith.constant 0 : index
      %c0_19 = arith.constant 0 : index
      %29 = vector.load %arg6[%c0_18, %c0_19] : memref<256x512xf32, #tpu.memory_space<vmem>>, vector<256x512xf32>
      tpu.vector_store %arg6[%c0_18, %c0_19], %28 {strides = array<i32>} : memref<256x512xf32, #tpu.memory_space<vmem>>, vector<256x512xf32>,
      %30 = arith.maximumf %25, %9 : vector<256x512xf32>
      %31 = arith.minimumf %26, %30 : vector<256x512xf32>
      %c0_20 = arith.constant 0 : index
      %c0_21 = arith.constant 0 : index
      %32 = vector.load %arg7[%c0_20, %c0_21] : memref<256x512xf32, #tpu.memory_space<vmem>>, vector<256x512xf32>
      tpu.vector_store %arg7[%c0_20, %c0_21], %31 {strides = array<i32>} : memref<256x512xf32, #tpu.memory_space<vmem>>, vector<256x512xf32>,
      %33 = arith.maximumf %26, %9 : vector<256x512xf32>
      %34 = arith.minimumf %27, %33 : vector<256x512xf32>
      %c0_22 = arith.constant 0 : index
      %c0_23 = arith.constant 0 : index
      %35 = vector.load %arg8[%c0_22, %c0_23] : memref<256x512xf32, #tpu.memory_space<vmem>>, vector<256x512xf32>
      tpu.vector_store %arg8[%c0_22, %c0_23], %34 {strides = array<i32>} : memref<256x512xf32, #tpu.memory_space<vmem>>, vector<256x512xf32>,
    } else {
    }
    %c1_i32 = arith.constant 1 : i32
    %22 = arith.cmpi eq, %arg2, %c1_i32 : i32
    %23 = arith.extui %22 : i1 to i32
    %c0_i32_11 = arith.constant 0 : i32
    %24 = arith.cmpi ne, %23, %c0_i32_11 : i32
    scf.if %24 {
      %c0_12 = arith.constant 0 : index
      %c0_13 = arith.constant 0 : index
      %25 = vector.load %arg6[%c0_12, %c0_13] : memref<256x512xf32, #tpu.memory_space<vmem>>, vector<128x512xf32>
      %c0_14 = arith.constant 0 : index
      %c0_15 = arith.constant 0 : index
      %26 = vector.load %arg7[%c0_14, %c0_15] : memref<256x512xf32, #tpu.memory_space<vmem>>, vector<128x512xf32>
      %c0_16 = arith.constant 0 : index
      %c0_17 = arith.constant 0 : index
      %27 = vector.load %arg8[%c0_16, %c0_17] : memref<256x512xf32, #tpu.memory_space<vmem>>, vector<128x512xf32>
      %c128 = arith.constant 128 : index
      %c0_18 = arith.constant 0 : index
      %28 = vector.load %arg6[%c128, %c0_18] : memref<256x512xf32, #tpu.memory_space<vmem>>, vector<128x512xf32>
      %c128_19 = arith.constant 128 : index
      %c0_20 = arith.constant 0 : index
      %29 = vector.load %arg7[%c128_19, %c0_20] : memref<256x512xf32, #tpu.memory_space<vmem>>, vector<128x512xf32>
      %c128_21 = arith.constant 128 : index
      %c0_22 = arith.constant 0 : index
      %30 = vector.load %arg8[%c128_21, %c0_22] : memref<256x512xf32, #tpu.memory_space<vmem>>, vector<128x512xf32>
      %31 = arith.minimumf %25, %28 : vector<128x512xf32>
      %32 = arith.maximumf %25, %28 : vector<128x512xf32>
      %33 = arith.minimumf %26, %32 : vector<128x512xf32>
      %34 = arith.maximumf %26, %28 : vector<128x512xf32>
      %35 = arith.minimumf %27, %34 : vector<128x512xf32>
      %36 = arith.minimumf %31, %29 : vector<128x512xf32>
      %37 = arith.maximumf %31, %29 : vector<128x512xf32>
      %38 = arith.minimumf %33, %37 : vector<128x512xf32>
      %39 = arith.maximumf %33, %29 : vector<128x512xf32>
      %40 = arith.minimumf %35, %39 : vector<128x512xf32>
      %41 = arith.minimumf %36, %30 : vector<128x512xf32>
      %42 = arith.maximumf %36, %30 : vector<128x512xf32>
      %43 = arith.minimumf %38, %42 : vector<128x512xf32>
      %44 = arith.maximumf %38, %30 : vector<128x512xf32>
      %45 = arith.minimumf %40, %44 : vector<128x512xf32>
      %c0_23 = arith.constant 0 : index
      %c0_24 = arith.constant 0 : index
      %46 = vector.load %arg6[%c0_23, %c0_24] : memref<256x512xf32, #tpu.memory_space<vmem>>, vector<128x512xf32>
      tpu.vector_store %arg6[%c0_23, %c0_24], %41 {strides = array<i32>} : memref<256x512xf32, #tpu.memory_space<vmem>>, vector<128x512xf32>,
      %c0_25 = arith.constant 0 : index
      %c0_26 = arith.constant 0 : index
      %47 = vector.load %arg7[%c0_25, %c0_26] : memref<256x512xf32, #tpu.memory_space<vmem>>, vector<128x512xf32>
      tpu.vector_store %arg7[%c0_25, %c0_26], %43 {strides = array<i32>} : memref<256x512xf32, #tpu.memory_space<vmem>>, vector<128x512xf32>,
      %c0_27 = arith.constant 0 : index
      %c0_28 = arith.constant 0 : index
      %48 = vector.load %arg8[%c0_27, %c0_28] : memref<256x512xf32, #tpu.memory_space<vmem>>, vector<128x512xf32>
      tpu.vector_store %arg8[%c0_27, %c0_28], %45 {strides = array<i32>} : memref<256x512xf32, #tpu.memory_space<vmem>>, vector<128x512xf32>,
      %c0_29 = arith.constant 0 : index
      %c0_30 = arith.constant 0 : index
      %49 = vector.load %arg6[%c0_29, %c0_30] : memref<256x512xf32, #tpu.memory_space<vmem>>, vector<64x512xf32>
      %c0_31 = arith.constant 0 : index
      %c0_32 = arith.constant 0 : index
      %50 = vector.load %arg7[%c0_31, %c0_32] : memref<256x512xf32, #tpu.memory_space<vmem>>, vector<64x512xf32>
      %c0_33 = arith.constant 0 : index
      %c0_34 = arith.constant 0 : index
      %51 = vector.load %arg8[%c0_33, %c0_34] : memref<256x512xf32, #tpu.memory_space<vmem>>, vector<64x512xf32>
      %c64 = arith.constant 64 : index
      %c0_35 = arith.constant 0 : index
      %52 = vector.load %arg6[%c64, %c0_35] : memref<256x512xf32, #tpu.memory_space<vmem>>, vector<64x512xf32>
      %c64_36 = arith.constant 64 : index
      %c0_37 = arith.constant 0 : index
      %53 = vector.load %arg7[%c64_36, %c0_37] : memref<256x512xf32, #tpu.memory_space<vmem>>, vector<64x512xf32>
      %c64_38 = arith.constant 64 : index
      %c0_39 = arith.constant 0 : index
      %54 = vector.load %arg8[%c64_38, %c0_39] : memref<256x512xf32, #tpu.memory_space<vmem>>, vector<64x512xf32>
      %55 = arith.minimumf %49, %52 : vector<64x512xf32>
      %56 = arith.maximumf %49, %52 : vector<64x512xf32>
      %57 = arith.minimumf %50, %56 : vector<64x512xf32>
      %58 = arith.maximumf %50, %52 : vector<64x512xf32>
      %59 = arith.minimumf %51, %58 : vector<64x512xf32>
      %60 = arith.minimumf %55, %53 : vector<64x512xf32>
      %61 = arith.maximumf %55, %53 : vector<64x512xf32>
      %62 = arith.minimumf %57, %61 : vector<64x512xf32>
      %63 = arith.maximumf %57, %53 : vector<64x512xf32>
      %64 = arith.minimumf %59, %63 : vector<64x512xf32>
      %65 = arith.minimumf %60, %54 : vector<64x512xf32>
      %66 = arith.maximumf %60, %54 : vector<64x512xf32>
      %67 = arith.minimumf %62, %66 : vector<64x512xf32>
      %68 = arith.maximumf %62, %54 : vector<64x512xf32>
      %69 = arith.minimumf %64, %68 : vector<64x512xf32>
      %c0_40 = arith.constant 0 : index
      %c0_41 = arith.constant 0 : index
      %70 = vector.load %arg6[%c0_40, %c0_41] : memref<256x512xf32, #tpu.memory_space<vmem>>, vector<64x512xf32>
      tpu.vector_store %arg6[%c0_40, %c0_41], %65 {strides = array<i32>} : memref<256x512xf32, #tpu.memory_space<vmem>>, vector<64x512xf32>,
      %c0_42 = arith.constant 0 : index
      %c0_43 = arith.constant 0 : index
      %71 = vector.load %arg7[%c0_42, %c0_43] : memref<256x512xf32, #tpu.memory_space<vmem>>, vector<64x512xf32>
      tpu.vector_store %arg7[%c0_42, %c0_43], %67 {strides = array<i32>} : memref<256x512xf32, #tpu.memory_space<vmem>>, vector<64x512xf32>,
      %c0_44 = arith.constant 0 : index
      %c0_45 = arith.constant 0 : index
      %72 = vector.load %arg8[%c0_44, %c0_45] : memref<256x512xf32, #tpu.memory_space<vmem>>, vector<64x512xf32>
      tpu.vector_store %arg8[%c0_44, %c0_45], %69 {strides = array<i32>} : memref<256x512xf32, #tpu.memory_space<vmem>>, vector<64x512xf32>,
      %c0_46 = arith.constant 0 : index
      %c0_47 = arith.constant 0 : index
      %73 = vector.load %arg6[%c0_46, %c0_47] : memref<256x512xf32, #tpu.memory_space<vmem>>, vector<32x512xf32>
      %c0_48 = arith.constant 0 : index
      %c0_49 = arith.constant 0 : index
      %74 = vector.load %arg7[%c0_48, %c0_49] : memref<256x512xf32, #tpu.memory_space<vmem>>, vector<32x512xf32>
      %c0_50 = arith.constant 0 : index
      %c0_51 = arith.constant 0 : index
      %75 = vector.load %arg8[%c0_50, %c0_51] : memref<256x512xf32, #tpu.memory_space<vmem>>, vector<32x512xf32>
      %c32 = arith.constant 32 : index
      %c0_52 = arith.constant 0 : index
      %76 = vector.load %arg6[%c32, %c0_52] : memref<256x512xf32, #tpu.memory_space<vmem>>, vector<32x512xf32>
      %c32_53 = arith.constant 32 : index
      %c0_54 = arith.constant 0 : index
      %77 = vector.load %arg7[%c32_53, %c0_54] : memref<256x512xf32, #tpu.memory_space<vmem>>, vector<32x512xf32>
      %c32_55 = arith.constant 32 : index
      %c0_56 = arith.constant 0 : index
      %78 = vector.load %arg8[%c32_55, %c0_56] : memref<256x512xf32, #tpu.memory_space<vmem>>, vector<32x512xf32>
      %79 = arith.minimumf %73, %76 : vector<32x512xf32>
      %80 = arith.maximumf %73, %76 : vector<32x512xf32>
      %81 = arith.minimumf %74, %80 : vector<32x512xf32>
      %82 = arith.maximumf %74, %76 : vector<32x512xf32>
      %83 = arith.minimumf %75, %82 : vector<32x512xf32>
      %84 = arith.minimumf %79, %77 : vector<32x512xf32>
      %85 = arith.maximumf %79, %77 : vector<32x512xf32>
      %86 = arith.minimumf %81, %85 : vector<32x512xf32>
      %87 = arith.maximumf %81, %77 : vector<32x512xf32>
      %88 = arith.minimumf %83, %87 : vector<32x512xf32>
      %89 = arith.minimumf %84, %78 : vector<32x512xf32>
      %90 = arith.maximumf %84, %78 : vector<32x512xf32>
      %91 = arith.minimumf %86, %90 : vector<32x512xf32>
      %92 = arith.maximumf %86, %78 : vector<32x512xf32>
      %93 = arith.minimumf %88, %92 : vector<32x512xf32>
      %c0_57 = arith.constant 0 : index
      %c0_58 = arith.constant 0 : index
      %94 = vector.load %arg6[%c0_57, %c0_58] : memref<256x512xf32, #tpu.memory_space<vmem>>, vector<32x512xf32>
      tpu.vector_store %arg6[%c0_57, %c0_58], %89 {strides = array<i32>} : memref<256x512xf32, #tpu.memory_space<vmem>>, vector<32x512xf32>,
      %c0_59 = arith.constant 0 : index
      %c0_60 = arith.constant 0 : index
      %95 = vector.load %arg7[%c0_59, %c0_60] : memref<256x512xf32, #tpu.memory_space<vmem>>, vector<32x512xf32>
      tpu.vector_store %arg7[%c0_59, %c0_60], %91 {strides = array<i32>} : memref<256x512xf32, #tpu.memory_space<vmem>>, vector<32x512xf32>,
      %c0_61 = arith.constant 0 : index
      %c0_62 = arith.constant 0 : index
      %96 = vector.load %arg8[%c0_61, %c0_62] : memref<256x512xf32, #tpu.memory_space<vmem>>, vector<32x512xf32>
      tpu.vector_store %arg8[%c0_61, %c0_62], %93 {strides = array<i32>} : memref<256x512xf32, #tpu.memory_space<vmem>>, vector<32x512xf32>,
      %c0_63 = arith.constant 0 : index
      %c0_64 = arith.constant 0 : index
      %97 = vector.load %arg6[%c0_63, %c0_64] : memref<256x512xf32, #tpu.memory_space<vmem>>, vector<16x512xf32>
      %c0_65 = arith.constant 0 : index
      %c0_66 = arith.constant 0 : index
      %98 = vector.load %arg7[%c0_65, %c0_66] : memref<256x512xf32, #tpu.memory_space<vmem>>, vector<16x512xf32>
      %c0_67 = arith.constant 0 : index
      %c0_68 = arith.constant 0 : index
      %99 = vector.load %arg8[%c0_67, %c0_68] : memref<256x512xf32, #tpu.memory_space<vmem>>, vector<16x512xf32>
      %c16 = arith.constant 16 : index
      %c0_69 = arith.constant 0 : index
      %100 = vector.load %arg6[%c16, %c0_69] : memref<256x512xf32, #tpu.memory_space<vmem>>, vector<16x512xf32>
      %c16_70 = arith.constant 16 : index
      %c0_71 = arith.constant 0 : index
      %101 = vector.load %arg7[%c16_70, %c0_71] : memref<256x512xf32, #tpu.memory_space<vmem>>, vector<16x512xf32>
      %c16_72 = arith.constant 16 : index
      %c0_73 = arith.constant 0 : index
      %102 = vector.load %arg8[%c16_72, %c0_73] : memref<256x512xf32, #tpu.memory_space<vmem>>, vector<16x512xf32>
      %103 = arith.minimumf %97, %100 : vector<16x512xf32>
      %104 = arith.maximumf %97, %100 : vector<16x512xf32>
      %105 = arith.minimumf %98, %104 : vector<16x512xf32>
      %106 = arith.maximumf %98, %100 : vector<16x512xf32>
      %107 = arith.minimumf %99, %106 : vector<16x512xf32>
      %108 = arith.minimumf %103, %101 : vector<16x512xf32>
      %109 = arith.maximumf %103, %101 : vector<16x512xf32>
      %110 = arith.minimumf %105, %109 : vector<16x512xf32>
      %111 = arith.maximumf %105, %101 : vector<16x512xf32>
      %112 = arith.minimumf %107, %111 : vector<16x512xf32>
      %113 = arith.minimumf %108, %102 : vector<16x512xf32>
      %114 = arith.maximumf %108, %102 : vector<16x512xf32>
      %115 = arith.minimumf %110, %114 : vector<16x512xf32>
      %116 = arith.maximumf %110, %102 : vector<16x512xf32>
      %117 = arith.minimumf %112, %116 : vector<16x512xf32>
      %c0_74 = arith.constant 0 : index
      %c0_75 = arith.constant 0 : index
      %118 = vector.load %arg6[%c0_74, %c0_75] : memref<256x512xf32, #tpu.memory_space<vmem>>, vector<16x512xf32>
      tpu.vector_store %arg6[%c0_74, %c0_75], %113 {strides = array<i32>} : memref<256x512xf32, #tpu.memory_space<vmem>>, vector<16x512xf32>,
      %c0_76 = arith.constant 0 : index
      %c0_77 = arith.constant 0 : index
      %119 = vector.load %arg7[%c0_76, %c0_77] : memref<256x512xf32, #tpu.memory_space<vmem>>, vector<16x512xf32>
      tpu.vector_store %arg7[%c0_76, %c0_77], %115 {strides = array<i32>} : memref<256x512xf32, #tpu.memory_space<vmem>>, vector<16x512xf32>,
      %c0_78 = arith.constant 0 : index
      %c0_79 = arith.constant 0 : index
      %120 = vector.load %arg8[%c0_78, %c0_79] : memref<256x512xf32, #tpu.memory_space<vmem>>, vector<16x512xf32>
      tpu.vector_store %arg8[%c0_78, %c0_79], %117 {strides = array<i32>} : memref<256x512xf32, #tpu.memory_space<vmem>>, vector<16x512xf32>,
      %c0_80 = arith.constant 0 : index
      %c0_81 = arith.constant 0 : index
      %121 = vector.load %arg6[%c0_80, %c0_81] : memref<256x512xf32, #tpu.memory_space<vmem>>, vector<8x512xf32>
      %c0_82 = arith.constant 0 : index
      %c0_83 = arith.constant 0 : index
      %122 = vector.load %arg7[%c0_82, %c0_83] : memref<256x512xf32, #tpu.memory_space<vmem>>, vector<8x512xf32>
      %c0_84 = arith.constant 0 : index
      %c0_85 = arith.constant 0 : index
      %123 = vector.load %arg8[%c0_84, %c0_85] : memref<256x512xf32, #tpu.memory_space<vmem>>, vector<8x512xf32>
      %c8 = arith.constant 8 : index
      %c0_86 = arith.constant 0 : index
      %124 = vector.load %arg6[%c8, %c0_86] : memref<256x512xf32, #tpu.memory_space<vmem>>, vector<8x512xf32>
      %c8_87 = arith.constant 8 : index
      %c0_88 = arith.constant 0 : index
      %125 = vector.load %arg7[%c8_87, %c0_88] : memref<256x512xf32, #tpu.memory_space<vmem>>, vector<8x512xf32>
      %c8_89 = arith.constant 8 : index
      %c0_90 = arith.constant 0 : index
      %126 = vector.load %arg8[%c8_89, %c0_90] : memref<256x512xf32, #tpu.memory_space<vmem>>, vector<8x512xf32>
      %127 = arith.minimumf %121, %124 : vector<8x512xf32>
      %128 = arith.maximumf %121, %124 : vector<8x512xf32>
      %129 = arith.minimumf %122, %128 : vector<8x512xf32>
      %130 = arith.maximumf %122, %124 : vector<8x512xf32>
      %131 = arith.minimumf %123, %130 : vector<8x512xf32>
      %132 = arith.minimumf %127, %125 : vector<8x512xf32>
      %133 = arith.maximumf %127, %125 : vector<8x512xf32>
      %134 = arith.minimumf %129, %133 : vector<8x512xf32>
      %135 = arith.maximumf %129, %125 : vector<8x512xf32>
      %136 = arith.minimumf %131, %135 : vector<8x512xf32>
      %137 = arith.minimumf %132, %126 : vector<8x512xf32>
      %138 = arith.maximumf %132, %126 : vector<8x512xf32>
      %139 = arith.minimumf %134, %138 : vector<8x512xf32>
      %140 = arith.maximumf %134, %126 : vector<8x512xf32>
      %141 = arith.minimumf %136, %140 : vector<8x512xf32>
      %c0_91 = arith.constant 0 : index
      %c0_92 = arith.constant 0 : index
      %142 = vector.load %arg6[%c0_91, %c0_92] : memref<256x512xf32, #tpu.memory_space<vmem>>, vector<8x512xf32>
      tpu.vector_store %arg6[%c0_91, %c0_92], %137 {strides = array<i32>} : memref<256x512xf32, #tpu.memory_space<vmem>>, vector<8x512xf32>,
      %c0_93 = arith.constant 0 : index
      %c0_94 = arith.constant 0 : index
      %143 = vector.load %arg7[%c0_93, %c0_94] : memref<256x512xf32, #tpu.memory_space<vmem>>, vector<8x512xf32>
      tpu.vector_store %arg7[%c0_93, %c0_94], %139 {strides = array<i32>} : memref<256x512xf32, #tpu.memory_space<vmem>>, vector<8x512xf32>,
      %c0_95 = arith.constant 0 : index
      %c0_96 = arith.constant 0 : index
      %144 = vector.load %arg8[%c0_95, %c0_96] : memref<256x512xf32, #tpu.memory_space<vmem>>, vector<8x512xf32>
      tpu.vector_store %arg8[%c0_95, %c0_96], %141 {strides = array<i32>} : memref<256x512xf32, #tpu.memory_space<vmem>>, vector<8x512xf32>,
      %c0_97 = arith.constant 0 : index
      %c0_98 = arith.constant 0 : index
      %145 = vector.load %arg6[%c0_97, %c0_98] : memref<256x512xf32, #tpu.memory_space<vmem>>, vector<4x512xf32>
      %c0_99 = arith.constant 0 : index
      %c0_100 = arith.constant 0 : index
      %146 = vector.load %arg7[%c0_99, %c0_100] : memref<256x512xf32, #tpu.memory_space<vmem>>, vector<4x512xf32>
      %c0_101 = arith.constant 0 : index
      %c0_102 = arith.constant 0 : index
      %147 = vector.load %arg8[%c0_101, %c0_102] : memref<256x512xf32, #tpu.memory_space<vmem>>, vector<4x512xf32>
      %c4 = arith.constant 4 : index
      %c0_103 = arith.constant 0 : index
      %148 = vector.load %arg6[%c4, %c0_103] : memref<256x512xf32, #tpu.memory_space<vmem>>, vector<4x512xf32>
      %c4_104 = arith.constant 4 : index
      %c0_105 = arith.constant 0 : index
      %149 = vector.load %arg7[%c4_104, %c0_105] : memref<256x512xf32, #tpu.memory_space<vmem>>, vector<4x512xf32>
      %c4_106 = arith.constant 4 : index
      %c0_107 = arith.constant 0 : index
      %150 = vector.load %arg8[%c4_106, %c0_107] : memref<256x512xf32, #tpu.memory_space<vmem>>, vector<4x512xf32>
      %151 = arith.minimumf %145, %148 : vector<4x512xf32>
      %152 = arith.maximumf %145, %148 : vector<4x512xf32>
      %153 = arith.minimumf %146, %152 : vector<4x512xf32>
      %154 = arith.maximumf %146, %148 : vector<4x512xf32>
      %155 = arith.minimumf %147, %154 : vector<4x512xf32>
      %156 = arith.minimumf %151, %149 : vector<4x512xf32>
      %157 = arith.maximumf %151, %149 : vector<4x512xf32>
      %158 = arith.minimumf %153, %157 : vector<4x512xf32>
      %159 = arith.maximumf %153, %149 : vector<4x512xf32>
      %160 = arith.minimumf %155, %159 : vector<4x512xf32>
      %161 = arith.minimumf %156, %150 : vector<4x512xf32>
      %162 = arith.maximumf %156, %150 : vector<4x512xf32>
      %163 = arith.minimumf %158, %162 : vector<4x512xf32>
      %164 = arith.maximumf %158, %150 : vector<4x512xf32>
      %165 = arith.minimumf %160, %164 : vector<4x512xf32>
      %c0_108 = arith.constant 0 : index
      %c0_109 = arith.constant 0 : index
      %166 = vector.load %arg6[%c0_108, %c0_109] : memref<256x512xf32, #tpu.memory_space<vmem>>, vector<4x512xf32>
      tpu.vector_store %arg6[%c0_108, %c0_109], %161 {strides = array<i32>} : memref<256x512xf32, #tpu.memory_space<vmem>>, vector<4x512xf32>,
      %c0_110 = arith.constant 0 : index
      %c0_111 = arith.constant 0 : index
      %167 = vector.load %arg7[%c0_110, %c0_111] : memref<256x512xf32, #tpu.memory_space<vmem>>, vector<4x512xf32>
      tpu.vector_store %arg7[%c0_110, %c0_111], %163 {strides = array<i32>} : memref<256x512xf32, #tpu.memory_space<vmem>>, vector<4x512xf32>,
      %c0_112 = arith.constant 0 : index
      %c0_113 = arith.constant 0 : index
      %168 = vector.load %arg8[%c0_112, %c0_113] : memref<256x512xf32, #tpu.memory_space<vmem>>, vector<4x512xf32>
      tpu.vector_store %arg8[%c0_112, %c0_113], %165 {strides = array<i32>} : memref<256x512xf32, #tpu.memory_space<vmem>>, vector<4x512xf32>,
      %c0_114 = arith.constant 0 : index
      %c0_115 = arith.constant 0 : index
      %169 = vector.load %arg6[%c0_114, %c0_115] : memref<256x512xf32, #tpu.memory_space<vmem>>, vector<2x512xf32>
      %c0_116 = arith.constant 0 : index
      %c0_117 = arith.constant 0 : index
      %170 = vector.load %arg7[%c0_116, %c0_117] : memref<256x512xf32, #tpu.memory_space<vmem>>, vector<2x512xf32>
      %c0_118 = arith.constant 0 : index
      %c0_119 = arith.constant 0 : index
      %171 = vector.load %arg8[%c0_118, %c0_119] : memref<256x512xf32, #tpu.memory_space<vmem>>, vector<2x512xf32>
      %c2 = arith.constant 2 : index
      %c0_120 = arith.constant 0 : index
      %172 = vector.load %arg6[%c2, %c0_120] : memref<256x512xf32, #tpu.memory_space<vmem>>, vector<2x512xf32>
      %c2_121 = arith.constant 2 : index
      %c0_122 = arith.constant 0 : index
      %173 = vector.load %arg7[%c2_121, %c0_122] : memref<256x512xf32, #tpu.memory_space<vmem>>, vector<2x512xf32>
      %c2_123 = arith.constant 2 : index
      %c0_124 = arith.constant 0 : index
      %174 = vector.load %arg8[%c2_123, %c0_124] : memref<256x512xf32, #tpu.memory_space<vmem>>, vector<2x512xf32>
      %175 = arith.minimumf %169, %172 : vector<2x512xf32>
      %176 = arith.maximumf %169, %172 : vector<2x512xf32>
      %177 = arith.minimumf %170, %176 : vector<2x512xf32>
      %178 = arith.maximumf %170, %172 : vector<2x512xf32>
      %179 = arith.minimumf %171, %178 : vector<2x512xf32>
      %180 = arith.minimumf %175, %173 : vector<2x512xf32>
      %181 = arith.maximumf %175, %173 : vector<2x512xf32>
      %182 = arith.minimumf %177, %181 : vector<2x512xf32>
      %183 = arith.maximumf %177, %173 : vector<2x512xf32>
      %184 = arith.minimumf %179, %183 : vector<2x512xf32>
      %185 = arith.minimumf %180, %174 : vector<2x512xf32>
      %186 = arith.maximumf %180, %174 : vector<2x512xf32>
      %187 = arith.minimumf %182, %186 : vector<2x512xf32>
      %188 = arith.maximumf %182, %174 : vector<2x512xf32>
      %189 = arith.minimumf %184, %188 : vector<2x512xf32>
      %c0_125 = arith.constant 0 : index
      %c0_126 = arith.constant 0 : index
      %190 = vector.load %arg6[%c0_125, %c0_126] : memref<256x512xf32, #tpu.memory_space<vmem>>, vector<2x512xf32>
      tpu.vector_store %arg6[%c0_125, %c0_126], %185 {strides = array<i32>} : memref<256x512xf32, #tpu.memory_space<vmem>>, vector<2x512xf32>,
      %c0_127 = arith.constant 0 : index
      %c0_128 = arith.constant 0 : index
      %191 = vector.load %arg7[%c0_127, %c0_128] : memref<256x512xf32, #tpu.memory_space<vmem>>, vector<2x512xf32>
      tpu.vector_store %arg7[%c0_127, %c0_128], %187 {strides = array<i32>} : memref<256x512xf32, #tpu.memory_space<vmem>>, vector<2x512xf32>,
      %c0_129 = arith.constant 0 : index
      %c0_130 = arith.constant 0 : index
      %192 = vector.load %arg8[%c0_129, %c0_130] : memref<256x512xf32, #tpu.memory_space<vmem>>, vector<2x512xf32>
      tpu.vector_store %arg8[%c0_129, %c0_130], %189 {strides = array<i32>} : memref<256x512xf32, #tpu.memory_space<vmem>>, vector<2x512xf32>,
      %c0_131 = arith.constant 0 : index
      %c0_132 = arith.constant 0 : index
      %193 = vector.load %arg6[%c0_131, %c0_132] : memref<256x512xf32, #tpu.memory_space<vmem>>, vector<1x512xf32>
      %c0_133 = arith.constant 0 : index
      %c0_134 = arith.constant 0 : index
      %194 = vector.load %arg7[%c0_133, %c0_134] : memref<256x512xf32, #tpu.memory_space<vmem>>, vector<1x512xf32>
      %c0_135 = arith.constant 0 : index
      %c0_136 = arith.constant 0 : index
      %195 = vector.load %arg8[%c0_135, %c0_136] : memref<256x512xf32, #tpu.memory_space<vmem>>, vector<1x512xf32>
      %c1 = arith.constant 1 : index
      %c0_137 = arith.constant 0 : index
      %196 = vector.load %arg6[%c1, %c0_137] : memref<256x512xf32, #tpu.memory_space<vmem>>, vector<1x512xf32>
      %c1_138 = arith.constant 1 : index
      %c0_139 = arith.constant 0 : index
      %197 = vector.load %arg7[%c1_138, %c0_139] : memref<256x512xf32, #tpu.memory_space<vmem>>, vector<1x512xf32>
      %c1_140 = arith.constant 1 : index
      %c0_141 = arith.constant 0 : index
      %198 = vector.load %arg8[%c1_140, %c0_141] : memref<256x512xf32, #tpu.memory_space<vmem>>, vector<1x512xf32>
      %199 = arith.minimumf %193, %196 : vector<1x512xf32>
      %200 = arith.maximumf %193, %196 : vector<1x512xf32>
      %201 = arith.minimumf %194, %200 : vector<1x512xf32>
      %202 = arith.maximumf %194, %196 : vector<1x512xf32>
      %203 = arith.minimumf %195, %202 : vector<1x512xf32>
      %204 = arith.minimumf %199, %197 : vector<1x512xf32>
      %205 = arith.maximumf %199, %197 : vector<1x512xf32>
      %206 = arith.minimumf %201, %205 : vector<1x512xf32>
      %207 = arith.maximumf %201, %197 : vector<1x512xf32>
      %208 = arith.minimumf %203, %207 : vector<1x512xf32>
      %209 = arith.minimumf %204, %198 : vector<1x512xf32>
      %210 = arith.maximumf %204, %198 : vector<1x512xf32>
      %211 = arith.minimumf %206, %210 : vector<1x512xf32>
      %212 = arith.maximumf %206, %198 : vector<1x512xf32>
      %213 = arith.minimumf %208, %212 : vector<1x512xf32>
      %c0_142 = arith.constant 0 : index
      %c0_143 = arith.constant 0 : index
      %214 = vector.load %arg6[%c0_142, %c0_143] : memref<256x512xf32, #tpu.memory_space<vmem>>, vector<1x512xf32>
      tpu.vector_store %arg6[%c0_142, %c0_143], %209 {strides = array<i32>} : memref<256x512xf32, #tpu.memory_space<vmem>>, vector<1x512xf32>,
      %c0_144 = arith.constant 0 : index
      %c0_145 = arith.constant 0 : index
      %215 = vector.load %arg7[%c0_144, %c0_145] : memref<256x512xf32, #tpu.memory_space<vmem>>, vector<1x512xf32>
      tpu.vector_store %arg7[%c0_144, %c0_145], %211 {strides = array<i32>} : memref<256x512xf32, #tpu.memory_space<vmem>>, vector<1x512xf32>,
      %c0_146 = arith.constant 0 : index
      %c0_147 = arith.constant 0 : index
      %216 = vector.load %arg8[%c0_146, %c0_147] : memref<256x512xf32, #tpu.memory_space<vmem>>, vector<1x512xf32>
      tpu.vector_store %arg8[%c0_146, %c0_147], %213 {strides = array<i32>} : memref<256x512xf32, #tpu.memory_space<vmem>>, vector<1x512xf32>,
      %c0_148 = arith.constant 0 : index
      %c0_149 = arith.constant 0 : index
      %217 = vector.load %arg6[%c0_148, %c0_149] : memref<256x512xf32, #tpu.memory_space<vmem>>, vector<1x512xf32>
      %c0_150 = arith.constant 0 : index
      %c0_151 = arith.constant 0 : index
      %218 = vector.load %arg7[%c0_150, %c0_151] : memref<256x512xf32, #tpu.memory_space<vmem>>, vector<1x512xf32>
      %219 = arith.addf %217, %218 : vector<1x512xf32>
      %c0_152 = arith.constant 0 : index
      %c0_153 = arith.constant 0 : index
      %220 = vector.load %arg8[%c0_152, %c0_153] : memref<256x512xf32, #tpu.memory_space<vmem>>, vector<1x512xf32>
      %221 = arith.addf %219, %220 : vector<1x512xf32>
      %cst_154 = arith.constant 0.333333343 : f32
      %222 = vector.broadcast %cst_154 : f32 to vector<1x512xf32>
      %223 = arith.mulf %221, %222 : vector<1x512xf32>
      %cst_155 = arith.constant 1.000000e-07 : f32
      %224 = vector.broadcast %cst_155 : f32 to vector<1x512xf32>
      %225 = arith.maximumf %223, %224 : vector<1x512xf32>
      %226 = math.sqrt %225 : vector<1x512xf32>
      %c0_156 = arith.constant 0 : index
      %c0_157 = arith.constant 0 : index
      %c0_158 = arith.constant 0 : index
      %227 = vector.load %arg5[%c0_156, %c0_157, %c0_158] : memref<1x1x512xf32, #tpu.memory_space<vmem>>, vector<1x1x512xf32>
      %228 = vector.shape_cast %227 : vector<1x1x512xf32> to vector<1x512xf32>
      %229 = vector.shape_cast %226 : vector<1x512xf32> to vector<1x1x512xf32>
      tpu.vector_store %arg5[%c0_156, %c0_157, %c0_158], %229 {strides = array<i32>} : memref<1x1x512xf32, #tpu.memory_space<vmem>>, vector<1x1x512xf32>,
    } else {
    }
    return
  }
  func.func @transform_0(%arg0: i32, %arg1: i32, %arg2: i32) -> (i32, i32, i32) {
    %c0_i32 = arith.constant 0 : i32
    %c0_i32_0 = arith.constant 0 : i32
    return %arg0, %arg2, %c0_i32 : i32, i32, i32
  }
  func.func @transform_1(%arg0: i32, %arg1: i32, %arg2: i32) -> (i32, i32, i32) {
    %c0_i32 = arith.constant 0 : i32
    %c0_i32_0 = arith.constant 0 : i32
    return %arg0, %c0_i32, %arg1 : i32, i32, i32
  }
  func.func @transform_2(%arg0: i32, %arg1: i32, %arg2: i32) -> (i32, i32, i32) {
    %c0_i32 = arith.constant 0 : i32
    %c0_i32_0 = arith.constant 0 : i32
    return %arg0, %c0_i32, %arg1 : i32, i32, i32
  }
}

</mosaic_0001>

<llo_original>
// kernel: tpu_custom_call.1
$region0: #{tpu_custom_call.1}
  #allocation0 [shape = 'u32[]', space=smem, size = 0x4, offset = 0x4, fixed_abs, tag = 'smem constant byte address 0x4 - core index']
  #allocation1 [shape = 'u32[144,128]{1,0:T(1,128)}', space=vmem, size = 0x12000, scoped, tag = 'internal scratch']
  #allocation2 [shape = 'f32[256,512]{1,0:T(8,128)}', space=vmem, size = 0x80000, scoped, tag = 'scratch operand']
  #allocation3 [shape = 'f32[256,512]{1,0:T(8,128)}', space=vmem, size = 0x80000, scoped, tag = 'scratch operand']
  #allocation4 [shape = 'f32[256,512]{1,0:T(8,128)}', space=vmem, size = 0x80000, scoped, tag = 'scratch operand']
  %s0 = inlined_call_operand.vmem [shape: f32[2,512,8], index: 0, kind: input, shape index: {}]
  %s1 = inlined_call_operand.vmem [shape: f32[2,8,512], index: 1, kind: input, shape index: {}]
  %s2 = inlined_call_operand.hbm [shape: f32[2,1,512], index: 2, kind: output, shape index: {}]
  %s3 = sld [smem:[#allocation0]]
  $region57: #{tpu_custom_call.1} parent=0
    _
  %s5 = ssub.s32 1, %s3
  %s6 = scalar_select 0, %s5, %s3
  $region1: #{tpu_custom_call.1} parent=0
    #allocation5 [shape = 'u8[4096]{0}', space=vmem, size = 0x1000, scoped, tag = 'output window, operand 0']
    #allocation6 [shape = 's32[2]{0}', space=sflag, size = 0x8, scoped, tag = 'scoped memory for tpu_custom_call.1']
    %7 = vsyncpa [#allocation6], 0
    %s8 = scalar_lea.sflag [#allocation6], 1
    %9 = vsyncpa %s8, 0
    loop: start=0, step=1, limit=6
    $region2: #{tpu_custom_call.1} parent=1 // loop_pre_header
      _
    $region3: #{tpu_custom_call.1} parent=1 // loop_header
      %s11 = sphi 0, %s15
      %p12 = scmp.ge.s32.totalorder %s11, 6
      %s18 = sphi 0, %s37
      %s19 = sphi 0, %s33
      %s20 = sphi 0, %s29
      %s21 = sphi 0, %s18
      %s22 = sphi 0, %s19
      %s23 = sphi 0, %s20
      %s24 = sphi 0, %s21
      %s25 = sphi 0, %s22
      %s26 = sphi 0, %s23
      %s42 = sphi 0, %s44
      %s45 = sphi 0, %s42
      %s46 = sphi 0, %s45
      %s62 = sphi 0, %s46
      %s70 = sphi 0, %s72
      %s73 = sphi 0, %s70
      %s74 = sphi 0, %s73
      %s90 = sphi 0, %s74
      %s98 = sphi 0, %s100
      %s101 = sphi 0, %s98
      %s102 = sphi 0, %s101
      %s118 = sphi 0, %s102
    $region4: #{tpu_custom_call.1} parent=1 // loop_header_branch
      %14 = sbr.rel (%p12) target = $region8
    $region5: #{tpu_custom_call.1} parent=1 // loop_body
      %s16 = ssub.s32 %s11, 1
      %s17 = ssub.s32 %s11, 2
      %s27 = sadd.s32 1, %s20
      %p28 = scmp.ge.s32.totalorder %s27, 2
      %s29 = scalar_select %p28, 0, %s27
      %s30 = sadd.s32 1, %s19
      %s31 = scalar_select %p28, %s30, %s19
      %p32 = scmp.ge.s32.totalorder %s31, 1
      %s33 = scalar_select %p32, 0, %s31
      %s34 = sadd.s32 1, %s18
      %s35 = scalar_select %p32, %s34, %s18
      %p36 = scmp.ge.s32.totalorder %s35, 2
      %s37 = scalar_select %p36, 0, %s35
      %s38 = ssub.s32 %s18, %s37
      %s39 = ssub.s32 %s20, %s29
      %s40 = sor.u32 %s38, %s39
      %p41 = scmp.eq.s32.totalorder %s40, 0
      %s43 = sadd.s32 %s42, 1
      %s44 = scalar_select %p41, %s42, %s43
      %p47 = pneg %p41
      %p48 = scmp.eq.s32.totalorder %s11, 3
      %p49 = por %p47, %p48
      %p50 = scmp.ne.s32.totalorder %s42, %s45
      %p51 = scmp.eq.s32.totalorder %s11, 0
      %p52 = por %p50, %p51
      %p53 = scmp.ne.s32.totalorder %s42, %s45
      %p54 = scmp.eq.s32.totalorder %s16, 3
      %p55 = por %p53, %p54
      %p56 = scmp.ne.s32.totalorder %s45, %s46
      %p57 = scmp.eq.s32.totalorder %s16, 0
      %p58 = por %p56, %p57
      %p59 = scmp.ne.s32.totalorder %s45, %s46
      %p60 = scmp.eq.s32.totalorder %s17, 3
      %p61 = por %p59, %p60
      %p63 = scmp.ne.s32.totalorder %s46, %s62
      %p64 = scmp.eq.s32.totalorder %s17, 0
      %p65 = por %p63, %p64
      %s66 = ssub.s32 %s18, %s37
      %s67 = ssub.s32 %s19, %s33
      %s68 = sor.u32 %s66, %s67
      %p69 = scmp.eq.s32.totalorder %s68, 0
      %s71 = sadd.s32 %s70, 1
      %s72 = scalar_select %p69, %s70, %s71
      %p75 = pneg %p69
      %p76 = scmp.eq.s32.totalorder %s11, 3
      %p77 = por %p75, %p76
      %p78 = scmp.ne.s32.totalorder %s70, %s73
      %p79 = scmp.eq.s32.totalorder %s11, 0
      %p80 = por %p78, %p79
      %p81 = scmp.ne.s32.totalorder %s70, %s73
      %p82 = scmp.eq.s32.totalorder %s16, 3
      %p83 = por %p81, %p82
      %p84 = scmp.ne.s32.totalorder %s73, %s74
      %p85 = scmp.eq.s32.totalorder %s16, 0
      %p86 = por %p84, %p85
      %p87 = scmp.ne.s32.totalorder %s73, %s74
      %p88 = scmp.eq.s32.totalorder %s17, 3
      %p89 = por %p87, %p88
      %p91 = scmp.ne.s32.totalorder %s74, %s90
      %p92 = scmp.eq.s32.totalorder %s17, 0
      %p93 = por %p91, %p92
      %s94 = ssub.s32 %s18, %s37
      %s95 = ssub.s32 %s19, %s33
      %s96 = sor.u32 %s94, %s95
      %p97 = scmp.eq.s32.totalorder %s96, 0
      %s99 = sadd.s32 %s98, 1
      %s100 = scalar_select %p97, %s98, %s99
      %p103 = pneg %p97
      %p104 = scmp.eq.s32.totalorder %s11, 3
      %p105 = por %p103, %p104
      %p106 = scmp.ne.s32.totalorder %s98, %s101
      %p107 = scmp.eq.s32.totalorder %s11, 0
      %p108 = por %p106, %p107
      %p109 = scmp.ne.s32.totalorder %s98, %s101
      %p110 = scmp.eq.s32.totalorder %s16, 3
      %p111 = por %p109, %p110
      %p112 = scmp.ne.s32.totalorder %s101, %s102
      %p113 = scmp.eq.s32.totalorder %s16, 0
      %p114 = por %p112, %p113
      %p115 = scmp.ne.s32.totalorder %s101, %s102
      %p116 = scmp.eq.s32.totalorder %s17, 3
      %p117 = por %p115, %p116
      %p119 = scmp.ne.s32.totalorder %s102, %s118
      %p120 = scmp.eq.s32.totalorder %s17, 0
      %p121 = por %p119, %p120
      %p122 = scmp.le.s32.totalorder 1, %s11
      %p123 = scmp.lt.s32.totalorder %s11, 5
      %p124 = pnand %p122, %p123
      %p125 = pneg %p124
      // Predicated region
      $region9: #{tpu_custom_call.1} parent=5 // pred_check
        _
      $region10: #{tpu_custom_call.1} parent=5 // pred_check_branch
        %127 = sbr.rel (%p124) target = $region12
      $region11: #{tpu_custom_call.1} parent=5 // pred_region
        %s128 = ssub.s32 %s11, 1
      $region12: #{tpu_custom_call.1} parent=5 // pred_fallthru
        _
      %p129 = scmp.lt.s32.totalorder %s11, 4
      // Predicated region
      $region13: #{tpu_custom_call.1} parent=5 // pred_check
        %p130 = pneg %p129
      $region14: #{tpu_custom_call.1} parent=5 // pred_check_branch
        %132 = sbr.rel (%p130) target = $region16
      $region15: #{tpu_custom_call.1} parent=5 // pred_region
        // Predicated region
        $region17: #{tpu_custom_call.1} parent=15 // pred_check
          %p133 = pneg %p52
        $region18: #{tpu_custom_call.1} parent=15 // pred_check_branch
          %135 = sbr.rel (%p133) target = $region20
        $region19: #{tpu_custom_call.1} parent=15 // pred_region
          %s136 = smul.u32 32, %s20
          %p137 = scmp.lt.s32.totalorder %s18, 1
          %s138 = scalar_select %p137, %s18, 1
          %p139 = scmp.lt.s32.totalorder %s136, 63
          %s140 = scalar_select %p139, %s136, 63
          %s141 = smul.addr %s138, 64
          %s142 = sadd.s32 %s140, %s141
          %s143 = smul.addr %s142, 8
          %s144 = scalar_lea.vmem %s0, %s143
          %s145 = smul.u32 32, %s20
        $region20: #{tpu_custom_call.1} parent=15 // pred_fallthru
          _
        // Predicated region
        $region21: #{tpu_custom_call.1} parent=15 // pred_check
          %p146 = pneg %p80
        $region22: #{tpu_custom_call.1} parent=15 // pred_check_branch
          %148 = sbr.rel (%p146) target = $region24
        $region23: #{tpu_custom_call.1} parent=15 // pred_region
          %s149 = smul.u32 4, %s19
          %p150 = scmp.lt.s32.totalorder %s18, 1
          %s151 = scalar_select %p150, %s18, 1
          %p152 = scmp.lt.s32.totalorder %s149, 3
          %s153 = scalar_select %p152, %s149, 3
          %s154 = smul.addr %s151, 4
          %s155 = sadd.s32 %s153, %s154
          %s156 = smul.addr %s155, 8
          %s157 = scalar_lea.vmem %s1, %s156
          %s158 = smul.u32 4, %s19
        $region24: #{tpu_custom_call.1} parent=15 // pred_fallthru
          _
      $region16: #{tpu_custom_call.1} parent=5 // pred_fallthru
        _
      %p159 = scmp.le.s32.totalorder 1, %s11
      %p160 = scmp.lt.s32.totalorder %s11, 5
      %p161 = pnand %p159, %p160
      %p162 = pneg %p161
      // Predicated region
      $region25: #{tpu_custom_call.1} parent=5 // pred_check
        _
      $region26: #{tpu_custom_call.1} parent=5 // pred_check_branch
        %164 = sbr.rel (%p161) target = $region28
      $region27: #{tpu_custom_call.1} parent=5 // pred_region
        %s165 = ssub.s32 %s11, 1
        %s166 = smul.u32 32, %s23
        %p167 = scmp.lt.s32.totalorder %s21, 1
        %s168 = scalar_select %p167, %s21, 1
        %p169 = scmp.lt.s32.totalorder %s166, 63
        %s170 = scalar_select %p169, %s166, 63
        %s171 = smul.addr %s168, 64
        %s172 = sadd.s32 %s170, %s171
        %s173 = smul.addr %s172, 8
        %s174 = scalar_lea.vmem %s0, %s173
        %p175 = pneg %p58
        %p176 = pneg %p55
        %s177 = smul.u32 4, %s22
        %p178 = scmp.lt.s32.totalorder %s21, 1
        %s179 = scalar_select %p178, %s21, 1
        %p180 = scmp.lt.s32.totalorder %s177, 3
        %s181 = scalar_select %p180, %s177, 3
        %s182 = smul.addr %s179, 4
        %s183 = sadd.s32 %s181, %s182
        %s184 = smul.addr %s183, 8
        %s185 = scalar_lea.vmem %s1, %s184
        %p186 = pneg %p86
        %p187 = pneg %p83
        %p188 = pneg %p114
        %p189 = pneg %p111
        %s190 = sand.u32 %s101, 1
        %s191 = scalar_lea.sflag [#allocation6], %s190
        %s192 = sand.u32 %s101, 1
        %s193 = smul.addr %s192, 4
        %s194 = scalar_lea.vmem [#allocation5], %s193
        %s195 = smul.u32 32, %s23
        %p196 = scmp.lt.s32.totalorder %s21, 1
        %s197 = scalar_select %p196, %s21, 1
        %p198 = scmp.lt.s32.totalorder %s195, 63
        %s199 = scalar_select %p198, %s195, 63
        %s200 = smul.addr %s197, 64
        %s201 = sadd.s32 %s199, %s200
        %s202 = smul.addr %s201, 8
        %s203 = scalar_lea.vmem %s0, %s202
        %s204 = smul.u32 32, %s23
        %s205 = smul.u32 4, %s22
        %p206 = scmp.lt.s32.totalorder %s21, 1
        %s207 = scalar_select %p206, %s21, 1
        %p208 = scmp.lt.s32.totalorder %s205, 3
        %s209 = scalar_select %p208, %s205, 3
        %s210 = smul.addr %s207, 4
        %s211 = sadd.s32 %s209, %s210
        %s212 = smul.addr %s211, 8
        %s213 = scalar_lea.vmem %s1, %s212
        %s214 = smul.u32 4, %s22
        %s215 = smul.u32 4, %s22
        %p216 = scmp.eq.s32.totalorder %s23, 0
        // Predicated region
        $region29: #{tpu_custom_call.1} parent=27 // pred_check
          %p217 = pneg %p216
        $region30: #{tpu_custom_call.1} parent=27 // pred_check_branch
          %219 = sbr.rel (%p217) target = $region32
        $region31: #{tpu_custom_call.1} parent=27 // pred_region
          %220 = vst [vmem:[#allocation2] sm:$0xff] 1e+30
          %221 = vst [vmem:[#allocation2 + $0x8] sm:$0xff] 1e+30
          %222 = vst [vmem:[#allocation2 + $0x10] sm:$0xff] 1e+30
          %223 = vst [vmem:[#allocation2 + $0x18] sm:$0xff] 1e+30
          %224 = vst [vmem:[#allocation2 + $0x20] sm:$0xff] 1e+30
          %225 = vst [vmem:[#allocation2 + $0x28] sm:$0xff] 1e+30
          %226 = vst [vmem:[#allocation2 + $0x30] sm:$0xff] 1e+30
          %227 = vst [vmem:[#allocation2 + $0x38] sm:$0xff] 1e+30
          %228 = vst [vmem:[#allocation2 + $0x40] sm:$0xff] 1e+30
          %229 = vst [vmem:[#allocation2 + $0x48] sm:$0xff] 1e+30
          %230 = vst [vmem:[#allocation2 + $0x50] sm:$0xff] 1e+30
          %231 = vst [vmem:[#allocation2 + $0x58] sm:$0xff] 1e+30
          %232 = vst [vmem:[#allocation2 + $0x60] sm:$0xff] 1e+30
          %233 = vst [vmem:[#allocation2 + $0x68] sm:$0xff] 1e+30
          %234 = vst [vmem:[#allocation2 + $0x70] sm:$0xff] 1e+30
          %235 = vst [vmem:[#allocation2 + $0x78] sm:$0xff] 1e+30
          %236 = vst [vmem:[#allocation2 + $0x80] sm:$0xff] 1e+30
          %237 = vst [vmem:[#allocation2 + $0x88] sm:$0xff] 1e+30
          %238 = vst [vmem:[#allocation2 + $0x90] sm:$0xff] 1e+30
          %239 = vst [vmem:[#allocation2 + $0x98] sm:$0xff] 1e+30
          %240 = vst [vmem:[#allocation2 + $0xa0] sm:$0xff] 1e+30
          %241 = vst [vmem:[#allocation2 + $0xa8] sm:$0xff] 1e+30
          %242 = vst [vmem:[#allocation2 + $0xb0] sm:$0xff] 1e+30
          %243 = vst [vmem:[#allocation2 + $0xb8] sm:$0xff] 1e+30
          %244 = vst [vmem:[#allocation2 + $0xc0] sm:$0xff] 1e+30
          %245 = vst [vmem:[#allocation2 + $0xc8] sm:$0xff] 1e+30
          %246 = vst [vmem:[#allocation2 + $0xd0] sm:$0xff] 1e+30
          %247 = vst [vmem:[#allocation2 + $0xd8] sm:$0xff] 1e+30
          %248 = vst [vmem:[#allocation2 + $0xe0] sm:$0xff] 1e+30
          %249 = vst [vmem:[#allocation2 + $0xe8] sm:$0xff] 1e+30
          %250 = vst [vmem:[#allocation2 + $0xf0] sm:$0xff] 1e+30
          %251 = vst [vmem:[#allocation2 + $0xf8] sm:$0xff] 1e+30
          %252 = vst [vmem:[#allocation2 + $0x100] sm:$0xff] 1e+30
          %253 = vst [vmem:[#allocation2 + $0x108] sm:$0xff] 1e+30
          %254 = vst [vmem:[#allocation2 + $0x110] sm:$0xff] 1e+30
          %255 = vst [vmem:[#allocation2 + $0x118] sm:$0xff] 1e+30
          %256 = vst [vmem:[#allocation2 + $0x120] sm:$0xff] 1e+30
          %257 = vst [vmem:[#allocation2 + $0x128] sm:$0xff] 1e+30
          %258 = vst [vmem:[#allocation2 + $0x130] sm:$0xff] 1e+30
          %259 = vst [vmem:[#allocation2 + $0x138] sm:$0xff] 1e+30
          %260 = vst [vmem:[#allocation2 + $0x140] sm:$0xff] 1e+30
          %261 = vst [vmem:[#allocation2 + $0x148] sm:$0xff] 1e+30
          %262 = vst [vmem:[#allocation2 + $0x150] sm:$0xff] 1e+30
          %263 = vst [vmem:[#allocation2 + $0x158] sm:$0xff] 1e+30
          %264 = vst [vmem:[#allocation2 + $0x160] sm:$0xff] 1e+30
          %265 = vst [vmem:[#allocation2 + $0x168] sm:$0xff] 1e+30
          %266 = vst [vmem:[#allocation2 + $0x170] sm:$0xff] 1e+30
          %267 = vst [vmem:[#allocation2 + $0x178] sm:$0xff] 1e+30
          %268 = vst [vmem:[#allocation2 + $0x180] sm:$0xff] 1e+30
          %269 = vst [vmem:[#allocation2 + $0x188] sm:$0xff] 1e+30
          %270 = vst [vmem:[#allocation2 + $0x190] sm:$0xff] 1e+30
          %271 = vst [vmem:[#allocation2 + $0x198] sm:$0xff] 1e+30
          %272 = vst [vmem:[#allocation2 + $0x1a0] sm:$0xff] 1e+30
          %273 = vst [vmem:[#allocation2 + $0x1a8] sm:$0xff] 1e+30
          %274 = vst [vmem:[#allocation2 + $0x1b0] sm:$0xff] 1e+30
          %275 = vst [vmem:[#allocation2 + $0x1b8] sm:$0xff] 1e+30
          %276 = vst [vmem:[#allocation2 + $0x1c0] sm:$0xff] 1e+30
          %277 = vst [vmem:[#allocation2 + $0x1c8] sm:$0xff] 1e+30
          %278 = vst [vmem:[#allocation2 + $0x1d0] sm:$0xff] 1e+30
          %279 = vst [vmem:[#allocation2 + $0x1d8] sm:$0xff] 1e+30
          %280 = vst [vmem:[#allocation2 + $0x1e0] sm:$0xff] 1e+30
          %281 = vst [vmem:[#allocation2 + $0x1e8] sm:$0xff] 1e+30
          %282 = vst [vmem:[#allocation2 + $0x1f0] sm:$0xff] 1e+30
          %283 = vst [vmem:[#allocation2 + $0x1f8] sm:$0xff] 1e+30
          %284 = vst [vmem:[#allocation2 + $0x200] sm:$0xff] 1e+30
          %285 = vst [vmem:[#allocation2 + $0x208] sm:$0xff] 1e+30
          %286 = vst [vmem:[#allocation2 + $0x210] sm:$0xff] 1e+30
          %287 = vst [vmem:[#allocation2 + $0x218] sm:$0xff] 1e+30
          %288 = vst [vmem:[#allocation2 + $0x220] sm:$0xff] 1e+30
          %289 = vst [vmem:[#allocation2 + $0x228] sm:$0xff] 1e+30
          %290 = vst [vmem:[#allocation2 + $0x230] sm:$0xff] 1e+30
          %291 = vst [vmem:[#allocation2 + $0x238] sm:$0xff] 1e+30
          %292 = vst [vmem:[#allocation2 + $0x240] sm:$0xff] 1e+30
          %293 = vst [vmem:[#allocation2 + $0x248] sm:$0xff] 1e+30
          %294 = vst [vmem:[#allocation2 + $0x250] sm:$0xff] 1e+30
          %295 = vst [vmem:[#allocation2 + $0x258] sm:$0xff] 1e+30
          %296 = vst [vmem:[#allocation2 + $0x260] sm:$0xff] 1e+30
          %297 = vst [vmem:[#allocation2 + $0x268] sm:$0xff] 1e+30
          %298 = vst [vmem:[#allocation2 + $0x270] sm:$0xff] 1e+30
          %299 = vst [vmem:[#allocation2 + $0x278] sm:$0xff] 1e+30
          %300 = vst [vmem:[#allocation2 + $0x280] sm:$0xff] 1e+30
          %301 = vst [vmem:[#allocation2 + $0x288] sm:$0xff] 1e+30
          %302 = vst [vmem:[#allocation2 + $0x290] sm:$0xff] 1e+30
          %303 = vst [vmem:[#allocation2 + $0x298] sm:$0xff] 1e+30
          %304 = vst [vmem:[#allocation2 + $0x2a0] sm:$0xff] 1e+30
          %305 = vst [vmem:[#allocation2 + $0x2a8] sm:$0xff] 1e+30
          %306 = vst [vmem:[#allocation2 + $0x2b0] sm:$0xff] 1e+30
          %307 = vst [vmem:[#allocation2 + $0x2b8] sm:$0xff] 1e+30
          %308 = vst [vmem:[#allocation2 + $0x2c0] sm:$0xff] 1e+30
          %309 = vst [vmem:[#allocation2 + $0x2c8] sm:$0xff] 1e+30
          %310 = vst [vmem:[#allocation2 + $0x2d0] sm:$0xff] 1e+30
          %311 = vst [vmem:[#allocation2 + $0x2d8] sm:$0xff] 1e+30
          %312 = vst [vmem:[#allocation2 + $0x2e0] sm:$0xff] 1e+30
          %313 = vst [vmem:[#allocation2 + $0x2e8] sm:$0xff] 1e+30
          %314 = vst [vmem:[#allocation2 + $0x2f0] sm:$0xff] 1e+30
          %315 = vst [vmem:[#allocation2 + $0x2f8] sm:$0xff] 1e+30
          %316 = vst [vmem:[#allocation2 + $0x300] sm:$0xff] 1e+30
          %317 = vst [vmem:[#allocation2 + $0x308] sm:$0xff] 1e+30
          %318 = vst [vmem:[#allocation2 + $0x310] sm:$0xff] 1e+30
          %319 = vst [vmem:[#allocation2 + $0x318] sm:$0xff] 1e+30
          %320 = vst [vmem:[#allocation2 + $0x320] sm:$0xff] 1e+30
          %321 = vst [vmem:[#allocation2 + $0x328] sm:$0xff] 1e+30
          %322 = vst [vmem:[#allocation2 + $0x330] sm:$0xff] 1e+30
          %323 = vst [vmem:[#allocation2 + $0x338] sm:$0xff] 1e+30
          %324 = vst [vmem:[#allocation2 + $0x340] sm:$0xff] 1e+30
          %325 = vst [vmem:[#allocation2 + $0x348] sm:$0xff] 1e+30
          %326 = vst [vmem:[#allocation2 + $0x350] sm:$0xff] 1e+30
          %327 = vst [vmem:[#allocation2 + $0x358] sm:$0xff] 1e+30
          %328 = vst [vmem:[#allocation2 + $0x360] sm:$0xff] 1e+30
          %329 = vst [vmem:[#allocation2 + $0x368] sm:$0xff] 1e+30
          %330 = vst [vmem:[#allocation2 + $0x370] sm:$0xff] 1e+30
          %331 = vst [vmem:[#allocation2 + $0x378] sm:$0xff] 1e+30
          %332 = vst [vmem:[#allocation2 + $0x380] sm:$0xff] 1e+30
          %333 = vst [vmem:[#allocation2 + $0x388] sm:$0xff] 1e+30
          %334 = vst [vmem:[#allocation2 + $0x390] sm:$0xff] 1e+30
          %335 = vst [vmem:[#allocation2 + $0x398] sm:$0xff] 1e+30
          %336 = vst [vmem:[#allocation2 + $0x3a0] sm:$0xff] 1e+30
          %337 = vst [vmem:[#allocation2 + $0x3a8] sm:$0xff] 1e+30
          %338 = vst [vmem:[#allocation2 + $0x3b0] sm:$0xff] 1e+30
          %339 = vst [vmem:[#allocation2 + $0x3b8] sm:$0xff] 1e+30
          %340 = vst [vmem:[#allocation2 + $0x3c0] sm:$0xff] 1e+30
          %341 = vst [vmem:[#allocation2 + $0x3c8] sm:$0xff] 1e+30
          %342 = vst [vmem:[#allocation2 + $0x3d0] sm:$0xff] 1e+30
          %343 = vst [vmem:[#allocation2 + $0x3d8] sm:$0xff] 1e+30
          %344 = vst [vmem:[#allocation2 + $0x3e0] sm:$0xff] 1e+30
          %345 = vst [vmem:[#allocation2 + $0x3e8] sm:$0xff] 1e+30
          %346 = vst [vmem:[#allocation2 + $0x3f0] sm:$0xff] 1e+30
          %347 = vst [vmem:[#allocation2 + $0x3f8] sm:$0xff] 1e+30
          %348 = vst [vmem:[#allocation3] sm:$0xff] 1e+30
          %349 = vst [vmem:[#allocation3 + $0x8] sm:$0xff] 1e+30
          %350 = vst [vmem:[#allocation3 + $0x10] sm:$0xff] 1e+30
          %351 = vst [vmem:[#allocation3 + $0x18] sm:$0xff] 1e+30
          %352 = vst [vmem:[#allocation3 + $0x20] sm:$0xff] 1e+30
          %353 = vst [vmem:[#allocation3 + $0x28] sm:$0xff] 1e+30
          %354 = vst [vmem:[#allocation3 + $0x30] sm:$0xff] 1e+30
          %355 = vst [vmem:[#allocation3 + $0x38] sm:$0xff] 1e+30
          %356 = vst [vmem:[#allocation3 + $0x40] sm:$0xff] 1e+30
          %357 = vst [vmem:[#allocation3 + $0x48] sm:$0xff] 1e+30
          %358 = vst [vmem:[#allocation3 + $0x50] sm:$0xff] 1e+30
          %359 = vst [vmem:[#allocation3 + $0x58] sm:$0xff] 1e+30
          %360 = vst [vmem:[#allocation3 + $0x60] sm:$0xff] 1e+30
          %361 = vst [vmem:[#allocation3 + $0x68] sm:$0xff] 1e+30
          %362 = vst [vmem:[#allocation3 + $0x70] sm:$0xff] 1e+30
          %363 = vst [vmem:[#allocation3 + $0x78] sm:$0xff] 1e+30
          %364 = vst [vmem:[#allocation3 + $0x80] sm:$0xff] 1e+30
          %365 = vst [vmem:[#allocation3 + $0x88] sm:$0xff] 1e+30
          %366 = vst [vmem:[#allocation3 + $0x90] sm:$0xff] 1e+30
          %367 = vst [vmem:[#allocation3 + $0x98] sm:$0xff] 1e+30
          %368 = vst [vmem:[#allocation3 + $0xa0] sm:$0xff] 1e+30
          %369 = vst [vmem:[#allocation3 + $0xa8] sm:$0xff] 1e+30
          %370 = vst [vmem:[#allocation3 + $0xb0] sm:$0xff] 1e+30
          %371 = vst [vmem:[#allocation3 + $0xb8] sm:$0xff] 1e+30
          %372 = vst [vmem:[#allocation3 + $0xc0] sm:$0xff] 1e+30
          %373 = vst [vmem:[#allocation3 + $0xc8] sm:$0xff] 1e+30
          %374 = vst [vmem:[#allocation3 + $0xd0] sm:$0xff] 1e+30
          %375 = vst [vmem:[#allocation3 + $0xd8] sm:$0xff] 1e+30
          %376 = vst [vmem:[#allocation3 + $0xe0] sm:$0xff] 1e+30
          %377 = vst [vmem:[#allocation3 + $0xe8] sm:$0xff] 1e+30
          %378 = vst [vmem:[#allocation3 + $0xf0] sm:$0xff] 1e+30
          %379 = vst [vmem:[#allocation3 + $0xf8] sm:$0xff] 1e+30
          %380 = vst [vmem:[#allocation3 + $0x100] sm:$0xff] 1e+30
          %381 = vst [vmem:[#allocation3 + $0x108] sm:$0xff] 1e+30
          %382 = vst [vmem:[#allocation3 + $0x110] sm:$0xff] 1e+30
          %383 = vst [vmem:[#allocation3 + $0x118] sm:$0xff] 1e+30
          %384 = vst [vmem:[#allocation3 + $0x120] sm:$0xff] 1e+30
          %385 = vst [vmem:[#allocation3 + $0x128] sm:$0xff] 1e+30
          %386 = vst [vmem:[#allocation3 + $0x130] sm:$0xff] 1e+30
          %387 = vst [vmem:[#allocation3 + $0x138] sm:$0xff] 1e+30
          %388 = vst [vmem:[#allocation3 + $0x140] sm:$0xff] 1e+30
          %389 = vst [vmem:[#allocation3 + $0x148] sm:$0xff] 1e+30
          %390 = vst [vmem:[#allocation3 + $0x150] sm:$0xff] 1e+30
          %391 = vst [vmem:[#allocation3 + $0x158] sm:$0xff] 1e+30
          %392 = vst [vmem:[#allocation3 + $0x160] sm:$0xff] 1e+30
          %393 = vst [vmem:[#allocation3 + $0x168] sm:$0xff] 1e+30
          %394 = vst [vmem:[#allocation3 + $0x170] sm:$0xff] 1e+30
          %395 = vst [vmem:[#allocation3 + $0x178] sm:$0xff] 1e+30
          %396 = vst [vmem:[#allocation3 + $0x180] sm:$0xff] 1e+30
          %397 = vst [vmem:[#allocation3 + $0x188] sm:$0xff] 1e+30
          %398 = vst [vmem:[#allocation3 + $0x190] sm:$0xff] 1e+30
          %399 = vst [vmem:[#allocation3 + $0x198] sm:$0xff] 1e+30
          %400 = vst [vmem:[#allocation3 + $0x1a0] sm:$0xff] 1e+30
          %401 = vst [vmem:[#allocation3 + $0x1a8] sm:$0xff] 1e+30
          %402 = vst [vmem:[#allocation3 + $0x1b0] sm:$0xff] 1e+30
          %403 = vst [vmem:[#allocation3 + $0x1b8] sm:$0xff] 1e+30
          %404 = vst [vmem:[#allocation3 + $0x1c0] sm:$0xff] 1e+30
          %405 = vst [vmem:[#allocation3 + $0x1c8] sm:$0xff] 1e+30
          %406 = vst [vmem:[#allocation3 + $0x1d0] sm:$0xff] 1e+30
          %407 = vst [vmem:[#allocation3 + $0x1d8] sm:$0xff] 1e+30
          %408 = vst [vmem:[#allocation3 + $0x1e0] sm:$0xff] 1e+30
          %409 = vst [vmem:[#allocation3 + $0x1e8] sm:$0xff] 1e+30
          %410 = vst [vmem:[#allocation3 + $0x1f0] sm:$0xff] 1e+30
          %411 = vst [vmem:[#allocation3 + $0x1f8] sm:$0xff] 1e+30
          %412 = vst [vmem:[#allocation3 + $0x200] sm:$0xff] 1e+30
          %413 = vst [vmem:[#allocation3 + $0x208] sm:$0xff] 1e+30
          %414 = vst [vmem:[#allocation3 + $0x210] sm:$0xff] 1e+30
          %415 = vst [vmem:[#allocation3 + $0x218] sm:$0xff] 1e+30
          %416 = vst [vmem:[#allocation3 + $0x220] sm:$0xff] 1e+30
          %417 = vst [vmem:[#allocation3 + $0x228] sm:$0xff] 1e+30
          %418 = vst [vmem:[#allocation3 + $0x230] sm:$0xff] 1e+30
          %419 = vst [vmem:[#allocation3 + $0x238] sm:$0xff] 1e+30
          %420 = vst [vmem:[#allocation3 + $0x240] sm:$0xff] 1e+30
          %421 = vst [vmem:[#allocation3 + $0x248] sm:$0xff] 1e+30
          %422 = vst [vmem:[#allocation3 + $0x250] sm:$0xff] 1e+30
          %423 = vst [vmem:[#allocation3 + $0x258] sm:$0xff] 1e+30
          %424 = vst [vmem:[#allocation3 + $0x260] sm:$0xff] 1e+30
          %425 = vst [vmem:[#allocation3 + $0x268] sm:$0xff] 1e+30
          %426 = vst [vmem:[#allocation3 + $0x270] sm:$0xff] 1e+30
          %427 = vst [vmem:[#allocation3 + $0x278] sm:$0xff] 1e+30
          %428 = vst [vmem:[#allocation3 + $0x280] sm:$0xff] 1e+30
          %429 = vst [vmem:[#allocation3 + $0x288] sm:$0xff] 1e+30
          %430 = vst [vmem:[#allocation3 + $0x290] sm:$0xff] 1e+30
          %431 = vst [vmem:[#allocation3 + $0x298] sm:$0xff] 1e+30
          %432 = vst [vmem:[#allocation3 + $0x2a0] sm:$0xff] 1e+30
          %433 = vst [vmem:[#allocation3 + $0x2a8] sm:$0xff] 1e+30
          %434 = vst [vmem:[#allocation3 + $0x2b0] sm:$0xff] 1e+30
          %435 = vst [vmem:[#allocation3 + $0x2b8] sm:$0xff] 1e+30
          %436 = vst [vmem:[#allocation3 + $0x2c0] sm:$0xff] 1e+30
          %437 = vst [vmem:[#allocation3 + $0x2c8] sm:$0xff] 1e+30
          %438 = vst [vmem:[#allocation3 + $0x2d0] sm:$0xff] 1e+30
          %439 = vst [vmem:[#allocation3 + $0x2d8] sm:$0xff] 1e+30
          %440 = vst [vmem:[#allocation3 + $0x2e0] sm:$0xff] 1e+30
          %441 = vst [vmem:[#allocation3 + $0x2e8] sm:$0xff] 1e+30
          %442 = vst [vmem:[#allocation3 + $0x2f0] sm:$0xff] 1e+30
          %443 = vst [vmem:[#allocation3 + $0x2f8] sm:$0xff] 1e+30
          %444 = vst [vmem:[#allocation3 + $0x300] sm:$0xff] 1e+30
          %445 = vst [vmem:[#allocation3 + $0x308] sm:$0xff] 1e+30
          %446 = vst [vmem:[#allocation3 + $0x310] sm:$0xff] 1e+30
          %447 = vst [vmem:[#allocation3 + $0x318] sm:$0xff] 1e+30
          %448 = vst [vmem:[#allocation3 + $0x320] sm:$0xff] 1e+30
          %449 = vst [vmem:[#allocation3 + $0x328] sm:$0xff] 1e+30
          %450 = vst [vmem:[#allocation3 + $0x330] sm:$0xff] 1e+30
          %451 = vst [vmem:[#allocation3 + $0x338] sm:$0xff] 1e+30
          %452 = vst [vmem:[#allocation3 + $0x340] sm:$0xff] 1e+30
          %453 = vst [vmem:[#allocation3 + $0x348] sm:$0xff] 1e+30
          %454 = vst [vmem:[#allocation3 + $0x350] sm:$0xff] 1e+30
          %455 = vst [vmem:[#allocation3 + $0x358] sm:$0xff] 1e+30
          %456 = vst [vmem:[#allocation3 + $0x360] sm:$0xff] 1e+30
          %457 = vst [vmem:[#allocation3 + $0x368] sm:$0xff] 1e+30
          %458 = vst [vmem:[#allocation3 + $0x370] sm:$0xff] 1e+30
          %459 = vst [vmem:[#allocation3 + $0x378] sm:$0xff] 1e+30
          %460 = vst [vmem:[#allocation3 + $0x380] sm:$0xff] 1e+30
          %461 = vst [vmem:[#allocation3 + $0x388] sm:$0xff] 1e+30
          %462 = vst [vmem:[#allocation3 + $0x390] sm:$0xff] 1e+30
          %463 = vst [vmem:[#allocation3 + $0x398] sm:$0xff] 1e+30
          %464 = vst [vmem:[#allocation3 + $0x3a0] sm:$0xff] 1e+30
          %465 = vst [vmem:[#allocation3 + $0x3a8] sm:$0xff] 1e+30
          %466 = vst [vmem:[#allocation3 + $0x3b0] sm:$0xff] 1e+30
          %467 = vst [vmem:[#allocation3 + $0x3b8] sm:$0xff] 1e+30
          %468 = vst [vmem:[#allocation3 + $0x3c0] sm:$0xff] 1e+30
          %469 = vst [vmem:[#allocation3 + $0x3c8] sm:$0xff] 1e+30
          %470 = vst [vmem:[#allocation3 + $0x3d0] sm:$0xff] 1e+30
          %471 = vst [vmem:[#allocation3 + $0x3d8] sm:$0xff] 1e+30
          %472 = vst [vmem:[#allocation3 + $0x3e0] sm:$0xff] 1e+30
          %473 = vst [vmem:[#allocation3 + $0x3e8] sm:$0xff] 1e+30
          %474 = vst [vmem:[#allocation3 + $0x3f0] sm:$0xff] 1e+30
          %475 = vst [vmem:[#allocation3 + $0x3f8] sm:$0xff] 1e+30
          %476 = vst [vmem:[#allocation4] sm:$0xff] 1e+30
          %477 = vst [vmem:[#allocation4 + $0x8] sm:$0xff] 1e+30
          %478 = vst [vmem:[#allocation4 + $0x10] sm:$0xff] 1e+30
          %479 = vst [vmem:[#allocation4 + $0x18] sm:$0xff] 1e+30
          %480 = vst [vmem:[#allocation4 + $0x20] sm:$0xff] 1e+30
          %481 = vst [vmem:[#allocation4 + $0x28] sm:$0xff] 1e+30
          %482 = vst [vmem:[#allocation4 + $0x30] sm:$0xff] 1e+30
          %483 = vst [vmem:[#allocation4 + $0x38] sm:$0xff] 1e+30
          %484 = vst [vmem:[#allocation4 + $0x40] sm:$0xff] 1e+30
          %485 = vst [vmem:[#allocation4 + $0x48] sm:$0xff] 1e+30
          %486 = vst [vmem:[#allocation4 + $0x50] sm:$0xff] 1e+30
          %487 = vst [vmem:[#allocation4 + $0x58] sm:$0xff] 1e+30
          %488 = vst [vmem:[#allocation4 + $0x60] sm:$0xff] 1e+30
          %489 = vst [vmem:[#allocation4 + $0x68] sm:$0xff] 1e+30
          %490 = vst [vmem:[#allocation4 + $0x70] sm:$0xff] 1e+30
          %491 = vst [vmem:[#allocation4 + $0x78] sm:$0xff] 1e+30
          %492 = vst [vmem:[#allocation4 + $0x80] sm:$0xff] 1e+30
          %493 = vst [vmem:[#allocation4 + $0x88] sm:$0xff] 1e+30
          %494 = vst [vmem:[#allocation4 + $0x90] sm:$0xff] 1e+30
          %495 = vst [vmem:[#allocation4 + $0x98] sm:$0xff] 1e+30
          %496 = vst [vmem:[#allocation4 + $0xa0] sm:$0xff] 1e+30
          %497 = vst [vmem:[#allocation4 + $0xa8] sm:$0xff] 1e+30
          %498 = vst [vmem:[#allocation4 + $0xb0] sm:$0xff] 1e+30
          %499 = vst [vmem:[#allocation4 + $0xb8] sm:$0xff] 1e+30
          %500 = vst [vmem:[#allocation4 + $0xc0] sm:$0xff] 1e+30
          %501 = vst [vmem:[#allocation4 + $0xc8] sm:$0xff] 1e+30
          %502 = vst [vmem:[#allocation4 + $0xd0] sm:$0xff] 1e+30
          %503 = vst [vmem:[#allocation4 + $0xd8] sm:$0xff] 1e+30
          %504 = vst [vmem:[#allocation4 + $0xe0] sm:$0xff] 1e+30
          %505 = vst [vmem:[#allocation4 + $0xe8] sm:$0xff] 1e+30
          %506 = vst [vmem:[#allocation4 + $0xf0] sm:$0xff] 1e+30
          %507 = vst [vmem:[#allocation4 + $0xf8] sm:$0xff] 1e+30
          %508 = vst [vmem:[#allocation4 + $0x100] sm:$0xff] 1e+30
          %509 = vst [vmem:[#allocation4 + $0x108] sm:$0xff] 1e+30
          %510 = vst [vmem:[#allocation4 + $0x110] sm:$0xff] 1e+30
          %511 = vst [vmem:[#allocation4 + $0x118] sm:$0xff] 1e+30
          %512 = vst [vmem:[#allocation4 + $0x120] sm:$0xff] 1e+30
          %513 = vst [vmem:[#allocation4 + $0x128] sm:$0xff] 1e+30
          %514 = vst [vmem:[#allocation4 + $0x130] sm:$0xff] 1e+30
          %515 = vst [vmem:[#allocation4 + $0x138] sm:$0xff] 1e+30
          %516 = vst [vmem:[#allocation4 + $0x140] sm:$0xff] 1e+30
          %517 = vst [vmem:[#allocation4 + $0x148] sm:$0xff] 1e+30
          %518 = vst [vmem:[#allocation4 + $0x150] sm:$0xff] 1e+30
          %519 = vst [vmem:[#allocation4 + $0x158] sm:$0xff] 1e+30
          %520 = vst [vmem:[#allocation4 + $0x160] sm:$0xff] 1e+30
          %521 = vst [vmem:[#allocation4 + $0x168] sm:$0xff] 1e+30
          %522 = vst [vmem:[#allocation4 + $0x170] sm:$0xff] 1e+30
          %523 = vst [vmem:[#allocation4 + $0x178] sm:$0xff] 1e+30
          %524 = vst [vmem:[#allocation4 + $0x180] sm:$0xff] 1e+30
          %525 = vst [vmem:[#allocation4 + $0x188] sm:$0xff] 1e+30
          %526 = vst [vmem:[#allocation4 + $0x190] sm:$0xff] 1e+30
          %527 = vst [vmem:[#allocation4 + $0x198] sm:$0xff] 1e+30
          %528 = vst [vmem:[#allocation4 + $0x1a0] sm:$0xff] 1e+30
          %529 = vst [vmem:[#allocation4 + $0x1a8] sm:$0xff] 1e+30
          %530 = vst [vmem:[#allocation4 + $0x1b0] sm:$0xff] 1e+30
          %531 = vst [vmem:[#allocation4 + $0x1b8] sm:$0xff] 1e+30
          %532 = vst [vmem:[#allocation4 + $0x1c0] sm:$0xff] 1e+30
          %533 = vst [vmem:[#allocation4 + $0x1c8] sm:$0xff] 1e+30
          %534 = vst [vmem:[#allocation4 + $0x1d0] sm:$0xff] 1e+30
          %535 = vst [vmem:[#allocation4 + $0x1d8] sm:$0xff] 1e+30
          %536 = vst [vmem:[#allocation4 + $0x1e0] sm:$0xff] 1e+30
          %537 = vst [vmem:[#allocation4 + $0x1e8] sm:$0xff] 1e+30
          %538 = vst [vmem:[#allocation4 + $0x1f0] sm:$0xff] 1e+30
          %539 = vst [vmem:[#allocation4 + $0x1f8] sm:$0xff] 1e+30
          %540 = vst [vmem:[#allocation4 + $0x200] sm:$0xff] 1e+30
          %541 = vst [vmem:[#allocation4 + $0x208] sm:$0xff] 1e+30
          %542 = vst [vmem:[#allocation4 + $0x210] sm:$0xff] 1e+30
          %543 = vst [vmem:[#allocation4 + $0x218] sm:$0xff] 1e+30
          %544 = vst [vmem:[#allocation4 + $0x220] sm:$0xff] 1e+30
          %545 = vst [vmem:[#allocation4 + $0x228] sm:$0xff] 1e+30
          %546 = vst [vmem:[#allocation4 + $0x230] sm:$0xff] 1e+30
          %547 = vst [vmem:[#allocation4 + $0x238] sm:$0xff] 1e+30
          %548 = vst [vmem:[#allocation4 + $0x240] sm:$0xff] 1e+30
          %549 = vst [vmem:[#allocation4 + $0x248] sm:$0xff] 1e+30
          %550 = vst [vmem:[#allocation4 + $0x250] sm:$0xff] 1e+30
          %551 = vst [vmem:[#allocation4 + $0x258] sm:$0xff] 1e+30
          %552 = vst [vmem:[#allocation4 + $0x260] sm:$0xff] 1e+30
          %553 = vst [vmem:[#allocation4 + $0x268] sm:$0xff] 1e+30
          %554 = vst [vmem:[#allocation4 + $0x270] sm:$0xff] 1e+30
          %555 = vst [vmem:[#allocation4 + $0x278] sm:$0xff] 1e+30
          %556 = vst [vmem:[#allocation4 + $0x280] sm:$0xff] 1e+30
          %557 = vst [vmem:[#allocation4 + $0x288] sm:$0xff] 1e+30
          %558 = vst [vmem:[#allocation4 + $0x290] sm:$0xff] 1e+30
          %559 = vst [vmem:[#allocation4 + $0x298] sm:$0xff] 1e+30
          %560 = vst [vmem:[#allocation4 + $0x2a0] sm:$0xff] 1e+30
          %561 = vst [vmem:[#allocation4 + $0x2a8] sm:$0xff] 1e+30
          %562 = vst [vmem:[#allocation4 + $0x2b0] sm:$0xff] 1e+30
          %563 = vst [vmem:[#allocation4 + $0x2b8] sm:$0xff] 1e+30
          %564 = vst [vmem:[#allocation4 + $0x2c0] sm:$0xff] 1e+30
          %565 = vst [vmem:[#allocation4 + $0x2c8] sm:$0xff] 1e+30
          %566 = vst [vmem:[#allocation4 + $0x2d0] sm:$0xff] 1e+30
          %567 = vst [vmem:[#allocation4 + $0x2d8] sm:$0xff] 1e+30
          %568 = vst [vmem:[#allocation4 + $0x2e0] sm:$0xff] 1e+30
          %569 = vst [vmem:[#allocation4 + $0x2e8] sm:$0xff] 1e+30
          %570 = vst [vmem:[#allocation4 + $0x2f0] sm:$0xff] 1e+30
          %571 = vst [vmem:[#allocation4 + $0x2f8] sm:$0xff] 1e+30
          %572 = vst [vmem:[#allocation4 + $0x300] sm:$0xff] 1e+30
          %573 = vst [vmem:[#allocation4 + $0x308] sm:$0xff] 1e+30
          %574 = vst [vmem:[#allocation4 + $0x310] sm:$0xff] 1e+30
          %575 = vst [vmem:[#allocation4 + $0x318] sm:$0xff] 1e+30
          %576 = vst [vmem:[#allocation4 + $0x320] sm:$0xff] 1e+30
          %577 = vst [vmem:[#allocation4 + $0x328] sm:$0xff] 1e+30
          %578 = vst [vmem:[#allocation4 + $0x330] sm:$0xff] 1e+30
          %579 = vst [vmem:[#allocation4 + $0x338] sm:$0xff] 1e+30
          %580 = vst [vmem:[#allocation4 + $0x340] sm:$0xff] 1e+30
          %581 = vst [vmem:[#allocation4 + $0x348] sm:$0xff] 1e+30
          %582 = vst [vmem:[#allocation4 + $0x350] sm:$0xff] 1e+30
          %583 = vst [vmem:[#allocation4 + $0x358] sm:$0xff] 1e+30
          %584 = vst [vmem:[#allocation4 + $0x360] sm:$0xff] 1e+30
          %585 = vst [vmem:[#allocation4 + $0x368] sm:$0xff] 1e+30
          %586 = vst [vmem:[#allocation4 + $0x370] sm:$0xff] 1e+30
          %587 = vst [vmem:[#allocation4 + $0x378] sm:$0xff] 1e+30
          %588 = vst [vmem:[#allocation4 + $0x380] sm:$0xff] 1e+30
          %589 = vst [vmem:[#allocation4 + $0x388] sm:$0xff] 1e+30
          %590 = vst [vmem:[#allocation4 + $0x390] sm:$0xff] 1e+30
          %591 = vst [vmem:[#allocation4 + $0x398] sm:$0xff] 1e+30
          %592 = vst [vmem:[#allocation4 + $0x3a0] sm:$0xff] 1e+30
          %593 = vst [vmem:[#allocation4 + $0x3a8] sm:$0xff] 1e+30
          %594 = vst [vmem:[#allocation4 + $0x3b0] sm:$0xff] 1e+30
          %595 = vst [vmem:[#allocation4 + $0x3b8] sm:$0xff] 1e+30
          %596 = vst [vmem:[#allocation4 + $0x3c0] sm:$0xff] 1e+30
          %597 = vst [vmem:[#allocation4 + $0x3c8] sm:$0xff] 1e+30
          %598 = vst [vmem:[#allocation4 + $0x3d0] sm:$0xff] 1e+30
          %599 = vst [vmem:[#allocation4 + $0x3d8] sm:$0xff] 1e+30
          %600 = vst [vmem:[#allocation4 + $0x3e0] sm:$0xff] 1e+30
          %601 = vst [vmem:[#allocation4 + $0x3e8] sm:$0xff] 1e+30
          %602 = vst [vmem:[#allocation4 + $0x3f0] sm:$0xff] 1e+30
          %603 = vst [vmem:[#allocation4 + $0x3f8] sm:$0xff] 1e+30
        $region32: #{tpu_custom_call.1} parent=27 // pred_fallthru
          _
        %v604 = vld [vmem:[%s203] sm:$0xff]
        %v605 = vld [vmem:[%s203 + $0x8] sm:$0xff]
        %v606 = vld [vmem:[%s203 + $0x10] sm:$0xff]
        %v607 = vld [vmem:[%s203 + $0x18] sm:$0xff]
        %v608 = vld [vmem:[%s203 + $0x20] sm:$0xff]
        %v609 = vld [vmem:[%s203 + $0x28] sm:$0xff]
        %v610 = vld [vmem:[%s203 + $0x30] sm:$0xff]
        %v611 = vld [vmem:[%s203 + $0x38] sm:$0xff]
        %v612 = vld [vmem:[%s203 + $0x40] sm:$0xff]
        %v613 = vld [vmem:[%s203 + $0x48] sm:$0xff]
        %v614 = vld [vmem:[%s203 + $0x50] sm:$0xff]
        %v615 = vld [vmem:[%s203 + $0x58] sm:$0xff]
        %v616 = vld [vmem:[%s203 + $0x60] sm:$0xff]
        %v617 = vld [vmem:[%s203 + $0x68] sm:$0xff]
        %v618 = vld [vmem:[%s203 + $0x70] sm:$0xff]
        %v619 = vld [vmem:[%s203 + $0x78] sm:$0xff]
        %v620 = vld [vmem:[%s203 + $0x80] sm:$0xff]
        %v621 = vld [vmem:[%s203 + $0x88] sm:$0xff]
        %v622 = vld [vmem:[%s203 + $0x90] sm:$0xff]
        %v623 = vld [vmem:[%s203 + $0x98] sm:$0xff]
        %v624 = vld [vmem:[%s203 + $0xa0] sm:$0xff]
        %v625 = vld [vmem:[%s203 + $0xa8] sm:$0xff]
        %v626 = vld [vmem:[%s203 + $0xb0] sm:$0xff]
        %v627 = vld [vmem:[%s203 + $0xb8] sm:$0xff]
        %v628 = vld [vmem:[%s203 + $0xc0] sm:$0xff]
        %v629 = vld [vmem:[%s203 + $0xc8] sm:$0xff]
        %v630 = vld [vmem:[%s203 + $0xd0] sm:$0xff]
        %v631 = vld [vmem:[%s203 + $0xd8] sm:$0xff]
        %v632 = vld [vmem:[%s203 + $0xe0] sm:$0xff]
        %v633 = vld [vmem:[%s203 + $0xe8] sm:$0xff]
        %v634 = vld [vmem:[%s203 + $0xf0] sm:$0xff]
        %v635 = vld [vmem:[%s203 + $0xf8] sm:$0xff]
        %v636 = vld [vmem:[%s213] sm:$0xff]
        %v637 = vld [vmem:[%s213 + $0x8] sm:$0xff]
        %v638 = vld [vmem:[%s213 + $0x10] sm:$0xff]
        %v639 = vld [vmem:[%s213 + $0x18] sm:$0xff]
        %vm640 = vcmask 64512
        %v642 = vsel %vm640, %v604, 0
        %v645 = vsel %vm640, %v605, 0
        %v648 = vsel %vm640, %v606, 0
        %v651 = vsel %vm640, %v607, 0
        %v654 = vsel %vm640, %v608, 0
        %v657 = vsel %vm640, %v609, 0
        %v660 = vsel %vm640, %v610, 0
        %v663 = vsel %vm640, %v611, 0
        %v666 = vsel %vm640, %v612, 0
        %v669 = vsel %vm640, %v613, 0
        %v672 = vsel %vm640, %v614, 0
        %v675 = vsel %vm640, %v615, 0
        %v678 = vsel %vm640, %v616, 0
        %v681 = vsel %vm640, %v617, 0
        %v684 = vsel %vm640, %v618, 0
        %v687 = vsel %vm640, %v619, 0
        %v690 = vsel %vm640, %v620, 0
        %v693 = vsel %vm640, %v621, 0
        %v696 = vsel %vm640, %v622, 0
        %v699 = vsel %vm640, %v623, 0
        %v702 = vsel %vm640, %v624, 0
        %v705 = vsel %vm640, %v625, 0
        %v708 = vsel %vm640, %v626, 0
        %v711 = vsel %vm640, %v627, 0
        %v714 = vsel %vm640, %v628, 0
        %v717 = vsel %vm640, %v629, 0
        %v720 = vsel %vm640, %v630, 0
        %v723 = vsel %vm640, %v631, 0
        %v726 = vsel %vm640, %v632, 0
        %v729 = vsel %vm640, %v633, 0
        %v732 = vsel %vm640, %v634, 0
        %v735 = vsel %vm640, %v635, 0
        %737 = vmatprep.subr.mxu0 %v637
        %738 = vmatpush1.msra.mxu0 %v636
        %739 = vmatprep.subr.mxu0 0.0
        %740 = vmatpush1.msra.mxu0 0.0
        %741 = vmatprep.subr.mxu0 0.0
        %742 = vmatpush1.msra.mxu0 0.0
        %743 = vmatprep.subr.mxu0 0.0
        %744 = vmatpush1.msra.mxu0 0.0
        %745 = vmatprep.subr.mxu0 0.0
        %746 = vmatpush1.msra.mxu0 0.0
        %747 = vmatprep.subr.mxu0 0.0
        %748 = vmatpush1.msra.mxu0 0.0
        %749 = vmatprep.subr.mxu0 0.0
        %750 = vmatpush1.msra.mxu0 0.0
        %751 = vmatprep.subr.mxu0 0.0
        %752 = vmatpush1.msra.mxu0 0.0
        %753 = vmatprep.subr.mxu0 0.0
        %754 = vmatpush1.msra.mxu0 0.0
        %755 = vmatprep.subr.mxu0 0.0
        %756 = vmatpush1.msra.mxu0 0.0
        %757 = vmatprep.subr.mxu0 0.0
        %758 = vmatpush1.msra.mxu0 0.0
        %759 = vmatprep.subr.mxu0 0.0
        %760 = vmatpush1.msra.mxu0 0.0
        %761 = vmatprep.subr.mxu0 0.0
        %762 = vmatpush1.msra.mxu0 0.0
        %763 = vmatprep.subr.mxu0 0.0
        %764 = vmatpush1.msra.mxu0 0.0
        %765 = vmatprep.subr.mxu0 0.0
        %766 = vmatpush1.msra.mxu0 0.0
        %767 = vmatprep.subr.mxu0 0.0
        %768 = vmatpush1.msra.mxu0 0.0
        %769 = vmatprep.subr.mxu0 0.0
        %770 = vmatpush1.msra.mxu0 0.0
        %771 = vmatprep.subr.mxu0 0.0
        %772 = vmatpush1.msra.mxu0 0.0
        %773 = vmatprep.subr.mxu0 0.0
        %774 = vmatpush1.msra.mxu0 0.0
        %775 = vmatprep.subr.mxu0 0.0
        %776 = vmatpush1.msra.mxu0 0.0
        %777 = vmatprep.subr.mxu0 0.0
        %778 = vmatpush1.msra.mxu0 0.0
        %779 = vmatprep.subr.mxu0 0.0
        %780 = vmatpush1.msra.mxu0 0.0
        %781 = vmatprep.subr.mxu0 0.0
        %782 = vmatpush1.msra.mxu0 0.0
        %783 = vmatprep.subr.mxu0 0.0
        %784 = vmatpush1.msra.mxu0 0.0
        %785 = vmatprep.subr.mxu0 0.0
        %786 = vmatpush1.msra.mxu0 0.0
        %787 = vmatprep.subr.mxu0 0.0
        %788 = vmatpush1.msra.mxu0 0.0
        %789 = vmatprep.subr.mxu0 0.0
        %790 = vmatpush1.msra.mxu0 0.0
        %791 = vmatprep.subr.mxu0 0.0
        %792 = vmatpush1.msra.mxu0 0.0
        %793 = vmatprep.subr.mxu0 0.0
        %794 = vmatpush1.msra.mxu0 0.0
        %795 = vmatprep.subr.mxu0 0.0
        %796 = vmatpush1.msra.mxu0 0.0
        %797 = vmatprep.subr.mxu0 0.0
        %798 = vmatpush1.msra.mxu0 0.0
        %799 = vmatprep.subr.mxu0 0.0
        %800 = vmatpush1.msra.mxu0 0.0
        %801 = vmatprep.mubr.f32.mxu0 0.0
        %802 = vmatmul.mubr.f32.gmra.mrb[0].mxu0 %v642
        %v803 = vpop.f32.mrb[0].mxu0
        %v804 = vadd.f32 0.0, %v803
        %v805 = vpop.f32.mrb[0].mxu0
        %v806 = vadd.f32 0.0, %v805
        %807 = vmatprep.mubr.f32.mxu0 0.0
        %808 = vmatmul.mubr.f32.gmra.mrb[0].mxu0 %v645
        %v809 = vpop.f32.mrb[0].mxu0
        %v810 = vadd.f32 0.0, %v809
        %v811 = vpop.f32.mrb[0].mxu0
        %v812 = vadd.f32 0.0, %v811
        %813 = vmatprep.mubr.f32.mxu0 0.0
        %814 = vmatmul.mubr.f32.gmra.mrb[0].mxu0 %v648
        %v815 = vpop.f32.mrb[0].mxu0
        %v816 = vadd.f32 0.0, %v815
        %v817 = vpop.f32.mrb[0].mxu0
        %v818 = vadd.f32 0.0, %v817
        %819 = vmatprep.mubr.f32.mxu0 0.0
        %820 = vmatmul.mubr.f32.gmra.mrb[0].mxu0 %v651
        %v821 = vpop.f32.mrb[0].mxu0
        %v822 = vadd.f32 0.0, %v821
        %v823 = vpop.f32.mrb[0].mxu0
        %v824 = vadd.f32 0.0, %v823
        %825 = vmatprep.mubr.f32.mxu0 0.0
        %826 = vmatmul.mubr.f32.gmra.mrb[0].mxu0 %v654
        %v827 = vpop.f32.mrb[0].mxu0
        %v828 = vadd.f32 0.0, %v827
        %v829 = vpop.f32.mrb[0].mxu0
        %v830 = vadd.f32 0.0, %v829
        %831 = vmatprep.mubr.f32.mxu0 0.0
        %832 = vmatmul.mubr.f32.gmra.mrb[0].mxu0 %v657
        %v833 = vpop.f32.mrb[0].mxu0
        %v834 = vadd.f32 0.0, %v833
        %v835 = vpop.f32.mrb[0].mxu0
        %v836 = vadd.f32 0.0, %v835
        %837 = vmatprep.mubr.f32.mxu0 0.0
        %838 = vmatmul.mubr.f32.gmra.mrb[0].mxu0 %v660
        %v839 = vpop.f32.mrb[0].mxu0
        %v840 = vadd.f32 0.0, %v839
        %v841 = vpop.f32.mrb[0].mxu0
        %v842 = vadd.f32 0.0, %v841
        %843 = vmatprep.mubr.f32.mxu0 0.0
        %844 = vmatmul.mubr.f32.gmra.mrb[0].mxu0 %v663
        %v845 = vpop.f32.mrb[0].mxu0
        %v846 = vadd.f32 0.0, %v845
        %v847 = vpop.f32.mrb[0].mxu0
        %v848 = vadd.f32 0.0, %v847
        %849 = vmatprep.mubr.f32.mxu0 0.0
        %850 = vmatmul.mubr.f32.gmra.mrb[0].mxu0 %v666
        %v851 = vpop.f32.mrb[0].mxu0
        %v852 = vadd.f32 0.0, %v851
        %v853 = vpop.f32.mrb[0].mxu0
        %v854 = vadd.f32 0.0, %v853
        %855 = vmatprep.mubr.f32.mxu0 0.0
        %856 = vmatmul.mubr.f32.gmra.mrb[0].mxu0 %v669
        %v857 = vpop.f32.mrb[0].mxu0
        %v858 = vadd.f32 0.0, %v857
        %v859 = vpop.f32.mrb[0].mxu0
        %v860 = vadd.f32 0.0, %v859
        %861 = vmatprep.mubr.f32.mxu0 0.0
        %862 = vmatmul.mubr.f32.gmra.mrb[0].mxu0 %v672
        %v863 = vpop.f32.mrb[0].mxu0
        %v864 = vadd.f32 0.0, %v863
        %v865 = vpop.f32.mrb[0].mxu0
        %v866 = vadd.f32 0.0, %v865
        %867 = vmatprep.mubr.f32.mxu0 0.0
        %868 = vmatmul.mubr.f32.gmra.mrb[0].mxu0 %v675
        %v869 = vpop.f32.mrb[0].mxu0
        %v870 = vadd.f32 0.0, %v869
        %v871 = vpop.f32.mrb[0].mxu0
        %v872 = vadd.f32 0.0, %v871
        %873 = vmatprep.mubr.f32.mxu0 0.0
        %874 = vmatmul.mubr.f32.gmra.mrb[0].mxu0 %v678
        %v875 = vpop.f32.mrb[0].mxu0
        %v876 = vadd.f32 0.0, %v875
        %v877 = vpop.f32.mrb[0].mxu0
        %v878 = vadd.f32 0.0, %v877
        %879 = vmatprep.mubr.f32.mxu0 0.0
        %880 = vmatmul.mubr.f32.gmra.mrb[0].mxu0 %v681
        %v881 = vpop.f32.mrb[0].mxu0
        %v882 = vadd.f32 0.0, %v881
        %v883 = vpop.f32.mrb[0].mxu0
        %v884 = vadd.f32 0.0, %v883
        %885 = vmatprep.mubr.f32.mxu0 0.0
        %886 = vmatmul.mubr.f32.gmra.mrb[0].mxu0 %v684
        %v887 = vpop.f32.mrb[0].mxu0
        %v888 = vadd.f32 0.0, %v887
        %v889 = vpop.f32.mrb[0].mxu0
        %v890 = vadd.f32 0.0, %v889
        %891 = vmatprep.mubr.f32.mxu0 0.0
        %892 = vmatmul.mubr.f32.gmra.mrb[0].mxu0 %v687
        %v893 = vpop.f32.mrb[0].mxu0
        %v894 = vadd.f32 0.0, %v893
        %v895 = vpop.f32.mrb[0].mxu0
        %v896 = vadd.f32 0.0, %v895
        %897 = vmatprep.mubr.f32.mxu0 0.0
        %898 = vmatmul.mubr.f32.gmra.mrb[0].mxu0 %v690
        %v899 = vpop.f32.mrb[0].mxu0
        %v900 = vadd.f32 0.0, %v899
        %v901 = vpop.f32.mrb[0].mxu0
        %v902 = vadd.f32 0.0, %v901
        %903 = vmatprep.mubr.f32.mxu0 0.0
        %904 = vmatmul.mubr.f32.gmra.mrb[0].mxu0 %v693
        %v905 = vpop.f32.mrb[0].mxu0
        %v906 = vadd.f32 0.0, %v905
        %v907 = vpop.f32.mrb[0].mxu0
        %v908 = vadd.f32 0.0, %v907
        %909 = vmatprep.mubr.f32.mxu0 0.0
        %910 = vmatmul.mubr.f32.gmra.mrb[0].mxu0 %v696
        %v911 = vpop.f32.mrb[0].mxu0
        %v912 = vadd.f32 0.0, %v911
        %v913 = vpop.f32.mrb[0].mxu0
        %v914 = vadd.f32 0.0, %v913
        %915 = vmatprep.mubr.f32.mxu0 0.0
        %916 = vmatmul.mubr.f32.gmra.mrb[0].mxu0 %v699
        %v917 = vpop.f32.mrb[0].mxu0
        %v918 = vadd.f32 0.0, %v917
        %v919 = vpop.f32.mrb[0].mxu0
        %v920 = vadd.f32 0.0, %v919
        %921 = vmatprep.mubr.f32.mxu0 0.0
        %922 = vmatmul.mubr.f32.gmra.mrb[0].mxu0 %v702
        %v923 = vpop.f32.mrb[0].mxu0
        %v924 = vadd.f32 0.0, %v923
        %v925 = vpop.f32.mrb[0].mxu0
        %v926 = vadd.f32 0.0, %v925
        %927 = vmatprep.mubr.f32.mxu0 0.0
        %928 = vmatmul.mubr.f32.gmra.mrb[0].mxu0 %v705
        %v929 = vpop.f32.mrb[0].mxu0
        %v930 = vadd.f32 0.0, %v929
        %v931 = vpop.f32.mrb[0].mxu0
        %v932 = vadd.f32 0.0, %v931
        %933 = vmatprep.mubr.f32.mxu0 0.0
        %934 = vmatmul.mubr.f32.gmra.mrb[0].mxu0 %v708
        %v935 = vpop.f32.mrb[0].mxu0
        %v936 = vadd.f32 0.0, %v935
        %v937 = vpop.f32.mrb[0].mxu0
        %v938 = vadd.f32 0.0, %v937
        %939 = vmatprep.mubr.f32.mxu0 0.0
        %940 = vmatmul.mubr.f32.gmra.mrb[0].mxu0 %v711
        %v941 = vpop.f32.mrb[0].mxu0
        %v942 = vadd.f32 0.0, %v941
        %v943 = vpop.f32.mrb[0].mxu0
        %v944 = vadd.f32 0.0, %v943
        %945 = vmatprep.mubr.f32.mxu0 0.0
        %946 = vmatmul.mubr.f32.gmra.mrb[0].mxu0 %v714
        %v947 = vpop.f32.mrb[0].mxu0
        %v948 = vadd.f32 0.0, %v947
        %v949 = vpop.f32.mrb[0].mxu0
        %v950 = vadd.f32 0.0, %v949
        %951 = vmatprep.mubr.f32.mxu0 0.0
        %952 = vmatmul.mubr.f32.gmra.mrb[0].mxu0 %v717
        %v953 = vpop.f32.mrb[0].mxu0
        %v954 = vadd.f32 0.0, %v953
        %v955 = vpop.f32.mrb[0].mxu0
        %v956 = vadd.f32 0.0, %v955
        %957 = vmatprep.mubr.f32.mxu0 0.0
        %958 = vmatmul.mubr.f32.gmra.mrb[0].mxu0 %v720
        %v959 = vpop.f32.mrb[0].mxu0
        %v960 = vadd.f32 0.0, %v959
        %v961 = vpop.f32.mrb[0].mxu0
        %v962 = vadd.f32 0.0, %v961
        %963 = vmatprep.mubr.f32.mxu0 0.0
        %964 = vmatmul.mubr.f32.gmra.mrb[0].mxu0 %v723
        %v965 = vpop.f32.mrb[0].mxu0
        %v966 = vadd.f32 0.0, %v965
        %v967 = vpop.f32.mrb[0].mxu0
        %v968 = vadd.f32 0.0, %v967
        %969 = vmatprep.mubr.f32.mxu0 0.0
        %970 = vmatmul.mubr.f32.gmra.mrb[0].mxu0 %v726
        %v971 = vpop.f32.mrb[0].mxu0
        %v972 = vadd.f32 0.0, %v971
        %v973 = vpop.f32.mrb[0].mxu0
        %v974 = vadd.f32 0.0, %v973
        %975 = vmatprep.mubr.f32.mxu0 0.0
        %976 = vmatmul.mubr.f32.gmra.mrb[0].mxu0 %v729
        %v977 = vpop.f32.mrb[0].mxu0
        %v978 = vadd.f32 0.0, %v977
        %v979 = vpop.f32.mrb[0].mxu0
        %v980 = vadd.f32 0.0, %v979
        %981 = vmatprep.mubr.f32.mxu0 0.0
        %982 = vmatmul.mubr.f32.gmra.mrb[0].mxu0 %v732
        %v983 = vpop.f32.mrb[0].mxu0
        %v984 = vadd.f32 0.0, %v983
        %v985 = vpop.f32.mrb[0].mxu0
        %v986 = vadd.f32 0.0, %v985
        %987 = vmatprep.mubr.f32.mxu0 0.0
        %988 = vmatmul.mubr.f32.gmra.mrb[0].mxu0 %v735
        %v989 = vpop.f32.mrb[0].mxu0
        %v990 = vadd.f32 0.0, %v989
        %v991 = vpop.f32.mrb[0].mxu0
        %v992 = vadd.f32 0.0, %v991
        %993 = vdwg.mxu0
        %994 = vmatprep.subr.mxu0 %v639
        %995 = vmatpush1.msra.mxu0 %v638
        %996 = vmatprep.subr.mxu0 0.0
        %997 = vmatpush1.msra.mxu0 0.0
        %998 = vmatprep.subr.mxu0 0.0
        %999 = vmatpush1.msra.mxu0 0.0
        %1000 = vmatprep.subr.mxu0 0.0
        %1001 = vmatpush1.msra.mxu0 0.0
        %1002 = vmatprep.subr.mxu0 0.0
        %1003 = vmatpush1.msra.mxu0 0.0
        %1004 = vmatprep.subr.mxu0 0.0
        %1005 = vmatpush1.msra.mxu0 0.0
        %1006 = vmatprep.subr.mxu0 0.0
        %1007 = vmatpush1.msra.mxu0 0.0
        %1008 = vmatprep.subr.mxu0 0.0
        %1009 = vmatpush1.msra.mxu0 0.0
        %1010 = vmatprep.subr.mxu0 0.0
        %1011 = vmatpush1.msra.mxu0 0.0
        %1012 = vmatprep.subr.mxu0 0.0
        %1013 = vmatpush1.msra.mxu0 0.0
        %1014 = vmatprep.subr.mxu0 0.0
        %1015 = vmatpush1.msra.mxu0 0.0
        %1016 = vmatprep.subr.mxu0 0.0
        %1017 = vmatpush1.msra.mxu0 0.0
        %1018 = vmatprep.subr.mxu0 0.0
        %1019 = vmatpush1.msra.mxu0 0.0
        %1020 = vmatprep.subr.mxu0 0.0
        %1021 = vmatpush1.msra.mxu0 0.0
        %1022 = vmatprep.subr.mxu0 0.0
        %1023 = vmatpush1.msra.mxu0 0.0
        %1024 = vmatprep.subr.mxu0 0.0
        %1025 = vmatpush1.msra.mxu0 0.0
        %1026 = vmatprep.subr.mxu0 0.0
        %1027 = vmatpush1.msra.mxu0 0.0
        %1028 = vmatprep.subr.mxu0 0.0
        %1029 = vmatpush1.msra.mxu0 0.0
        %1030 = vmatprep.subr.mxu0 0.0
        %1031 = vmatpush1.msra.mxu0 0.0
        %1032 = vmatprep.subr.mxu0 0.0
        %1033 = vmatpush1.msra.mxu0 0.0
        %1034 = vmatprep.subr.mxu0 0.0
        %1035 = vmatpush1.msra.mxu0 0.0
        %1036 = vmatprep.subr.mxu0 0.0
        %1037 = vmatpush1.msra.mxu0 0.0
        %1038 = vmatprep.subr.mxu0 0.0
        %1039 = vmatpush1.msra.mxu0 0.0
        %1040 = vmatprep.subr.mxu0 0.0
        %1041 = vmatpush1.msra.mxu0 0.0
        %1042 = vmatprep.subr.mxu0 0.0
        %1043 = vmatpush1.msra.mxu0 0.0
        %1044 = vmatprep.subr.mxu0 0.0
        %1045 = vmatpush1.msra.mxu0 0.0
        %1046 = vmatprep.subr.mxu0 0.0
        %1047 = vmatpush1.msra.mxu0 0.0
        %1048 = vmatprep.subr.mxu0 0.0
        %1049 = vmatpush1.msra.mxu0 0.0
        %1050 = vmatprep.subr.mxu0 0.0
        %1051 = vmatpush1.msra.mxu0 0.0
        %1052 = vmatprep.subr.mxu0 0.0
        %1053 = vmatpush1.msra.mxu0 0.0
        %1054 = vmatprep.subr.mxu0 0.0
        %1055 = vmatpush1.msra.mxu0 0.0
        %1056 = vmatprep.subr.mxu0 0.0
        %1057 = vmatpush1.msra.mxu0 0.0
        %1058 = vmatprep.mubr.f32.mxu0 0.0
        %1059 = vmatmul.mubr.f32.gmra.mrb[0].mxu0 %v642
        %v1060 = vpop.f32.mrb[0].mxu0
        %v1061 = vadd.f32 0.0, %v1060
        %v1062 = vpop.f32.mrb[0].mxu0
        %v1063 = vadd.f32 0.0, %v1062
        %1064 = vmatprep.mubr.f32.mxu0 0.0
        %1065 = vmatmul.mubr.f32.gmra.mrb[0].mxu0 %v645
        %v1066 = vpop.f32.mrb[0].mxu0
        %v1067 = vadd.f32 0.0, %v1066
        %v1068 = vpop.f32.mrb[0].mxu0
        %v1069 = vadd.f32 0.0, %v1068
        %1070 = vmatprep.mubr.f32.mxu0 0.0
        %1071 = vmatmul.mubr.f32.gmra.mrb[0].mxu0 %v648
        %v1072 = vpop.f32.mrb[0].mxu0
        %v1073 = vadd.f32 0.0, %v1072
        %v1074 = vpop.f32.mrb[0].mxu0
        %v1075 = vadd.f32 0.0, %v1074
        %1076 = vmatprep.mubr.f32.mxu0 0.0
        %1077 = vmatmul.mubr.f32.gmra.mrb[0].mxu0 %v651
        %v1078 = vpop.f32.mrb[0].mxu0
        %v1079 = vadd.f32 0.0, %v1078
        %v1080 = vpop.f32.mrb[0].mxu0
        %v1081 = vadd.f32 0.0, %v1080
        %1082 = vmatprep.mubr.f32.mxu0 0.0
        %1083 = vmatmul.mubr.f32.gmra.mrb[0].mxu0 %v654
        %v1084 = vpop.f32.mrb[0].mxu0
        %v1085 = vadd.f32 0.0, %v1084
        %v1086 = vpop.f32.mrb[0].mxu0
        %v1087 = vadd.f32 0.0, %v1086
        %1088 = vmatprep.mubr.f32.mxu0 0.0
        %1089 = vmatmul.mubr.f32.gmra.mrb[0].mxu0 %v657
        %v1090 = vpop.f32.mrb[0].mxu0
        %v1091 = vadd.f32 0.0, %v1090
        %v1092 = vpop.f32.mrb[0].mxu0
        %v1093 = vadd.f32 0.0, %v1092
        %1094 = vmatprep.mubr.f32.mxu0 0.0
        %1095 = vmatmul.mubr.f32.gmra.mrb[0].mxu0 %v660
        %v1096 = vpop.f32.mrb[0].mxu0
        %v1097 = vadd.f32 0.0, %v1096
        %v1098 = vpop.f32.mrb[0].mxu0
        %v1099 = vadd.f32 0.0, %v1098
        %1100 = vmatprep.mubr.f32.mxu0 0.0
        %1101 = vmatmul.mubr.f32.gmra.mrb[0].mxu0 %v663
        %v1102 = vpop.f32.mrb[0].mxu0
        %v1103 = vadd.f32 0.0, %v1102
        %v1104 = vpop.f32.mrb[0].mxu0
        %v1105 = vadd.f32 0.0, %v1104
        %1106 = vmatprep.mubr.f32.mxu0 0.0
        %1107 = vmatmul.mubr.f32.gmra.mrb[0].mxu0 %v666
        %v1108 = vpop.f32.mrb[0].mxu0
        %v1109 = vadd.f32 0.0, %v1108
        %v1110 = vpop.f32.mrb[0].mxu0
        %v1111 = vadd.f32 0.0, %v1110
        %1112 = vmatprep.mubr.f32.mxu0 0.0
        %1113 = vmatmul.mubr.f32.gmra.mrb[0].mxu0 %v669
        %v1114 = vpop.f32.mrb[0].mxu0
        %v1115 = vadd.f32 0.0, %v1114
        %v1116 = vpop.f32.mrb[0].mxu0
        %v1117 = vadd.f32 0.0, %v1116
        %1118 = vmatprep.mubr.f32.mxu0 0.0
        %1119 = vmatmul.mubr.f32.gmra.mrb[0].mxu0 %v672
        %v1120 = vpop.f32.mrb[0].mxu0
        %v1121 = vadd.f32 0.0, %v1120
        %v1122 = vpop.f32.mrb[0].mxu0
        %v1123 = vadd.f32 0.0, %v1122
        %1124 = vmatprep.mubr.f32.mxu0 0.0
        %1125 = vmatmul.mubr.f32.gmra.mrb[0].mxu0 %v675
        %v1126 = vpop.f32.mrb[0].mxu0
        %v1127 = vadd.f32 0.0, %v1126
        %v1128 = vpop.f32.mrb[0].mxu0
        %v1129 = vadd.f32 0.0, %v1128
        %1130 = vmatprep.mubr.f32.mxu0 0.0
        %1131 = vmatmul.mubr.f32.gmra.mrb[0].mxu0 %v678
        %v1132 = vpop.f32.mrb[0].mxu0
        %v1133 = vadd.f32 0.0, %v1132
        %v1134 = vpop.f32.mrb[0].mxu0
        %v1135 = vadd.f32 0.0, %v1134
        %1136 = vmatprep.mubr.f32.mxu0 0.0
        %1137 = vmatmul.mubr.f32.gmra.mrb[0].mxu0 %v681
        %v1138 = vpop.f32.mrb[0].mxu0
        %v1139 = vadd.f32 0.0, %v1138
        %v1140 = vpop.f32.mrb[0].mxu0
        %v1141 = vadd.f32 0.0, %v1140
        %1142 = vmatprep.mubr.f32.mxu0 0.0
        %1143 = vmatmul.mubr.f32.gmra.mrb[0].mxu0 %v684
        %v1144 = vpop.f32.mrb[0].mxu0
        %v1145 = vadd.f32 0.0, %v1144
        %v1146 = vpop.f32.mrb[0].mxu0
        %v1147 = vadd.f32 0.0, %v1146
        %1148 = vmatprep.mubr.f32.mxu0 0.0
        %1149 = vmatmul.mubr.f32.gmra.mrb[0].mxu0 %v687
        %v1150 = vpop.f32.mrb[0].mxu0
        %v1151 = vadd.f32 0.0, %v1150
        %v1152 = vpop.f32.mrb[0].mxu0
        %v1153 = vadd.f32 0.0, %v1152
        %1154 = vmatprep.mubr.f32.mxu0 0.0
        %1155 = vmatmul.mubr.f32.gmra.mrb[0].mxu0 %v690
        %v1156 = vpop.f32.mrb[0].mxu0
        %v1157 = vadd.f32 0.0, %v1156
        %v1158 = vpop.f32.mrb[0].mxu0
        %v1159 = vadd.f32 0.0, %v1158
        %1160 = vmatprep.mubr.f32.mxu0 0.0
        %1161 = vmatmul.mubr.f32.gmra.mrb[0].mxu0 %v693
        %v1162 = vpop.f32.mrb[0].mxu0
        %v1163 = vadd.f32 0.0, %v1162
        %v1164 = vpop.f32.mrb[0].mxu0
        %v1165 = vadd.f32 0.0, %v1164
        %1166 = vmatprep.mubr.f32.mxu0 0.0
        %1167 = vmatmul.mubr.f32.gmra.mrb[0].mxu0 %v696
        %v1168 = vpop.f32.mrb[0].mxu0
        %v1169 = vadd.f32 0.0, %v1168
        %v1170 = vpop.f32.mrb[0].mxu0
        %v1171 = vadd.f32 0.0, %v1170
        %1172 = vmatprep.mubr.f32.mxu0 0.0
        %1173 = vmatmul.mubr.f32.gmra.mrb[0].mxu0 %v699
        %v1174 = vpop.f32.mrb[0].mxu0
        %v1175 = vadd.f32 0.0, %v1174
        %v1176 = vpop.f32.mrb[0].mxu0
        %v1177 = vadd.f32 0.0, %v1176
        %1178 = vmatprep.mubr.f32.mxu0 0.0
        %1179 = vmatmul.mubr.f32.gmra.mrb[0].mxu0 %v702
        %v1180 = vpop.f32.mrb[0].mxu0
        %v1181 = vadd.f32 0.0, %v1180
        %v1182 = vpop.f32.mrb[0].mxu0
        %v1183 = vadd.f32 0.0, %v1182
        %1184 = vmatprep.mubr.f32.mxu0 0.0
        %1185 = vmatmul.mubr.f32.gmra.mrb[0].mxu0 %v705
        %v1186 = vpop.f32.mrb[0].mxu0
        %v1187 = vadd.f32 0.0, %v1186
        %v1188 = vpop.f32.mrb[0].mxu0
        %v1189 = vadd.f32 0.0, %v1188
        %1190 = vmatprep.mubr.f32.mxu0 0.0
        %1191 = vmatmul.mubr.f32.gmra.mrb[0].mxu0 %v708
        %v1192 = vpop.f32.mrb[0].mxu0
        %v1193 = vadd.f32 0.0, %v1192
        %v1194 = vpop.f32.mrb[0].mxu0
        %v1195 = vadd.f32 0.0, %v1194
        %1196 = vmatprep.mubr.f32.mxu0 0.0
        %1197 = vmatmul.mubr.f32.gmra.mrb[0].mxu0 %v711
        %v1198 = vpop.f32.mrb[0].mxu0
        %v1199 = vadd.f32 0.0, %v1198
        %v1200 = vpop.f32.mrb[0].mxu0
        %v1201 = vadd.f32 0.0, %v1200
        %1202 = vmatprep.mubr.f32.mxu0 0.0
        %1203 = vmatmul.mubr.f32.gmra.mrb[0].mxu0 %v714
        %v1204 = vpop.f32.mrb[0].mxu0
        %v1205 = vadd.f32 0.0, %v1204
        %v1206 = vpop.f32.mrb[0].mxu0
        %v1207 = vadd.f32 0.0, %v1206
        %1208 = vmatprep.mubr.f32.mxu0 0.0
        %1209 = vmatmul.mubr.f32.gmra.mrb[0].mxu0 %v717
        %v1210 = vpop.f32.mrb[0].mxu0
        %v1211 = vadd.f32 0.0, %v1210
        %v1212 = vpop.f32.mrb[0].mxu0
        %v1213 = vadd.f32 0.0, %v1212
        %1214 = vmatprep.mubr.f32.mxu0 0.0
        %1215 = vmatmul.mubr.f32.gmra.mrb[0].mxu0 %v720
        %v1216 = vpop.f32.mrb[0].mxu0
        %v1217 = vadd.f32 0.0, %v1216
        %v1218 = vpop.f32.mrb[0].mxu0
        %v1219 = vadd.f32 0.0, %v1218
        %1220 = vmatprep.mubr.f32.mxu0 0.0
        %1221 = vmatmul.mubr.f32.gmra.mrb[0].mxu0 %v723
        %v1222 = vpop.f32.mrb[0].mxu0
        %v1223 = vadd.f32 0.0, %v1222
        %v1224 = vpop.f32.mrb[0].mxu0
        %v1225 = vadd.f32 0.0, %v1224
        %1226 = vmatprep.mubr.f32.mxu0 0.0
        %1227 = vmatmul.mubr.f32.gmra.mrb[0].mxu0 %v726
        %v1228 = vpop.f32.mrb[0].mxu0
        %v1229 = vadd.f32 0.0, %v1228
        %v1230 = vpop.f32.mrb[0].mxu0
        %v1231 = vadd.f32 0.0, %v1230
        %1232 = vmatprep.mubr.f32.mxu0 0.0
        %1233 = vmatmul.mubr.f32.gmra.mrb[0].mxu0 %v729
        %v1234 = vpop.f32.mrb[0].mxu0
        %v1235 = vadd.f32 0.0, %v1234
        %v1236 = vpop.f32.mrb[0].mxu0
        %v1237 = vadd.f32 0.0, %v1236
        %1238 = vmatprep.mubr.f32.mxu0 0.0
        %1239 = vmatmul.mubr.f32.gmra.mrb[0].mxu0 %v732
        %v1240 = vpop.f32.mrb[0].mxu0
        %v1241 = vadd.f32 0.0, %v1240
        %v1242 = vpop.f32.mrb[0].mxu0
        %v1243 = vadd.f32 0.0, %v1242
        %1244 = vmatprep.mubr.f32.mxu0 0.0
        %1245 = vmatmul.mubr.f32.gmra.mrb[0].mxu0 %v735
        %v1246 = vpop.f32.mrb[0].mxu0
        %v1247 = vadd.f32 0.0, %v1246
        %v1248 = vpop.f32.mrb[0].mxu0
        %v1249 = vadd.f32 0.0, %v1248
        %1250 = vdwg.mxu0
        %v1251 = vmax.f32 %v804, 0.0
        %v1252 = vmax.f32 %v806, 0.0
        %v1253 = vmax.f32 %v1061, 0.0
        %v1254 = vmax.f32 %v1063, 0.0
        %v1255 = vmax.f32 %v810, 0.0
        %v1256 = vmax.f32 %v812, 0.0
        %v1257 = vmax.f32 %v1067, 0.0
        %v1258 = vmax.f32 %v1069, 0.0
        %v1259 = vmax.f32 %v816, 0.0
        %v1260 = vmax.f32 %v818, 0.0
        %v1261 = vmax.f32 %v1073, 0.0
        %v1262 = vmax.f32 %v1075, 0.0
        %v1263 = vmax.f32 %v822, 0.0
        %v1264 = vmax.f32 %v824, 0.0
        %v1265 = vmax.f32 %v1079, 0.0
        %v1266 = vmax.f32 %v1081, 0.0
        %v1267 = vmax.f32 %v828, 0.0
        %v1268 = vmax.f32 %v830, 0.0
        %v1269 = vmax.f32 %v1085, 0.0
        %v1270 = vmax.f32 %v1087, 0.0
        %v1271 = vmax.f32 %v834, 0.0
        %v1272 = vmax.f32 %v836, 0.0
        %v1273 = vmax.f32 %v1091, 0.0
        %v1274 = vmax.f32 %v1093, 0.0
        %v1275 = vmax.f32 %v840, 0.0
        %v1276 = vmax.f32 %v842, 0.0
        %v1277 = vmax.f32 %v1097, 0.0
        %v1278 = vmax.f32 %v1099, 0.0
        %v1279 = vmax.f32 %v846, 0.0
        %v1280 = vmax.f32 %v848, 0.0
        %v1281 = vmax.f32 %v1103, 0.0
        %v1282 = vmax.f32 %v1105, 0.0
        %v1283 = vmax.f32 %v852, 0.0
        %v1284 = vmax.f32 %v854, 0.0
        %v1285 = vmax.f32 %v1109, 0.0
        %v1286 = vmax.f32 %v1111, 0.0
        %v1287 = vmax.f32 %v858, 0.0
        %v1288 = vmax.f32 %v860, 0.0
        %v1289 = vmax.f32 %v1115, 0.0
        %v1290 = vmax.f32 %v1117, 0.0
        %v1291 = vmax.f32 %v864, 0.0
        %v1292 = vmax.f32 %v866, 0.0
        %v1293 = vmax.f32 %v1121, 0.0
        %v1294 = vmax.f32 %v1123, 0.0
        %v1295 = vmax.f32 %v870, 0.0
        %v1296 = vmax.f32 %v872, 0.0
        %v1297 = vmax.f32 %v1127, 0.0
        %v1298 = vmax.f32 %v1129, 0.0
        %v1299 = vmax.f32 %v876, 0.0
        %v1300 = vmax.f32 %v878, 0.0
        %v1301 = vmax.f32 %v1133, 0.0
        %v1302 = vmax.f32 %v1135, 0.0
        %v1303 = vmax.f32 %v882, 0.0
        %v1304 = vmax.f32 %v884, 0.0
        %v1305 = vmax.f32 %v1139, 0.0
        %v1306 = vmax.f32 %v1141, 0.0
        %v1307 = vmax.f32 %v888, 0.0
        %v1308 = vmax.f32 %v890, 0.0
        %v1309 = vmax.f32 %v1145, 0.0
        %v1310 = vmax.f32 %v1147, 0.0
        %v1311 = vmax.f32 %v894, 0.0
        %v1312 = vmax.f32 %v896, 0.0
        %v1313 = vmax.f32 %v1151, 0.0
        %v1314 = vmax.f32 %v1153, 0.0
        %v1315 = vmax.f32 %v900, 0.0
        %v1316 = vmax.f32 %v902, 0.0
        %v1317 = vmax.f32 %v1157, 0.0
        %v1318 = vmax.f32 %v1159, 0.0
        %v1319 = vmax.f32 %v906, 0.0
        %v1320 = vmax.f32 %v908, 0.0
        %v1321 = vmax.f32 %v1163, 0.0
        %v1322 = vmax.f32 %v1165, 0.0
        %v1323 = vmax.f32 %v912, 0.0
        %v1324 = vmax.f32 %v914, 0.0
        %v1325 = vmax.f32 %v1169, 0.0
        %v1326 = vmax.f32 %v1171, 0.0
        %v1327 = vmax.f32 %v918, 0.0
        %v1328 = vmax.f32 %v920, 0.0
        %v1329 = vmax.f32 %v1175, 0.0
        %v1330 = vmax.f32 %v1177, 0.0
        %v1331 = vmax.f32 %v924, 0.0
        %v1332 = vmax.f32 %v926, 0.0
        %v1333 = vmax.f32 %v1181, 0.0
        %v1334 = vmax.f32 %v1183, 0.0
        %v1335 = vmax.f32 %v930, 0.0
        %v1336 = vmax.f32 %v932, 0.0
        %v1337 = vmax.f32 %v1187, 0.0
        %v1338 = vmax.f32 %v1189, 0.0
        %v1339 = vmax.f32 %v936, 0.0
        %v1340 = vmax.f32 %v938, 0.0
        %v1341 = vmax.f32 %v1193, 0.0
        %v1342 = vmax.f32 %v1195, 0.0
        %v1343 = vmax.f32 %v942, 0.0
        %v1344 = vmax.f32 %v944, 0.0
        %v1345 = vmax.f32 %v1199, 0.0
        %v1346 = vmax.f32 %v1201, 0.0
        %v1347 = vmax.f32 %v948, 0.0
        %v1348 = vmax.f32 %v950, 0.0
        %v1349 = vmax.f32 %v1205, 0.0
        %v1350 = vmax.f32 %v1207, 0.0
        %v1351 = vmax.f32 %v954, 0.0
        %v1352 = vmax.f32 %v956, 0.0
        %v1353 = vmax.f32 %v1211, 0.0
        %v1354 = vmax.f32 %v1213, 0.0
        %v1355 = vmax.f32 %v960, 0.0
        %v1356 = vmax.f32 %v962, 0.0
        %v1357 = vmax.f32 %v1217, 0.0
        %v1358 = vmax.f32 %v1219, 0.0
        %v1359 = vmax.f32 %v966, 0.0
        %v1360 = vmax.f32 %v968, 0.0
        %v1361 = vmax.f32 %v1223, 0.0
        %v1362 = vmax.f32 %v1225, 0.0
        %v1363 = vmax.f32 %v972, 0.0
        %v1364 = vmax.f32 %v974, 0.0
        %v1365 = vmax.f32 %v1229, 0.0
        %v1366 = vmax.f32 %v1231, 0.0
        %v1367 = vmax.f32 %v978, 0.0
        %v1368 = vmax.f32 %v980, 0.0
        %v1369 = vmax.f32 %v1235, 0.0
        %v1370 = vmax.f32 %v1237, 0.0
        %v1371 = vmax.f32 %v984, 0.0
        %v1372 = vmax.f32 %v986, 0.0
        %v1373 = vmax.f32 %v1241, 0.0
        %v1374 = vmax.f32 %v1243, 0.0
        %v1375 = vmax.f32 %v990, 0.0
        %v1376 = vmax.f32 %v992, 0.0
        %v1377 = vmax.f32 %v1247, 0.0
        %v1378 = vmax.f32 %v1249, 0.0
        %s1379 = smul.u32 %s22, 512
        %s1380 = smul.u32 %s23, 256
        %s1381 = sadd.s32 %s1379, 512
        %p1382 = scmp.lt.s32.totalorder %s1380, %s1381
        %s1383 = sadd.s32 %s1380, 256
        %p1384 = scmp.lt.s32.totalorder %s1379, %s1383
        %p1385 = pnand %p1382, %p1384
        %p1386 = pneg %p1385
        // Predicated region
        $region33: #{tpu_custom_call.1} parent=27 // pred_check
          _
        $region34: #{tpu_custom_call.1} parent=27 // pred_check_branch
          %1388 = sbr.rel (%p1385) target = $region36
        $region35: #{tpu_custom_call.1} parent=27 // pred_region
          %v1389 = vlaneseq
          %v1390 = vshrl.u32 %v1389, 7
          %v1391 = vadd.s32 %v1390, 8
          %v1392 = vadd.s32 %v1390, 16
          %v1393 = vadd.s32 %v1390, 24
          %v1394 = vadd.s32 %v1390, 32
          %v1395 = vadd.s32 %v1390, 40
          %v1396 = vadd.s32 %v1390, 48
          %v1397 = vadd.s32 %v1390, 56
          %v1398 = vadd.s32 %v1390, 64
          %v1399 = vadd.s32 %v1390, 72
          %v1400 = vadd.s32 %v1390, 80
          %v1401 = vadd.s32 %v1390, 88
          %v1402 = vadd.s32 %v1390, 96
          %v1403 = vadd.s32 %v1390, 104
          %v1404 = vadd.s32 %v1390, 112
          %v1405 = vadd.s32 %v1390, 120
          %v1406 = vadd.s32 %v1390, 128
          %v1407 = vadd.s32 %v1390, 136
          %v1408 = vadd.s32 %v1390, 144
          %v1409 = vadd.s32 %v1390, 152
          %v1410 = vadd.s32 %v1390, 160
          %v1411 = vadd.s32 %v1390, 168
          %v1412 = vadd.s32 %v1390, 176
          %v1413 = vadd.s32 %v1390, 184
          %v1414 = vadd.s32 %v1390, 192
          %v1415 = vadd.s32 %v1390, 200
          %v1416 = vadd.s32 %v1390, 208
          %v1417 = vadd.s32 %v1390, 216
          %v1418 = vadd.s32 %v1390, 224
          %v1419 = vadd.s32 %v1390, 232
          %v1420 = vadd.s32 %v1390, 240
          %v1421 = vadd.s32 %v1390, 248
          %v1422 = vlaneseq
          %v1423 = vand.u32 %v1422, 127
          %v1424 = vadd.s32 %v1423, 128
          %v1425 = vadd.s32 %v1423, 256
          %v1426 = vadd.s32 %v1423, 384
          %v1427 = vstv %s1380
          %v1428 = vadd.s32 %v1427, %v1390
          %v1429 = vadd.s32 %v1427, %v1391
          %v1430 = vadd.s32 %v1427, %v1392
          %v1431 = vadd.s32 %v1427, %v1393
          %v1432 = vadd.s32 %v1427, %v1394
          %v1433 = vadd.s32 %v1427, %v1395
          %v1434 = vadd.s32 %v1427, %v1396
          %v1435 = vadd.s32 %v1427, %v1397
          %v1436 = vadd.s32 %v1427, %v1398
          %v1437 = vadd.s32 %v1427, %v1399
          %v1438 = vadd.s32 %v1427, %v1400
          %v1439 = vadd.s32 %v1427, %v1401
          %v1440 = vadd.s32 %v1427, %v1402
          %v1441 = vadd.s32 %v1427, %v1403
          %v1442 = vadd.s32 %v1427, %v1404
          %v1443 = vadd.s32 %v1427, %v1405
          %v1444 = vadd.s32 %v1427, %v1406
          %v1445 = vadd.s32 %v1427, %v1407
          %v1446 = vadd.s32 %v1427, %v1408
          %v1447 = vadd.s32 %v1427, %v1409
          %v1448 = vadd.s32 %v1427, %v1410
          %v1449 = vadd.s32 %v1427, %v1411
          %v1450 = vadd.s32 %v1427, %v1412
          %v1451 = vadd.s32 %v1427, %v1413
          %v1452 = vadd.s32 %v1427, %v1414
          %v1453 = vadd.s32 %v1427, %v1415
          %v1454 = vadd.s32 %v1427, %v1416
          %v1455 = vadd.s32 %v1427, %v1417
          %v1456 = vadd.s32 %v1427, %v1418
          %v1457 = vadd.s32 %v1427, %v1419
          %v1458 = vadd.s32 %v1427, %v1420
          %v1459 = vadd.s32 %v1427, %v1421
          %v1460 = vstv %s1379
          %v1461 = vadd.s32 %v1460, %v1423
          %v1462 = vadd.s32 %v1460, %v1424
          %v1463 = vadd.s32 %v1460, %v1425
          %v1464 = vadd.s32 %v1460, %v1426
          %vm1465 = vcmp.eq.s32.totalorder %v1428, %v1461
          %vm1466 = vcmp.eq.s32.totalorder %v1428, %v1462
          %vm1467 = vcmp.eq.s32.totalorder %v1428, %v1463
          %vm1468 = vcmp.eq.s32.totalorder %v1428, %v1464
          %vm1469 = vcmp.eq.s32.totalorder %v1429, %v1461
          %vm1470 = vcmp.eq.s32.totalorder %v1429, %v1462
          %vm1471 = vcmp.eq.s32.totalorder %v1429, %v1463
          %vm1472 = vcmp.eq.s32.totalorder %v1429, %v1464
          %vm1473 = vcmp.eq.s32.totalorder %v1430, %v1461
          %vm1474 = vcmp.eq.s32.totalorder %v1430, %v1462
          %vm1475 = vcmp.eq.s32.totalorder %v1430, %v1463
          %vm1476 = vcmp.eq.s32.totalorder %v1430, %v1464
          %vm1477 = vcmp.eq.s32.totalorder %v1431, %v1461
          %vm1478 = vcmp.eq.s32.totalorder %v1431, %v1462
          %vm1479 = vcmp.eq.s32.totalorder %v1431, %v1463
          %vm1480 = vcmp.eq.s32.totalorder %v1431, %v1464
          %vm1481 = vcmp.eq.s32.totalorder %v1432, %v1461
          %vm1482 = vcmp.eq.s32.totalorder %v1432, %v1462
          %vm1483 = vcmp.eq.s32.totalorder %v1432, %v1463
          %vm1484 = vcmp.eq.s32.totalorder %v1432, %v1464
          %vm1485 = vcmp.eq.s32.totalorder %v1433, %v1461
          %vm1486 = vcmp.eq.s32.totalorder %v1433, %v1462
          %vm1487 = vcmp.eq.s32.totalorder %v1433, %v1463
          %vm1488 = vcmp.eq.s32.totalorder %v1433, %v1464
          %vm1489 = vcmp.eq.s32.totalorder %v1434, %v1461
          %vm1490 = vcmp.eq.s32.totalorder %v1434, %v1462
          %vm1491 = vcmp.eq.s32.totalorder %v1434, %v1463
          %vm1492 = vcmp.eq.s32.totalorder %v1434, %v1464
          %vm1493 = vcmp.eq.s32.totalorder %v1435, %v1461
          %vm1494 = vcmp.eq.s32.totalorder %v1435, %v1462
          %vm1495 = vcmp.eq.s32.totalorder %v1435, %v1463
          %vm1496 = vcmp.eq.s32.totalorder %v1435, %v1464
          %vm1497 = vcmp.eq.s32.totalorder %v1436, %v1461
          %vm1498 = vcmp.eq.s32.totalorder %v1436, %v1462
          %vm1499 = vcmp.eq.s32.totalorder %v1436, %v1463
          %vm1500 = vcmp.eq.s32.totalorder %v1436, %v1464
          %vm1501 = vcmp.eq.s32.totalorder %v1437, %v1461
          %vm1502 = vcmp.eq.s32.totalorder %v1437, %v1462
          %vm1503 = vcmp.eq.s32.totalorder %v1437, %v1463
          %vm1504 = vcmp.eq.s32.totalorder %v1437, %v1464
          %vm1505 = vcmp.eq.s32.totalorder %v1438, %v1461
          %vm1506 = vcmp.eq.s32.totalorder %v1438, %v1462
          %vm1507 = vcmp.eq.s32.totalorder %v1438, %v1463
          %vm1508 = vcmp.eq.s32.totalorder %v1438, %v1464
          %vm1509 = vcmp.eq.s32.totalorder %v1439, %v1461
          %vm1510 = vcmp.eq.s32.totalorder %v1439, %v1462
          %vm1511 = vcmp.eq.s32.totalorder %v1439, %v1463
          %vm1512 = vcmp.eq.s32.totalorder %v1439, %v1464
          %vm1513 = vcmp.eq.s32.totalorder %v1440, %v1461
          %vm1514 = vcmp.eq.s32.totalorder %v1440, %v1462
          %vm1515 = vcmp.eq.s32.totalorder %v1440, %v1463
          %vm1516 = vcmp.eq.s32.totalorder %v1440, %v1464
          %vm1517 = vcmp.eq.s32.totalorder %v1441, %v1461
          %vm1518 = vcmp.eq.s32.totalorder %v1441, %v1462
          %vm1519 = vcmp.eq.s32.totalorder %v1441, %v1463
          %vm1520 = vcmp.eq.s32.totalorder %v1441, %v1464
          %vm1521 = vcmp.eq.s32.totalorder %v1442, %v1461
          %vm1522 = vcmp.eq.s32.totalorder %v1442, %v1462
          %vm1523 = vcmp.eq.s32.totalorder %v1442, %v1463
          %vm1524 = vcmp.eq.s32.totalorder %v1442, %v1464
          %vm1525 = vcmp.eq.s32.totalorder %v1443, %v1461
          %vm1526 = vcmp.eq.s32.totalorder %v1443, %v1462
          %vm1527 = vcmp.eq.s32.totalorder %v1443, %v1463
          %vm1528 = vcmp.eq.s32.totalorder %v1443, %v1464
          %vm1529 = vcmp.eq.s32.totalorder %v1444, %v1461
          %vm1530 = vcmp.eq.s32.totalorder %v1444, %v1462
          %vm1531 = vcmp.eq.s32.totalorder %v1444, %v1463
          %vm1532 = vcmp.eq.s32.totalorder %v1444, %v1464
          %vm1533 = vcmp.eq.s32.totalorder %v1445, %v1461
          %vm1534 = vcmp.eq.s32.totalorder %v1445, %v1462
          %vm1535 = vcmp.eq.s32.totalorder %v1445, %v1463
          %vm1536 = vcmp.eq.s32.totalorder %v1445, %v1464
          %vm1537 = vcmp.eq.s32.totalorder %v1446, %v1461
          %vm1538 = vcmp.eq.s32.totalorder %v1446, %v1462
          %vm1539 = vcmp.eq.s32.totalorder %v1446, %v1463
          %vm1540 = vcmp.eq.s32.totalorder %v1446, %v1464
          %vm1541 = vcmp.eq.s32.totalorder %v1447, %v1461
          %vm1542 = vcmp.eq.s32.totalorder %v1447, %v1462
          %vm1543 = vcmp.eq.s32.totalorder %v1447, %v1463
          %vm1544 = vcmp.eq.s32.totalorder %v1447, %v1464
          %vm1545 = vcmp.eq.s32.totalorder %v1448, %v1461
          %vm1546 = vcmp.eq.s32.totalorder %v1448, %v1462
          %vm1547 = vcmp.eq.s32.totalorder %v1448, %v1463
          %vm1548 = vcmp.eq.s32.totalorder %v1448, %v1464
          %vm1549 = vcmp.eq.s32.totalorder %v1449, %v1461
          %vm1550 = vcmp.eq.s32.totalorder %v1449, %v1462
          %vm1551 = vcmp.eq.s32.totalorder %v1449, %v1463
          %vm1552 = vcmp.eq.s32.totalorder %v1449, %v1464
          %vm1553 = vcmp.eq.s32.totalorder %v1450, %v1461
          %vm1554 = vcmp.eq.s32.totalorder %v1450, %v1462
          %vm1555 = vcmp.eq.s32.totalorder %v1450, %v1463
          %vm1556 = vcmp.eq.s32.totalorder %v1450, %v1464
          %vm1557 = vcmp.eq.s32.totalorder %v1451, %v1461
          %vm1558 = vcmp.eq.s32.totalorder %v1451, %v1462
          %vm1559 = vcmp.eq.s32.totalorder %v1451, %v1463
          %vm1560 = vcmp.eq.s32.totalorder %v1451, %v1464
          %vm1561 = vcmp.eq.s32.totalorder %v1452, %v1461
          %vm1562 = vcmp.eq.s32.totalorder %v1452, %v1462
          %vm1563 = vcmp.eq.s32.totalorder %v1452, %v1463
          %vm1564 = vcmp.eq.s32.totalorder %v1452, %v1464
          %vm1565 = vcmp.eq.s32.totalorder %v1453, %v1461
          %vm1566 = vcmp.eq.s32.totalorder %v1453, %v1462
          %vm1567 = vcmp.eq.s32.totalorder %v1453, %v1463
          %vm1568 = vcmp.eq.s32.totalorder %v1453, %v1464
          %vm1569 = vcmp.eq.s32.totalorder %v1454, %v1461
          %vm1570 = vcmp.eq.s32.totalorder %v1454, %v1462
          %vm1571 = vcmp.eq.s32.totalorder %v1454, %v1463
          %vm1572 = vcmp.eq.s32.totalorder %v1454, %v1464
          %vm1573 = vcmp.eq.s32.totalorder %v1455, %v1461
          %vm1574 = vcmp.eq.s32.totalorder %v1455, %v1462
          %vm1575 = vcmp.eq.s32.totalorder %v1455, %v1463
          %vm1576 = vcmp.eq.s32.totalorder %v1455, %v1464
          %vm1577 = vcmp.eq.s32.totalorder %v1456, %v1461
          %vm1578 = vcmp.eq.s32.totalorder %v1456, %v1462
          %vm1579 = vcmp.eq.s32.totalorder %v1456, %v1463
          %vm1580 = vcmp.eq.s32.totalorder %v1456, %v1464
          %vm1581 = vcmp.eq.s32.totalorder %v1457, %v1461
          %vm1582 = vcmp.eq.s32.totalorder %v1457, %v1462
          %vm1583 = vcmp.eq.s32.totalorder %v1457, %v1463
          %vm1584 = vcmp.eq.s32.totalorder %v1457, %v1464
          %vm1585 = vcmp.eq.s32.totalorder %v1458, %v1461
          %vm1586 = vcmp.eq.s32.totalorder %v1458, %v1462
          %vm1587 = vcmp.eq.s32.totalorder %v1458, %v1463
          %vm1588 = vcmp.eq.s32.totalorder %v1458, %v1464
          %vm1589 = vcmp.eq.s32.totalorder %v1459, %v1461
          %vm1590 = vcmp.eq.s32.totalorder %v1459, %v1462
          %vm1591 = vcmp.eq.s32.totalorder %v1459, %v1463
          %vm1592 = vcmp.eq.s32.totalorder %v1459, %v1464
          %v1593 = vsel %vm1465, 1e+30, %v1251
          %v1594 = vsel %vm1466, 1e+30, %v1252
          %v1595 = vsel %vm1467, 1e+30, %v1253
          %v1596 = vsel %vm1468, 1e+30, %v1254
          %v1597 = vsel %vm1469, 1e+30, %v1255
          %v1598 = vsel %vm1470, 1e+30, %v1256
          %v1599 = vsel %vm1471, 1e+30, %v1257
          %v1600 = vsel %vm1472, 1e+30, %v1258
          %v1601 = vsel %vm1473, 1e+30, %v1259
          %v1602 = vsel %vm1474, 1e+30, %v1260
          %v1603 = vsel %vm1475, 1e+30, %v1261
          %v1604 = vsel %vm1476, 1e+30, %v1262
          %v1605 = vsel %vm1477, 1e+30, %v1263
          %v1606 = vsel %vm1478, 1e+30, %v1264
          %v1607 = vsel %vm1479, 1e+30, %v1265
          %v1608 = vsel %vm1480, 1e+30, %v1266
          %v1609 = vsel %vm1481, 1e+30, %v1267
          %v1610 = vsel %vm1482, 1e+30, %v1268
          %v1611 = vsel %vm1483, 1e+30, %v1269
          %v1612 = vsel %vm1484, 1e+30, %v1270
          %v1613 = vsel %vm1485, 1e+30, %v1271
          %v1614 = vsel %vm1486, 1e+30, %v1272
          %v1615 = vsel %vm1487, 1e+30, %v1273
          %v1616 = vsel %vm1488, 1e+30, %v1274
          %v1617 = vsel %vm1489, 1e+30, %v1275
          %v1618 = vsel %vm1490, 1e+30, %v1276
          %v1619 = vsel %vm1491, 1e+30, %v1277
          %v1620 = vsel %vm1492, 1e+30, %v1278
          %v1621 = vsel %vm1493, 1e+30, %v1279
          %v1622 = vsel %vm1494, 1e+30, %v1280
          %v1623 = vsel %vm1495, 1e+30, %v1281
          %v1624 = vsel %vm1496, 1e+30, %v1282
          %v1625 = vsel %vm1497, 1e+30, %v1283
          %v1626 = vsel %vm1498, 1e+30, %v1284
          %v1627 = vsel %vm1499, 1e+30, %v1285
          %v1628 = vsel %vm1500, 1e+30, %v1286
          %v1629 = vsel %vm1501, 1e+30, %v1287
          %v1630 = vsel %vm1502, 1e+30, %v1288
          %v1631 = vsel %vm1503, 1e+30, %v1289
          %v1632 = vsel %vm1504, 1e+30, %v1290
          %v1633 = vsel %vm1505, 1e+30, %v1291
          %v1634 = vsel %vm1506, 1e+30, %v1292
          %v1635 = vsel %vm1507, 1e+30, %v1293
          %v1636 = vsel %vm1508, 1e+30, %v1294
          %v1637 = vsel %vm1509, 1e+30, %v1295
          %v1638 = vsel %vm1510, 1e+30, %v1296
          %v1639 = vsel %vm1511, 1e+30, %v1297
          %v1640 = vsel %vm1512, 1e+30, %v1298
          %v1641 = vsel %vm1513, 1e+30, %v1299
          %v1642 = vsel %vm1514, 1e+30, %v1300
          %v1643 = vsel %vm1515, 1e+30, %v1301
          %v1644 = vsel %vm1516, 1e+30, %v1302
          %v1645 = vsel %vm1517, 1e+30, %v1303
          %v1646 = vsel %vm1518, 1e+30, %v1304
          %v1647 = vsel %vm1519, 1e+30, %v1305
          %v1648 = vsel %vm1520, 1e+30, %v1306
          %v1649 = vsel %vm1521, 1e+30, %v1307
          %v1650 = vsel %vm1522, 1e+30, %v1308
          %v1651 = vsel %vm1523, 1e+30, %v1309
          %v1652 = vsel %vm1524, 1e+30, %v1310
          %v1653 = vsel %vm1525, 1e+30, %v1311
          %v1654 = vsel %vm1526, 1e+30, %v1312
          %v1655 = vsel %vm1527, 1e+30, %v1313
          %v1656 = vsel %vm1528, 1e+30, %v1314
          %v1657 = vsel %vm1529, 1e+30, %v1315
          %v1658 = vsel %vm1530, 1e+30, %v1316
          %v1659 = vsel %vm1531, 1e+30, %v1317
          %v1660 = vsel %vm1532, 1e+30, %v1318
          %v1661 = vsel %vm1533, 1e+30, %v1319
          %v1662 = vsel %vm1534, 1e+30, %v1320
          %v1663 = vsel %vm1535, 1e+30, %v1321
          %v1664 = vsel %vm1536, 1e+30, %v1322
          %v1665 = vsel %vm1537, 1e+30, %v1323
          %v1666 = vsel %vm1538, 1e+30, %v1324
          %v1667 = vsel %vm1539, 1e+30, %v1325
          %v1668 = vsel %vm1540, 1e+30, %v1326
          %v1669 = vsel %vm1541, 1e+30, %v1327
          %v1670 = vsel %vm1542, 1e+30, %v1328
          %v1671 = vsel %vm1543, 1e+30, %v1329
          %v1672 = vsel %vm1544, 1e+30, %v1330
          %v1673 = vsel %vm1545, 1e+30, %v1331
          %v1674 = vsel %vm1546, 1e+30, %v1332
          %v1675 = vsel %vm1547, 1e+30, %v1333
          %v1676 = vsel %vm1548, 1e+30, %v1334
          %v1677 = vsel %vm1549, 1e+30, %v1335
          %v1678 = vsel %vm1550, 1e+30, %v1336
          %v1679 = vsel %vm1551, 1e+30, %v1337
          %v1680 = vsel %vm1552, 1e+30, %v1338
          %v1681 = vsel %vm1553, 1e+30, %v1339
          %v1682 = vsel %vm1554, 1e+30, %v1340
          %v1683 = vsel %vm1555, 1e+30, %v1341
          %v1684 = vsel %vm1556, 1e+30, %v1342
          %v1685 = vsel %vm1557, 1e+30, %v1343
          %v1686 = vsel %vm1558, 1e+30, %v1344
          %v1687 = vsel %vm1559, 1e+30, %v1345
          %v1688 = vsel %vm1560, 1e+30, %v1346
          %v1689 = vsel %vm1561, 1e+30, %v1347
          %v1690 = vsel %vm1562, 1e+30, %v1348
          %v1691 = vsel %vm1563, 1e+30, %v1349
          %v1692 = vsel %vm1564, 1e+30, %v1350
          %v1693 = vsel %vm1565, 1e+30, %v1351
          %v1694 = vsel %vm1566, 1e+30, %v1352
          %v1695 = vsel %vm1567, 1e+30, %v1353
          %v1696 = vsel %vm1568, 1e+30, %v1354
          %v1697 = vsel %vm1569, 1e+30, %v1355
          %v1698 = vsel %vm1570, 1e+30, %v1356
          %v1699 = vsel %vm1571, 1e+30, %v1357
          %v1700 = vsel %vm1572, 1e+30, %v1358
          %v1701 = vsel %vm1573, 1e+30, %v1359
          %v1702 = vsel %vm1574, 1e+30, %v1360
          %v1703 = vsel %vm1575, 1e+30, %v1361
          %v1704 = vsel %vm1576, 1e+30, %v1362
          %v1705 = vsel %vm1577, 1e+30, %v1363
          %v1706 = vsel %vm1578, 1e+30, %v1364
          %v1707 = vsel %vm1579, 1e+30, %v1365
          %v1708 = vsel %vm1580, 1e+30, %v1366
          %v1709 = vsel %vm1581, 1e+30, %v1367
          %v1710 = vsel %vm1582, 1e+30, %v1368
          %v1711 = vsel %vm1583, 1e+30, %v1369
          %v1712 = vsel %vm1584, 1e+30, %v1370
          %v1713 = vsel %vm1585, 1e+30, %v1371
          %v1714 = vsel %vm1586, 1e+30, %v1372
          %v1715 = vsel %vm1587, 1e+30, %v1373
          %v1716 = vsel %vm1588, 1e+30, %v1374
          %v1717 = vsel %vm1589, 1e+30, %v1375
          %v1718 = vsel %vm1590, 1e+30, %v1376
          %v1719 = vsel %vm1591, 1e+30, %v1377
          %v1720 = vsel %vm1592, 1e+30, %v1378
          %v1721 = vld [vmem:[#allocation2] sm:$0xff]
          %v1722 = vld [vmem:[#allocation2 + $0x8] sm:$0xff]
          %v1723 = vld [vmem:[#allocation2 + $0x10] sm:$0xff]
          %v1724 = vld [vmem:[#allocation2 + $0x18] sm:$0xff]
          %v1725 = vld [vmem:[#allocation2 + $0x20] sm:$0xff]
          %v1726 = vld [vmem:[#allocation2 + $0x28] sm:$0xff]
          %v1727 = vld [vmem:[#allocation2 + $0x30] sm:$0xff]
          %v1728 = vld [vmem:[#allocation2 + $0x38] sm:$0xff]
          %v1729 = vld [vmem:[#allocation2 + $0x40] sm:$0xff]
          %v1730 = vld [vmem:[#allocation2 + $0x48] sm:$0xff]
          %v1731 = vld [vmem:[#allocation2 + $0x50] sm:$0xff]
          %v1732 = vld [vmem:[#allocation2 + $0x58] sm:$0xff]
          %v1733 = vld [vmem:[#allocation2 + $0x60] sm:$0xff]
          %v1734 = vld [vmem:[#allocation2 + $0x68] sm:$0xff]
          %v1735 = vld [vmem:[#allocation2 + $0x70] sm:$0xff]
          %v1736 = vld [vmem:[#allocation2 + $0x78] sm:$0xff]
          %v1737 = vld [vmem:[#allocation2 + $0x80] sm:$0xff]
          %v1738 = vld [vmem:[#allocation2 + $0x88] sm:$0xff]
          %v1739 = vld [vmem:[#allocation2 + $0x90] sm:$0xff]
          %v1740 = vld [vmem:[#allocation2 + $0x98] sm:$0xff]
          %v1741 = vld [vmem:[#allocation2 + $0xa0] sm:$0xff]
          %v1742 = vld [vmem:[#allocation2 + $0xa8] sm:$0xff]
          %v1743 = vld [vmem:[#allocation2 + $0xb0] sm:$0xff]
          %v1744 = vld [vmem:[#allocation2 + $0xb8] sm:$0xff]
          %v1745 = vld [vmem:[#allocation2 + $0xc0] sm:$0xff]
          %v1746 = vld [vmem:[#allocation2 + $0xc8] sm:$0xff]
          %v1747 = vld [vmem:[#allocation2 + $0xd0] sm:$0xff]
          %v1748 = vld [vmem:[#allocation2 + $0xd8] sm:$0xff]
          %v1749 = vld [vmem:[#allocation2 + $0xe0] sm:$0xff]
          %v1750 = vld [vmem:[#allocation2 + $0xe8] sm:$0xff]
          %v1751 = vld [vmem:[#allocation2 + $0xf0] sm:$0xff]
          %v1752 = vld [vmem:[#allocation2 + $0xf8] sm:$0xff]
          %v1753 = vld [vmem:[#allocation2 + $0x100] sm:$0xff]
          %v1754 = vld [vmem:[#allocation2 + $0x108] sm:$0xff]
          %v1755 = vld [vmem:[#allocation2 + $0x110] sm:$0xff]
          %v1756 = vld [vmem:[#allocation2 + $0x118] sm:$0xff]
          %v1757 = vld [vmem:[#allocation2 + $0x120] sm:$0xff]
          %v1758 = vld [vmem:[#allocation2 + $0x128] sm:$0xff]
          %v1759 = vld [vmem:[#allocation2 + $0x130] sm:$0xff]
          %v1760 = vld [vmem:[#allocation2 + $0x138] sm:$0xff]
          %v1761 = vld [vmem:[#allocation2 + $0x140] sm:$0xff]
          %v1762 = vld [vmem:[#allocation2 + $0x148] sm:$0xff]
          %v1763 = vld [vmem:[#allocation2 + $0x150] sm:$0xff]
          %v1764 = vld [vmem:[#allocation2 + $0x158] sm:$0xff]
          %v1765 = vld [vmem:[#allocation2 + $0x160] sm:$0xff]
          %v1766 = vld [vmem:[#allocation2 + $0x168] sm:$0xff]
          %v1767 = vld [vmem:[#allocation2 + $0x170] sm:$0xff]
          %v1768 = vld [vmem:[#allocation2 + $0x178] sm:$0xff]
          %v1769 = vld [vmem:[#allocation2 + $0x180] sm:$0xff]
          %v1770 = vld [vmem:[#allocation2 + $0x188] sm:$0xff]
          %v1771 = vld [vmem:[#allocation2 + $0x190] sm:$0xff]
          %v1772 = vld [vmem:[#allocation2 + $0x198] sm:$0xff]
          %v1773 = vld [vmem:[#allocation2 + $0x1a0] sm:$0xff]
          %v1774 = vld [vmem:[#allocation2 + $0x1a8] sm:$0xff]
          %v1775 = vld [vmem:[#allocation2 + $0x1b0] sm:$0xff]
          %v1776 = vld [vmem:[#allocation2 + $0x1b8] sm:$0xff]
          %v1777 = vld [vmem:[#allocation2 + $0x1c0] sm:$0xff]
          %v1778 = vld [vmem:[#allocation2 + $0x1c8] sm:$0xff]
          %v1779 = vld [vmem:[#allocation2 + $0x1d0] sm:$0xff]
          %v1780 = vld [vmem:[#allocation2 + $0x1d8] sm:$0xff]
          %v1781 = vld [vmem:[#allocation2 + $0x1e0] sm:$0xff]
          %v1782 = vld [vmem:[#allocation2 + $0x1e8] sm:$0xff]
          %v1783 = vld [vmem:[#allocation2 + $0x1f0] sm:$0xff]
          %v1784 = vld [vmem:[#allocation2 + $0x1f8] sm:$0xff]
          %v1785 = vld [vmem:[#allocation2 + $0x200] sm:$0xff]
          %v1786 = vld [vmem:[#allocation2 + $0x208] sm:$0xff]
          %v1787 = vld [vmem:[#allocation2 + $0x210] sm:$0xff]
          %v1788 = vld [vmem:[#allocation2 + $0x218] sm:$0xff]
          %v1789 = vld [vmem:[#allocation2 + $0x220] sm:$0xff]
          %v1790 = vld [vmem:[#allocation2 + $0x228] sm:$0xff]
          %v1791 = vld [vmem:[#allocation2 + $0x230] sm:$0xff]
          %v1792 = vld [vmem:[#allocation2 + $0x238] sm:$0xff]
          %v1793 = vld [vmem:[#allocation2 + $0x240] sm:$0xff]
          %v1794 = vld [vmem:[#allocation2 + $0x248] sm:$0xff]
          %v1795 = vld [vmem:[#allocation2 + $0x250] sm:$0xff]
          %v1796 = vld [vmem:[#allocation2 + $0x258] sm:$0xff]
          %v1797 = vld [vmem:[#allocation2 + $0x260] sm:$0xff]
          %v1798 = vld [vmem:[#allocation2 + $0x268] sm:$0xff]
          %v1799 = vld [vmem:[#allocation2 + $0x270] sm:$0xff]
          %v1800 = vld [vmem:[#allocation2 + $0x278] sm:$0xff]
          %v1801 = vld [vmem:[#allocation2 + $0x280] sm:$0xff]
          %v1802 = vld [vmem:[#allocation2 + $0x288] sm:$0xff]
          %v1803 = vld [vmem:[#allocation2 + $0x290] sm:$0xff]
          %v1804 = vld [vmem:[#allocation2 + $0x298] sm:$0xff]
          %v1805 = vld [vmem:[#allocation2 + $0x2a0] sm:$0xff]
          %v1806 = vld [vmem:[#allocation2 + $0x2a8] sm:$0xff]
          %v1807 = vld [vmem:[#allocation2 + $0x2b0] sm:$0xff]
          %v1808 = vld [vmem:[#allocation2 + $0x2b8] sm:$0xff]
          %v1809 = vld [vmem:[#allocation2 + $0x2c0] sm:$0xff]
          %v1810 = vld [vmem:[#allocation2 + $0x2c8] sm:$0xff]
          %v1811 = vld [vmem:[#allocation2 + $0x2d0] sm:$0xff]
          %v1812 = vld [vmem:[#allocation2 + $0x2d8] sm:$0xff]
          %v1813 = vld [vmem:[#allocation2 + $0x2e0] sm:$0xff]
          %v1814 = vld [vmem:[#allocation2 + $0x2e8] sm:$0xff]
          %v1815 = vld [vmem:[#allocation2 + $0x2f0] sm:$0xff]
          %v1816 = vld [vmem:[#allocation2 + $0x2f8] sm:$0xff]
          %v1817 = vld [vmem:[#allocation2 + $0x300] sm:$0xff]
          %v1818 = vld [vmem:[#allocation2 + $0x308] sm:$0xff]
          %v1819 = vld [vmem:[#allocation2 + $0x310] sm:$0xff]
          %v1820 = vld [vmem:[#allocation2 + $0x318] sm:$0xff]
          %v1821 = vld [vmem:[#allocation2 + $0x320] sm:$0xff]
          %v1822 = vld [vmem:[#allocation2 + $0x328] sm:$0xff]
          %v1823 = vld [vmem:[#allocation2 + $0x330] sm:$0xff]
          %v1824 = vld [vmem:[#allocation2 + $0x338] sm:$0xff]
          %v1825 = vld [vmem:[#allocation2 + $0x340] sm:$0xff]
          %v1826 = vld [vmem:[#allocation2 + $0x348] sm:$0xff]
          %v1827 = vld [vmem:[#allocation2 + $0x350] sm:$0xff]
          %v1828 = vld [vmem:[#allocation2 + $0x358] sm:$0xff]
          %v1829 = vld [vmem:[#allocation2 + $0x360] sm:$0xff]
          %v1830 = vld [vmem:[#allocation2 + $0x368] sm:$0xff]
          %v1831 = vld [vmem:[#allocation2 + $0x370] sm:$0xff]
          %v1832 = vld [vmem:[#allocation2 + $0x378] sm:$0xff]
          %v1833 = vld [vmem:[#allocation2 + $0x380] sm:$0xff]
          %v1834 = vld [vmem:[#allocation2 + $0x388] sm:$0xff]
          %v1835 = vld [vmem:[#allocation2 + $0x390] sm:$0xff]
          %v1836 = vld [vmem:[#allocation2 + $0x398] sm:$0xff]
          %v1837 = vld [vmem:[#allocation2 + $0x3a0] sm:$0xff]
          %v1838 = vld [vmem:[#allocation2 + $0x3a8] sm:$0xff]
          %v1839 = vld [vmem:[#allocation2 + $0x3b0] sm:$0xff]
          %v1840 = vld [vmem:[#allocation2 + $0x3b8] sm:$0xff]
          %v1841 = vld [vmem:[#allocation2 + $0x3c0] sm:$0xff]
          %v1842 = vld [vmem:[#allocation2 + $0x3c8] sm:$0xff]
          %v1843 = vld [vmem:[#allocation2 + $0x3d0] sm:$0xff]
          %v1844 = vld [vmem:[#allocation2 + $0x3d8] sm:$0xff]
          %v1845 = vld [vmem:[#allocation2 + $0x3e0] sm:$0xff]
          %v1846 = vld [vmem:[#allocation2 + $0x3e8] sm:$0xff]
          %v1847 = vld [vmem:[#allocation2 + $0x3f0] sm:$0xff]
          %v1848 = vld [vmem:[#allocation2 + $0x3f8] sm:$0xff]
          %v1849 = vld [vmem:[#allocation3] sm:$0xff]
          %v1850 = vld [vmem:[#allocation3 + $0x8] sm:$0xff]
          %v1851 = vld [vmem:[#allocation3 + $0x10] sm:$0xff]
          %v1852 = vld [vmem:[#allocation3 + $0x18] sm:$0xff]
          %v1853 = vld [vmem:[#allocation3 + $0x20] sm:$0xff]
          %v1854 = vld [vmem:[#allocation3 + $0x28] sm:$0xff]
          %v1855 = vld [vmem:[#allocation3 + $0x30] sm:$0xff]
          %v1856 = vld [vmem:[#allocation3 + $0x38] sm:$0xff]
          %v1857 = vld [vmem:[#allocation3 + $0x40] sm:$0xff]
          %v1858 = vld [vmem:[#allocation3 + $0x48] sm:$0xff]
          %v1859 = vld [vmem:[#allocation3 + $0x50] sm:$0xff]
          %v1860 = vld [vmem:[#allocation3 + $0x58] sm:$0xff]
          %v1861 = vld [vmem:[#allocation3 + $0x60] sm:$0xff]
          %v1862 = vld [vmem:[#allocation3 + $0x68] sm:$0xff]
          %v1863 = vld [vmem:[#allocation3 + $0x70] sm:$0xff]
          %v1864 = vld [vmem:[#allocation3 + $0x78] sm:$0xff]
          %v1865 = vld [vmem:[#allocation3 + $0x80] sm:$0xff]
          %v1866 = vld [vmem:[#allocation3 + $0x88] sm:$0xff]
          %v1867 = vld [vmem:[#allocation3 + $0x90] sm:$0xff]
          %v1868 = vld [vmem:[#allocation3 + $0x98] sm:$0xff]
          %v1869 = vld [vmem:[#allocation3 + $0xa0] sm:$0xff]
          %v1870 = vld [vmem:[#allocation3 + $0xa8] sm:$0xff]
          %v1871 = vld [vmem:[#allocation3 + $0xb0] sm:$0xff]
          %v1872 = vld [vmem:[#allocation3 + $0xb8] sm:$0xff]
          %v1873 = vld [vmem:[#allocation3 + $0xc0] sm:$0xff]
          %v1874 = vld [vmem:[#allocation3 + $0xc8] sm:$0xff]
          %v1875 = vld [vmem:[#allocation3 + $0xd0] sm:$0xff]
          %v1876 = vld [vmem:[#allocation3 + $0xd8] sm:$0xff]
          %v1877 = vld [vmem:[#allocation3 + $0xe0] sm:$0xff]
          %v1878 = vld [vmem:[#allocation3 + $0xe8] sm:$0xff]
          %v1879 = vld [vmem:[#allocation3 + $0xf0] sm:$0xff]
          %v1880 = vld [vmem:[#allocation3 + $0xf8] sm:$0xff]
          %v1881 = vld [vmem:[#allocation3 + $0x100] sm:$0xff]
          %v1882 = vld [vmem:[#allocation3 + $0x108] sm:$0xff]
          %v1883 = vld [vmem:[#allocation3 + $0x110] sm:$0xff]
          %v1884 = vld [vmem:[#allocation3 + $0x118] sm:$0xff]
          %v1885 = vld [vmem:[#allocation3 + $0x120] sm:$0xff]
          %v1886 = vld [vmem:[#allocation3 + $0x128] sm:$0xff]
          %v1887 = vld [vmem:[#allocation3 + $0x130] sm:$0xff]
          %v1888 = vld [vmem:[#allocation3 + $0x138] sm:$0xff]
          %v1889 = vld [vmem:[#allocation3 + $0x140] sm:$0xff]
          %v1890 = vld [vmem:[#allocation3 + $0x148] sm:$0xff]
          %v1891 = vld [vmem:[#allocation3 + $0x150] sm:$0xff]
          %v1892 = vld [vmem:[#allocation3 + $0x158] sm:$0xff]
          %v1893 = vld [vmem:[#allocation3 + $0x160] sm:$0xff]
          %v1894 = vld [vmem:[#allocation3 + $0x168] sm:$0xff]
          %v1895 = vld [vmem:[#allocation3 + $0x170] sm:$0xff]
          %v1896 = vld [vmem:[#allocation3 + $0x178] sm:$0xff]
          %v1897 = vld [vmem:[#allocation3 + $0x180] sm:$0xff]
          %v1898 = vld [vmem:[#allocation3 + $0x188] sm:$0xff]
          %v1899 = vld [vmem:[#allocation3 + $0x190] sm:$0xff]
          %v1900 = vld [vmem:[#allocation3 + $0x198] sm:$0xff]
          %v1901 = vld [vmem:[#allocation3 + $0x1a0] sm:$0xff]
          %v1902 = vld [vmem:[#allocation3 + $0x1a8] sm:$0xff]
          %v1903 = vld [vmem:[#allocation3 + $0x1b0] sm:$0xff]
          %v1904 = vld [vmem:[#allocation3 + $0x1b8] sm:$0xff]
          %v1905 = vld [vmem:[#allocation3 + $0x1c0] sm:$0xff]
          %v1906 = vld [vmem:[#allocation3 + $0x1c8] sm:$0xff]
          %v1907 = vld [vmem:[#allocation3 + $0x1d0] sm:$0xff]
          %v1908 = vld [vmem:[#allocation3 + $0x1d8] sm:$0xff]
          %v1909 = vld [vmem:[#allocation3 + $0x1e0] sm:$0xff]
          %v1910 = vld [vmem:[#allocation3 + $0x1e8] sm:$0xff]
          %v1911 = vld [vmem:[#allocation3 + $0x1f0] sm:$0xff]
          %v1912 = vld [vmem:[#allocation3 + $0x1f8] sm:$0xff]
          %v1913 = vld [vmem:[#allocation3 + $0x200] sm:$0xff]
          %v1914 = vld [vmem:[#allocation3 + $0x208] sm:$0xff]
          %v1915 = vld [vmem:[#allocation3 + $0x210] sm:$0xff]
          %v1916 = vld [vmem:[#allocation3 + $0x218] sm:$0xff]
          %v1917 = vld [vmem:[#allocation3 + $0x220] sm:$0xff]
          %v1918 = vld [vmem:[#allocation3 + $0x228] sm:$0xff]
          %v1919 = vld [vmem:[#allocation3 + $0x230] sm:$0xff]
          %v1920 = vld [vmem:[#allocation3 + $0x238] sm:$0xff]
          %v1921 = vld [vmem:[#allocation3 + $0x240] sm:$0xff]
          %v1922 = vld [vmem:[#allocation3 + $0x248] sm:$0xff]
          %v1923 = vld [vmem:[#allocation3 + $0x250] sm:$0xff]
          %v1924 = vld [vmem:[#allocation3 + $0x258] sm:$0xff]
          %v1925 = vld [vmem:[#allocation3 + $0x260] sm:$0xff]
          %v1926 = vld [vmem:[#allocation3 + $0x268] sm:$0xff]
          %v1927 = vld [vmem:[#allocation3 + $0x270] sm:$0xff]
          %v1928 = vld [vmem:[#allocation3 + $0x278] sm:$0xff]
          %v1929 = vld [vmem:[#allocation3 + $0x280] sm:$0xff]
          %v1930 = vld [vmem:[#allocation3 + $0x288] sm:$0xff]
          %v1931 = vld [vmem:[#allocation3 + $0x290] sm:$0xff]
          %v1932 = vld [vmem:[#allocation3 + $0x298] sm:$0xff]
          %v1933 = vld [vmem:[#allocation3 + $0x2a0] sm:$0xff]
          %v1934 = vld [vmem:[#allocation3 + $0x2a8] sm:$0xff]
          %v1935 = vld [vmem:[#allocation3 + $0x2b0] sm:$0xff]
          %v1936 = vld [vmem:[#allocation3 + $0x2b8] sm:$0xff]
          %v1937 = vld [vmem:[#allocation3 + $0x2c0] sm:$0xff]
          %v1938 = vld [vmem:[#allocation3 + $0x2c8] sm:$0xff]
          %v1939 = vld [vmem:[#allocation3 + $0x2d0] sm:$0xff]
          %v1940 = vld [vmem:[#allocation3 + $0x2d8] sm:$0xff]
          %v1941 = vld [vmem:[#allocation3 + $0x2e0] sm:$0xff]
          %v1942 = vld [vmem:[#allocation3 + $0x2e8] sm:$0xff]
          %v1943 = vld [vmem:[#allocation3 + $0x2f0] sm:$0xff]
          %v1944 = vld [vmem:[#allocation3 + $0x2f8] sm:$0xff]
          %v1945 = vld [vmem:[#allocation3 + $0x300] sm:$0xff]
          %v1946 = vld [vmem:[#allocation3 + $0x308] sm:$0xff]
          %v1947 = vld [vmem:[#allocation3 + $0x310] sm:$0xff]
          %v1948 = vld [vmem:[#allocation3 + $0x318] sm:$0xff]
          %v1949 = vld [vmem:[#allocation3 + $0x320] sm:$0xff]
          %v1950 = vld [vmem:[#allocation3 + $0x328] sm:$0xff]
          %v1951 = vld [vmem:[#allocation3 + $0x330] sm:$0xff]
          %v1952 = vld [vmem:[#allocation3 + $0x338] sm:$0xff]
          %v1953 = vld [vmem:[#allocation3 + $0x340] sm:$0xff]
          %v1954 = vld [vmem:[#allocation3 + $0x348] sm:$0xff]
          %v1955 = vld [vmem:[#allocation3 + $0x350] sm:$0xff]
          %v1956 = vld [vmem:[#allocation3 + $0x358] sm:$0xff]
          %v1957 = vld [vmem:[#allocation3 + $0x360] sm:$0xff]
          %v1958 = vld [vmem:[#allocation3 + $0x368] sm:$0xff]
          %v1959 = vld [vmem:[#allocation3 + $0x370] sm:$0xff]
          %v1960 = vld [vmem:[#allocation3 + $0x378] sm:$0xff]
          %v1961 = vld [vmem:[#allocation3 + $0x380] sm:$0xff]
          %v1962 = vld [vmem:[#allocation3 + $0x388] sm:$0xff]
          %v1963 = vld [vmem:[#allocation3 + $0x390] sm:$0xff]
          %v1964 = vld [vmem:[#allocation3 + $0x398] sm:$0xff]
          %v1965 = vld [vmem:[#allocation3 + $0x3a0] sm:$0xff]
          %v1966 = vld [vmem:[#allocation3 + $0x3a8] sm:$0xff]
          %v1967 = vld [vmem:[#allocation3 + $0x3b0] sm:$0xff]
          %v1968 = vld [vmem:[#allocation3 + $0x3b8] sm:$0xff]
          %v1969 = vld [vmem:[#allocation3 + $0x3c0] sm:$0xff]
          %v1970 = vld [vmem:[#allocation3 + $0x3c8] sm:$0xff]
          %v1971 = vld [vmem:[#allocation3 + $0x3d0] sm:$0xff]
          %v1972 = vld [vmem:[#allocation3 + $0x3d8] sm:$0xff]
          %v1973 = vld [vmem:[#allocation3 + $0x3e0] sm:$0xff]
          %v1974 = vld [vmem:[#allocation3 + $0x3e8] sm:$0xff]
          %v1975 = vld [vmem:[#allocation3 + $0x3f0] sm:$0xff]
          %v1976 = vld [vmem:[#allocation3 + $0x3f8] sm:$0xff]
          %v1977 = vld [vmem:[#allocation4] sm:$0xff]
          %v1978 = vld [vmem:[#allocation4 + $0x8] sm:$0xff]
          %v1979 = vld [vmem:[#allocation4 + $0x10] sm:$0xff]
          %v1980 = vld [vmem:[#allocation4 + $0x18] sm:$0xff]
          %v1981 = vld [vmem:[#allocation4 + $0x20] sm:$0xff]
          %v1982 = vld [vmem:[#allocation4 + $0x28] sm:$0xff]
          %v1983 = vld [vmem:[#allocation4 + $0x30] sm:$0xff]
          %v1984 = vld [vmem:[#allocation4 + $0x38] sm:$0xff]
          %v1985 = vld [vmem:[#allocation4 + $0x40] sm:$0xff]
          %v1986 = vld [vmem:[#allocation4 + $0x48] sm:$0xff]
          %v1987 = vld [vmem:[#allocation4 + $0x50] sm:$0xff]
          %v1988 = vld [vmem:[#allocation4 + $0x58] sm:$0xff]
          %v1989 = vld [vmem:[#allocation4 + $0x60] sm:$0xff]
          %v1990 = vld [vmem:[#allocation4 + $0x68] sm:$0xff]
          %v1991 = vld [vmem:[#allocation4 + $0x70] sm:$0xff]
          %v1992 = vld [vmem:[#allocation4 + $0x78] sm:$0xff]
          %v1993 = vld [vmem:[#allocation4 + $0x80] sm:$0xff]
          %v1994 = vld [vmem:[#allocation4 + $0x88] sm:$0xff]
          %v1995 = vld [vmem:[#allocation4 + $0x90] sm:$0xff]
          %v1996 = vld [vmem:[#allocation4 + $0x98] sm:$0xff]
          %v1997 = vld [vmem:[#allocation4 + $0xa0] sm:$0xff]
          %v1998 = vld [vmem:[#allocation4 + $0xa8] sm:$0xff]
          %v1999 = vld [vmem:[#allocation4 + $0xb0] sm:$0xff]
          %v2000 = vld [vmem:[#allocation4 + $0xb8] sm:$0xff]
          %v2001 = vld [vmem:[#allocation4 + $0xc0] sm:$0xff]
          %v2002 = vld [vmem:[#allocation4 + $0xc8] sm:$0xff]
          %v2003 = vld [vmem:[#allocation4 + $0xd0] sm:$0xff]
          %v2004 = vld [vmem:[#allocation4 + $0xd8] sm:$0xff]
          %v2005 = vld [vmem:[#allocation4 + $0xe0] sm:$0xff]
          %v2006 = vld [vmem:[#allocation4 + $0xe8] sm:$0xff]
          %v2007 = vld [vmem:[#allocation4 + $0xf0] sm:$0xff]
          %v2008 = vld [vmem:[#allocation4 + $0xf8] sm:$0xff]
          %v2009 = vld [vmem:[#allocation4 + $0x100] sm:$0xff]
          %v2010 = vld [vmem:[#allocation4 + $0x108] sm:$0xff]
          %v2011 = vld [vmem:[#allocation4 + $0x110] sm:$0xff]
          %v2012 = vld [vmem:[#allocation4 + $0x118] sm:$0xff]
          %v2013 = vld [vmem:[#allocation4 + $0x120] sm:$0xff]
          %v2014 = vld [vmem:[#allocation4 + $0x128] sm:$0xff]
          %v2015 = vld [vmem:[#allocation4 + $0x130] sm:$0xff]
          %v2016 = vld [vmem:[#allocation4 + $0x138] sm:$0xff]
          %v2017 = vld [vmem:[#allocation4 + $0x140] sm:$0xff]
          %v2018 = vld [vmem:[#allocation4 + $0x148] sm:$0xff]
          %v2019 = vld [vmem:[#allocation4 + $0x150] sm:$0xff]
          %v2020 = vld [vmem:[#allocation4 + $0x158] sm:$0xff]
          %v2021 = vld [vmem:[#allocation4 + $0x160] sm:$0xff]
          %v2022 = vld [vmem:[#allocation4 + $0x168] sm:$0xff]
          %v2023 = vld [vmem:[#allocation4 + $0x170] sm:$0xff]
          %v2024 = vld [vmem:[#allocation4 + $0x178] sm:$0xff]
          %v2025 = vld [vmem:[#allocation4 + $0x180] sm:$0xff]
          %v2026 = vld [vmem:[#allocation4 + $0x188] sm:$0xff]
          %v2027 = vld [vmem:[#allocation4 + $0x190] sm:$0xff]
          %v2028 = vld [vmem:[#allocation4 + $0x198] sm:$0xff]
          %v2029 = vld [vmem:[#allocation4 + $0x1a0] sm:$0xff]
          %v2030 = vld [vmem:[#allocation4 + $0x1a8] sm:$0xff]
          %v2031 = vld [vmem:[#allocation4 + $0x1b0] sm:$0xff]
          %v2032 = vld [vmem:[#allocation4 + $0x1b8] sm:$0xff]
          %v2033 = vld [vmem:[#allocation4 + $0x1c0] sm:$0xff]
          %v2034 = vld [vmem:[#allocation4 + $0x1c8] sm:$0xff]
          %v2035 = vld [vmem:[#allocation4 + $0x1d0] sm:$0xff]
          %v2036 = vld [vmem:[#allocation4 + $0x1d8] sm:$0xff]
          %v2037 = vld [vmem:[#allocation4 + $0x1e0] sm:$0xff]
          %v2038 = vld [vmem:[#allocation4 + $0x1e8] sm:$0xff]
          %v2039 = vld [vmem:[#allocation4 + $0x1f0] sm:$0xff]
          %v2040 = vld [vmem:[#allocation4 + $0x1f8] sm:$0xff]
          %v2041 = vld [vmem:[#allocation4 + $0x200] sm:$0xff]
          %v2042 = vld [vmem:[#allocation4 + $0x208] sm:$0xff]
          %v2043 = vld [vmem:[#allocation4 + $0x210] sm:$0xff]
          %v2044 = vld [vmem:[#allocation4 + $0x218] sm:$0xff]
          %v2045 = vld [vmem:[#allocation4 + $0x220] sm:$0xff]
          %v2046 = vld [vmem:[#allocation4 + $0x228] sm:$0xff]
          %v2047 = vld [vmem:[#allocation4 + $0x230] sm:$0xff]
          %v2048 = vld [vmem:[#allocation4 + $0x238] sm:$0xff]
          %v2049 = vld [vmem:[#allocation4 + $0x240] sm:$0xff]
          %v2050 = vld [vmem:[#allocation4 + $0x248] sm:$0xff]
          %v2051 = vld [vmem:[#allocation4 + $0x250] sm:$0xff]
          %v2052 = vld [vmem:[#allocation4 + $0x258] sm:$0xff]
          %v2053 = vld [vmem:[#allocation4 + $0x260] sm:$0xff]
          %v2054 = vld [vmem:[#allocation4 + $0x268] sm:$0xff]
          %v2055 = vld [vmem:[#allocation4 + $0x270] sm:$0xff]
          %v2056 = vld [vmem:[#allocation4 + $0x278] sm:$0xff]
          %v2057 = vld [vmem:[#allocation4 + $0x280] sm:$0xff]
          %v2058 = vld [vmem:[#allocation4 + $0x288] sm:$0xff]
          %v2059 = vld [vmem:[#allocation4 + $0x290] sm:$0xff]
          %v2060 = vld [vmem:[#allocation4 + $0x298] sm:$0xff]
          %v2061 = vld [vmem:[#allocation4 + $0x2a0] sm:$0xff]
          %v2062 = vld [vmem:[#allocation4 + $0x2a8] sm:$0xff]
          %v2063 = vld [vmem:[#allocation4 + $0x2b0] sm:$0xff]
          %v2064 = vld [vmem:[#allocation4 + $0x2b8] sm:$0xff]
          %v2065 = vld [vmem:[#allocation4 + $0x2c0] sm:$0xff]
          %v2066 = vld [vmem:[#allocation4 + $0x2c8] sm:$0xff]
          %v2067 = vld [vmem:[#allocation4 + $0x2d0] sm:$0xff]
          %v2068 = vld [vmem:[#allocation4 + $0x2d8] sm:$0xff]
          %v2069 = vld [vmem:[#allocation4 + $0x2e0] sm:$0xff]
          %v2070 = vld [vmem:[#allocation4 + $0x2e8] sm:$0xff]
          %v2071 = vld [vmem:[#allocation4 + $0x2f0] sm:$0xff]
          %v2072 = vld [vmem:[#allocation4 + $0x2f8] sm:$0xff]
          %v2073 = vld [vmem:[#allocation4 + $0x300] sm:$0xff]
          %v2074 = vld [vmem:[#allocation4 + $0x308] sm:$0xff]
          %v2075 = vld [vmem:[#allocation4 + $0x310] sm:$0xff]
          %v2076 = vld [vmem:[#allocation4 + $0x318] sm:$0xff]
          %v2077 = vld [vmem:[#allocation4 + $0x320] sm:$0xff]
          %v2078 = vld [vmem:[#allocation4 + $0x328] sm:$0xff]
          %v2079 = vld [vmem:[#allocation4 + $0x330] sm:$0xff]
          %v2080 = vld [vmem:[#allocation4 + $0x338] sm:$0xff]
          %v2081 = vld [vmem:[#allocation4 + $0x340] sm:$0xff]
          %v2082 = vld [vmem:[#allocation4 + $0x348] sm:$0xff]
          %v2083 = vld [vmem:[#allocation4 + $0x350] sm:$0xff]
          %v2084 = vld [vmem:[#allocation4 + $0x358] sm:$0xff]
          %v2085 = vld [vmem:[#allocation4 + $0x360] sm:$0xff]
          %v2086 = vld [vmem:[#allocation4 + $0x368] sm:$0xff]
          %v2087 = vld [vmem:[#allocation4 + $0x370] sm:$0xff]
          %v2088 = vld [vmem:[#allocation4 + $0x378] sm:$0xff]
          %v2089 = vld [vmem:[#allocation4 + $0x380] sm:$0xff]
          %v2090 = vld [vmem:[#allocation4 + $0x388] sm:$0xff]
          %v2091 = vld [vmem:[#allocation4 + $0x390] sm:$0xff]
          %v2092 = vld [vmem:[#allocation4 + $0x398] sm:$0xff]
          %v2093 = vld [vmem:[#allocation4 + $0x3a0] sm:$0xff]
          %v2094 = vld [vmem:[#allocation4 + $0x3a8] sm:$0xff]
          %v2095 = vld [vmem:[#allocation4 + $0x3b0] sm:$0xff]
          %v2096 = vld [vmem:[#allocation4 + $0x3b8] sm:$0xff]
          %v2097 = vld [vmem:[#allocation4 + $0x3c0] sm:$0xff]
          %v2098 = vld [vmem:[#allocation4 + $0x3c8] sm:$0xff]
          %v2099 = vld [vmem:[#allocation4 + $0x3d0] sm:$0xff]
          %v2100 = vld [vmem:[#allocation4 + $0x3d8] sm:$0xff]
          %v2101 = vld [vmem:[#allocation4 + $0x3e0] sm:$0xff]
          %v2102 = vld [vmem:[#allocation4 + $0x3e8] sm:$0xff]
          %v2103 = vld [vmem:[#allocation4 + $0x3f0] sm:$0xff]
          %v2104 = vld [vmem:[#allocation4 + $0x3f8] sm:$0xff]
          %v2105 = vmin.f32 %v1721, %v1593
          %v2106 = vmin.f32 %v1722, %v1594
          %v2107 = vmin.f32 %v1723, %v1595
          %v2108 = vmin.f32 %v1724, %v1596
          %v2109 = vmin.f32 %v1725, %v1597
          %v2110 = vmin.f32 %v1726, %v1598
          %v2111 = vmin.f32 %v1727, %v1599
          %v2112 = vmin.f32 %v1728, %v1600
          %v2113 = vmin.f32 %v1729, %v1601
          %v2114 = vmin.f32 %v1730, %v1602
          %v2115 = vmin.f32 %v1731, %v1603
          %v2116 = vmin.f32 %v1732, %v1604
          %v2117 = vmin.f32 %v1733, %v1605
          %v2118 = vmin.f32 %v1734, %v1606
          %v2119 = vmin.f32 %v1735, %v1607
          %v2120 = vmin.f32 %v1736, %v1608
          %v2121 = vmin.f32 %v1737, %v1609
          %v2122 = vmin.f32 %v1738, %v1610
          %v2123 = vmin.f32 %v1739, %v1611
          %v2124 = vmin.f32 %v1740, %v1612
          %v2125 = vmin.f32 %v1741, %v1613
          %v2126 = vmin.f32 %v1742, %v1614
          %v2127 = vmin.f32 %v1743, %v1615
          %v2128 = vmin.f32 %v1744, %v1616
          %v2129 = vmin.f32 %v1745, %v1617
          %v2130 = vmin.f32 %v1746, %v1618
          %v2131 = vmin.f32 %v1747, %v1619
          %v2132 = vmin.f32 %v1748, %v1620
          %v2133 = vmin.f32 %v1749, %v1621
          %v2134 = vmin.f32 %v1750, %v1622
          %v2135 = vmin.f32 %v1751, %v1623
          %v2136 = vmin.f32 %v1752, %v1624
          %v2137 = vmin.f32 %v1753, %v1625
          %v2138 = vmin.f32 %v1754, %v1626
          %v2139 = vmin.f32 %v1755, %v1627
          %v2140 = vmin.f32 %v1756, %v1628
          %v2141 = vmin.f32 %v1757, %v1629
          %v2142 = vmin.f32 %v1758, %v1630
          %v2143 = vmin.f32 %v1759, %v1631
          %v2144 = vmin.f32 %v1760, %v1632
          %v2145 = vmin.f32 %v1761, %v1633
          %v2146 = vmin.f32 %v1762, %v1634
          %v2147 = vmin.f32 %v1763, %v1635
          %v2148 = vmin.f32 %v1764, %v1636
          %v2149 = vmin.f32 %v1765, %v1637
          %v2150 = vmin.f32 %v1766, %v1638
          %v2151 = vmin.f32 %v1767, %v1639
          %v2152 = vmin.f32 %v1768, %v1640
          %v2153 = vmin.f32 %v1769, %v1641
          %v2154 = vmin.f32 %v1770, %v1642
          %v2155 = vmin.f32 %v1771, %v1643
          %v2156 = vmin.f32 %v1772, %v1644
          %v2157 = vmin.f32 %v1773, %v1645
          %v2158 = vmin.f32 %v1774, %v1646
          %v2159 = vmin.f32 %v1775, %v1647
          %v2160 = vmin.f32 %v1776, %v1648
          %v2161 = vmin.f32 %v1777, %v1649
          %v2162 = vmin.f32 %v1778, %v1650
          %v2163 = vmin.f32 %v1779, %v1651
          %v2164 = vmin.f32 %v1780, %v1652
          %v2165 = vmin.f32 %v1781, %v1653
          %v2166 = vmin.f32 %v1782, %v1654
          %v2167 = vmin.f32 %v1783, %v1655
          %v2168 = vmin.f32 %v1784, %v1656
          %v2169 = vmin.f32 %v1785, %v1657
          %v2170 = vmin.f32 %v1786, %v1658
          %v2171 = vmin.f32 %v1787, %v1659
          %v2172 = vmin.f32 %v1788, %v1660
          %v2173 = vmin.f32 %v1789, %v1661
          %v2174 = vmin.f32 %v1790, %v1662
          %v2175 = vmin.f32 %v1791, %v1663
          %v2176 = vmin.f32 %v1792, %v1664
          %v2177 = vmin.f32 %v1793, %v1665
          %v2178 = vmin.f32 %v1794, %v1666
          %v2179 = vmin.f32 %v1795, %v1667
          %v2180 = vmin.f32 %v1796, %v1668
          %v2181 = vmin.f32 %v1797, %v1669
          %v2182 = vmin.f32 %v1798, %v1670
          %v2183 = vmin.f32 %v1799, %v1671
          %v2184 = vmin.f32 %v1800, %v1672
          %v2185 = vmin.f32 %v1801, %v1673
          %v2186 = vmin.f32 %v1802, %v1674
          %v2187 = vmin.f32 %v1803, %v1675
          %v2188 = vmin.f32 %v1804, %v1676
          %v2189 = vmin.f32 %v1805, %v1677
          %v2190 = vmin.f32 %v1806, %v1678
          %v2191 = vmin.f32 %v1807, %v1679
          %v2192 = vmin.f32 %v1808, %v1680
          %v2193 = vmin.f32 %v1809, %v1681
          %v2194 = vmin.f32 %v1810, %v1682
          %v2195 = vmin.f32 %v1811, %v1683
          %v2196 = vmin.f32 %v1812, %v1684
          %v2197 = vmin.f32 %v1813, %v1685
          %v2198 = vmin.f32 %v1814, %v1686
          %v2199 = vmin.f32 %v1815, %v1687
          %v2200 = vmin.f32 %v1816, %v1688
          %v2201 = vmin.f32 %v1817, %v1689
          %v2202 = vmin.f32 %v1818, %v1690
          %v2203 = vmin.f32 %v1819, %v1691
          %v2204 = vmin.f32 %v1820, %v1692
          %v2205 = vmin.f32 %v1821, %v1693
          %v2206 = vmin.f32 %v1822, %v1694
          %v2207 = vmin.f32 %v1823, %v1695
          %v2208 = vmin.f32 %v1824, %v1696
          %v2209 = vmin.f32 %v1825, %v1697
          %v2210 = vmin.f32 %v1826, %v1698
          %v2211 = vmin.f32 %v1827, %v1699
          %v2212 = vmin.f32 %v1828, %v1700
          %v2213 = vmin.f32 %v1829, %v1701
          %v2214 = vmin.f32 %v1830, %v1702
          %v2215 = vmin.f32 %v1831, %v1703
          %v2216 = vmin.f32 %v1832, %v1704
          %v2217 = vmin.f32 %v1833, %v1705
          %v2218 = vmin.f32 %v1834, %v1706
          %v2219 = vmin.f32 %v1835, %v1707
          %v2220 = vmin.f32 %v1836, %v1708
          %v2221 = vmin.f32 %v1837, %v1709
          %v2222 = vmin.f32 %v1838, %v1710
          %v2223 = vmin.f32 %v1839, %v1711
          %v2224 = vmin.f32 %v1840, %v1712
          %v2225 = vmin.f32 %v1841, %v1713
          %v2226 = vmin.f32 %v1842, %v1714
          %v2227 = vmin.f32 %v1843, %v1715
          %v2228 = vmin.f32 %v1844, %v1716
          %v2229 = vmin.f32 %v1845, %v1717
          %v2230 = vmin.f32 %v1846, %v1718
          %v2231 = vmin.f32 %v1847, %v1719
          %v2232 = vmin.f32 %v1848, %v1720
          %2233 = vst [vmem:[#allocation2] sm:$0xff] %v2105
          %2234 = vst [vmem:[#allocation2 + $0x8] sm:$0xff] %v2106
          %2235 = vst [vmem:[#allocation2 + $0x10] sm:$0xff] %v2107
          %2236 = vst [vmem:[#allocation2 + $0x18] sm:$0xff] %v2108
          %2237 = vst [vmem:[#allocation2 + $0x20] sm:$0xff] %v2109
          %2238 = vst [vmem:[#allocation2 + $0x28] sm:$0xff] %v2110
          %2239 = vst [vmem:[#allocation2 + $0x30] sm:$0xff] %v2111
          %2240 = vst [vmem:[#allocation2 + $0x38] sm:$0xff] %v2112
          %2241 = vst [vmem:[#allocation2 + $0x40] sm:$0xff] %v2113
          %2242 = vst [vmem:[#allocation2 + $0x48] sm:$0xff] %v2114
          %2243 = vst [vmem:[#allocation2 + $0x50] sm:$0xff] %v2115
          %2244 = vst [vmem:[#allocation2 + $0x58] sm:$0xff] %v2116
          %2245 = vst [vmem:[#allocation2 + $0x60] sm:$0xff] %v2117
          %2246 = vst [vmem:[#allocation2 + $0x68] sm:$0xff] %v2118
          %2247 = vst [vmem:[#allocation2 + $0x70] sm:$0xff] %v2119
          %2248 = vst [vmem:[#allocation2 + $0x78] sm:$0xff] %v2120
          %2249 = vst [vmem:[#allocation2 + $0x80] sm:$0xff] %v2121
          %2250 = vst [vmem:[#allocation2 + $0x88] sm:$0xff] %v2122
          %2251 = vst [vmem:[#allocation2 + $0x90] sm:$0xff] %v2123
          %2252 = vst [vmem:[#allocation2 + $0x98] sm:$0xff] %v2124
          %2253 = vst [vmem:[#allocation2 + $0xa0] sm:$0xff] %v2125
          %2254 = vst [vmem:[#allocation2 + $0xa8] sm:$0xff] %v2126
          %2255 = vst [vmem:[#allocation2 + $0xb0] sm:$0xff] %v2127
          %2256 = vst [vmem:[#allocation2 + $0xb8] sm:$0xff] %v2128
          %2257 = vst [vmem:[#allocation2 + $0xc0] sm:$0xff] %v2129
          %2258 = vst [vmem:[#allocation2 + $0xc8] sm:$0xff] %v2130
          %2259 = vst [vmem:[#allocation2 + $0xd0] sm:$0xff] %v2131
          %2260 = vst [vmem:[#allocation2 + $0xd8] sm:$0xff] %v2132
          %2261 = vst [vmem:[#allocation2 + $0xe0] sm:$0xff] %v2133
          %2262 = vst [vmem:[#allocation2 + $0xe8] sm:$0xff] %v2134
          %2263 = vst [vmem:[#allocation2 + $0xf0] sm:$0xff] %v2135
          %2264 = vst [vmem:[#allocation2 + $0xf8] sm:$0xff] %v2136
          %2265 = vst [vmem:[#allocation2 + $0x100] sm:$0xff] %v2137
          %2266 = vst [vmem:[#allocation2 + $0x108] sm:$0xff] %v2138
          %2267 = vst [vmem:[#allocation2 + $0x110] sm:$0xff] %v2139
          %2268 = vst [vmem:[#allocation2 + $0x118] sm:$0xff] %v2140
          %2269 = vst [vmem:[#allocation2 + $0x120] sm:$0xff] %v2141
          %2270 = vst [vmem:[#allocation2 + $0x128] sm:$0xff] %v2142
          %2271 = vst [vmem:[#allocation2 + $0x130] sm:$0xff] %v2143
          %2272 = vst [vmem:[#allocation2 + $0x138] sm:$0xff] %v2144
          %2273 = vst [vmem:[#allocation2 + $0x140] sm:$0xff] %v2145
          %2274 = vst [vmem:[#allocation2 + $0x148] sm:$0xff] %v2146
          %2275 = vst [vmem:[#allocation2 + $0x150] sm:$0xff] %v2147
          %2276 = vst [vmem:[#allocation2 + $0x158] sm:$0xff] %v2148
          %2277 = vst [vmem:[#allocation2 + $0x160] sm:$0xff] %v2149
          %2278 = vst [vmem:[#allocation2 + $0x168] sm:$0xff] %v2150
          %2279 = vst [vmem:[#allocation2 + $0x170] sm:$0xff] %v2151
          %2280 = vst [vmem:[#allocation2 + $0x178] sm:$0xff] %v2152
          %2281 = vst [vmem:[#allocation2 + $0x180] sm:$0xff] %v2153
          %2282 = vst [vmem:[#allocation2 + $0x188] sm:$0xff] %v2154
          %2283 = vst [vmem:[#allocation2 + $0x190] sm:$0xff] %v2155
          %2284 = vst [vmem:[#allocation2 + $0x198] sm:$0xff] %v2156
          %2285 = vst [vmem:[#allocation2 + $0x1a0] sm:$0xff] %v2157
          %2286 = vst [vmem:[#allocation2 + $0x1a8] sm:$0xff] %v2158
          %2287 = vst [vmem:[#allocation2 + $0x1b0] sm:$0xff] %v2159
          %2288 = vst [vmem:[#allocation2 + $0x1b8] sm:$0xff] %v2160
          %2289 = vst [vmem:[#allocation2 + $0x1c0] sm:$0xff] %v2161
          %2290 = vst [vmem:[#allocation2 + $0x1c8] sm:$0xff] %v2162
          %2291 = vst [vmem:[#allocation2 + $0x1d0] sm:$0xff] %v2163
          %2292 = vst [vmem:[#allocation2 + $0x1d8] sm:$0xff] %v2164
          %2293 = vst [vmem:[#allocation2 + $0x1e0] sm:$0xff] %v2165
          %2294 = vst [vmem:[#allocation2 + $0x1e8] sm:$0xff] %v2166
          %2295 = vst [vmem:[#allocation2 + $0x1f0] sm:$0xff] %v2167
          %2296 = vst [vmem:[#allocation2 + $0x1f8] sm:$0xff] %v2168
          %2297 = vst [vmem:[#allocation2 + $0x200] sm:$0xff] %v2169
          %2298 = vst [vmem:[#allocation2 + $0x208] sm:$0xff] %v2170
          %2299 = vst [vmem:[#allocation2 + $0x210] sm:$0xff] %v2171
          %2300 = vst [vmem:[#allocation2 + $0x218] sm:$0xff] %v2172
          %2301 = vst [vmem:[#allocation2 + $0x220] sm:$0xff] %v2173
          %2302 = vst [vmem:[#allocation2 + $0x228] sm:$0xff] %v2174
          %2303 = vst [vmem:[#allocation2 + $0x230] sm:$0xff] %v2175
          %2304 = vst [vmem:[#allocation2 + $0x238] sm:$0xff] %v2176
          %2305 = vst [vmem:[#allocation2 + $0x240] sm:$0xff] %v2177
          %2306 = vst [vmem:[#allocation2 + $0x248] sm:$0xff] %v2178
          %2307 = vst [vmem:[#allocation2 + $0x250] sm:$0xff] %v2179
          %2308 = vst [vmem:[#allocation2 + $0x258] sm:$0xff] %v2180
          %2309 = vst [vmem:[#allocation2 + $0x260] sm:$0xff] %v2181
          %2310 = vst [vmem:[#allocation2 + $0x268] sm:$0xff] %v2182
          %2311 = vst [vmem:[#allocation2 + $0x270] sm:$0xff] %v2183
          %2312 = vst [vmem:[#allocation2 + $0x278] sm:$0xff] %v2184
          %2313 = vst [vmem:[#allocation2 + $0x280] sm:$0xff] %v2185
          %2314 = vst [vmem:[#allocation2 + $0x288] sm:$0xff] %v2186
          %2315 = vst [vmem:[#allocation2 + $0x290] sm:$0xff] %v2187
          %2316 = vst [vmem:[#allocation2 + $0x298] sm:$0xff] %v2188
          %2317 = vst [vmem:[#allocation2 + $0x2a0] sm:$0xff] %v2189
          %2318 = vst [vmem:[#allocation2 + $0x2a8] sm:$0xff] %v2190
          %2319 = vst [vmem:[#allocation2 + $0x2b0] sm:$0xff] %v2191
          %2320 = vst [vmem:[#allocation2 + $0x2b8] sm:$0xff] %v2192
          %2321 = vst [vmem:[#allocation2 + $0x2c0] sm:$0xff] %v2193
          %2322 = vst [vmem:[#allocation2 + $0x2c8] sm:$0xff] %v2194
          %2323 = vst [vmem:[#allocation2 + $0x2d0] sm:$0xff] %v2195
          %2324 = vst [vmem:[#allocation2 + $0x2d8] sm:$0xff] %v2196
          %2325 = vst [vmem:[#allocation2 + $0x2e0] sm:$0xff] %v2197
          %2326 = vst [vmem:[#allocation2 + $0x2e8] sm:$0xff] %v2198
          %2327 = vst [vmem:[#allocation2 + $0x2f0] sm:$0xff] %v2199
          %2328 = vst [vmem:[#allocation2 + $0x2f8] sm:$0xff] %v2200
          %2329 = vst [vmem:[#allocation2 + $0x300] sm:$0xff] %v2201
          %2330 = vst [vmem:[#allocation2 + $0x308] sm:$0xff] %v2202
          %2331 = vst [vmem:[#allocation2 + $0x310] sm:$0xff] %v2203
          %2332 = vst [vmem:[#allocation2 + $0x318] sm:$0xff] %v2204
          %2333 = vst [vmem:[#allocation2 + $0x320] sm:$0xff] %v2205
          %2334 = vst [vmem:[#allocation2 + $0x328] sm:$0xff] %v2206
          %2335 = vst [vmem:[#allocation2 + $0x330] sm:$0xff] %v2207
          %2336 = vst [vmem:[#allocation2 + $0x338] sm:$0xff] %v2208
          %2337 = vst [vmem:[#allocation2 + $0x340] sm:$0xff] %v2209
          %2338 = vst [vmem:[#allocation2 + $0x348] sm:$0xff] %v2210
          %2339 = vst [vmem:[#allocation2 + $0x350] sm:$0xff] %v2211
          %2340 = vst [vmem:[#allocation2 + $0x358] sm:$0xff] %v2212
          %2341 = vst [vmem:[#allocation2 + $0x360] sm:$0xff] %v2213
          %2342 = vst [vmem:[#allocation2 + $0x368] sm:$0xff] %v2214
          %2343 = vst [vmem:[#allocation2 + $0x370] sm:$0xff] %v2215
          %2344 = vst [vmem:[#allocation2 + $0x378] sm:$0xff] %v2216
          %2345 = vst [vmem:[#allocation2 + $0x380] sm:$0xff] %v2217
          %2346 = vst [vmem:[#allocation2 + $0x388] sm:$0xff] %v2218
          %2347 = vst [vmem:[#allocation2 + $0x390] sm:$0xff] %v2219
          %2348 = vst [vmem:[#allocation2 + $0x398] sm:$0xff] %v2220
          %2349 = vst [vmem:[#allocation2 + $0x3a0] sm:$0xff] %v2221
          %2350 = vst [vmem:[#allocation2 + $0x3a8] sm:$0xff] %v2222
          %2351 = vst [vmem:[#allocation2 + $0x3b0] sm:$0xff] %v2223
          %2352 = vst [vmem:[#allocation2 + $0x3b8] sm:$0xff] %v2224
          %2353 = vst [vmem:[#allocation2 + $0x3c0] sm:$0xff] %v2225
          %2354 = vst [vmem:[#allocation2 + $0x3c8] sm:$0xff] %v2226
          %2355 = vst [vmem:[#allocation2 + $0x3d0] sm:$0xff] %v2227
          %2356 = vst [vmem:[#allocation2 + $0x3d8] sm:$0xff] %v2228
          %2357 = vst [vmem:[#allocation2 + $0x3e0] sm:$0xff] %v2229
          %2358 = vst [vmem:[#allocation2 + $0x3e8] sm:$0xff] %v2230
          %2359 = vst [vmem:[#allocation2 + $0x3f0] sm:$0xff] %v2231
          %2360 = vst [vmem:[#allocation2 + $0x3f8] sm:$0xff] %v2232
          %v2361 = vmax.f32 %v1721, %v1593
          %v2362 = vmax.f32 %v1722, %v1594
          %v2363 = vmax.f32 %v1723, %v1595
          %v2364 = vmax.f32 %v1724, %v1596
          %v2365 = vmax.f32 %v1725, %v1597
          %v2366 = vmax.f32 %v1726, %v1598
          %v2367 = vmax.f32 %v1727, %v1599
          %v2368 = vmax.f32 %v1728, %v1600
          %v2369 = vmax.f32 %v1729, %v1601
          %v2370 = vmax.f32 %v1730, %v1602
          %v2371 = vmax.f32 %v1731, %v1603
          %v2372 = vmax.f32 %v1732, %v1604
          %v2373 = vmax.f32 %v1733, %v1605
          %v2374 = vmax.f32 %v1734, %v1606
          %v2375 = vmax.f32 %v1735, %v1607
          %v2376 = vmax.f32 %v1736, %v1608
          %v2377 = vmax.f32 %v1737, %v1609
          %v2378 = vmax.f32 %v1738, %v1610
          %v2379 = vmax.f32 %v1739, %v1611
          %v2380 = vmax.f32 %v1740, %v1612
          %v2381 = vmax.f32 %v1741, %v1613
          %v2382 = vmax.f32 %v1742, %v1614
          %v2383 = vmax.f32 %v1743, %v1615
          %v2384 = vmax.f32 %v1744, %v1616
          %v2385 = vmax.f32 %v1745, %v1617
          %v2386 = vmax.f32 %v1746, %v1618
          %v2387 = vmax.f32 %v1747, %v1619
          %v2388 = vmax.f32 %v1748, %v1620
          %v2389 = vmax.f32 %v1749, %v1621
          %v2390 = vmax.f32 %v1750, %v1622
          %v2391 = vmax.f32 %v1751, %v1623
          %v2392 = vmax.f32 %v1752, %v1624
          %v2393 = vmax.f32 %v1753, %v1625
          %v2394 = vmax.f32 %v1754, %v1626
          %v2395 = vmax.f32 %v1755, %v1627
          %v2396 = vmax.f32 %v1756, %v1628
          %v2397 = vmax.f32 %v1757, %v1629
          %v2398 = vmax.f32 %v1758, %v1630
          %v2399 = vmax.f32 %v1759, %v1631
          %v2400 = vmax.f32 %v1760, %v1632
          %v2401 = vmax.f32 %v1761, %v1633
          %v2402 = vmax.f32 %v1762, %v1634
          %v2403 = vmax.f32 %v1763, %v1635
          %v2404 = vmax.f32 %v1764, %v1636
          %v2405 = vmax.f32 %v1765, %v1637
          %v2406 = vmax.f32 %v1766, %v1638
          %v2407 = vmax.f32 %v1767, %v1639
          %v2408 = vmax.f32 %v1768, %v1640
          %v2409 = vmax.f32 %v1769, %v1641
          %v2410 = vmax.f32 %v1770, %v1642
          %v2411 = vmax.f32 %v1771, %v1643
          %v2412 = vmax.f32 %v1772, %v1644
          %v2413 = vmax.f32 %v1773, %v1645
          %v2414 = vmax.f32 %v1774, %v1646
          %v2415 = vmax.f32 %v1775, %v1647
          %v2416 = vmax.f32 %v1776, %v1648
          %v2417 = vmax.f32 %v1777, %v1649
          %v2418 = vmax.f32 %v1778, %v1650
          %v2419 = vmax.f32 %v1779, %v1651
          %v2420 = vmax.f32 %v1780, %v1652
          %v2421 = vmax.f32 %v1781, %v1653
          %v2422 = vmax.f32 %v1782, %v1654
          %v2423 = vmax.f32 %v1783, %v1655
          %v2424 = vmax.f32 %v1784, %v1656
          %v2425 = vmax.f32 %v1785, %v1657
          %v2426 = vmax.f32 %v1786, %v1658
          %v2427 = vmax.f32 %v1787, %v1659
          %v2428 = vmax.f32 %v1788, %v1660
          %v2429 = vmax.f32 %v1789, %v1661
          %v2430 = vmax.f32 %v1790, %v1662
          %v2431 = vmax.f32 %v1791, %v1663
          %v2432 = vmax.f32 %v1792, %v1664
          %v2433 = vmax.f32 %v1793, %v1665
          %v2434 = vmax.f32 %v1794, %v1666
          %v2435 = vmax.f32 %v1795, %v1667
          %v2436 = vmax.f32 %v1796, %v1668
          %v2437 = vmax.f32 %v1797, %v1669
          %v2438 = vmax.f32 %v1798, %v1670
          %v2439 = vmax.f32 %v1799, %v1671
          %v2440 = vmax.f32 %v1800, %v1672
          %v2441 = vmax.f32 %v1801, %v1673
          %v2442 = vmax.f32 %v1802, %v1674
          %v2443 = vmax.f32 %v1803, %v1675
          %v2444 = vmax.f32 %v1804, %v1676
          %v2445 = vmax.f32 %v1805, %v1677
          %v2446 = vmax.f32 %v1806, %v1678
          %v2447 = vmax.f32 %v1807, %v1679
          %v2448 = vmax.f32 %v1808, %v1680
          %v2449 = vmax.f32 %v1809, %v1681
          %v2450 = vmax.f32 %v1810, %v1682
          %v2451 = vmax.f32 %v1811, %v1683
          %v2452 = vmax.f32 %v1812, %v1684
          %v2453 = vmax.f32 %v1813, %v1685
          %v2454 = vmax.f32 %v1814, %v1686
          %v2455 = vmax.f32 %v1815, %v1687
          %v2456 = vmax.f32 %v1816, %v1688
          %v2457 = vmax.f32 %v1817, %v1689
          %v2458 = vmax.f32 %v1818, %v1690
          %v2459 = vmax.f32 %v1819, %v1691
          %v2460 = vmax.f32 %v1820, %v1692
          %v2461 = vmax.f32 %v1821, %v1693
          %v2462 = vmax.f32 %v1822, %v1694
          %v2463 = vmax.f32 %v1823, %v1695
          %v2464 = vmax.f32 %v1824, %v1696
          %v2465 = vmax.f32 %v1825, %v1697
          %v2466 = vmax.f32 %v1826, %v1698
          %v2467 = vmax.f32 %v1827, %v1699
          %v2468 = vmax.f32 %v1828, %v1700
          %v2469 = vmax.f32 %v1829, %v1701
          %v2470 = vmax.f32 %v1830, %v1702
          %v2471 = vmax.f32 %v1831, %v1703
          %v2472 = vmax.f32 %v1832, %v1704
          %v2473 = vmax.f32 %v1833, %v1705
          %v2474 = vmax.f32 %v1834, %v1706
          %v2475 = vmax.f32 %v1835, %v1707
          %v2476 = vmax.f32 %v1836, %v1708
          %v2477 = vmax.f32 %v1837, %v1709
          %v2478 = vmax.f32 %v1838, %v1710
          %v2479 = vmax.f32 %v1839, %v1711
          %v2480 = vmax.f32 %v1840, %v1712
          %v2481 = vmax.f32 %v1841, %v1713
          %v2482 = vmax.f32 %v1842, %v1714
          %v2483 = vmax.f32 %v1843, %v1715
          %v2484 = vmax.f32 %v1844, %v1716
          %v2485 = vmax.f32 %v1845, %v1717
          %v2486 = vmax.f32 %v1846, %v1718
          %v2487 = vmax.f32 %v1847, %v1719
          %v2488 = vmax.f32 %v1848, %v1720
          %v2489 = vmin.f32 %v1849, %v2361
          %v2490 = vmin.f32 %v1850, %v2362
          %v2491 = vmin.f32 %v1851, %v2363
          %v2492 = vmin.f32 %v1852, %v2364
          %v2493 = vmin.f32 %v1853, %v2365
          %v2494 = vmin.f32 %v1854, %v2366
          %v2495 = vmin.f32 %v1855, %v2367
          %v2496 = vmin.f32 %v1856, %v2368
          %v2497 = vmin.f32 %v1857, %v2369
          %v2498 = vmin.f32 %v1858, %v2370
          %v2499 = vmin.f32 %v1859, %v2371
          %v2500 = vmin.f32 %v1860, %v2372
          %v2501 = vmin.f32 %v1861, %v2373
          %v2502 = vmin.f32 %v1862, %v2374
          %v2503 = vmin.f32 %v1863, %v2375
          %v2504 = vmin.f32 %v1864, %v2376
          %v2505 = vmin.f32 %v1865, %v2377
          %v2506 = vmin.f32 %v1866, %v2378
          %v2507 = vmin.f32 %v1867, %v2379
          %v2508 = vmin.f32 %v1868, %v2380
          %v2509 = vmin.f32 %v1869, %v2381
          %v2510 = vmin.f32 %v1870, %v2382
          %v2511 = vmin.f32 %v1871, %v2383
          %v2512 = vmin.f32 %v1872, %v2384
          %v2513 = vmin.f32 %v1873, %v2385
          %v2514 = vmin.f32 %v1874, %v2386
          %v2515 = vmin.f32 %v1875, %v2387
          %v2516 = vmin.f32 %v1876, %v2388
          %v2517 = vmin.f32 %v1877, %v2389
          %v2518 = vmin.f32 %v1878, %v2390
          %v2519 = vmin.f32 %v1879, %v2391
          %v2520 = vmin.f32 %v1880, %v2392
          %v2521 = vmin.f32 %v1881, %v2393
          %v2522 = vmin.f32 %v1882, %v2394
          %v2523 = vmin.f32 %v1883, %v2395
          %v2524 = vmin.f32 %v1884, %v2396
          %v2525 = vmin.f32 %v1885, %v2397
          %v2526 = vmin.f32 %v1886, %v2398
          %v2527 = vmin.f32 %v1887, %v2399
          %v2528 = vmin.f32 %v1888, %v2400
          %v2529 = vmin.f32 %v1889, %v2401
          %v2530 = vmin.f32 %v1890, %v2402
          %v2531 = vmin.f32 %v1891, %v2403
          %v2532 = vmin.f32 %v1892, %v2404
          %v2533 = vmin.f32 %v1893, %v2405
          %v2534 = vmin.f32 %v1894, %v2406
          %v2535 = vmin.f32 %v1895, %v2407
          %v2536 = vmin.f32 %v1896, %v2408
          %v2537 = vmin.f32 %v1897, %v2409
          %v2538 = vmin.f32 %v1898, %v2410
          %v2539 = vmin.f32 %v1899, %v2411
          %v2540 = vmin.f32 %v1900, %v2412
          %v2541 = vmin.f32 %v1901, %v2413
          %v2542 = vmin.f32 %v1902, %v2414
          %v2543 = vmin.f32 %v1903, %v2415
          %v2544 = vmin.f32 %v1904, %v2416
          %v2545 = vmin.f32 %v1905, %v2417
          %v2546 = vmin.f32 %v1906, %v2418
          %v2547 = vmin.f32 %v1907, %v2419
          %v2548 = vmin.f32 %v1908, %v2420
          %v2549 = vmin.f32 %v1909, %v2421
          %v2550 = vmin.f32 %v1910, %v2422
          %v2551 = vmin.f32 %v1911, %v2423
          %v2552 = vmin.f32 %v1912, %v2424
          %v2553 = vmin.f32 %v1913, %v2425
          %v2554 = vmin.f32 %v1914, %v2426
          %v2555 = vmin.f32 %v1915, %v2427
          %v2556 = vmin.f32 %v1916, %v2428
          %v2557 = vmin.f32 %v1917, %v2429
          %v2558 = vmin.f32 %v1918, %v2430
          %v2559 = vmin.f32 %v1919, %v2431
          %v2560 = vmin.f32 %v1920, %v2432
          %v2561 = vmin.f32 %v1921, %v2433
          %v2562 = vmin.f32 %v1922, %v2434
          %v2563 = vmin.f32 %v1923, %v2435
          %v2564 = vmin.f32 %v1924, %v2436
          %v2565 = vmin.f32 %v1925, %v2437
          %v2566 = vmin.f32 %v1926, %v2438
          %v2567 = vmin.f32 %v1927, %v2439
          %v2568 = vmin.f32 %v1928, %v2440
          %v2569 = vmin.f32 %v1929, %v2441
          %v2570 = vmin.f32 %v1930, %v2442
          %v2571 = vmin.f32 %v1931, %v2443
          %v2572 = vmin.f32 %v1932, %v2444
          %v2573 = vmin.f32 %v1933, %v2445
          %v2574 = vmin.f32 %v1934, %v2446
          %v2575 = vmin.f32 %v1935, %v2447
          %v2576 = vmin.f32 %v1936, %v2448
          %v2577 = vmin.f32 %v1937, %v2449
          %v2578 = vmin.f32 %v1938, %v2450
          %v2579 = vmin.f32 %v1939, %v2451
          %v2580 = vmin.f32 %v1940, %v2452
          %v2581 = vmin.f32 %v1941, %v2453
          %v2582 = vmin.f32 %v1942, %v2454
          %v2583 = vmin.f32 %v1943, %v2455
          %v2584 = vmin.f32 %v1944, %v2456
          %v2585 = vmin.f32 %v1945, %v2457
          %v2586 = vmin.f32 %v1946, %v2458
          %v2587 = vmin.f32 %v1947, %v2459
          %v2588 = vmin.f32 %v1948, %v2460
          %v2589 = vmin.f32 %v1949, %v2461
          %v2590 = vmin.f32 %v1950, %v2462
          %v2591 = vmin.f32 %v1951, %v2463
          %v2592 = vmin.f32 %v1952, %v2464
          %v2593 = vmin.f32 %v1953, %v2465
          %v2594 = vmin.f32 %v1954, %v2466
          %v2595 = vmin.f32 %v1955, %v2467
          %v2596 = vmin.f32 %v1956, %v2468
          %v2597 = vmin.f32 %v1957, %v2469
          %v2598 = vmin.f32 %v1958, %v2470
          %v2599 = vmin.f32 %v1959, %v2471
          %v2600 = vmin.f32 %v1960, %v2472
          %v2601 = vmin.f32 %v1961, %v2473
          %v2602 = vmin.f32 %v1962, %v2474
          %v2603 = vmin.f32 %v1963, %v2475
          %v2604 = vmin.f32 %v1964, %v2476
          %v2605 = vmin.f32 %v1965, %v2477
          %v2606 = vmin.f32 %v1966, %v2478
          %v2607 = vmin.f32 %v1967, %v2479
          %v2608 = vmin.f32 %v1968, %v2480
          %v2609 = vmin.f32 %v1969, %v2481
          %v2610 = vmin.f32 %v1970, %v2482
          %v2611 = vmin.f32 %v1971, %v2483
          %v2612 = vmin.f32 %v1972, %v2484
          %v2613 = vmin.f32 %v1973, %v2485
          %v2614 = vmin.f32 %v1974, %v2486
          %v2615 = vmin.f32 %v1975, %v2487
          %v2616 = vmin.f32 %v1976, %v2488
          %2617 = vst [vmem:[#allocation3] sm:$0xff] %v2489
          %2618 = vst [vmem:[#allocation3 + $0x8] sm:$0xff] %v2490
          %2619 = vst [vmem:[#allocation3 + $0x10] sm:$0xff] %v2491
          %2620 = vst [vmem:[#allocation3 + $0x18] sm:$0xff] %v2492
          %2621 = vst [vmem:[#allocation3 + $0x20] sm:$0xff] %v2493
          %2622 = vst [vmem:[#allocation3 + $0x28] sm:$0xff] %v2494
          %2623 = vst [vmem:[#allocation3 + $0x30] sm:$0xff] %v2495
          %2624 = vst [vmem:[#allocation3 + $0x38] sm:$0xff] %v2496
          %2625 = vst [vmem:[#allocation3 + $0x40] sm:$0xff] %v2497
          %2626 = vst [vmem:[#allocation3 + $0x48] sm:$0xff] %v2498
          %2627 = vst [vmem:[#allocation3 + $0x50] sm:$0xff] %v2499
          %2628 = vst [vmem:[#allocation3 + $0x58] sm:$0xff] %v2500
          %2629 = vst [vmem:[#allocation3 + $0x60] sm:$0xff] %v2501
          %2630 = vst [vmem:[#allocation3 + $0x68] sm:$0xff] %v2502
          %2631 = vst [vmem:[#allocation3 + $0x70] sm:$0xff] %v2503
          %2632 = vst [vmem:[#allocation3 + $0x78] sm:$0xff] %v2504
          %2633 = vst [vmem:[#allocation3 + $0x80] sm:$0xff] %v2505
          %2634 = vst [vmem:[#allocation3 + $0x88] sm:$0xff] %v2506
          %2635 = vst [vmem:[#allocation3 + $0x90] sm:$0xff] %v2507
          %2636 = vst [vmem:[#allocation3 + $0x98] sm:$0xff] %v2508
          %2637 = vst [vmem:[#allocation3 + $0xa0] sm:$0xff] %v2509
          %2638 = vst [vmem:[#allocation3 + $0xa8] sm:$0xff] %v2510
          %2639 = vst [vmem:[#allocation3 + $0xb0] sm:$0xff] %v2511
          %2640 = vst [vmem:[#allocation3 + $0xb8] sm:$0xff] %v2512
          %2641 = vst [vmem:[#allocation3 + $0xc0] sm:$0xff] %v2513
          %2642 = vst [vmem:[#allocation3 + $0xc8] sm:$0xff] %v2514
          %2643 = vst [vmem:[#allocation3 + $0xd0] sm:$0xff] %v2515
          %2644 = vst [vmem:[#allocation3 + $0xd8] sm:$0xff] %v2516
          %2645 = vst [vmem:[#allocation3 + $0xe0] sm:$0xff] %v2517
          %2646 = vst [vmem:[#allocation3 + $0xe8] sm:$0xff] %v2518
          %2647 = vst [vmem:[#allocation3 + $0xf0] sm:$0xff] %v2519
          %2648 = vst [vmem:[#allocation3 + $0xf8] sm:$0xff] %v2520
          %2649 = vst [vmem:[#allocation3 + $0x100] sm:$0xff] %v2521
          %2650 = vst [vmem:[#allocation3 + $0x108] sm:$0xff] %v2522
          %2651 = vst [vmem:[#allocation3 + $0x110] sm:$0xff] %v2523
          %2652 = vst [vmem:[#allocation3 + $0x118] sm:$0xff] %v2524
          %2653 = vst [vmem:[#allocation3 + $0x120] sm:$0xff] %v2525
          %2654 = vst [vmem:[#allocation3 + $0x128] sm:$0xff] %v2526
          %2655 = vst [vmem:[#allocation3 + $0x130] sm:$0xff] %v2527
          %2656 = vst [vmem:[#allocation3 + $0x138] sm:$0xff] %v2528
          %2657 = vst [vmem:[#allocation3 + $0x140] sm:$0xff] %v2529
          %2658 = vst [vmem:[#allocation3 + $0x148] sm:$0xff] %v2530
          %2659 = vst [vmem:[#allocation3 + $0x150] sm:$0xff] %v2531
          %2660 = vst [vmem:[#allocation3 + $0x158] sm:$0xff] %v2532
          %2661 = vst [vmem:[#allocation3 + $0x160] sm:$0xff] %v2533
          %2662 = vst [vmem:[#allocation3 + $0x168] sm:$0xff] %v2534
          %2663 = vst [vmem:[#allocation3 + $0x170] sm:$0xff] %v2535
          %2664 = vst [vmem:[#allocation3 + $0x178] sm:$0xff] %v2536
          %2665 = vst [vmem:[#allocation3 + $0x180] sm:$0xff] %v2537
          %2666 = vst [vmem:[#allocation3 + $0x188] sm:$0xff] %v2538
          %2667 = vst [vmem:[#allocation3 + $0x190] sm:$0xff] %v2539
          %2668 = vst [vmem:[#allocation3 + $0x198] sm:$0xff] %v2540
          %2669 = vst [vmem:[#allocation3 + $0x1a0] sm:$0xff] %v2541
          %2670 = vst [vmem:[#allocation3 + $0x1a8] sm:$0xff] %v2542
          %2671 = vst [vmem:[#allocation3 + $0x1b0] sm:$0xff] %v2543
          %2672 = vst [vmem:[#allocation3 + $0x1b8] sm:$0xff] %v2544
          %2673 = vst [vmem:[#allocation3 + $0x1c0] sm:$0xff] %v2545
          %2674 = vst [vmem:[#allocation3 + $0x1c8] sm:$0xff] %v2546
          %2675 = vst [vmem:[#allocation3 + $0x1d0] sm:$0xff] %v2547
          %2676 = vst [vmem:[#allocation3 + $0x1d8] sm:$0xff] %v2548
          %2677 = vst [vmem:[#allocation3 + $0x1e0] sm:$0xff] %v2549
          %2678 = vst [vmem:[#allocation3 + $0x1e8] sm:$0xff] %v2550
          %2679 = vst [vmem:[#allocation3 + $0x1f0] sm:$0xff] %v2551
          %2680 = vst [vmem:[#allocation3 + $0x1f8] sm:$0xff] %v2552
          %2681 = vst [vmem:[#allocation3 + $0x200] sm:$0xff] %v2553
          %2682 = vst [vmem:[#allocation3 + $0x208] sm:$0xff] %v2554
          %2683 = vst [vmem:[#allocation3 + $0x210] sm:$0xff] %v2555
          %2684 = vst [vmem:[#allocation3 + $0x218] sm:$0xff] %v2556
          %2685 = vst [vmem:[#allocation3 + $0x220] sm:$0xff] %v2557
          %2686 = vst [vmem:[#allocation3 + $0x228] sm:$0xff] %v2558
          %2687 = vst [vmem:[#allocation3 + $0x230] sm:$0xff] %v2559
          %2688 = vst [vmem:[#allocation3 + $0x238] sm:$0xff] %v2560
          %2689 = vst [vmem:[#allocation3 + $0x240] sm:$0xff] %v2561
          %2690 = vst [vmem:[#allocation3 + $0x248] sm:$0xff] %v2562
          %2691 = vst [vmem:[#allocation3 + $0x250] sm:$0xff] %v2563
          %2692 = vst [vmem:[#allocation3 + $0x258] sm:$0xff] %v2564
          %2693 = vst [vmem:[#allocation3 + $0x260] sm:$0xff] %v2565
          %2694 = vst [vmem:[#allocation3 + $0x268] sm:$0xff] %v2566
          %2695 = vst [vmem:[#allocation3 + $0x270] sm:$0xff] %v2567
          %2696 = vst [vmem:[#allocation3 + $0x278] sm:$0xff] %v2568
          %2697 = vst [vmem:[#allocation3 + $0x280] sm:$0xff] %v2569
          %2698 = vst [vmem:[#allocation3 + $0x288] sm:$0xff] %v2570
          %2699 = vst [vmem:[#allocation3 + $0x290] sm:$0xff] %v2571
          %2700 = vst [vmem:[#allocation3 + $0x298] sm:$0xff] %v2572
          %2701 = vst [vmem:[#allocation3 + $0x2a0] sm:$0xff] %v2573
          %2702 = vst [vmem:[#allocation3 + $0x2a8] sm:$0xff] %v2574
          %2703 = vst [vmem:[#allocation3 + $0x2b0] sm:$0xff] %v2575
          %2704 = vst [vmem:[#allocation3 + $0x2b8] sm:$0xff] %v2576
          %2705 = vst [vmem:[#allocation3 + $0x2c0] sm:$0xff] %v2577
          %2706 = vst [vmem:[#allocation3 + $0x2c8] sm:$0xff] %v2578
          %2707 = vst [vmem:[#allocation3 + $0x2d0] sm:$0xff] %v2579
          %2708 = vst [vmem:[#allocation3 + $0x2d8] sm:$0xff] %v2580
          %2709 = vst [vmem:[#allocation3 + $0x2e0] sm:$0xff] %v2581
          %2710 = vst [vmem:[#allocation3 + $0x2e8] sm:$0xff] %v2582
          %2711 = vst [vmem:[#allocation3 + $0x2f0] sm:$0xff] %v2583
          %2712 = vst [vmem:[#allocation3 + $0x2f8] sm:$0xff] %v2584
          %2713 = vst [vmem:[#allocation3 + $0x300] sm:$0xff] %v2585
          %2714 = vst [vmem:[#allocation3 + $0x308] sm:$0xff] %v2586
          %2715 = vst [vmem:[#allocation3 + $0x310] sm:$0xff] %v2587
          %2716 = vst [vmem:[#allocation3 + $0x318] sm:$0xff] %v2588
          %2717 = vst [vmem:[#allocation3 + $0x320] sm:$0xff] %v2589
          %2718 = vst [vmem:[#allocation3 + $0x328] sm:$0xff] %v2590
          %2719 = vst [vmem:[#allocation3 + $0x330] sm:$0xff] %v2591
          %2720 = vst [vmem:[#allocation3 + $0x338] sm:$0xff] %v2592
          %2721 = vst [vmem:[#allocation3 + $0x340] sm:$0xff] %v2593
          %2722 = vst [vmem:[#allocation3 + $0x348] sm:$0xff] %v2594
          %2723 = vst [vmem:[#allocation3 + $0x350] sm:$0xff] %v2595
          %2724 = vst [vmem:[#allocation3 + $0x358] sm:$0xff] %v2596
          %2725 = vst [vmem:[#allocation3 + $0x360] sm:$0xff] %v2597
          %2726 = vst [vmem:[#allocation3 + $0x368] sm:$0xff] %v2598
          %2727 = vst [vmem:[#allocation3 + $0x370] sm:$0xff] %v2599
          %2728 = vst [vmem:[#allocation3 + $0x378] sm:$0xff] %v2600
          %2729 = vst [vmem:[#allocation3 + $0x380] sm:$0xff] %v2601
          %2730 = vst [vmem:[#allocation3 + $0x388] sm:$0xff] %v2602
          %2731 = vst [vmem:[#allocation3 + $0x390] sm:$0xff] %v2603
          %2732 = vst [vmem:[#allocation3 + $0x398] sm:$0xff] %v2604
          %2733 = vst [vmem:[#allocation3 + $0x3a0] sm:$0xff] %v2605
          %2734 = vst [vmem:[#allocation3 + $0x3a8] sm:$0xff] %v2606
          %2735 = vst [vmem:[#allocation3 + $0x3b0] sm:$0xff] %v2607
          %2736 = vst [vmem:[#allocation3 + $0x3b8] sm:$0xff] %v2608
          %2737 = vst [vmem:[#allocation3 + $0x3c0] sm:$0xff] %v2609
          %2738 = vst [vmem:[#allocation3 + $0x3c8] sm:$0xff] %v2610
          %2739 = vst [vmem:[#allocation3 + $0x3d0] sm:$0xff] %v2611
          %2740 = vst [vmem:[#allocation3 + $0x3d8] sm:$0xff] %v2612
          %2741 = vst [vmem:[#allocation3 + $0x3e0] sm:$0xff] %v2613
          %2742 = vst [vmem:[#allocation3 + $0x3e8] sm:$0xff] %v2614
          %2743 = vst [vmem:[#allocation3 + $0x3f0] sm:$0xff] %v2615
          %2744 = vst [vmem:[#allocation3 + $0x3f8] sm:$0xff] %v2616
          %v2745 = vmax.f32 %v1849, %v1593
          %v2746 = vmax.f32 %v1850, %v1594
          %v2747 = vmax.f32 %v1851, %v1595
          %v2748 = vmax.f32 %v1852, %v1596
          %v2749 = vmax.f32 %v1853, %v1597
          %v2750 = vmax.f32 %v1854, %v1598
          %v2751 = vmax.f32 %v1855, %v1599
          %v2752 = vmax.f32 %v1856, %v1600
          %v2753 = vmax.f32 %v1857, %v1601
          %v2754 = vmax.f32 %v1858, %v1602
          %v2755 = vmax.f32 %v1859, %v1603
          %v2756 = vmax.f32 %v1860, %v1604
          %v2757 = vmax.f32 %v1861, %v1605
          %v2758 = vmax.f32 %v1862, %v1606
          %v2759 = vmax.f32 %v1863, %v1607
          %v2760 = vmax.f32 %v1864, %v1608
          %v2761 = vmax.f32 %v1865, %v1609
          %v2762 = vmax.f32 %v1866, %v1610
          %v2763 = vmax.f32 %v1867, %v1611
          %v2764 = vmax.f32 %v1868, %v1612
          %v2765 = vmax.f32 %v1869, %v1613
          %v2766 = vmax.f32 %v1870, %v1614
          %v2767 = vmax.f32 %v1871, %v1615
          %v2768 = vmax.f32 %v1872, %v1616
          %v2769 = vmax.f32 %v1873, %v1617
          %v2770 = vmax.f32 %v1874, %v1618
          %v2771 = vmax.f32 %v1875, %v1619
          %v2772 = vmax.f32 %v1876, %v1620
          %v2773 = vmax.f32 %v1877, %v1621
          %v2774 = vmax.f32 %v1878, %v1622
          %v2775 = vmax.f32 %v1879, %v1623
          %v2776 = vmax.f32 %v1880, %v1624
          %v2777 = vmax.f32 %v1881, %v1625
          %v2778 = vmax.f32 %v1882, %v1626
          %v2779 = vmax.f32 %v1883, %v1627
          %v2780 = vmax.f32 %v1884, %v1628
          %v2781 = vmax.f32 %v1885, %v1629
          %v2782 = vmax.f32 %v1886, %v1630
          %v2783 = vmax.f32 %v1887, %v1631
          %v2784 = vmax.f32 %v1888, %v1632
          %v2785 = vmax.f32 %v1889, %v1633
          %v2786 = vmax.f32 %v1890, %v1634
          %v2787 = vmax.f32 %v1891, %v1635
          %v2788 = vmax.f32 %v1892, %v1636
          %v2789 = vmax.f32 %v1893, %v1637
          %v2790 = vmax.f32 %v1894, %v1638
          %v2791 = vmax.f32 %v1895, %v1639
          %v2792 = vmax.f32 %v1896, %v1640
          %v2793 = vmax.f32 %v1897, %v1641
          %v2794 = vmax.f32 %v1898, %v1642
          %v2795 = vmax.f32 %v1899, %v1643
          %v2796 = vmax.f32 %v1900, %v1644
          %v2797 = vmax.f32 %v1901, %v1645
          %v2798 = vmax.f32 %v1902, %v1646
          %v2799 = vmax.f32 %v1903, %v1647
          %v2800 = vmax.f32 %v1904, %v1648
          %v2801 = vmax.f32 %v1905, %v1649
          %v2802 = vmax.f32 %v1906, %v1650
          %v2803 = vmax.f32 %v1907, %v1651
          %v2804 = vmax.f32 %v1908, %v1652
          %v2805 = vmax.f32 %v1909, %v1653
          %v2806 = vmax.f32 %v1910, %v1654
          %v2807 = vmax.f32 %v1911, %v1655
          %v2808 = vmax.f32 %v1912, %v1656
          %v2809 = vmax.f32 %v1913, %v1657
          %v2810 = vmax.f32 %v1914, %v1658
          %v2811 = vmax.f32 %v1915, %v1659
          %v2812 = vmax.f32 %v1916, %v1660
          %v2813 = vmax.f32 %v1917, %v1661
          %v2814 = vmax.f32 %v1918, %v1662
          %v2815 = vmax.f32 %v1919, %v1663
          %v2816 = vmax.f32 %v1920, %v1664
          %v2817 = vmax.f32 %v1921, %v1665
          %v2818 = vmax.f32 %v1922, %v1666
          %v2819 = vmax.f32 %v1923, %v1667
          %v2820 = vmax.f32 %v1924, %v1668
          %v2821 = vmax.f32 %v1925, %v1669
          %v2822 = vmax.f32 %v1926, %v1670
          %v2823 = vmax.f32 %v1927, %v1671
          %v2824 = vmax.f32 %v1928, %v1672
          %v2825 = vmax.f32 %v1929, %v1673
          %v2826 = vmax.f32 %v1930, %v1674
          %v2827 = vmax.f32 %v1931, %v1675
          %v2828 = vmax.f32 %v1932, %v1676
          %v2829 = vmax.f32 %v1933, %v1677
          %v2830 = vmax.f32 %v1934, %v1678
          %v2831 = vmax.f32 %v1935, %v1679
          %v2832 = vmax.f32 %v1936, %v1680
          %v2833 = vmax.f32 %v1937, %v1681
          %v2834 = vmax.f32 %v1938, %v1682
          %v2835 = vmax.f32 %v1939, %v1683
          %v2836 = vmax.f32 %v1940, %v1684
          %v2837 = vmax.f32 %v1941, %v1685
          %v2838 = vmax.f32 %v1942, %v1686
          %v2839 = vmax.f32 %v1943, %v1687
          %v2840 = vmax.f32 %v1944, %v1688
          %v2841 = vmax.f32 %v1945, %v1689
          %v2842 = vmax.f32 %v1946, %v1690
          %v2843 = vmax.f32 %v1947, %v1691
          %v2844 = vmax.f32 %v1948, %v1692
          %v2845 = vmax.f32 %v1949, %v1693
          %v2846 = vmax.f32 %v1950, %v1694
          %v2847 = vmax.f32 %v1951, %v1695
          %v2848 = vmax.f32 %v1952, %v1696
          %v2849 = vmax.f32 %v1953, %v1697
          %v2850 = vmax.f32 %v1954, %v1698
          %v2851 = vmax.f32 %v1955, %v1699
          %v2852 = vmax.f32 %v1956, %v1700
          %v2853 = vmax.f32 %v1957, %v1701
          %v2854 = vmax.f32 %v1958, %v1702
          %v2855 = vmax.f32 %v1959, %v1703
          %v2856 = vmax.f32 %v1960, %v1704
          %v2857 = vmax.f32 %v1961, %v1705
          %v2858 = vmax.f32 %v1962, %v1706
          %v2859 = vmax.f32 %v1963, %v1707
          %v2860 = vmax.f32 %v1964, %v1708
          %v2861 = vmax.f32 %v1965, %v1709
          %v2862 = vmax.f32 %v1966, %v1710
          %v2863 = vmax.f32 %v1967, %v1711
          %v2864 = vmax.f32 %v1968, %v1712
          %v2865 = vmax.f32 %v1969, %v1713
          %v2866 = vmax.f32 %v1970, %v1714
          %v2867 = vmax.f32 %v1971, %v1715
          %v2868 = vmax.f32 %v1972, %v1716
          %v2869 = vmax.f32 %v1973, %v1717
          %v2870 = vmax.f32 %v1974, %v1718
          %v2871 = vmax.f32 %v1975, %v1719
          %v2872 = vmax.f32 %v1976, %v1720
          %v2873 = vmin.f32 %v1977, %v2745
          %v2874 = vmin.f32 %v1978, %v2746
          %v2875 = vmin.f32 %v1979, %v2747
          %v2876 = vmin.f32 %v1980, %v2748
          %v2877 = vmin.f32 %v1981, %v2749
          %v2878 = vmin.f32 %v1982, %v2750
          %v2879 = vmin.f32 %v1983, %v2751
          %v2880 = vmin.f32 %v1984, %v2752
          %v2881 = vmin.f32 %v1985, %v2753
          %v2882 = vmin.f32 %v1986, %v2754
          %v2883 = vmin.f32 %v1987, %v2755
          %v2884 = vmin.f32 %v1988, %v2756
          %v2885 = vmin.f32 %v1989, %v2757
          %v2886 = vmin.f32 %v1990, %v2758
          %v2887 = vmin.f32 %v1991, %v2759
          %v2888 = vmin.f32 %v1992, %v2760
          %v2889 = vmin.f32 %v1993, %v2761
          %v2890 = vmin.f32 %v1994, %v2762
          %v2891 = vmin.f32 %v1995, %v2763
          %v2892 = vmin.f32 %v1996, %v2764
          %v2893 = vmin.f32 %v1997, %v2765
          %v2894 = vmin.f32 %v1998, %v2766
          %v2895 = vmin.f32 %v1999, %v2767
          %v2896 = vmin.f32 %v2000, %v2768
          %v2897 = vmin.f32 %v2001, %v2769
          %v2898 = vmin.f32 %v2002, %v2770
          %v2899 = vmin.f32 %v2003, %v2771
          %v2900 = vmin.f32 %v2004, %v2772
          %v2901 = vmin.f32 %v2005, %v2773
          %v2902 = vmin.f32 %v2006, %v2774
          %v2903 = vmin.f32 %v2007, %v2775
          %v2904 = vmin.f32 %v2008, %v2776
          %v2905 = vmin.f32 %v2009, %v2777
          %v2906 = vmin.f32 %v2010, %v2778
          %v2907 = vmin.f32 %v2011, %v2779
          %v2908 = vmin.f32 %v2012, %v2780
          %v2909 = vmin.f32 %v2013, %v2781
          %v2910 = vmin.f32 %v2014, %v2782
          %v2911 = vmin.f32 %v2015, %v2783
          %v2912 = vmin.f32 %v2016, %v2784
          %v2913 = vmin.f32 %v2017, %v2785
          %v2914 = vmin.f32 %v2018, %v2786
          %v2915 = vmin.f32 %v2019, %v2787
          %v2916 = vmin.f32 %v2020, %v2788
          %v2917 = vmin.f32 %v2021, %v2789
          %v2918 = vmin.f32 %v2022, %v2790
          %v2919 = vmin.f32 %v2023, %v2791
          %v2920 = vmin.f32 %v2024, %v2792
          %v2921 = vmin.f32 %v2025, %v2793
          %v2922 = vmin.f32 %v2026, %v2794
          %v2923 = vmin.f32 %v2027, %v2795
          %v2924 = vmin.f32 %v2028, %v2796
          %v2925 = vmin.f32 %v2029, %v2797
          %v2926 = vmin.f32 %v2030, %v2798
          %v2927 = vmin.f32 %v2031, %v2799
          %v2928 = vmin.f32 %v2032, %v2800
          %v2929 = vmin.f32 %v2033, %v2801
          %v2930 = vmin.f32 %v2034, %v2802
          %v2931 = vmin.f32 %v2035, %v2803
          %v2932 = vmin.f32 %v2036, %v2804
          %v2933 = vmin.f32 %v2037, %v2805
          %v2934 = vmin.f32 %v2038, %v2806
          %v2935 = vmin.f32 %v2039, %v2807
          %v2936 = vmin.f32 %v2040, %v2808
          %v2937 = vmin.f32 %v2041, %v2809
          %v2938 = vmin.f32 %v2042, %v2810
          %v2939 = vmin.f32 %v2043, %v2811
          %v2940 = vmin.f32 %v2044, %v2812
          %v2941 = vmin.f32 %v2045, %v2813
          %v2942 = vmin.f32 %v2046, %v2814
          %v2943 = vmin.f32 %v2047, %v2815
          %v2944 = vmin.f32 %v2048, %v2816
          %v2945 = vmin.f32 %v2049, %v2817
          %v2946 = vmin.f32 %v2050, %v2818
          %v2947 = vmin.f32 %v2051, %v2819
          %v2948 = vmin.f32 %v2052, %v2820
          %v2949 = vmin.f32 %v2053, %v2821
          %v2950 = vmin.f32 %v2054, %v2822
          %v2951 = vmin.f32 %v2055, %v2823
          %v2952 = vmin.f32 %v2056, %v2824
          %v2953 = vmin.f32 %v2057, %v2825
          %v2954 = vmin.f32 %v2058, %v2826
          %v2955 = vmin.f32 %v2059, %v2827
          %v2956 = vmin.f32 %v2060, %v2828
          %v2957 = vmin.f32 %v2061, %v2829
          %v2958 = vmin.f32 %v2062, %v2830
          %v2959 = vmin.f32 %v2063, %v2831
          %v2960 = vmin.f32 %v2064, %v2832
          %v2961 = vmin.f32 %v2065, %v2833
          %v2962 = vmin.f32 %v2066, %v2834
          %v2963 = vmin.f32 %v2067, %v2835
          %v2964 = vmin.f32 %v2068, %v2836
          %v2965 = vmin.f32 %v2069, %v2837
          %v2966 = vmin.f32 %v2070, %v2838
          %v2967 = vmin.f32 %v2071, %v2839
          %v2968 = vmin.f32 %v2072, %v2840
          %v2969 = vmin.f32 %v2073, %v2841
          %v2970 = vmin.f32 %v2074, %v2842
          %v2971 = vmin.f32 %v2075, %v2843
          %v2972 = vmin.f32 %v2076, %v2844
          %v2973 = vmin.f32 %v2077, %v2845
          %v2974 = vmin.f32 %v2078, %v2846
          %v2975 = vmin.f32 %v2079, %v2847
          %v2976 = vmin.f32 %v2080, %v2848
          %v2977 = vmin.f32 %v2081, %v2849
          %v2978 = vmin.f32 %v2082, %v2850
          %v2979 = vmin.f32 %v2083, %v2851
          %v2980 = vmin.f32 %v2084, %v2852
          %v2981 = vmin.f32 %v2085, %v2853
          %v2982 = vmin.f32 %v2086, %v2854
          %v2983 = vmin.f32 %v2087, %v2855
          %v2984 = vmin.f32 %v2088, %v2856
          %v2985 = vmin.f32 %v2089, %v2857
          %v2986 = vmin.f32 %v2090, %v2858
          %v2987 = vmin.f32 %v2091, %v2859
          %v2988 = vmin.f32 %v2092, %v2860
          %v2989 = vmin.f32 %v2093, %v2861
          %v2990 = vmin.f32 %v2094, %v2862
          %v2991 = vmin.f32 %v2095, %v2863
          %v2992 = vmin.f32 %v2096, %v2864
          %v2993 = vmin.f32 %v2097, %v2865
          %v2994 = vmin.f32 %v2098, %v2866
          %v2995 = vmin.f32 %v2099, %v2867
          %v2996 = vmin.f32 %v2100, %v2868
          %v2997 = vmin.f32 %v2101, %v2869
          %v2998 = vmin.f32 %v2102, %v2870
          %v2999 = vmin.f32 %v2103, %v2871
          %v3000 = vmin.f32 %v2104, %v2872
          %3001 = vst [vmem:[#allocation4] sm:$0xff] %v2873
          %3002 = vst [vmem:[#allocation4 + $0x8] sm:$0xff] %v2874
          %3003 = vst [vmem:[#allocation4 + $0x10] sm:$0xff] %v2875
          %3004 = vst [vmem:[#allocation4 + $0x18] sm:$0xff] %v2876
          %3005 = vst [vmem:[#allocation4 + $0x20] sm:$0xff] %v2877
          %3006 = vst [vmem:[#allocation4 + $0x28] sm:$0xff] %v2878
          %3007 = vst [vmem:[#allocation4 + $0x30] sm:$0xff] %v2879
          %3008 = vst [vmem:[#allocation4 + $0x38] sm:$0xff] %v2880
          %3009 = vst [vmem:[#allocation4 + $0x40] sm:$0xff] %v2881
          %3010 = vst [vmem:[#allocation4 + $0x48] sm:$0xff] %v2882
          %3011 = vst [vmem:[#allocation4 + $0x50] sm:$0xff] %v2883
          %3012 = vst [vmem:[#allocation4 + $0x58] sm:$0xff] %v2884
          %3013 = vst [vmem:[#allocation4 + $0x60] sm:$0xff] %v2885
          %3014 = vst [vmem:[#allocation4 + $0x68] sm:$0xff] %v2886
          %3015 = vst [vmem:[#allocation4 + $0x70] sm:$0xff] %v2887
          %3016 = vst [vmem:[#allocation4 + $0x78] sm:$0xff] %v2888
          %3017 = vst [vmem:[#allocation4 + $0x80] sm:$0xff] %v2889
          %3018 = vst [vmem:[#allocation4 + $0x88] sm:$0xff] %v2890
          %3019 = vst [vmem:[#allocation4 + $0x90] sm:$0xff] %v2891
          %3020 = vst [vmem:[#allocation4 + $0x98] sm:$0xff] %v2892
          %3021 = vst [vmem:[#allocation4 + $0xa0] sm:$0xff] %v2893
          %3022 = vst [vmem:[#allocation4 + $0xa8] sm:$0xff] %v2894
          %3023 = vst [vmem:[#allocation4 + $0xb0] sm:$0xff] %v2895
          %3024 = vst [vmem:[#allocation4 + $0xb8] sm:$0xff] %v2896
          %3025 = vst [vmem:[#allocation4 + $0xc0] sm:$0xff] %v2897
          %3026 = vst [vmem:[#allocation4 + $0xc8] sm:$0xff] %v2898
          %3027 = vst [vmem:[#allocation4 + $0xd0] sm:$0xff] %v2899
          %3028 = vst [vmem:[#allocation4 + $0xd8] sm:$0xff] %v2900
          %3029 = vst [vmem:[#allocation4 + $0xe0] sm:$0xff] %v2901
          %3030 = vst [vmem:[#allocation4 + $0xe8] sm:$0xff] %v2902
          %3031 = vst [vmem:[#allocation4 + $0xf0] sm:$0xff] %v2903
          %3032 = vst [vmem:[#allocation4 + $0xf8] sm:$0xff] %v2904
          %3033 = vst [vmem:[#allocation4 + $0x100] sm:$0xff] %v2905
          %3034 = vst [vmem:[#allocation4 + $0x108] sm:$0xff] %v2906
          %3035 = vst [vmem:[#allocation4 + $0x110] sm:$0xff] %v2907
          %3036 = vst [vmem:[#allocation4 + $0x118] sm:$0xff] %v2908
          %3037 = vst [vmem:[#allocation4 + $0x120] sm:$0xff] %v2909
          %3038 = vst [vmem:[#allocation4 + $0x128] sm:$0xff] %v2910
          %3039 = vst [vmem:[#allocation4 + $0x130] sm:$0xff] %v2911
          %3040 = vst [vmem:[#allocation4 + $0x138] sm:$0xff] %v2912
          %3041 = vst [vmem:[#allocation4 + $0x140] sm:$0xff] %v2913
          %3042 = vst [vmem:[#allocation4 + $0x148] sm:$0xff] %v2914
          %3043 = vst [vmem:[#allocation4 + $0x150] sm:$0xff] %v2915
          %3044 = vst [vmem:[#allocation4 + $0x158] sm:$0xff] %v2916
          %3045 = vst [vmem:[#allocation4 + $0x160] sm:$0xff] %v2917
          %3046 = vst [vmem:[#allocation4 + $0x168] sm:$0xff] %v2918
          %3047 = vst [vmem:[#allocation4 + $0x170] sm:$0xff] %v2919
          %3048 = vst [vmem:[#allocation4 + $0x178] sm:$0xff] %v2920
          %3049 = vst [vmem:[#allocation4 + $0x180] sm:$0xff] %v2921
          %3050 = vst [vmem:[#allocation4 + $0x188] sm:$0xff] %v2922
          %3051 = vst [vmem:[#allocation4 + $0x190] sm:$0xff] %v2923
          %3052 = vst [vmem:[#allocation4 + $0x198] sm:$0xff] %v2924
          %3053 = vst [vmem:[#allocation4 + $0x1a0] sm:$0xff] %v2925
          %3054 = vst [vmem:[#allocation4 + $0x1a8] sm:$0xff] %v2926
          %3055 = vst [vmem:[#allocation4 + $0x1b0] sm:$0xff] %v2927
          %3056 = vst [vmem:[#allocation4 + $0x1b8] sm:$0xff] %v2928
          %3057 = vst [vmem:[#allocation4 + $0x1c0] sm:$0xff] %v2929
          %3058 = vst [vmem:[#allocation4 + $0x1c8] sm:$0xff] %v2930
          %3059 = vst [vmem:[#allocation4 + $0x1d0] sm:$0xff] %v2931
          %3060 = vst [vmem:[#allocation4 + $0x1d8] sm:$0xff] %v2932
          %3061 = vst [vmem:[#allocation4 + $0x1e0] sm:$0xff] %v2933
          %3062 = vst [vmem:[#allocation4 + $0x1e8] sm:$0xff] %v2934
          %3063 = vst [vmem:[#allocation4 + $0x1f0] sm:$0xff] %v2935
          %3064 = vst [vmem:[#allocation4 + $0x1f8] sm:$0xff] %v2936
          %3065 = vst [vmem:[#allocation4 + $0x200] sm:$0xff] %v2937
          %3066 = vst [vmem:[#allocation4 + $0x208] sm:$0xff] %v2938
          %3067 = vst [vmem:[#allocation4 + $0x210] sm:$0xff] %v2939
          %3068 = vst [vmem:[#allocation4 + $0x218] sm:$0xff] %v2940
          %3069 = vst [vmem:[#allocation4 + $0x220] sm:$0xff] %v2941
          %3070 = vst [vmem:[#allocation4 + $0x228] sm:$0xff] %v2942
          %3071 = vst [vmem:[#allocation4 + $0x230] sm:$0xff] %v2943
          %3072 = vst [vmem:[#allocation4 + $0x238] sm:$0xff] %v2944
          %3073 = vst [vmem:[#allocation4 + $0x240] sm:$0xff] %v2945
          %3074 = vst [vmem:[#allocation4 + $0x248] sm:$0xff] %v2946
          %3075 = vst [vmem:[#allocation4 + $0x250] sm:$0xff] %v2947
          %3076 = vst [vmem:[#allocation4 + $0x258] sm:$0xff] %v2948
          %3077 = vst [vmem:[#allocation4 + $0x260] sm:$0xff] %v2949
          %3078 = vst [vmem:[#allocation4 + $0x268] sm:$0xff] %v2950
          %3079 = vst [vmem:[#allocation4 + $0x270] sm:$0xff] %v2951
          %3080 = vst [vmem:[#allocation4 + $0x278] sm:$0xff] %v2952
          %3081 = vst [vmem:[#allocation4 + $0x280] sm:$0xff] %v2953
          %3082 = vst [vmem:[#allocation4 + $0x288] sm:$0xff] %v2954
          %3083 = vst [vmem:[#allocation4 + $0x290] sm:$0xff] %v2955
          %3084 = vst [vmem:[#allocation4 + $0x298] sm:$0xff] %v2956
          %3085 = vst [vmem:[#allocation4 + $0x2a0] sm:$0xff] %v2957
          %3086 = vst [vmem:[#allocation4 + $0x2a8] sm:$0xff] %v2958
          %3087 = vst [vmem:[#allocation4 + $0x2b0] sm:$0xff] %v2959
          %3088 = vst [vmem:[#allocation4 + $0x2b8] sm:$0xff] %v2960
          %3089 = vst [vmem:[#allocation4 + $0x2c0] sm:$0xff] %v2961
          %3090 = vst [vmem:[#allocation4 + $0x2c8] sm:$0xff] %v2962
          %3091 = vst [vmem:[#allocation4 + $0x2d0] sm:$0xff] %v2963
          %3092 = vst [vmem:[#allocation4 + $0x2d8] sm:$0xff] %v2964
          %3093 = vst [vmem:[#allocation4 + $0x2e0] sm:$0xff] %v2965
          %3094 = vst [vmem:[#allocation4 + $0x2e8] sm:$0xff] %v2966
          %3095 = vst [vmem:[#allocation4 + $0x2f0] sm:$0xff] %v2967
          %3096 = vst [vmem:[#allocation4 + $0x2f8] sm:$0xff] %v2968
          %3097 = vst [vmem:[#allocation4 + $0x300] sm:$0xff] %v2969
          %3098 = vst [vmem:[#allocation4 + $0x308] sm:$0xff] %v2970
          %3099 = vst [vmem:[#allocation4 + $0x310] sm:$0xff] %v2971
          %3100 = vst [vmem:[#allocation4 + $0x318] sm:$0xff] %v2972
          %3101 = vst [vmem:[#allocation4 + $0x320] sm:$0xff] %v2973
          %3102 = vst [vmem:[#allocation4 + $0x328] sm:$0xff] %v2974
          %3103 = vst [vmem:[#allocation4 + $0x330] sm:$0xff] %v2975
          %3104 = vst [vmem:[#allocation4 + $0x338] sm:$0xff] %v2976
          %3105 = vst [vmem:[#allocation4 + $0x340] sm:$0xff] %v2977
          %3106 = vst [vmem:[#allocation4 + $0x348] sm:$0xff] %v2978
          %3107 = vst [vmem:[#allocation4 + $0x350] sm:$0xff] %v2979
          %3108 = vst [vmem:[#allocation4 + $0x358] sm:$0xff] %v2980
          %3109 = vst [vmem:[#allocation4 + $0x360] sm:$0xff] %v2981
          %3110 = vst [vmem:[#allocation4 + $0x368] sm:$0xff] %v2982
          %3111 = vst [vmem:[#allocation4 + $0x370] sm:$0xff] %v2983
          %3112 = vst [vmem:[#allocation4 + $0x378] sm:$0xff] %v2984
          %3113 = vst [vmem:[#allocation4 + $0x380] sm:$0xff] %v2985
          %3114 = vst [vmem:[#allocation4 + $0x388] sm:$0xff] %v2986
          %3115 = vst [vmem:[#allocation4 + $0x390] sm:$0xff] %v2987
          %3116 = vst [vmem:[#allocation4 + $0x398] sm:$0xff] %v2988
          %3117 = vst [vmem:[#allocation4 + $0x3a0] sm:$0xff] %v2989
          %3118 = vst [vmem:[#allocation4 + $0x3a8] sm:$0xff] %v2990
          %3119 = vst [vmem:[#allocation4 + $0x3b0] sm:$0xff] %v2991
          %3120 = vst [vmem:[#allocation4 + $0x3b8] sm:$0xff] %v2992
          %3121 = vst [vmem:[#allocation4 + $0x3c0] sm:$0xff] %v2993
          %3122 = vst [vmem:[#allocation4 + $0x3c8] sm:$0xff] %v2994
          %3123 = vst [vmem:[#allocation4 + $0x3d0] sm:$0xff] %v2995
          %3124 = vst [vmem:[#allocation4 + $0x3d8] sm:$0xff] %v2996
          %3125 = vst [vmem:[#allocation4 + $0x3e0] sm:$0xff] %v2997
          %3126 = vst [vmem:[#allocation4 + $0x3e8] sm:$0xff] %v2998
          %3127 = vst [vmem:[#allocation4 + $0x3f0] sm:$0xff] %v2999
          %3128 = vst [vmem:[#allocation4 + $0x3f8] sm:$0xff] %v3000
        $region36: #{tpu_custom_call.1} parent=27 // pred_fallthru
          _
        %p3129 = pneg %p1386
        // Predicated region
        $region37: #{tpu_custom_call.1} parent=27 // pred_check
          _
        $region38: #{tpu_custom_call.1} parent=27 // pred_check_branch
          %3131 = sbr.rel (%p1386) target = $region40
        $region39: #{tpu_custom_call.1} parent=27 // pred_region
          %v3132 = vld [vmem:[#allocation2] sm:$0xff]
          %v3133 = vld [vmem:[#allocation2 + $0x8] sm:$0xff]
          %v3134 = vld [vmem:[#allocation2 + $0x10] sm:$0xff]
          %v3135 = vld [vmem:[#allocation2 + $0x18] sm:$0xff]
          %v3136 = vld [vmem:[#allocation2 + $0x20] sm:$0xff]
          %v3137 = vld [vmem:[#allocation2 + $0x28] sm:$0xff]
          %v3138 = vld [vmem:[#allocation2 + $0x30] sm:$0xff]
          %v3139 = vld [vmem:[#allocation2 + $0x38] sm:$0xff]
          %v3140 = vld [vmem:[#allocation2 + $0x40] sm:$0xff]
          %v3141 = vld [vmem:[#allocation2 + $0x48] sm:$0xff]
          %v3142 = vld [vmem:[#allocation2 + $0x50] sm:$0xff]
          %v3143 = vld [vmem:[#allocation2 + $0x58] sm:$0xff]
          %v3144 = vld [vmem:[#allocation2 + $0x60] sm:$0xff]
          %v3145 = vld [vmem:[#allocation2 + $0x68] sm:$0xff]
          %v3146 = vld [vmem:[#allocation2 + $0x70] sm:$0xff]
          %v3147 = vld [vmem:[#allocation2 + $0x78] sm:$0xff]
          %v3148 = vld [vmem:[#allocation2 + $0x80] sm:$0xff]
          %v3149 = vld [vmem:[#allocation2 + $0x88] sm:$0xff]
          %v3150 = vld [vmem:[#allocation2 + $0x90] sm:$0xff]
          %v3151 = vld [vmem:[#allocation2 + $0x98] sm:$0xff]
          %v3152 = vld [vmem:[#allocation2 + $0xa0] sm:$0xff]
          %v3153 = vld [vmem:[#allocation2 + $0xa8] sm:$0xff]
          %v3154 = vld [vmem:[#allocation2 + $0xb0] sm:$0xff]
          %v3155 = vld [vmem:[#allocation2 + $0xb8] sm:$0xff]
          %v3156 = vld [vmem:[#allocation2 + $0xc0] sm:$0xff]
          %v3157 = vld [vmem:[#allocation2 + $0xc8] sm:$0xff]
          %v3158 = vld [vmem:[#allocation2 + $0xd0] sm:$0xff]
          %v3159 = vld [vmem:[#allocation2 + $0xd8] sm:$0xff]
          %v3160 = vld [vmem:[#allocation2 + $0xe0] sm:$0xff]
          %v3161 = vld [vmem:[#allocation2 + $0xe8] sm:$0xff]
          %v3162 = vld [vmem:[#allocation2 + $0xf0] sm:$0xff]
          %v3163 = vld [vmem:[#allocation2 + $0xf8] sm:$0xff]
          %v3164 = vld [vmem:[#allocation2 + $0x100] sm:$0xff]
          %v3165 = vld [vmem:[#allocation2 + $0x108] sm:$0xff]
          %v3166 = vld [vmem:[#allocation2 + $0x110] sm:$0xff]
          %v3167 = vld [vmem:[#allocation2 + $0x118] sm:$0xff]
          %v3168 = vld [vmem:[#allocation2 + $0x120] sm:$0xff]
          %v3169 = vld [vmem:[#allocation2 + $0x128] sm:$0xff]
          %v3170 = vld [vmem:[#allocation2 + $0x130] sm:$0xff]
          %v3171 = vld [vmem:[#allocation2 + $0x138] sm:$0xff]
          %v3172 = vld [vmem:[#allocation2 + $0x140] sm:$0xff]
          %v3173 = vld [vmem:[#allocation2 + $0x148] sm:$0xff]
          %v3174 = vld [vmem:[#allocation2 + $0x150] sm:$0xff]
          %v3175 = vld [vmem:[#allocation2 + $0x158] sm:$0xff]
          %v3176 = vld [vmem:[#allocation2 + $0x160] sm:$0xff]
          %v3177 = vld [vmem:[#allocation2 + $0x168] sm:$0xff]
          %v3178 = vld [vmem:[#allocation2 + $0x170] sm:$0xff]
          %v3179 = vld [vmem:[#allocation2 + $0x178] sm:$0xff]
          %v3180 = vld [vmem:[#allocation2 + $0x180] sm:$0xff]
          %v3181 = vld [vmem:[#allocation2 + $0x188] sm:$0xff]
          %v3182 = vld [vmem:[#allocation2 + $0x190] sm:$0xff]
          %v3183 = vld [vmem:[#allocation2 + $0x198] sm:$0xff]
          %v3184 = vld [vmem:[#allocation2 + $0x1a0] sm:$0xff]
          %v3185 = vld [vmem:[#allocation2 + $0x1a8] sm:$0xff]
          %v3186 = vld [vmem:[#allocation2 + $0x1b0] sm:$0xff]
          %v3187 = vld [vmem:[#allocation2 + $0x1b8] sm:$0xff]
          %v3188 = vld [vmem:[#allocation2 + $0x1c0] sm:$0xff]
          %v3189 = vld [vmem:[#allocation2 + $0x1c8] sm:$0xff]
          %v3190 = vld [vmem:[#allocation2 + $0x1d0] sm:$0xff]
          %v3191 = vld [vmem:[#allocation2 + $0x1d8] sm:$0xff]
          %v3192 = vld [vmem:[#allocation2 + $0x1e0] sm:$0xff]
          %v3193 = vld [vmem:[#allocation2 + $0x1e8] sm:$0xff]
          %v3194 = vld [vmem:[#allocation2 + $0x1f0] sm:$0xff]
          %v3195 = vld [vmem:[#allocation2 + $0x1f8] sm:$0xff]
          %v3196 = vld [vmem:[#allocation2 + $0x200] sm:$0xff]
          %v3197 = vld [vmem:[#allocation2 + $0x208] sm:$0xff]
          %v3198 = vld [vmem:[#allocation2 + $0x210] sm:$0xff]
          %v3199 = vld [vmem:[#allocation2 + $0x218] sm:$0xff]
          %v3200 = vld [vmem:[#allocation2 + $0x220] sm:$0xff]
          %v3201 = vld [vmem:[#allocation2 + $0x228] sm:$0xff]
          %v3202 = vld [vmem:[#allocation2 + $0x230] sm:$0xff]
          %v3203 = vld [vmem:[#allocation2 + $0x238] sm:$0xff]
          %v3204 = vld [vmem:[#allocation2 + $0x240] sm:$0xff]
          %v3205 = vld [vmem:[#allocation2 + $0x248] sm:$0xff]
          %v3206 = vld [vmem:[#allocation2 + $0x250] sm:$0xff]
          %v3207 = vld [vmem:[#allocation2 + $0x258] sm:$0xff]
          %v3208 = vld [vmem:[#allocation2 + $0x260] sm:$0xff]
          %v3209 = vld [vmem:[#allocation2 + $0x268] sm:$0xff]
          %v3210 = vld [vmem:[#allocation2 + $0x270] sm:$0xff]
          %v3211 = vld [vmem:[#allocation2 + $0x278] sm:$0xff]
          %v3212 = vld [vmem:[#allocation2 + $0x280] sm:$0xff]
          %v3213 = vld [vmem:[#allocation2 + $0x288] sm:$0xff]
          %v3214 = vld [vmem:[#allocation2 + $0x290] sm:$0xff]
          %v3215 = vld [vmem:[#allocation2 + $0x298] sm:$0xff]
          %v3216 = vld [vmem:[#allocation2 + $0x2a0] sm:$0xff]
          %v3217 = vld [vmem:[#allocation2 + $0x2a8] sm:$0xff]
          %v3218 = vld [vmem:[#allocation2 + $0x2b0] sm:$0xff]
          %v3219 = vld [vmem:[#allocation2 + $0x2b8] sm:$0xff]
          %v3220 = vld [vmem:[#allocation2 + $0x2c0] sm:$0xff]
          %v3221 = vld [vmem:[#allocation2 + $0x2c8] sm:$0xff]
          %v3222 = vld [vmem:[#allocation2 + $0x2d0] sm:$0xff]
          %v3223 = vld [vmem:[#allocation2 + $0x2d8] sm:$0xff]
          %v3224 = vld [vmem:[#allocation2 + $0x2e0] sm:$0xff]
          %v3225 = vld [vmem:[#allocation2 + $0x2e8] sm:$0xff]
          %v3226 = vld [vmem:[#allocation2 + $0x2f0] sm:$0xff]
          %v3227 = vld [vmem:[#allocation2 + $0x2f8] sm:$0xff]
          %v3228 = vld [vmem:[#allocation2 + $0x300] sm:$0xff]
          %v3229 = vld [vmem:[#allocation2 + $0x308] sm:$0xff]
          %v3230 = vld [vmem:[#allocation2 + $0x310] sm:$0xff]
          %v3231 = vld [vmem:[#allocation2 + $0x318] sm:$0xff]
          %v3232 = vld [vmem:[#allocation2 + $0x320] sm:$0xff]
          %v3233 = vld [vmem:[#allocation2 + $0x328] sm:$0xff]
          %v3234 = vld [vmem:[#allocation2 + $0x330] sm:$0xff]
          %v3235 = vld [vmem:[#allocation2 + $0x338] sm:$0xff]
          %v3236 = vld [vmem:[#allocation2 + $0x340] sm:$0xff]
          %v3237 = vld [vmem:[#allocation2 + $0x348] sm:$0xff]
          %v3238 = vld [vmem:[#allocation2 + $0x350] sm:$0xff]
          %v3239 = vld [vmem:[#allocation2 + $0x358] sm:$0xff]
          %v3240 = vld [vmem:[#allocation2 + $0x360] sm:$0xff]
          %v3241 = vld [vmem:[#allocation2 + $0x368] sm:$0xff]
          %v3242 = vld [vmem:[#allocation2 + $0x370] sm:$0xff]
          %v3243 = vld [vmem:[#allocation2 + $0x378] sm:$0xff]
          %v3244 = vld [vmem:[#allocation2 + $0x380] sm:$0xff]
          %v3245 = vld [vmem:[#allocation2 + $0x388] sm:$0xff]
          %v3246 = vld [vmem:[#allocation2 + $0x390] sm:$0xff]
          %v3247 = vld [vmem:[#allocation2 + $0x398] sm:$0xff]
          %v3248 = vld [vmem:[#allocation2 + $0x3a0] sm:$0xff]
          %v3249 = vld [vmem:[#allocation2 + $0x3a8] sm:$0xff]
          %v3250 = vld [vmem:[#allocation2 + $0x3b0] sm:$0xff]
          %v3251 = vld [vmem:[#allocation2 + $0x3b8] sm:$0xff]
          %v3252 = vld [vmem:[#allocation2 + $0x3c0] sm:$0xff]
          %v3253 = vld [vmem:[#allocation2 + $0x3c8] sm:$0xff]
          %v3254 = vld [vmem:[#allocation2 + $0x3d0] sm:$0xff]
          %v3255 = vld [vmem:[#allocation2 + $0x3d8] sm:$0xff]
          %v3256 = vld [vmem:[#allocation2 + $0x3e0] sm:$0xff]
          %v3257 = vld [vmem:[#allocation2 + $0x3e8] sm:$0xff]
          %v3258 = vld [vmem:[#allocation2 + $0x3f0] sm:$0xff]
          %v3259 = vld [vmem:[#allocation2 + $0x3f8] sm:$0xff]
          %v3260 = vld [vmem:[#allocation3] sm:$0xff]
          %v3261 = vld [vmem:[#allocation3 + $0x8] sm:$0xff]
          %v3262 = vld [vmem:[#allocation3 + $0x10] sm:$0xff]
          %v3263 = vld [vmem:[#allocation3 + $0x18] sm:$0xff]
          %v3264 = vld [vmem:[#allocation3 + $0x20] sm:$0xff]
          %v3265 = vld [vmem:[#allocation3 + $0x28] sm:$0xff]
          %v3266 = vld [vmem:[#allocation3 + $0x30] sm:$0xff]
          %v3267 = vld [vmem:[#allocation3 + $0x38] sm:$0xff]
          %v3268 = vld [vmem:[#allocation3 + $0x40] sm:$0xff]
          %v3269 = vld [vmem:[#allocation3 + $0x48] sm:$0xff]
          %v3270 = vld [vmem:[#allocation3 + $0x50] sm:$0xff]
          %v3271 = vld [vmem:[#allocation3 + $0x58] sm:$0xff]
          %v3272 = vld [vmem:[#allocation3 + $0x60] sm:$0xff]
          %v3273 = vld [vmem:[#allocation3 + $0x68] sm:$0xff]
          %v3274 = vld [vmem:[#allocation3 + $0x70] sm:$0xff]
          %v3275 = vld [vmem:[#allocation3 + $0x78] sm:$0xff]
          %v3276 = vld [vmem:[#allocation3 + $0x80] sm:$0xff]
          %v3277 = vld [vmem:[#allocation3 + $0x88] sm:$0xff]
          %v3278 = vld [vmem:[#allocation3 + $0x90] sm:$0xff]
          %v3279 = vld [vmem:[#allocation3 + $0x98] sm:$0xff]
          %v3280 = vld [vmem:[#allocation3 + $0xa0] sm:$0xff]
          %v3281 = vld [vmem:[#allocation3 + $0xa8] sm:$0xff]
          %v3282 = vld [vmem:[#allocation3 + $0xb0] sm:$0xff]
          %v3283 = vld [vmem:[#allocation3 + $0xb8] sm:$0xff]
          %v3284 = vld [vmem:[#allocation3 + $0xc0] sm:$0xff]
          %v3285 = vld [vmem:[#allocation3 + $0xc8] sm:$0xff]
          %v3286 = vld [vmem:[#allocation3 + $0xd0] sm:$0xff]
          %v3287 = vld [vmem:[#allocation3 + $0xd8] sm:$0xff]
          %v3288 = vld [vmem:[#allocation3 + $0xe0] sm:$0xff]
          %v3289 = vld [vmem:[#allocation3 + $0xe8] sm:$0xff]
          %v3290 = vld [vmem:[#allocation3 + $0xf0] sm:$0xff]
          %v3291 = vld [vmem:[#allocation3 + $0xf8] sm:$0xff]
          %v3292 = vld [vmem:[#allocation3 + $0x100] sm:$0xff]
          %v3293 = vld [vmem:[#allocation3 + $0x108] sm:$0xff]
          %v3294 = vld [vmem:[#allocation3 + $0x110] sm:$0xff]
          %v3295 = vld [vmem:[#allocation3 + $0x118] sm:$0xff]
          %v3296 = vld [vmem:[#allocation3 + $0x120] sm:$0xff]
          %v3297 = vld [vmem:[#allocation3 + $0x128] sm:$0xff]
          %v3298 = vld [vmem:[#allocation3 + $0x130] sm:$0xff]
          %v3299 = vld [vmem:[#allocation3 + $0x138] sm:$0xff]
          %v3300 = vld [vmem:[#allocation3 + $0x140] sm:$0xff]
          %v3301 = vld [vmem:[#allocation3 + $0x148] sm:$0xff]
          %v3302 = vld [vmem:[#allocation3 + $0x150] sm:$0xff]
          %v3303 = vld [vmem:[#allocation3 + $0x158] sm:$0xff]
          %v3304 = vld [vmem:[#allocation3 + $0x160] sm:$0xff]
          %v3305 = vld [vmem:[#allocation3 + $0x168] sm:$0xff]
          %v3306 = vld [vmem:[#allocation3 + $0x170] sm:$0xff]
          %v3307 = vld [vmem:[#allocation3 + $0x178] sm:$0xff]
          %v3308 = vld [vmem:[#allocation3 + $0x180] sm:$0xff]
          %v3309 = vld [vmem:[#allocation3 + $0x188] sm:$0xff]
          %v3310 = vld [vmem:[#allocation3 + $0x190] sm:$0xff]
          %v3311 = vld [vmem:[#allocation3 + $0x198] sm:$0xff]
          %v3312 = vld [vmem:[#allocation3 + $0x1a0] sm:$0xff]
          %v3313 = vld [vmem:[#allocation3 + $0x1a8] sm:$0xff]
          %v3314 = vld [vmem:[#allocation3 + $0x1b0] sm:$0xff]
          %v3315 = vld [vmem:[#allocation3 + $0x1b8] sm:$0xff]
          %v3316 = vld [vmem:[#allocation3 + $0x1c0] sm:$0xff]
          %v3317 = vld [vmem:[#allocation3 + $0x1c8] sm:$0xff]
          %v3318 = vld [vmem:[#allocation3 + $0x1d0] sm:$0xff]
          %v3319 = vld [vmem:[#allocation3 + $0x1d8] sm:$0xff]
          %v3320 = vld [vmem:[#allocation3 + $0x1e0] sm:$0xff]
          %v3321 = vld [vmem:[#allocation3 + $0x1e8] sm:$0xff]
          %v3322 = vld [vmem:[#allocation3 + $0x1f0] sm:$0xff]
          %v3323 = vld [vmem:[#allocation3 + $0x1f8] sm:$0xff]
          %v3324 = vld [vmem:[#allocation3 + $0x200] sm:$0xff]
          %v3325 = vld [vmem:[#allocation3 + $0x208] sm:$0xff]
          %v3326 = vld [vmem:[#allocation3 + $0x210] sm:$0xff]
          %v3327 = vld [vmem:[#allocation3 + $0x218] sm:$0xff]
          %v3328 = vld [vmem:[#allocation3 + $0x220] sm:$0xff]
          %v3329 = vld [vmem:[#allocation3 + $0x228] sm:$0xff]
          %v3330 = vld [vmem:[#allocation3 + $0x230] sm:$0xff]
          %v3331 = vld [vmem:[#allocation3 + $0x238] sm:$0xff]
          %v3332 = vld [vmem:[#allocation3 + $0x240] sm:$0xff]
          %v3333 = vld [vmem:[#allocation3 + $0x248] sm:$0xff]
          %v3334 = vld [vmem:[#allocation3 + $0x250] sm:$0xff]
          %v3335 = vld [vmem:[#allocation3 + $0x258] sm:$0xff]
          %v3336 = vld [vmem:[#allocation3 + $0x260] sm:$0xff]
          %v3337 = vld [vmem:[#allocation3 + $0x268] sm:$0xff]
          %v3338 = vld [vmem:[#allocation3 + $0x270] sm:$0xff]
          %v3339 = vld [vmem:[#allocation3 + $0x278] sm:$0xff]
          %v3340 = vld [vmem:[#allocation3 + $0x280] sm:$0xff]
          %v3341 = vld [vmem:[#allocation3 + $0x288] sm:$0xff]
          %v3342 = vld [vmem:[#allocation3 + $0x290] sm:$0xff]
          %v3343 = vld [vmem:[#allocation3 + $0x298] sm:$0xff]
          %v3344 = vld [vmem:[#allocation3 + $0x2a0] sm:$0xff]
          %v3345 = vld [vmem:[#allocation3 + $0x2a8] sm:$0xff]
          %v3346 = vld [vmem:[#allocation3 + $0x2b0] sm:$0xff]
          %v3347 = vld [vmem:[#allocation3 + $0x2b8] sm:$0xff]
          %v3348 = vld [vmem:[#allocation3 + $0x2c0] sm:$0xff]
          %v3349 = vld [vmem:[#allocation3 + $0x2c8] sm:$0xff]
          %v3350 = vld [vmem:[#allocation3 + $0x2d0] sm:$0xff]
          %v3351 = vld [vmem:[#allocation3 + $0x2d8] sm:$0xff]
          %v3352 = vld [vmem:[#allocation3 + $0x2e0] sm:$0xff]
          %v3353 = vld [vmem:[#allocation3 + $0x2e8] sm:$0xff]
          %v3354 = vld [vmem:[#allocation3 + $0x2f0] sm:$0xff]
          %v3355 = vld [vmem:[#allocation3 + $0x2f8] sm:$0xff]
          %v3356 = vld [vmem:[#allocation3 + $0x300] sm:$0xff]
          %v3357 = vld [vmem:[#allocation3 + $0x308] sm:$0xff]
          %v3358 = vld [vmem:[#allocation3 + $0x310] sm:$0xff]
          %v3359 = vld [vmem:[#allocation3 + $0x318] sm:$0xff]
          %v3360 = vld [vmem:[#allocation3 + $0x320] sm:$0xff]
          %v3361 = vld [vmem:[#allocation3 + $0x328] sm:$0xff]
          %v3362 = vld [vmem:[#allocation3 + $0x330] sm:$0xff]
          %v3363 = vld [vmem:[#allocation3 + $0x338] sm:$0xff]
          %v3364 = vld [vmem:[#allocation3 + $0x340] sm:$0xff]
          %v3365 = vld [vmem:[#allocation3 + $0x348] sm:$0xff]
          %v3366 = vld [vmem:[#allocation3 + $0x350] sm:$0xff]
          %v3367 = vld [vmem:[#allocation3 + $0x358] sm:$0xff]
          %v3368 = vld [vmem:[#allocation3 + $0x360] sm:$0xff]
          %v3369 = vld [vmem:[#allocation3 + $0x368] sm:$0xff]
          %v3370 = vld [vmem:[#allocation3 + $0x370] sm:$0xff]
          %v3371 = vld [vmem:[#allocation3 + $0x378] sm:$0xff]
          %v3372 = vld [vmem:[#allocation3 + $0x380] sm:$0xff]
          %v3373 = vld [vmem:[#allocation3 + $0x388] sm:$0xff]
          %v3374 = vld [vmem:[#allocation3 + $0x390] sm:$0xff]
          %v3375 = vld [vmem:[#allocation3 + $0x398] sm:$0xff]
          %v3376 = vld [vmem:[#allocation3 + $0x3a0] sm:$0xff]
          %v3377 = vld [vmem:[#allocation3 + $0x3a8] sm:$0xff]
          %v3378 = vld [vmem:[#allocation3 + $0x3b0] sm:$0xff]
          %v3379 = vld [vmem:[#allocation3 + $0x3b8] sm:$0xff]
          %v3380 = vld [vmem:[#allocation3 + $0x3c0] sm:$0xff]
          %v3381 = vld [vmem:[#allocation3 + $0x3c8] sm:$0xff]
          %v3382 = vld [vmem:[#allocation3 + $0x3d0] sm:$0xff]
          %v3383 = vld [vmem:[#allocation3 + $0x3d8] sm:$0xff]
          %v3384 = vld [vmem:[#allocation3 + $0x3e0] sm:$0xff]
          %v3385 = vld [vmem:[#allocation3 + $0x3e8] sm:$0xff]
          %v3386 = vld [vmem:[#allocation3 + $0x3f0] sm:$0xff]
          %v3387 = vld [vmem:[#allocation3 + $0x3f8] sm:$0xff]
          %v3388 = vld [vmem:[#allocation4] sm:$0xff]
          %v3389 = vld [vmem:[#allocation4 + $0x8] sm:$0xff]
          %v3390 = vld [vmem:[#allocation4 + $0x10] sm:$0xff]
          %v3391 = vld [vmem:[#allocation4 + $0x18] sm:$0xff]
          %v3392 = vld [vmem:[#allocation4 + $0x20] sm:$0xff]
          %v3393 = vld [vmem:[#allocation4 + $0x28] sm:$0xff]
          %v3394 = vld [vmem:[#allocation4 + $0x30] sm:$0xff]
          %v3395 = vld [vmem:[#allocation4 + $0x38] sm:$0xff]
          %v3396 = vld [vmem:[#allocation4 + $0x40] sm:$0xff]
          %v3397 = vld [vmem:[#allocation4 + $0x48] sm:$0xff]
          %v3398 = vld [vmem:[#allocation4 + $0x50] sm:$0xff]
          %v3399 = vld [vmem:[#allocation4 + $0x58] sm:$0xff]
          %v3400 = vld [vmem:[#allocation4 + $0x60] sm:$0xff]
          %v3401 = vld [vmem:[#allocation4 + $0x68] sm:$0xff]
          %v3402 = vld [vmem:[#allocation4 + $0x70] sm:$0xff]
          %v3403 = vld [vmem:[#allocation4 + $0x78] sm:$0xff]
          %v3404 = vld [vmem:[#allocation4 + $0x80] sm:$0xff]
          %v3405 = vld [vmem:[#allocation4 + $0x88] sm:$0xff]
          %v3406 = vld [vmem:[#allocation4 + $0x90] sm:$0xff]
          %v3407 = vld [vmem:[#allocation4 + $0x98] sm:$0xff]
          %v3408 = vld [vmem:[#allocation4 + $0xa0] sm:$0xff]
          %v3409 = vld [vmem:[#allocation4 + $0xa8] sm:$0xff]
          %v3410 = vld [vmem:[#allocation4 + $0xb0] sm:$0xff]
          %v3411 = vld [vmem:[#allocation4 + $0xb8] sm:$0xff]
          %v3412 = vld [vmem:[#allocation4 + $0xc0] sm:$0xff]
          %v3413 = vld [vmem:[#allocation4 + $0xc8] sm:$0xff]
          %v3414 = vld [vmem:[#allocation4 + $0xd0] sm:$0xff]
          %v3415 = vld [vmem:[#allocation4 + $0xd8] sm:$0xff]
          %v3416 = vld [vmem:[#allocation4 + $0xe0] sm:$0xff]
          %v3417 = vld [vmem:[#allocation4 + $0xe8] sm:$0xff]
          %v3418 = vld [vmem:[#allocation4 + $0xf0] sm:$0xff]
          %v3419 = vld [vmem:[#allocation4 + $0xf8] sm:$0xff]
          %v3420 = vld [vmem:[#allocation4 + $0x100] sm:$0xff]
          %v3421 = vld [vmem:[#allocation4 + $0x108] sm:$0xff]
          %v3422 = vld [vmem:[#allocation4 + $0x110] sm:$0xff]
          %v3423 = vld [vmem:[#allocation4 + $0x118] sm:$0xff]
          %v3424 = vld [vmem:[#allocation4 + $0x120] sm:$0xff]
          %v3425 = vld [vmem:[#allocation4 + $0x128] sm:$0xff]
          %v3426 = vld [vmem:[#allocation4 + $0x130] sm:$0xff]
          %v3427 = vld [vmem:[#allocation4 + $0x138] sm:$0xff]
          %v3428 = vld [vmem:[#allocation4 + $0x140] sm:$0xff]
          %v3429 = vld [vmem:[#allocation4 + $0x148] sm:$0xff]
          %v3430 = vld [vmem:[#allocation4 + $0x150] sm:$0xff]
          %v3431 = vld [vmem:[#allocation4 + $0x158] sm:$0xff]
          %v3432 = vld [vmem:[#allocation4 + $0x160] sm:$0xff]
          %v3433 = vld [vmem:[#allocation4 + $0x168] sm:$0xff]
          %v3434 = vld [vmem:[#allocation4 + $0x170] sm:$0xff]
          %v3435 = vld [vmem:[#allocation4 + $0x178] sm:$0xff]
          %v3436 = vld [vmem:[#allocation4 + $0x180] sm:$0xff]
          %v3437 = vld [vmem:[#allocation4 + $0x188] sm:$0xff]
          %v3438 = vld [vmem:[#allocation4 + $0x190] sm:$0xff]
          %v3439 = vld [vmem:[#allocation4 + $0x198] sm:$0xff]
          %v3440 = vld [vmem:[#allocation4 + $0x1a0] sm:$0xff]
          %v3441 = vld [vmem:[#allocation4 + $0x1a8] sm:$0xff]
          %v3442 = vld [vmem:[#allocation4 + $0x1b0] sm:$0xff]
          %v3443 = vld [vmem:[#allocation4 + $0x1b8] sm:$0xff]
          %v3444 = vld [vmem:[#allocation4 + $0x1c0] sm:$0xff]
          %v3445 = vld [vmem:[#allocation4 + $0x1c8] sm:$0xff]
          %v3446 = vld [vmem:[#allocation4 + $0x1d0] sm:$0xff]
          %v3447 = vld [vmem:[#allocation4 + $0x1d8] sm:$0xff]
          %v3448 = vld [vmem:[#allocation4 + $0x1e0] sm:$0xff]
          %v3449 = vld [vmem:[#allocation4 + $0x1e8] sm:$0xff]
          %v3450 = vld [vmem:[#allocation4 + $0x1f0] sm:$0xff]
          %v3451 = vld [vmem:[#allocation4 + $0x1f8] sm:$0xff]
          %v3452 = vld [vmem:[#allocation4 + $0x200] sm:$0xff]
          %v3453 = vld [vmem:[#allocation4 + $0x208] sm:$0xff]
          %v3454 = vld [vmem:[#allocation4 + $0x210] sm:$0xff]
          %v3455 = vld [vmem:[#allocation4 + $0x218] sm:$0xff]
          %v3456 = vld [vmem:[#allocation4 + $0x220] sm:$0xff]
          %v3457 = vld [vmem:[#allocation4 + $0x228] sm:$0xff]
          %v3458 = vld [vmem:[#allocation4 + $0x230] sm:$0xff]
          %v3459 = vld [vmem:[#allocation4 + $0x238] sm:$0xff]
          %v3460 = vld [vmem:[#allocation4 + $0x240] sm:$0xff]
          %v3461 = vld [vmem:[#allocation4 + $0x248] sm:$0xff]
          %v3462 = vld [vmem:[#allocation4 + $0x250] sm:$0xff]
          %v3463 = vld [vmem:[#allocation4 + $0x258] sm:$0xff]
          %v3464 = vld [vmem:[#allocation4 + $0x260] sm:$0xff]
          %v3465 = vld [vmem:[#allocation4 + $0x268] sm:$0xff]
          %v3466 = vld [vmem:[#allocation4 + $0x270] sm:$0xff]
          %v3467 = vld [vmem:[#allocation4 + $0x278] sm:$0xff]
          %v3468 = vld [vmem:[#allocation4 + $0x280] sm:$0xff]
          %v3469 = vld [vmem:[#allocation4 + $0x288] sm:$0xff]
          %v3470 = vld [vmem:[#allocation4 + $0x290] sm:$0xff]
          %v3471 = vld [vmem:[#allocation4 + $0x298] sm:$0xff]
          %v3472 = vld [vmem:[#allocation4 + $0x2a0] sm:$0xff]
          %v3473 = vld [vmem:[#allocation4 + $0x2a8] sm:$0xff]
          %v3474 = vld [vmem:[#allocation4 + $0x2b0] sm:$0xff]
          %v3475 = vld [vmem:[#allocation4 + $0x2b8] sm:$0xff]
          %v3476 = vld [vmem:[#allocation4 + $0x2c0] sm:$0xff]
          %v3477 = vld [vmem:[#allocation4 + $0x2c8] sm:$0xff]
          %v3478 = vld [vmem:[#allocation4 + $0x2d0] sm:$0xff]
          %v3479 = vld [vmem:[#allocation4 + $0x2d8] sm:$0xff]
          %v3480 = vld [vmem:[#allocation4 + $0x2e0] sm:$0xff]
          %v3481 = vld [vmem:[#allocation4 + $0x2e8] sm:$0xff]
          %v3482 = vld [vmem:[#allocation4 + $0x2f0] sm:$0xff]
          %v3483 = vld [vmem:[#allocation4 + $0x2f8] sm:$0xff]
          %v3484 = vld [vmem:[#allocation4 + $0x300] sm:$0xff]
          %v3485 = vld [vmem:[#allocation4 + $0x308] sm:$0xff]
          %v3486 = vld [vmem:[#allocation4 + $0x310] sm:$0xff]
          %v3487 = vld [vmem:[#allocation4 + $0x318] sm:$0xff]
          %v3488 = vld [vmem:[#allocation4 + $0x320] sm:$0xff]
          %v3489 = vld [vmem:[#allocation4 + $0x328] sm:$0xff]
          %v3490 = vld [vmem:[#allocation4 + $0x330] sm:$0xff]
          %v3491 = vld [vmem:[#allocation4 + $0x338] sm:$0xff]
          %v3492 = vld [vmem:[#allocation4 + $0x340] sm:$0xff]
          %v3493 = vld [vmem:[#allocation4 + $0x348] sm:$0xff]
          %v3494 = vld [vmem:[#allocation4 + $0x350] sm:$0xff]
          %v3495 = vld [vmem:[#allocation4 + $0x358] sm:$0xff]
          %v3496 = vld [vmem:[#allocation4 + $0x360] sm:$0xff]
          %v3497 = vld [vmem:[#allocation4 + $0x368] sm:$0xff]
          %v3498 = vld [vmem:[#allocation4 + $0x370] sm:$0xff]
          %v3499 = vld [vmem:[#allocation4 + $0x378] sm:$0xff]
          %v3500 = vld [vmem:[#allocation4 + $0x380] sm:$0xff]
          %v3501 = vld [vmem:[#allocation4 + $0x388] sm:$0xff]
          %v3502 = vld [vmem:[#allocation4 + $0x390] sm:$0xff]
          %v3503 = vld [vmem:[#allocation4 + $0x398] sm:$0xff]
          %v3504 = vld [vmem:[#allocation4 + $0x3a0] sm:$0xff]
          %v3505 = vld [vmem:[#allocation4 + $0x3a8] sm:$0xff]
          %v3506 = vld [vmem:[#allocation4 + $0x3b0] sm:$0xff]
          %v3507 = vld [vmem:[#allocation4 + $0x3b8] sm:$0xff]
          %v3508 = vld [vmem:[#allocation4 + $0x3c0] sm:$0xff]
          %v3509 = vld [vmem:[#allocation4 + $0x3c8] sm:$0xff]
          %v3510 = vld [vmem:[#allocation4 + $0x3d0] sm:$0xff]
          %v3511 = vld [vmem:[#allocation4 + $0x3d8] sm:$0xff]
          %v3512 = vld [vmem:[#allocation4 + $0x3e0] sm:$0xff]
          %v3513 = vld [vmem:[#allocation4 + $0x3e8] sm:$0xff]
          %v3514 = vld [vmem:[#allocation4 + $0x3f0] sm:$0xff]
          %v3515 = vld [vmem:[#allocation4 + $0x3f8] sm:$0xff]
          %v3516 = vmin.f32 %v3132, %v1251
          %v3517 = vmin.f32 %v3133, %v1252
          %v3518 = vmin.f32 %v3134, %v1253
          %v3519 = vmin.f32 %v3135, %v1254
          %v3520 = vmin.f32 %v3136, %v1255
          %v3521 = vmin.f32 %v3137, %v1256
          %v3522 = vmin.f32 %v3138, %v1257
          %v3523 = vmin.f32 %v3139, %v1258
          %v3524 = vmin.f32 %v3140, %v1259
          %v3525 = vmin.f32 %v3141, %v1260
          %v3526 = vmin.f32 %v3142, %v1261
          %v3527 = vmin.f32 %v3143, %v1262
          %v3528 = vmin.f32 %v3144, %v1263
          %v3529 = vmin.f32 %v3145, %v1264
          %v3530 = vmin.f32 %v3146, %v1265
          %v3531 = vmin.f32 %v3147, %v1266
          %v3532 = vmin.f32 %v3148, %v1267
          %v3533 = vmin.f32 %v3149, %v1268
          %v3534 = vmin.f32 %v3150, %v1269
          %v3535 = vmin.f32 %v3151, %v1270
          %v3536 = vmin.f32 %v3152, %v1271
          %v3537 = vmin.f32 %v3153, %v1272
          %v3538 = vmin.f32 %v3154, %v1273
          %v3539 = vmin.f32 %v3155, %v1274
          %v3540 = vmin.f32 %v3156, %v1275
          %v3541 = vmin.f32 %v3157, %v1276
          %v3542 = vmin.f32 %v3158, %v1277
          %v3543 = vmin.f32 %v3159, %v1278
          %v3544 = vmin.f32 %v3160, %v1279
          %v3545 = vmin.f32 %v3161, %v1280
          %v3546 = vmin.f32 %v3162, %v1281
          %v3547 = vmin.f32 %v3163, %v1282
          %v3548 = vmin.f32 %v3164, %v1283
          %v3549 = vmin.f32 %v3165, %v1284
          %v3550 = vmin.f32 %v3166, %v1285
          %v3551 = vmin.f32 %v3167, %v1286
          %v3552 = vmin.f32 %v3168, %v1287
          %v3553 = vmin.f32 %v3169, %v1288
          %v3554 = vmin.f32 %v3170, %v1289
          %v3555 = vmin.f32 %v3171, %v1290
          %v3556 = vmin.f32 %v3172, %v1291
          %v3557 = vmin.f32 %v3173, %v1292
          %v3558 = vmin.f32 %v3174, %v1293
          %v3559 = vmin.f32 %v3175, %v1294
          %v3560 = vmin.f32 %v3176, %v1295
          %v3561 = vmin.f32 %v3177, %v1296
          %v3562 = vmin.f32 %v3178, %v1297
          %v3563 = vmin.f32 %v3179, %v1298
          %v3564 = vmin.f32 %v3180, %v1299
          %v3565 = vmin.f32 %v3181, %v1300
          %v3566 = vmin.f32 %v3182, %v1301
          %v3567 = vmin.f32 %v3183, %v1302
          %v3568 = vmin.f32 %v3184, %v1303
          %v3569 = vmin.f32 %v3185, %v1304
          %v3570 = vmin.f32 %v3186, %v1305
          %v3571 = vmin.f32 %v3187, %v1306
          %v3572 = vmin.f32 %v3188, %v1307
          %v3573 = vmin.f32 %v3189, %v1308
          %v3574 = vmin.f32 %v3190, %v1309
          %v3575 = vmin.f32 %v3191, %v1310
          %v3576 = vmin.f32 %v3192, %v1311
          %v3577 = vmin.f32 %v3193, %v1312
          %v3578 = vmin.f32 %v3194, %v1313
          %v3579 = vmin.f32 %v3195, %v1314
          %v3580 = vmin.f32 %v3196, %v1315
          %v3581 = vmin.f32 %v3197, %v1316
          %v3582 = vmin.f32 %v3198, %v1317
          %v3583 = vmin.f32 %v3199, %v1318
          %v3584 = vmin.f32 %v3200, %v1319
          %v3585 = vmin.f32 %v3201, %v1320
          %v3586 = vmin.f32 %v3202, %v1321
          %v3587 = vmin.f32 %v3203, %v1322
          %v3588 = vmin.f32 %v3204, %v1323
          %v3589 = vmin.f32 %v3205, %v1324
          %v3590 = vmin.f32 %v3206, %v1325
          %v3591 = vmin.f32 %v3207, %v1326
          %v3592 = vmin.f32 %v3208, %v1327
          %v3593 = vmin.f32 %v3209, %v1328
          %v3594 = vmin.f32 %v3210, %v1329
          %v3595 = vmin.f32 %v3211, %v1330
          %v3596 = vmin.f32 %v3212, %v1331
          %v3597 = vmin.f32 %v3213, %v1332
          %v3598 = vmin.f32 %v3214, %v1333
          %v3599 = vmin.f32 %v3215, %v1334
          %v3600 = vmin.f32 %v3216, %v1335
          %v3601 = vmin.f32 %v3217, %v1336
          %v3602 = vmin.f32 %v3218, %v1337
          %v3603 = vmin.f32 %v3219, %v1338
          %v3604 = vmin.f32 %v3220, %v1339
          %v3605 = vmin.f32 %v3221, %v1340
          %v3606 = vmin.f32 %v3222, %v1341
          %v3607 = vmin.f32 %v3223, %v1342
          %v3608 = vmin.f32 %v3224, %v1343
          %v3609 = vmin.f32 %v3225, %v1344
          %v3610 = vmin.f32 %v3226, %v1345
          %v3611 = vmin.f32 %v3227, %v1346
          %v3612 = vmin.f32 %v3228, %v1347
          %v3613 = vmin.f32 %v3229, %v1348
          %v3614 = vmin.f32 %v3230, %v1349
          %v3615 = vmin.f32 %v3231, %v1350
          %v3616 = vmin.f32 %v3232, %v1351
          %v3617 = vmin.f32 %v3233, %v1352
          %v3618 = vmin.f32 %v3234, %v1353
          %v3619 = vmin.f32 %v3235, %v1354
          %v3620 = vmin.f32 %v3236, %v1355
          %v3621 = vmin.f32 %v3237, %v1356
          %v3622 = vmin.f32 %v3238, %v1357
          %v3623 = vmin.f32 %v3239, %v1358
          %v3624 = vmin.f32 %v3240, %v1359
          %v3625 = vmin.f32 %v3241, %v1360
          %v3626 = vmin.f32 %v3242, %v1361
          %v3627 = vmin.f32 %v3243, %v1362
          %v3628 = vmin.f32 %v3244, %v1363
          %v3629 = vmin.f32 %v3245, %v1364
          %v3630 = vmin.f32 %v3246, %v1365
          %v3631 = vmin.f32 %v3247, %v1366
          %v3632 = vmin.f32 %v3248, %v1367
          %v3633 = vmin.f32 %v3249, %v1368
          %v3634 = vmin.f32 %v3250, %v1369
          %v3635 = vmin.f32 %v3251, %v1370
          %v3636 = vmin.f32 %v3252, %v1371
          %v3637 = vmin.f32 %v3253, %v1372
          %v3638 = vmin.f32 %v3254, %v1373
          %v3639 = vmin.f32 %v3255, %v1374
          %v3640 = vmin.f32 %v3256, %v1375
          %v3641 = vmin.f32 %v3257, %v1376
          %v3642 = vmin.f32 %v3258, %v1377
          %v3643 = vmin.f32 %v3259, %v1378
          %3644 = vst [vmem:[#allocation2] sm:$0xff] %v3516
          %3645 = vst [vmem:[#allocation2 + $0x8] sm:$0xff] %v3517
          %3646 = vst [vmem:[#allocation2 + $0x10] sm:$0xff] %v3518
          %3647 = vst [vmem:[#allocation2 + $0x18] sm:$0xff] %v3519
          %3648 = vst [vmem:[#allocation2 + $0x20] sm:$0xff] %v3520
          %3649 = vst [vmem:[#allocation2 + $0x28] sm:$0xff] %v3521
          %3650 = vst [vmem:[#allocation2 + $0x30] sm:$0xff] %v3522
          %3651 = vst [vmem:[#allocation2 + $0x38] sm:$0xff] %v3523
          %3652 = vst [vmem:[#allocation2 + $0x40] sm:$0xff] %v3524
          %3653 = vst [vmem:[#allocation2 + $0x48] sm:$0xff] %v3525
          %3654 = vst [vmem:[#allocation2 + $0x50] sm:$0xff] %v3526
          %3655 = vst [vmem:[#allocation2 + $0x58] sm:$0xff] %v3527
          %3656 = vst [vmem:[#allocation2 + $0x60] sm:$0xff] %v3528
          %3657 = vst [vmem:[#allocation2 + $0x68] sm:$0xff] %v3529
          %3658 = vst [vmem:[#allocation2 + $0x70] sm:$0xff] %v3530
          %3659 = vst [vmem:[#allocation2 + $0x78] sm:$0xff] %v3531
          %3660 = vst [vmem:[#allocation2 + $0x80] sm:$0xff] %v3532
          %3661 = vst [vmem:[#allocation2 + $0x88] sm:$0xff] %v3533
          %3662 = vst [vmem:[#allocation2 + $0x90] sm:$0xff] %v3534
          %3663 = vst [vmem:[#allocation2 + $0x98] sm:$0xff] %v3535
          %3664 = vst [vmem:[#allocation2 + $0xa0] sm:$0xff] %v3536
          %3665 = vst [vmem:[#allocation2 + $0xa8] sm:$0xff] %v3537
          %3666 = vst [vmem:[#allocation2 + $0xb0] sm:$0xff] %v3538
          %3667 = vst [vmem:[#allocation2 + $0xb8] sm:$0xff] %v3539
          %3668 = vst [vmem:[#allocation2 + $0xc0] sm:$0xff] %v3540
          %3669 = vst [vmem:[#allocation2 + $0xc8] sm:$0xff] %v3541
          %3670 = vst [vmem:[#allocation2 + $0xd0] sm:$0xff] %v3542
          %3671 = vst [vmem:[#allocation2 + $0xd8] sm:$0xff] %v3543
          %3672 = vst [vmem:[#allocation2 + $0xe0] sm:$0xff] %v3544
          %3673 = vst [vmem:[#allocation2 + $0xe8] sm:$0xff] %v3545
          %3674 = vst [vmem:[#allocation2 + $0xf0] sm:$0xff] %v3546
          %3675 = vst [vmem:[#allocation2 + $0xf8] sm:$0xff] %v3547
          %3676 = vst [vmem:[#allocation2 + $0x100] sm:$0xff] %v3548
          %3677 = vst [vmem:[#allocation2 + $0x108] sm:$0xff] %v3549
          %3678 = vst [vmem:[#allocation2 + $0x110] sm:$0xff] %v3550
          %3679 = vst [vmem:[#allocation2 + $0x118] sm:$0xff] %v3551
          %3680 = vst [vmem:[#allocation2 + $0x120] sm:$0xff] %v3552
          %3681 = vst [vmem:[#allocation2 + $0x128] sm:$0xff] %v3553
          %3682 = vst [vmem:[#allocation2 + $0x130] sm:$0xff] %v3554
          %3683 = vst [vmem:[#allocation2 + $0x138] sm:$0xff] %v3555
          %3684 = vst [vmem:[#allocation2 + $0x140] sm:$0xff] %v3556
          %3685 = vst [vmem:[#allocation2 + $0x148] sm:$0xff] %v3557
          %3686 = vst [vmem:[#allocation2 + $0x150] sm:$0xff] %v3558
          %3687 = vst [vmem:[#allocation2 + $0x158] sm:$0xff] %v3559
          %3688 = vst [vmem:[#allocation2 + $0x160] sm:$0xff] %v3560
          %3689 = vst [vmem:[#allocation2 + $0x168] sm:$0xff] %v3561
          %3690 = vst [vmem:[#allocation2 + $0x170] sm:$0xff] %v3562
          %3691 = vst [vmem:[#allocation2 + $0x178] sm:$0xff] %v3563
          %3692 = vst [vmem:[#allocation2 + $0x180] sm:$0xff] %v3564
          %3693 = vst [vmem:[#allocation2 + $0x188] sm:$0xff] %v3565
          %3694 = vst [vmem:[#allocation2 + $0x190] sm:$0xff] %v3566
          %3695 = vst [vmem:[#allocation2 + $0x198] sm:$0xff] %v3567
          %3696 = vst [vmem:[#allocation2 + $0x1a0] sm:$0xff] %v3568
          %3697 = vst [vmem:[#allocation2 + $0x1a8] sm:$0xff] %v3569
          %3698 = vst [vmem:[#allocation2 + $0x1b0] sm:$0xff] %v3570
          %3699 = vst [vmem:[#allocation2 + $0x1b8] sm:$0xff] %v3571
          %3700 = vst [vmem:[#allocation2 + $0x1c0] sm:$0xff] %v3572
          %3701 = vst [vmem:[#allocation2 + $0x1c8] sm:$0xff] %v3573
          %3702 = vst [vmem:[#allocation2 + $0x1d0] sm:$0xff] %v3574
          %3703 = vst [vmem:[#allocation2 + $0x1d8] sm:$0xff] %v3575
          %3704 = vst [vmem:[#allocation2 + $0x1e0] sm:$0xff] %v3576
          %3705 = vst [vmem:[#allocation2 + $0x1e8] sm:$0xff] %v3577
          %3706 = vst [vmem:[#allocation2 + $0x1f0] sm:$0xff] %v3578
          %3707 = vst [vmem:[#allocation2 + $0x1f8] sm:$0xff] %v3579
          %3708 = vst [vmem:[#allocation2 + $0x200] sm:$0xff] %v3580
          %3709 = vst [vmem:[#allocation2 + $0x208] sm:$0xff] %v3581
          %3710 = vst [vmem:[#allocation2 + $0x210] sm:$0xff] %v3582
          %3711 = vst [vmem:[#allocation2 + $0x218] sm:$0xff] %v3583
          %3712 = vst [vmem:[#allocation2 + $0x220] sm:$0xff] %v3584
          %3713 = vst [vmem:[#allocation2 + $0x228] sm:$0xff] %v3585
          %3714 = vst [vmem:[#allocation2 + $0x230] sm:$0xff] %v3586
          %3715 = vst [vmem:[#allocation2 + $0x238] sm:$0xff] %v3587
          %3716 = vst [vmem:[#allocation2 + $0x240] sm:$0xff] %v3588
          %3717 = vst [vmem:[#allocation2 + $0x248] sm:$0xff] %v3589
          %3718 = vst [vmem:[#allocation2 + $0x250] sm:$0xff] %v3590
          %3719 = vst [vmem:[#allocation2 + $0x258] sm:$0xff] %v3591
          %3720 = vst [vmem:[#allocation2 + $0x260] sm:$0xff] %v3592
          %3721 = vst [vmem:[#allocation2 + $0x268] sm:$0xff] %v3593
          %3722 = vst [vmem:[#allocation2 + $0x270] sm:$0xff] %v3594
          %3723 = vst [vmem:[#allocation2 + $0x278] sm:$0xff] %v3595
          %3724 = vst [vmem:[#allocation2 + $0x280] sm:$0xff] %v3596
          %3725 = vst [vmem:[#allocation2 + $0x288] sm:$0xff] %v3597
          %3726 = vst [vmem:[#allocation2 + $0x290] sm:$0xff] %v3598
          %3727 = vst [vmem:[#allocation2 + $0x298] sm:$0xff] %v3599
          %3728 = vst [vmem:[#allocation2 + $0x2a0] sm:$0xff] %v3600
          %3729 = vst [vmem:[#allocation2 + $0x2a8] sm:$0xff] %v3601
          %3730 = vst [vmem:[#allocation2 + $0x2b0] sm:$0xff] %v3602
          %3731 = vst [vmem:[#allocation2 + $0x2b8] sm:$0xff] %v3603
          %3732 = vst [vmem:[#allocation2 + $0x2c0] sm:$0xff] %v3604
          %3733 = vst [vmem:[#allocation2 + $0x2c8] sm:$0xff] %v3605
          %3734 = vst [vmem:[#allocation2 + $0x2d0] sm:$0xff] %v3606
          %3735 = vst [vmem:[#allocation2 + $0x2d8] sm:$0xff] %v3607
          %3736 = vst [vmem:[#allocation2 + $0x2e0] sm:$0xff] %v3608
          %3737 = vst [vmem:[#allocation2 + $0x2e8] sm:$0xff] %v3609
          %3738 = vst [vmem:[#allocation2 + $0x2f0] sm:$0xff] %v3610
          %3739 = vst [vmem:[#allocation2 + $0x2f8] sm:$0xff] %v3611
          %3740 = vst [vmem:[#allocation2 + $0x300] sm:$0xff] %v3612
          %3741 = vst [vmem:[#allocation2 + $0x308] sm:$0xff] %v3613
          %3742 = vst [vmem:[#allocation2 + $0x310] sm:$0xff] %v3614
          %3743 = vst [vmem:[#allocation2 + $0x318] sm:$0xff] %v3615
          %3744 = vst [vmem:[#allocation2 + $0x320] sm:$0xff] %v3616
          %3745 = vst [vmem:[#allocation2 + $0x328] sm:$0xff] %v3617
          %3746 = vst [vmem:[#allocation2 + $0x330] sm:$0xff] %v3618
          %3747 = vst [vmem:[#allocation2 + $0x338] sm:$0xff] %v3619
          %3748 = vst [vmem:[#allocation2 + $0x340] sm:$0xff] %v3620
          %3749 = vst [vmem:[#allocation2 + $0x348] sm:$0xff] %v3621
          %3750 = vst [vmem:[#allocation2 + $0x350] sm:$0xff] %v3622
          %3751 = vst [vmem:[#allocation2 + $0x358] sm:$0xff] %v3623
          %3752 = vst [vmem:[#allocation2 + $0x360] sm:$0xff] %v3624
          %3753 = vst [vmem:[#allocation2 + $0x368] sm:$0xff] %v3625
          %3754 = vst [vmem:[#allocation2 + $0x370] sm:$0xff] %v3626
          %3755 = vst [vmem:[#allocation2 + $0x378] sm:$0xff] %v3627
          %3756 = vst [vmem:[#allocation2 + $0x380] sm:$0xff] %v3628
          %3757 = vst [vmem:[#allocation2 + $0x388] sm:$0xff] %v3629
          %3758 = vst [vmem:[#allocation2 + $0x390] sm:$0xff] %v3630
          %3759 = vst [vmem:[#allocation2 + $0x398] sm:$0xff] %v3631
          %3760 = vst [vmem:[#allocation2 + $0x3a0] sm:$0xff] %v3632
          %3761 = vst [vmem:[#allocation2 + $0x3a8] sm:$0xff] %v3633
          %3762 = vst [vmem:[#allocation2 + $0x3b0] sm:$0xff] %v3634
          %3763 = vst [vmem:[#allocation2 + $0x3b8] sm:$0xff] %v3635
          %3764 = vst [vmem:[#allocation2 + $0x3c0] sm:$0xff] %v3636
          %3765 = vst [vmem:[#allocation2 + $0x3c8] sm:$0xff] %v3637
          %3766 = vst [vmem:[#allocation2 + $0x3d0] sm:$0xff] %v3638
          %3767 = vst [vmem:[#allocation2 + $0x3d8] sm:$0xff] %v3639
          %3768 = vst [vmem:[#allocation2 + $0x3e0] sm:$0xff] %v3640
          %3769 = vst [vmem:[#allocation2 + $0x3e8] sm:$0xff] %v3641
          %3770 = vst [vmem:[#allocation2 + $0x3f0] sm:$0xff] %v3642
          %3771 = vst [vmem:[#allocation2 + $0x3f8] sm:$0xff] %v3643
          %v3772 = vmax.f32 %v3132, %v1251
          %v3773 = vmax.f32 %v3133, %v1252
          %v3774 = vmax.f32 %v3134, %v1253
          %v3775 = vmax.f32 %v3135, %v1254
          %v3776 = vmax.f32 %v3136, %v1255
          %v3777 = vmax.f32 %v3137, %v1256
          %v3778 = vmax.f32 %v3138, %v1257
          %v3779 = vmax.f32 %v3139, %v1258
          %v3780 = vmax.f32 %v3140, %v1259
          %v3781 = vmax.f32 %v3141, %v1260
          %v3782 = vmax.f32 %v3142, %v1261
          %v3783 = vmax.f32 %v3143, %v1262
          %v3784 = vmax.f32 %v3144, %v1263
          %v3785 = vmax.f32 %v3145, %v1264
          %v3786 = vmax.f32 %v3146, %v1265
          %v3787 = vmax.f32 %v3147, %v1266
          %v3788 = vmax.f32 %v3148, %v1267
          %v3789 = vmax.f32 %v3149, %v1268
          %v3790 = vmax.f32 %v3150, %v1269
          %v3791 = vmax.f32 %v3151, %v1270
          %v3792 = vmax.f32 %v3152, %v1271
          %v3793 = vmax.f32 %v3153, %v1272
          %v3794 = vmax.f32 %v3154, %v1273
          %v3795 = vmax.f32 %v3155, %v1274
          %v3796 = vmax.f32 %v3156, %v1275
          %v3797 = vmax.f32 %v3157, %v1276
          %v3798 = vmax.f32 %v3158, %v1277
          %v3799 = vmax.f32 %v3159, %v1278
          %v3800 = vmax.f32 %v3160, %v1279
          %v3801 = vmax.f32 %v3161, %v1280
          %v3802 = vmax.f32 %v3162, %v1281
          %v3803 = vmax.f32 %v3163, %v1282
          %v3804 = vmax.f32 %v3164, %v1283
          %v3805 = vmax.f32 %v3165, %v1284
          %v3806 = vmax.f32 %v3166, %v1285
          %v3807 = vmax.f32 %v3167, %v1286
          %v3808 = vmax.f32 %v3168, %v1287
          %v3809 = vmax.f32 %v3169, %v1288
          %v3810 = vmax.f32 %v3170, %v1289
          %v3811 = vmax.f32 %v3171, %v1290
          %v3812 = vmax.f32 %v3172, %v1291
          %v3813 = vmax.f32 %v3173, %v1292
          %v3814 = vmax.f32 %v3174, %v1293
          %v3815 = vmax.f32 %v3175, %v1294
          %v3816 = vmax.f32 %v3176, %v1295
          %v3817 = vmax.f32 %v3177, %v1296
          %v3818 = vmax.f32 %v3178, %v1297
          %v3819 = vmax.f32 %v3179, %v1298
          %v3820 = vmax.f32 %v3180, %v1299
          %v3821 = vmax.f32 %v3181, %v1300
          %v3822 = vmax.f32 %v3182, %v1301
          %v3823 = vmax.f32 %v3183, %v1302
          %v3824 = vmax.f32 %v3184, %v1303
          %v3825 = vmax.f32 %v3185, %v1304
          %v3826 = vmax.f32 %v3186, %v1305
          %v3827 = vmax.f32 %v3187, %v1306
          %v3828 = vmax.f32 %v3188, %v1307
          %v3829 = vmax.f32 %v3189, %v1308
          %v3830 = vmax.f32 %v3190, %v1309
          %v3831 = vmax.f32 %v3191, %v1310
          %v3832 = vmax.f32 %v3192, %v1311
          %v3833 = vmax.f32 %v3193, %v1312
          %v3834 = vmax.f32 %v3194, %v1313
          %v3835 = vmax.f32 %v3195, %v1314
          %v3836 = vmax.f32 %v3196, %v1315
          %v3837 = vmax.f32 %v3197, %v1316
          %v3838 = vmax.f32 %v3198, %v1317
          %v3839 = vmax.f32 %v3199, %v1318
          %v3840 = vmax.f32 %v3200, %v1319
          %v3841 = vmax.f32 %v3201, %v1320
          %v3842 = vmax.f32 %v3202, %v1321
          %v3843 = vmax.f32 %v3203, %v1322
          %v3844 = vmax.f32 %v3204, %v1323
          %v3845 = vmax.f32 %v3205, %v1324
          %v3846 = vmax.f32 %v3206, %v1325
          %v3847 = vmax.f32 %v3207, %v1326
          %v3848 = vmax.f32 %v3208, %v1327
          %v3849 = vmax.f32 %v3209, %v1328
          %v3850 = vmax.f32 %v3210, %v1329
          %v3851 = vmax.f32 %v3211, %v1330
          %v3852 = vmax.f32 %v3212, %v1331
          %v3853 = vmax.f32 %v3213, %v1332
          %v3854 = vmax.f32 %v3214, %v1333
          %v3855 = vmax.f32 %v3215, %v1334
          %v3856 = vmax.f32 %v3216, %v1335
          %v3857 = vmax.f32 %v3217, %v1336
          %v3858 = vmax.f32 %v3218, %v1337
          %v3859 = vmax.f32 %v3219, %v1338
          %v3860 = vmax.f32 %v3220, %v1339
          %v3861 = vmax.f32 %v3221, %v1340
          %v3862 = vmax.f32 %v3222, %v1341
          %v3863 = vmax.f32 %v3223, %v1342
          %v3864 = vmax.f32 %v3224, %v1343
          %v3865 = vmax.f32 %v3225, %v1344
          %v3866 = vmax.f32 %v3226, %v1345
          %v3867 = vmax.f32 %v3227, %v1346
          %v3868 = vmax.f32 %v3228, %v1347
          %v3869 = vmax.f32 %v3229, %v1348
          %v3870 = vmax.f32 %v3230, %v1349
          %v3871 = vmax.f32 %v3231, %v1350
          %v3872 = vmax.f32 %v3232, %v1351
          %v3873 = vmax.f32 %v3233, %v1352
          %v3874 = vmax.f32 %v3234, %v1353
          %v3875 = vmax.f32 %v3235, %v1354
          %v3876 = vmax.f32 %v3236, %v1355
          %v3877 = vmax.f32 %v3237, %v1356
          %v3878 = vmax.f32 %v3238, %v1357
          %v3879 = vmax.f32 %v3239, %v1358
          %v3880 = vmax.f32 %v3240, %v1359
          %v3881 = vmax.f32 %v3241, %v1360
          %v3882 = vmax.f32 %v3242, %v1361
          %v3883 = vmax.f32 %v3243, %v1362
          %v3884 = vmax.f32 %v3244, %v1363
          %v3885 = vmax.f32 %v3245, %v1364
          %v3886 = vmax.f32 %v3246, %v1365
          %v3887 = vmax.f32 %v3247, %v1366
          %v3888 = vmax.f32 %v3248, %v1367
          %v3889 = vmax.f32 %v3249, %v1368
          %v3890 = vmax.f32 %v3250, %v1369
          %v3891 = vmax.f32 %v3251, %v1370
          %v3892 = vmax.f32 %v3252, %v1371
          %v3893 = vmax.f32 %v3253, %v1372
          %v3894 = vmax.f32 %v3254, %v1373
          %v3895 = vmax.f32 %v3255, %v1374
          %v3896 = vmax.f32 %v3256, %v1375
          %v3897 = vmax.f32 %v3257, %v1376
          %v3898 = vmax.f32 %v3258, %v1377
          %v3899 = vmax.f32 %v3259, %v1378
          %v3900 = vmin.f32 %v3260, %v3772
          %v3901 = vmin.f32 %v3261, %v3773
          %v3902 = vmin.f32 %v3262, %v3774
          %v3903 = vmin.f32 %v3263, %v3775
          %v3904 = vmin.f32 %v3264, %v3776
          %v3905 = vmin.f32 %v3265, %v3777
          %v3906 = vmin.f32 %v3266, %v3778
          %v3907 = vmin.f32 %v3267, %v3779
          %v3908 = vmin.f32 %v3268, %v3780
          %v3909 = vmin.f32 %v3269, %v3781
          %v3910 = vmin.f32 %v3270, %v3782
          %v3911 = vmin.f32 %v3271, %v3783
          %v3912 = vmin.f32 %v3272, %v3784
          %v3913 = vmin.f32 %v3273, %v3785
          %v3914 = vmin.f32 %v3274, %v3786
          %v3915 = vmin.f32 %v3275, %v3787
          %v3916 = vmin.f32 %v3276, %v3788
          %v3917 = vmin.f32 %v3277, %v3789
          %v3918 = vmin.f32 %v3278, %v3790
          %v3919 = vmin.f32 %v3279, %v3791
          %v3920 = vmin.f32 %v3280, %v3792
          %v3921 = vmin.f32 %v3281, %v3793
          %v3922 = vmin.f32 %v3282, %v3794
          %v3923 = vmin.f32 %v3283, %v3795
          %v3924 = vmin.f32 %v3284, %v3796
          %v3925 = vmin.f32 %v3285, %v3797
          %v3926 = vmin.f32 %v3286, %v3798
          %v3927 = vmin.f32 %v3287, %v3799
          %v3928 = vmin.f32 %v3288, %v3800
          %v3929 = vmin.f32 %v3289, %v3801
          %v3930 = vmin.f32 %v3290, %v3802
          %v3931 = vmin.f32 %v3291, %v3803
          %v3932 = vmin.f32 %v3292, %v3804
          %v3933 = vmin.f32 %v3293, %v3805
          %v3934 = vmin.f32 %v3294, %v3806
          %v3935 = vmin.f32 %v3295, %v3807
          %v3936 = vmin.f32 %v3296, %v3808
          %v3937 = vmin.f32 %v3297, %v3809
          %v3938 = vmin.f32 %v3298, %v3810
          %v3939 = vmin.f32 %v3299, %v3811
          %v3940 = vmin.f32 %v3300, %v3812
          %v3941 = vmin.f32 %v3301, %v3813
          %v3942 = vmin.f32 %v3302, %v3814
          %v3943 = vmin.f32 %v3303, %v3815
          %v3944 = vmin.f32 %v3304, %v3816
          %v3945 = vmin.f32 %v3305, %v3817
          %v3946 = vmin.f32 %v3306, %v3818
          %v3947 = vmin.f32 %v3307, %v3819
          %v3948 = vmin.f32 %v3308, %v3820
          %v3949 = vmin.f32 %v3309, %v3821
          %v3950 = vmin.f32 %v3310, %v3822
          %v3951 = vmin.f32 %v3311, %v3823
          %v3952 = vmin.f32 %v3312, %v3824
          %v3953 = vmin.f32 %v3313, %v3825
          %v3954 = vmin.f32 %v3314, %v3826
          %v3955 = vmin.f32 %v3315, %v3827
          %v3956 = vmin.f32 %v3316, %v3828
          %v3957 = vmin.f32 %v3317, %v3829
          %v3958 = vmin.f32 %v3318, %v3830
          %v3959 = vmin.f32 %v3319, %v3831
          %v3960 = vmin.f32 %v3320, %v3832
          %v3961 = vmin.f32 %v3321, %v3833
          %v3962 = vmin.f32 %v3322, %v3834
          %v3963 = vmin.f32 %v3323, %v3835
          %v3964 = vmin.f32 %v3324, %v3836
          %v3965 = vmin.f32 %v3325, %v3837
          %v3966 = vmin.f32 %v3326, %v3838
          %v3967 = vmin.f32 %v3327, %v3839
          %v3968 = vmin.f32 %v3328, %v3840
          %v3969 = vmin.f32 %v3329, %v3841
          %v3970 = vmin.f32 %v3330, %v3842
          %v3971 = vmin.f32 %v3331, %v3843
          %v3972 = vmin.f32 %v3332, %v3844
          %v3973 = vmin.f32 %v3333, %v3845
          %v3974 = vmin.f32 %v3334, %v3846
          %v3975 = vmin.f32 %v3335, %v3847
          %v3976 = vmin.f32 %v3336, %v3848
          %v3977 = vmin.f32 %v3337, %v3849
          %v3978 = vmin.f32 %v3338, %v3850
          %v3979 = vmin.f32 %v3339, %v3851
          %v3980 = vmin.f32 %v3340, %v3852
          %v3981 = vmin.f32 %v3341, %v3853
          %v3982 = vmin.f32 %v3342, %v3854
          %v3983 = vmin.f32 %v3343, %v3855
          %v3984 = vmin.f32 %v3344, %v3856
          %v3985 = vmin.f32 %v3345, %v3857
          %v3986 = vmin.f32 %v3346, %v3858
          %v3987 = vmin.f32 %v3347, %v3859
          %v3988 = vmin.f32 %v3348, %v3860
          %v3989 = vmin.f32 %v3349, %v3861
          %v3990 = vmin.f32 %v3350, %v3862
          %v3991 = vmin.f32 %v3351, %v3863
          %v3992 = vmin.f32 %v3352, %v3864
          %v3993 = vmin.f32 %v3353, %v3865
          %v3994 = vmin.f32 %v3354, %v3866
          %v3995 = vmin.f32 %v3355, %v3867
          %v3996 = vmin.f32 %v3356, %v3868
          %v3997 = vmin.f32 %v3357, %v3869
          %v3998 = vmin.f32 %v3358, %v3870
          %v3999 = vmin.f32 %v3359, %v3871
          %v4000 = vmin.f32 %v3360, %v3872
          %v4001 = vmin.f32 %v3361, %v3873
          %v4002 = vmin.f32 %v3362, %v3874
          %v4003 = vmin.f32 %v3363, %v3875
          %v4004 = vmin.f32 %v3364, %v3876
          %v4005 = vmin.f32 %v3365, %v3877
          %v4006 = vmin.f32 %v3366, %v3878
          %v4007 = vmin.f32 %v3367, %v3879
          %v4008 = vmin.f32 %v3368, %v3880
          %v4009 = vmin.f32 %v3369, %v3881
          %v4010 = vmin.f32 %v3370, %v3882
          %v4011 = vmin.f32 %v3371, %v3883
          %v4012 = vmin.f32 %v3372, %v3884
          %v4013 = vmin.f32 %v3373, %v3885
          %v4014 = vmin.f32 %v3374, %v3886
          %v4015 = vmin.f32 %v3375, %v3887
          %v4016 = vmin.f32 %v3376, %v3888
          %v4017 = vmin.f32 %v3377, %v3889
          %v4018 = vmin.f32 %v3378, %v3890
          %v4019 = vmin.f32 %v3379, %v3891
          %v4020 = vmin.f32 %v3380, %v3892
          %v4021 = vmin.f32 %v3381, %v3893
          %v4022 = vmin.f32 %v3382, %v3894
          %v4023 = vmin.f32 %v3383, %v3895
          %v4024 = vmin.f32 %v3384, %v3896
          %v4025 = vmin.f32 %v3385, %v3897
          %v4026 = vmin.f32 %v3386, %v3898
          %v4027 = vmin.f32 %v3387, %v3899
          %4028 = vst [vmem:[#allocation3] sm:$0xff] %v3900
          %4029 = vst [vmem:[#allocation3 + $0x8] sm:$0xff] %v3901
          %4030 = vst [vmem:[#allocation3 + $0x10] sm:$0xff] %v3902
          %4031 = vst [vmem:[#allocation3 + $0x18] sm:$0xff] %v3903
          %4032 = vst [vmem:[#allocation3 + $0x20] sm:$0xff] %v3904
          %4033 = vst [vmem:[#allocation3 + $0x28] sm:$0xff] %v3905
          %4034 = vst [vmem:[#allocation3 + $0x30] sm:$0xff] %v3906
          %4035 = vst [vmem:[#allocation3 + $0x38] sm:$0xff] %v3907
          %4036 = vst [vmem:[#allocation3 + $0x40] sm:$0xff] %v3908
          %4037 = vst [vmem:[#allocation3 + $0x48] sm:$0xff] %v3909
          %4038 = vst [vmem:[#allocation3 + $0x50] sm:$0xff] %v3910
          %4039 = vst [vmem:[#allocation3 + $0x58] sm:$0xff] %v3911
          %4040 = vst [vmem:[#allocation3 + $0x60] sm:$0xff] %v3912
          %4041 = vst [vmem:[#allocation3 + $0x68] sm:$0xff] %v3913
          %4042 = vst [vmem:[#allocation3 + $0x70] sm:$0xff] %v3914
          %4043 = vst [vmem:[#allocation3 + $0x78] sm:$0xff] %v3915
          %4044 = vst [vmem:[#allocation3 + $0x80] sm:$0xff] %v3916
          %4045 = vst [vmem:[#allocation3 + $0x88] sm:$0xff] %v3917
          %4046 = vst [vmem:[#allocation3 + $0x90] sm:$0xff] %v3918
          %4047 = vst [vmem:[#allocation3 + $0x98] sm:$0xff] %v3919
          %4048 = vst [vmem:[#allocation3 + $0xa0] sm:$0xff] %v3920
          %4049 = vst [vmem:[#allocation3 + $0xa8] sm:$0xff] %v3921
          %4050 = vst [vmem:[#allocation3 + $0xb0] sm:$0xff] %v3922
          %4051 = vst [vmem:[#allocation3 + $0xb8] sm:$0xff] %v3923
          %4052 = vst [vmem:[#allocation3 + $0xc0] sm:$0xff] %v3924
          %4053 = vst [vmem:[#allocation3 + $0xc8] sm:$0xff] %v3925
          %4054 = vst [vmem:[#allocation3 + $0xd0] sm:$0xff] %v3926
          %4055 = vst [vmem:[#allocation3 + $0xd8] sm:$0xff] %v3927
          %4056 = vst [vmem:[#allocation3 + $0xe0] sm:$0xff] %v3928
          %4057 = vst [vmem:[#allocation3 + $0xe8] sm:$0xff] %v3929
          %4058 = vst [vmem:[#allocation3 + $0xf0] sm:$0xff] %v3930
          %4059 = vst [vmem:[#allocation3 + $0xf8] sm:$0xff] %v3931
          %4060 = vst [vmem:[#allocation3 + $0x100] sm:$0xff] %v3932
          %4061 = vst [vmem:[#allocation3 + $0x108] sm:$0xff] %v3933
          %4062 = vst [vmem:[#allocation3 + $0x110] sm:$0xff] %v3934
          %4063 = vst [vmem:[#allocation3 + $0x118] sm:$0xff] %v3935
          %4064 = vst [vmem:[#allocation3 + $0x120] sm:$0xff] %v3936
          %4065 = vst [vmem:[#allocation3 + $0x128] sm:$0xff] %v3937
          %4066 = vst [vmem:[#allocation3 + $0x130] sm:$0xff] %v3938
          %4067 = vst [vmem:[#allocation3 + $0x138] sm:$0xff] %v3939
          %4068 = vst [vmem:[#allocation3 + $0x140] sm:$0xff] %v3940
          %4069 = vst [vmem:[#allocation3 + $0x148] sm:$0xff] %v3941
          %4070 = vst [vmem:[#allocation3 + $0x150] sm:$0xff] %v3942
          %4071 = vst [vmem:[#allocation3 + $0x158] sm:$0xff] %v3943
          %4072 = vst [vmem:[#allocation3 + $0x160] sm:$0xff] %v3944
          %4073 = vst [vmem:[#allocation3 + $0x168] sm:$0xff] %v3945
          %4074 = vst [vmem:[#allocation3 + $0x170] sm:$0xff] %v3946
          %4075 = vst [vmem:[#allocation3 + $0x178] sm:$0xff] %v3947
          %4076 = vst [vmem:[#allocation3 + $0x180] sm:$0xff] %v3948
          %4077 = vst [vmem:[#allocation3 + $0x188] sm:$0xff] %v3949
          %4078 = vst [vmem:[#allocation3 + $0x190] sm:$0xff] %v3950
          %4079 = vst [vmem:[#allocation3 + $0x198] sm:$0xff] %v3951
          %4080 = vst [vmem:[#allocation3 + $0x1a0] sm:$0xff] %v3952
          %4081 = vst [vmem:[#allocation3 + $0x1a8] sm:$0xff] %v3953
          %4082 = vst [vmem:[#allocation3 + $0x1b0] sm:$0xff] %v3954
          %4083 = vst [vmem:[#allocation3 + $0x1b8] sm:$0xff] %v3955
          %4084 = vst [vmem:[#allocation3 + $0x1c0] sm:$0xff] %v3956
          %4085 = vst [vmem:[#allocation3 + $0x1c8] sm:$0xff] %v3957
          %4086 = vst [vmem:[#allocation3 + $0x1d0] sm:$0xff] %v3958
          %4087 = vst [vmem:[#allocation3 + $0x1d8] sm:$0xff] %v3959
          %4088 = vst [vmem:[#allocation3 + $0x1e0] sm:$0xff] %v3960
          %4089 = vst [vmem:[#allocation3 + $0x1e8] sm:$0xff] %v3961
          %4090 = vst [vmem:[#allocation3 + $0x1f0] sm:$0xff] %v3962
          %4091 = vst [vmem:[#allocation3 + $0x1f8] sm:$0xff] %v3963
          %4092 = vst [vmem:[#allocation3 + $0x200] sm:$0xff] %v3964
          %4093 = vst [vmem:[#allocation3 + $0x208] sm:$0xff] %v3965
          %4094 = vst [vmem:[#allocation3 + $0x210] sm:$0xff] %v3966
          %4095 = vst [vmem:[#allocation3 + $0x218] sm:$0xff] %v3967
          %4096 = vst [vmem:[#allocation3 + $0x220] sm:$0xff] %v3968
          %4097 = vst [vmem:[#allocation3 + $0x228] sm:$0xff] %v3969
          %4098 = vst [vmem:[#allocation3 + $0x230] sm:$0xff] %v3970
          %4099 = vst [vmem:[#allocation3 + $0x238] sm:$0xff] %v3971
          %4100 = vst [vmem:[#allocation3 + $0x240] sm:$0xff] %v3972
          %4101 = vst [vmem:[#allocation3 + $0x248] sm:$0xff] %v3973
          %4102 = vst [vmem:[#allocation3 + $0x250] sm:$0xff] %v3974
          %4103 = vst [vmem:[#allocation3 + $0x258] sm:$0xff] %v3975
          %4104 = vst [vmem:[#allocation3 + $0x260] sm:$0xff] %v3976
          %4105 = vst [vmem:[#allocation3 + $0x268] sm:$0xff] %v3977
          %4106 = vst [vmem:[#allocation3 + $0x270] sm:$0xff] %v3978
          %4107 = vst [vmem:[#allocation3 + $0x278] sm:$0xff] %v3979
          %4108 = vst [vmem:[#allocation3 + $0x280] sm:$0xff] %v3980
          %4109 = vst [vmem:[#allocation3 + $0x288] sm:$0xff] %v3981
          %4110 = vst [vmem:[#allocation3 + $0x290] sm:$0xff] %v3982
          %4111 = vst [vmem:[#allocation3 + $0x298] sm:$0xff] %v3983
          %4112 = vst [vmem:[#allocation3 + $0x2a0] sm:$0xff] %v3984
          %4113 = vst [vmem:[#allocation3 + $0x2a8] sm:$0xff] %v3985
          %4114 = vst [vmem:[#allocation3 + $0x2b0] sm:$0xff] %v3986
          %4115 = vst [vmem:[#allocation3 + $0x2b8] sm:$0xff] %v3987
          %4116 = vst [vmem:[#allocation3 + $0x2c0] sm:$0xff] %v3988
          %4117 = vst [vmem:[#allocation3 + $0x2c8] sm:$0xff] %v3989
          %4118 = vst [vmem:[#allocation3 + $0x2d0] sm:$0xff] %v3990
          %4119 = vst [vmem:[#allocation3 + $0x2d8] sm:$0xff] %v3991
          %4120 = vst [vmem:[#allocation3 + $0x2e0] sm:$0xff] %v3992
          %4121 = vst [vmem:[#allocation3 + $0x2e8] sm:$0xff] %v3993
          %4122 = vst [vmem:[#allocation3 + $0x2f0] sm:$0xff] %v3994
          %4123 = vst [vmem:[#allocation3 + $0x2f8] sm:$0xff] %v3995
          %4124 = vst [vmem:[#allocation3 + $0x300] sm:$0xff] %v3996
          %4125 = vst [vmem:[#allocation3 + $0x308] sm:$0xff] %v3997
          %4126 = vst [vmem:[#allocation3 + $0x310] sm:$0xff] %v3998
          %4127 = vst [vmem:[#allocation3 + $0x318] sm:$0xff] %v3999
          %4128 = vst [vmem:[#allocation3 + $0x320] sm:$0xff] %v4000
          %4129 = vst [vmem:[#allocation3 + $0x328] sm:$0xff] %v4001
          %4130 = vst [vmem:[#allocation3 + $0x330] sm:$0xff] %v4002
          %4131 = vst [vmem:[#allocation3 + $0x338] sm:$0xff] %v4003
          %4132 = vst [vmem:[#allocation3 + $0x340] sm:$0xff] %v4004
          %4133 = vst [vmem:[#allocation3 + $0x348] sm:$0xff] %v4005
          %4134 = vst [vmem:[#allocation3 + $0x350] sm:$0xff] %v4006
          %4135 = vst [vmem:[#allocation3 + $0x358] sm:$0xff] %v4007
          %4136 = vst [vmem:[#allocation3 + $0x360] sm:$0xff] %v4008
          %4137 = vst [vmem:[#allocation3 + $0x368] sm:$0xff] %v4009
          %4138 = vst [vmem:[#allocation3 + $0x370] sm:$0xff] %v4010
          %4139 = vst [vmem:[#allocation3 + $0x378] sm:$0xff] %v4011
          %4140 = vst [vmem:[#allocation3 + $0x380] sm:$0xff] %v4012
          %4141 = vst [vmem:[#allocation3 + $0x388] sm:$0xff] %v4013
          %4142 = vst [vmem:[#allocation3 + $0x390] sm:$0xff] %v4014
          %4143 = vst [vmem:[#allocation3 + $0x398] sm:$0xff] %v4015
          %4144 = vst [vmem:[#allocation3 + $0x3a0] sm:$0xff] %v4016
          %4145 = vst [vmem:[#allocation3 + $0x3a8] sm:$0xff] %v4017
          %4146 = vst [vmem:[#allocation3 + $0x3b0] sm:$0xff] %v4018
          %4147 = vst [vmem:[#allocation3 + $0x3b8] sm:$0xff] %v4019
          %4148 = vst [vmem:[#allocation3 + $0x3c0] sm:$0xff] %v4020
          %4149 = vst [vmem:[#allocation3 + $0x3c8] sm:$0xff] %v4021
          %4150 = vst [vmem:[#allocation3 + $0x3d0] sm:$0xff] %v4022
          %4151 = vst [vmem:[#allocation3 + $0x3d8] sm:$0xff] %v4023
          %4152 = vst [vmem:[#allocation3 + $0x3e0] sm:$0xff] %v4024
          %4153 = vst [vmem:[#allocation3 + $0x3e8] sm:$0xff] %v4025
          %4154 = vst [vmem:[#allocation3 + $0x3f0] sm:$0xff] %v4026
          %4155 = vst [vmem:[#allocation3 + $0x3f8] sm:$0xff] %v4027
          %v4156 = vmax.f32 %v3260, %v1251
          %v4157 = vmax.f32 %v3261, %v1252
          %v4158 = vmax.f32 %v3262, %v1253
          %v4159 = vmax.f32 %v3263, %v1254
          %v4160 = vmax.f32 %v3264, %v1255
          %v4161 = vmax.f32 %v3265, %v1256
          %v4162 = vmax.f32 %v3266, %v1257
          %v4163 = vmax.f32 %v3267, %v1258
          %v4164 = vmax.f32 %v3268, %v1259
          %v4165 = vmax.f32 %v3269, %v1260
          %v4166 = vmax.f32 %v3270, %v1261
          %v4167 = vmax.f32 %v3271, %v1262
          %v4168 = vmax.f32 %v3272, %v1263
          %v4169 = vmax.f32 %v3273, %v1264
          %v4170 = vmax.f32 %v3274, %v1265
          %v4171 = vmax.f32 %v3275, %v1266
          %v4172 = vmax.f32 %v3276, %v1267
          %v4173 = vmax.f32 %v3277, %v1268
          %v4174 = vmax.f32 %v3278, %v1269
          %v4175 = vmax.f32 %v3279, %v1270
          %v4176 = vmax.f32 %v3280, %v1271
          %v4177 = vmax.f32 %v3281, %v1272
          %v4178 = vmax.f32 %v3282, %v1273
          %v4179 = vmax.f32 %v3283, %v1274
          %v4180 = vmax.f32 %v3284, %v1275
          %v4181 = vmax.f32 %v3285, %v1276
          %v4182 = vmax.f32 %v3286, %v1277
          %v4183 = vmax.f32 %v3287, %v1278
          %v4184 = vmax.f32 %v3288, %v1279
          %v4185 = vmax.f32 %v3289, %v1280
          %v4186 = vmax.f32 %v3290, %v1281
          %v4187 = vmax.f32 %v3291, %v1282
          %v4188 = vmax.f32 %v3292, %v1283
          %v4189 = vmax.f32 %v3293, %v1284
          %v4190 = vmax.f32 %v3294, %v1285
          %v4191 = vmax.f32 %v3295, %v1286
          %v4192 = vmax.f32 %v3296, %v1287
          %v4193 = vmax.f32 %v3297, %v1288
          %v4194 = vmax.f32 %v3298, %v1289
          %v4195 = vmax.f32 %v3299, %v1290
          %v4196 = vmax.f32 %v3300, %v1291
          %v4197 = vmax.f32 %v3301, %v1292
          %v4198 = vmax.f32 %v3302, %v1293
          %v4199 = vmax.f32 %v3303, %v1294
          %v4200 = vmax.f32 %v3304, %v1295
          %v4201 = vmax.f32 %v3305, %v1296
          %v4202 = vmax.f32 %v3306, %v1297
          %v4203 = vmax.f32 %v3307, %v1298
          %v4204 = vmax.f32 %v3308, %v1299
          %v4205 = vmax.f32 %v3309, %v1300
          %v4206 = vmax.f32 %v3310, %v1301
          %v4207 = vmax.f32 %v3311, %v1302
          %v4208 = vmax.f32 %v3312, %v1303
          %v4209 = vmax.f32 %v3313, %v1304
          %v4210 = vmax.f32 %v3314, %v1305
          %v4211 = vmax.f32 %v3315, %v1306
          %v4212 = vmax.f32 %v3316, %v1307
          %v4213 = vmax.f32 %v3317, %v1308
          %v4214 = vmax.f32 %v3318, %v1309
          %v4215 = vmax.f32 %v3319, %v1310
          %v4216 = vmax.f32 %v3320, %v1311
          %v4217 = vmax.f32 %v3321, %v1312
          %v4218 = vmax.f32 %v3322, %v1313
          %v4219 = vmax.f32 %v3323, %v1314
          %v4220 = vmax.f32 %v3324, %v1315
          %v4221 = vmax.f32 %v3325, %v1316
          %v4222 = vmax.f32 %v3326, %v1317
          %v4223 = vmax.f32 %v3327, %v1318
          %v4224 = vmax.f32 %v3328, %v1319
          %v4225 = vmax.f32 %v3329, %v1320
          %v4226 = vmax.f32 %v3330, %v1321
          %v4227 = vmax.f32 %v3331, %v1322
          %v4228 = vmax.f32 %v3332, %v1323
          %v4229 = vmax.f32 %v3333, %v1324
          %v4230 = vmax.f32 %v3334, %v1325
          %v4231 = vmax.f32 %v3335, %v1326
          %v4232 = vmax.f32 %v3336, %v1327
          %v4233 = vmax.f32 %v3337, %v1328
          %v4234 = vmax.f32 %v3338, %v1329
          %v4235 = vmax.f32 %v3339, %v1330
          %v4236 = vmax.f32 %v3340, %v1331
          %v4237 = vmax.f32 %v3341, %v1332
          %v4238 = vmax.f32 %v3342, %v1333
          %v4239 = vmax.f32 %v3343, %v1334
          %v4240 = vmax.f32 %v3344, %v1335
          %v4241 = vmax.f32 %v3345, %v1336
          %v4242 = vmax.f32 %v3346, %v1337
          %v4243 = vmax.f32 %v3347, %v1338
          %v4244 = vmax.f32 %v3348, %v1339
          %v4245 = vmax.f32 %v3349, %v1340
          %v4246 = vmax.f32 %v3350, %v1341
          %v4247 = vmax.f32 %v3351, %v1342
          %v4248 = vmax.f32 %v3352, %v1343
          %v4249 = vmax.f32 %v3353, %v1344
          %v4250 = vmax.f32 %v3354, %v1345
          %v4251 = vmax.f32 %v3355, %v1346
          %v4252 = vmax.f32 %v3356, %v1347
          %v4253 = vmax.f32 %v3357, %v1348
          %v4254 = vmax.f32 %v3358, %v1349
          %v4255 = vmax.f32 %v3359, %v1350
          %v4256 = vmax.f32 %v3360, %v1351
          %v4257 = vmax.f32 %v3361, %v1352
          %v4258 = vmax.f32 %v3362, %v1353
          %v4259 = vmax.f32 %v3363, %v1354
          %v4260 = vmax.f32 %v3364, %v1355
          %v4261 = vmax.f32 %v3365, %v1356
          %v4262 = vmax.f32 %v3366, %v1357
          %v4263 = vmax.f32 %v3367, %v1358
          %v4264 = vmax.f32 %v3368, %v1359
          %v4265 = vmax.f32 %v3369, %v1360
          %v4266 = vmax.f32 %v3370, %v1361
          %v4267 = vmax.f32 %v3371, %v1362
          %v4268 = vmax.f32 %v3372, %v1363
          %v4269 = vmax.f32 %v3373, %v1364
          %v4270 = vmax.f32 %v3374, %v1365
          %v4271 = vmax.f32 %v3375, %v1366
          %v4272 = vmax.f32 %v3376, %v1367
          %v4273 = vmax.f32 %v3377, %v1368
          %v4274 = vmax.f32 %v3378, %v1369
          %v4275 = vmax.f32 %v3379, %v1370
          %v4276 = vmax.f32 %v3380, %v1371
          %v4277 = vmax.f32 %v3381, %v1372
          %v4278 = vmax.f32 %v3382, %v1373
          %v4279 = vmax.f32 %v3383, %v1374
          %v4280 = vmax.f32 %v3384, %v1375
          %v4281 = vmax.f32 %v3385, %v1376
          %v4282 = vmax.f32 %v3386, %v1377
          %v4283 = vmax.f32 %v3387, %v1378
          %v4284 = vmin.f32 %v3388, %v4156
          %v4285 = vmin.f32 %v3389, %v4157
          %v4286 = vmin.f32 %v3390, %v4158
          %v4287 = vmin.f32 %v3391, %v4159
          %v4288 = vmin.f32 %v3392, %v4160
          %v4289 = vmin.f32 %v3393, %v4161
          %v4290 = vmin.f32 %v3394, %v4162
          %v4291 = vmin.f32 %v3395, %v4163
          %v4292 = vmin.f32 %v3396, %v4164
          %v4293 = vmin.f32 %v3397, %v4165
          %v4294 = vmin.f32 %v3398, %v4166
          %v4295 = vmin.f32 %v3399, %v4167
          %v4296 = vmin.f32 %v3400, %v4168
          %v4297 = vmin.f32 %v3401, %v4169
          %v4298 = vmin.f32 %v3402, %v4170
          %v4299 = vmin.f32 %v3403, %v4171
          %v4300 = vmin.f32 %v3404, %v4172
          %v4301 = vmin.f32 %v3405, %v4173
          %v4302 = vmin.f32 %v3406, %v4174
          %v4303 = vmin.f32 %v3407, %v4175
          %v4304 = vmin.f32 %v3408, %v4176
          %v4305 = vmin.f32 %v3409, %v4177
          %v4306 = vmin.f32 %v3410, %v4178
          %v4307 = vmin.f32 %v3411, %v4179
          %v4308 = vmin.f32 %v3412, %v4180
          %v4309 = vmin.f32 %v3413, %v4181
          %v4310 = vmin.f32 %v3414, %v4182
          %v4311 = vmin.f32 %v3415, %v4183
          %v4312 = vmin.f32 %v3416, %v4184
          %v4313 = vmin.f32 %v3417, %v4185
          %v4314 = vmin.f32 %v3418, %v4186
          %v4315 = vmin.f32 %v3419, %v4187
          %v4316 = vmin.f32 %v3420, %v4188
          %v4317 = vmin.f32 %v3421, %v4189
          %v4318 = vmin.f32 %v3422, %v4190
          %v4319 = vmin.f32 %v3423, %v4191
          %v4320 = vmin.f32 %v3424, %v4192
          %v4321 = vmin.f32 %v3425, %v4193
          %v4322 = vmin.f32 %v3426, %v4194
          %v4323 = vmin.f32 %v3427, %v4195
          %v4324 = vmin.f32 %v3428, %v4196
          %v4325 = vmin.f32 %v3429, %v4197
          %v4326 = vmin.f32 %v3430, %v4198
          %v4327 = vmin.f32 %v3431, %v4199
          %v4328 = vmin.f32 %v3432, %v4200
          %v4329 = vmin.f32 %v3433, %v4201
          %v4330 = vmin.f32 %v3434, %v4202
          %v4331 = vmin.f32 %v3435, %v4203
          %v4332 = vmin.f32 %v3436, %v4204
          %v4333 = vmin.f32 %v3437, %v4205
          %v4334 = vmin.f32 %v3438, %v4206
          %v4335 = vmin.f32 %v3439, %v4207
          %v4336 = vmin.f32 %v3440, %v4208
          %v4337 = vmin.f32 %v3441, %v4209
          %v4338 = vmin.f32 %v3442, %v4210
          %v4339 = vmin.f32 %v3443, %v4211
          %v4340 = vmin.f32 %v3444, %v4212
          %v4341 = vmin.f32 %v3445, %v4213
          %v4342 = vmin.f32 %v3446, %v4214
          %v4343 = vmin.f32 %v3447, %v4215
          %v4344 = vmin.f32 %v3448, %v4216
          %v4345 = vmin.f32 %v3449, %v4217
          %v4346 = vmin.f32 %v3450, %v4218
          %v4347 = vmin.f32 %v3451, %v4219
          %v4348 = vmin.f32 %v3452, %v4220
          %v4349 = vmin.f32 %v3453, %v4221
          %v4350 = vmin.f32 %v3454, %v4222
          %v4351 = vmin.f32 %v3455, %v4223
          %v4352 = vmin.f32 %v3456, %v4224
          %v4353 = vmin.f32 %v3457, %v4225
          %v4354 = vmin.f32 %v3458, %v4226
          %v4355 = vmin.f32 %v3459, %v4227
          %v4356 = vmin.f32 %v3460, %v4228
          %v4357 = vmin.f32 %v3461, %v4229
          %v4358 = vmin.f32 %v3462, %v4230
          %v4359 = vmin.f32 %v3463, %v4231
          %v4360 = vmin.f32 %v3464, %v4232
          %v4361 = vmin.f32 %v3465, %v4233
          %v4362 = vmin.f32 %v3466, %v4234
          %v4363 = vmin.f32 %v3467, %v4235
          %v4364 = vmin.f32 %v3468, %v4236
          %v4365 = vmin.f32 %v3469, %v4237
          %v4366 = vmin.f32 %v3470, %v4238
          %v4367 = vmin.f32 %v3471, %v4239
          %v4368 = vmin.f32 %v3472, %v4240
          %v4369 = vmin.f32 %v3473, %v4241
          %v4370 = vmin.f32 %v3474, %v4242
          %v4371 = vmin.f32 %v3475, %v4243
          %v4372 = vmin.f32 %v3476, %v4244
          %v4373 = vmin.f32 %v3477, %v4245
          %v4374 = vmin.f32 %v3478, %v4246
          %v4375 = vmin.f32 %v3479, %v4247
          %v4376 = vmin.f32 %v3480, %v4248
          %v4377 = vmin.f32 %v3481, %v4249
          %v4378 = vmin.f32 %v3482, %v4250
          %v4379 = vmin.f32 %v3483, %v4251
          %v4380 = vmin.f32 %v3484, %v4252
          %v4381 = vmin.f32 %v3485, %v4253
          %v4382 = vmin.f32 %v3486, %v4254
          %v4383 = vmin.f32 %v3487, %v4255
          %v4384 = vmin.f32 %v3488, %v4256
          %v4385 = vmin.f32 %v3489, %v4257
          %v4386 = vmin.f32 %v3490, %v4258
          %v4387 = vmin.f32 %v3491, %v4259
          %v4388 = vmin.f32 %v3492, %v4260
          %v4389 = vmin.f32 %v3493, %v4261
          %v4390 = vmin.f32 %v3494, %v4262
          %v4391 = vmin.f32 %v3495, %v4263
          %v4392 = vmin.f32 %v3496, %v4264
          %v4393 = vmin.f32 %v3497, %v4265
          %v4394 = vmin.f32 %v3498, %v4266
          %v4395 = vmin.f32 %v3499, %v4267
          %v4396 = vmin.f32 %v3500, %v4268
          %v4397 = vmin.f32 %v3501, %v4269
          %v4398 = vmin.f32 %v3502, %v4270
          %v4399 = vmin.f32 %v3503, %v4271
          %v4400 = vmin.f32 %v3504, %v4272
          %v4401 = vmin.f32 %v3505, %v4273
          %v4402 = vmin.f32 %v3506, %v4274
          %v4403 = vmin.f32 %v3507, %v4275
          %v4404 = vmin.f32 %v3508, %v4276
          %v4405 = vmin.f32 %v3509, %v4277
          %v4406 = vmin.f32 %v3510, %v4278
          %v4407 = vmin.f32 %v3511, %v4279
          %v4408 = vmin.f32 %v3512, %v4280
          %v4409 = vmin.f32 %v3513, %v4281
          %v4410 = vmin.f32 %v3514, %v4282
          %v4411 = vmin.f32 %v3515, %v4283
          %4412 = vst [vmem:[#allocation4] sm:$0xff] %v4284
          %4413 = vst [vmem:[#allocation4 + $0x8] sm:$0xff] %v4285
          %4414 = vst [vmem:[#allocation4 + $0x10] sm:$0xff] %v4286
          %4415 = vst [vmem:[#allocation4 + $0x18] sm:$0xff] %v4287
          %4416 = vst [vmem:[#allocation4 + $0x20] sm:$0xff] %v4288
          %4417 = vst [vmem:[#allocation4 + $0x28] sm:$0xff] %v4289
          %4418 = vst [vmem:[#allocation4 + $0x30] sm:$0xff] %v4290
          %4419 = vst [vmem:[#allocation4 + $0x38] sm:$0xff] %v4291
          %4420 = vst [vmem:[#allocation4 + $0x40] sm:$0xff] %v4292
          %4421 = vst [vmem:[#allocation4 + $0x48] sm:$0xff] %v4293
          %4422 = vst [vmem:[#allocation4 + $0x50] sm:$0xff] %v4294
          %4423 = vst [vmem:[#allocation4 + $0x58] sm:$0xff] %v4295
          %4424 = vst [vmem:[#allocation4 + $0x60] sm:$0xff] %v4296
          %4425 = vst [vmem:[#allocation4 + $0x68] sm:$0xff] %v4297
          %4426 = vst [vmem:[#allocation4 + $0x70] sm:$0xff] %v4298
          %4427 = vst [vmem:[#allocation4 + $0x78] sm:$0xff] %v4299
          %4428 = vst [vmem:[#allocation4 + $0x80] sm:$0xff] %v4300
          %4429 = vst [vmem:[#allocation4 + $0x88] sm:$0xff] %v4301
          %4430 = vst [vmem:[#allocation4 + $0x90] sm:$0xff] %v4302
          %4431 = vst [vmem:[#allocation4 + $0x98] sm:$0xff] %v4303
          %4432 = vst [vmem:[#allocation4 + $0xa0] sm:$0xff] %v4304
          %4433 = vst [vmem:[#allocation4 + $0xa8] sm:$0xff] %v4305
          %4434 = vst [vmem:[#allocation4 + $0xb0] sm:$0xff] %v4306
          %4435 = vst [vmem:[#allocation4 + $0xb8] sm:$0xff] %v4307
          %4436 = vst [vmem:[#allocation4 + $0xc0] sm:$0xff] %v4308
          %4437 = vst [vmem:[#allocation4 + $0xc8] sm:$0xff] %v4309
          %4438 = vst [vmem:[#allocation4 + $0xd0] sm:$0xff] %v4310
          %4439 = vst [vmem:[#allocation4 + $0xd8] sm:$0xff] %v4311
          %4440 = vst [vmem:[#allocation4 + $0xe0] sm:$0xff] %v4312
          %4441 = vst [vmem:[#allocation4 + $0xe8] sm:$0xff] %v4313
          %4442 = vst [vmem:[#allocation4 + $0xf0] sm:$0xff] %v4314
          %4443 = vst [vmem:[#allocation4 + $0xf8] sm:$0xff] %v4315
          %4444 = vst [vmem:[#allocation4 + $0x100] sm:$0xff] %v4316
          %4445 = vst [vmem:[#allocation4 + $0x108] sm:$0xff] %v4317
          %4446 = vst [vmem:[#allocation4 + $0x110] sm:$0xff] %v4318
          %4447 = vst [vmem:[#allocation4 + $0x118] sm:$0xff] %v4319
          %4448 = vst [vmem:[#allocation4 + $0x120] sm:$0xff] %v4320
          %4449 = vst [vmem:[#allocation4 + $0x128] sm:$0xff] %v4321
          %4450 = vst [vmem:[#allocation4 + $0x130] sm:$0xff] %v4322
          %4451 = vst [vmem:[#allocation4 + $0x138] sm:$0xff] %v4323
          %4452 = vst [vmem:[#allocation4 + $0x140] sm:$0xff] %v4324
          %4453 = vst [vmem:[#allocation4 + $0x148] sm:$0xff] %v4325
          %4454 = vst [vmem:[#allocation4 + $0x150] sm:$0xff] %v4326
          %4455 = vst [vmem:[#allocation4 + $0x158] sm:$0xff] %v4327
          %4456 = vst [vmem:[#allocation4 + $0x160] sm:$0xff] %v4328
          %4457 = vst [vmem:[#allocation4 + $0x168] sm:$0xff] %v4329
          %4458 = vst [vmem:[#allocation4 + $0x170] sm:$0xff] %v4330
          %4459 = vst [vmem:[#allocation4 + $0x178] sm:$0xff] %v4331
          %4460 = vst [vmem:[#allocation4 + $0x180] sm:$0xff] %v4332
          %4461 = vst [vmem:[#allocation4 + $0x188] sm:$0xff] %v4333
          %4462 = vst [vmem:[#allocation4 + $0x190] sm:$0xff] %v4334
          %4463 = vst [vmem:[#allocation4 + $0x198] sm:$0xff] %v4335
          %4464 = vst [vmem:[#allocation4 + $0x1a0] sm:$0xff] %v4336
          %4465 = vst [vmem:[#allocation4 + $0x1a8] sm:$0xff] %v4337
          %4466 = vst [vmem:[#allocation4 + $0x1b0] sm:$0xff] %v4338
          %4467 = vst [vmem:[#allocation4 + $0x1b8] sm:$0xff] %v4339
          %4468 = vst [vmem:[#allocation4 + $0x1c0] sm:$0xff] %v4340
          %4469 = vst [vmem:[#allocation4 + $0x1c8] sm:$0xff] %v4341
          %4470 = vst [vmem:[#allocation4 + $0x1d0] sm:$0xff] %v4342
          %4471 = vst [vmem:[#allocation4 + $0x1d8] sm:$0xff] %v4343
          %4472 = vst [vmem:[#allocation4 + $0x1e0] sm:$0xff] %v4344
          %4473 = vst [vmem:[#allocation4 + $0x1e8] sm:$0xff] %v4345
          %4474 = vst [vmem:[#allocation4 + $0x1f0] sm:$0xff] %v4346
          %4475 = vst [vmem:[#allocation4 + $0x1f8] sm:$0xff] %v4347
          %4476 = vst [vmem:[#allocation4 + $0x200] sm:$0xff] %v4348
          %4477 = vst [vmem:[#allocation4 + $0x208] sm:$0xff] %v4349
          %4478 = vst [vmem:[#allocation4 + $0x210] sm:$0xff] %v4350
          %4479 = vst [vmem:[#allocation4 + $0x218] sm:$0xff] %v4351
          %4480 = vst [vmem:[#allocation4 + $0x220] sm:$0xff] %v4352
          %4481 = vst [vmem:[#allocation4 + $0x228] sm:$0xff] %v4353
          %4482 = vst [vmem:[#allocation4 + $0x230] sm:$0xff] %v4354
          %4483 = vst [vmem:[#allocation4 + $0x238] sm:$0xff] %v4355
          %4484 = vst [vmem:[#allocation4 + $0x240] sm:$0xff] %v4356
          %4485 = vst [vmem:[#allocation4 + $0x248] sm:$0xff] %v4357
          %4486 = vst [vmem:[#allocation4 + $0x250] sm:$0xff] %v4358
          %4487 = vst [vmem:[#allocation4 + $0x258] sm:$0xff] %v4359
          %4488 = vst [vmem:[#allocation4 + $0x260] sm:$0xff] %v4360
          %4489 = vst [vmem:[#allocation4 + $0x268] sm:$0xff] %v4361
          %4490 = vst [vmem:[#allocation4 + $0x270] sm:$0xff] %v4362
          %4491 = vst [vmem:[#allocation4 + $0x278] sm:$0xff] %v4363
          %4492 = vst [vmem:[#allocation4 + $0x280] sm:$0xff] %v4364
          %4493 = vst [vmem:[#allocation4 + $0x288] sm:$0xff] %v4365
          %4494 = vst [vmem:[#allocation4 + $0x290] sm:$0xff] %v4366
          %4495 = vst [vmem:[#allocation4 + $0x298] sm:$0xff] %v4367
          %4496 = vst [vmem:[#allocation4 + $0x2a0] sm:$0xff] %v4368
          %4497 = vst [vmem:[#allocation4 + $0x2a8] sm:$0xff] %v4369
          %4498 = vst [vmem:[#allocation4 + $0x2b0] sm:$0xff] %v4370
          %4499 = vst [vmem:[#allocation4 + $0x2b8] sm:$0xff] %v4371
          %4500 = vst [vmem:[#allocation4 + $0x2c0] sm:$0xff] %v4372
          %4501 = vst [vmem:[#allocation4 + $0x2c8] sm:$0xff] %v4373
          %4502 = vst [vmem:[#allocation4 + $0x2d0] sm:$0xff] %v4374
          %4503 = vst [vmem:[#allocation4 + $0x2d8] sm:$0xff] %v4375
          %4504 = vst [vmem:[#allocation4 + $0x2e0] sm:$0xff] %v4376
          %4505 = vst [vmem:[#allocation4 + $0x2e8] sm:$0xff] %v4377
          %4506 = vst [vmem:[#allocation4 + $0x2f0] sm:$0xff] %v4378
          %4507 = vst [vmem:[#allocation4 + $0x2f8] sm:$0xff] %v4379
          %4508 = vst [vmem:[#allocation4 + $0x300] sm:$0xff] %v4380
          %4509 = vst [vmem:[#allocation4 + $0x308] sm:$0xff] %v4381
          %4510 = vst [vmem:[#allocation4 + $0x310] sm:$0xff] %v4382
          %4511 = vst [vmem:[#allocation4 + $0x318] sm:$0xff] %v4383
          %4512 = vst [vmem:[#allocation4 + $0x320] sm:$0xff] %v4384
          %4513 = vst [vmem:[#allocation4 + $0x328] sm:$0xff] %v4385
          %4514 = vst [vmem:[#allocation4 + $0x330] sm:$0xff] %v4386
          %4515 = vst [vmem:[#allocation4 + $0x338] sm:$0xff] %v4387
          %4516 = vst [vmem:[#allocation4 + $0x340] sm:$0xff] %v4388
          %4517 = vst [vmem:[#allocation4 + $0x348] sm:$0xff] %v4389
          %4518 = vst [vmem:[#allocation4 + $0x350] sm:$0xff] %v4390
          %4519 = vst [vmem:[#allocation4 + $0x358] sm:$0xff] %v4391
          %4520 = vst [vmem:[#allocation4 + $0x360] sm:$0xff] %v4392
          %4521 = vst [vmem:[#allocation4 + $0x368] sm:$0xff] %v4393
          %4522 = vst [vmem:[#allocation4 + $0x370] sm:$0xff] %v4394
          %4523 = vst [vmem:[#allocation4 + $0x378] sm:$0xff] %v4395
          %4524 = vst [vmem:[#allocation4 + $0x380] sm:$0xff] %v4396
          %4525 = vst [vmem:[#allocation4 + $0x388] sm:$0xff] %v4397
          %4526 = vst [vmem:[#allocation4 + $0x390] sm:$0xff] %v4398
          %4527 = vst [vmem:[#allocation4 + $0x398] sm:$0xff] %v4399
          %4528 = vst [vmem:[#allocation4 + $0x3a0] sm:$0xff] %v4400
          %4529 = vst [vmem:[#allocation4 + $0x3a8] sm:$0xff] %v4401
          %4530 = vst [vmem:[#allocation4 + $0x3b0] sm:$0xff] %v4402
          %4531 = vst [vmem:[#allocation4 + $0x3b8] sm:$0xff] %v4403
          %4532 = vst [vmem:[#allocation4 + $0x3c0] sm:$0xff] %v4404
          %4533 = vst [vmem:[#allocation4 + $0x3c8] sm:$0xff] %v4405
          %4534 = vst [vmem:[#allocation4 + $0x3d0] sm:$0xff] %v4406
          %4535 = vst [vmem:[#allocation4 + $0x3d8] sm:$0xff] %v4407
          %4536 = vst [vmem:[#allocation4 + $0x3e0] sm:$0xff] %v4408
          %4537 = vst [vmem:[#allocation4 + $0x3e8] sm:$0xff] %v4409
          %4538 = vst [vmem:[#allocation4 + $0x3f0] sm:$0xff] %v4410
          %4539 = vst [vmem:[#allocation4 + $0x3f8] sm:$0xff] %v4411
        $region40: #{tpu_custom_call.1} parent=27 // pred_fallthru
          _
        %p4540 = scmp.eq.s32.totalorder %s23, 1
        // Predicated region
        $region41: #{tpu_custom_call.1} parent=27 // pred_check
          %p4541 = pneg %p4540
        $region42: #{tpu_custom_call.1} parent=27 // pred_check_branch
          %4543 = sbr.rel (%p4541) target = $region44
        $region43: #{tpu_custom_call.1} parent=27 // pred_region
          %v4544 = vld [vmem:[#allocation2] sm:$0xff]
          %v4545 = vld [vmem:[#allocation2 + $0x8] sm:$0xff]
          %v4546 = vld [vmem:[#allocation2 + $0x10] sm:$0xff]
          %v4547 = vld [vmem:[#allocation2 + $0x18] sm:$0xff]
          %v4548 = vld [vmem:[#allocation2 + $0x20] sm:$0xff]
          %v4549 = vld [vmem:[#allocation2 + $0x28] sm:$0xff]
          %v4550 = vld [vmem:[#allocation2 + $0x30] sm:$0xff]
          %v4551 = vld [vmem:[#allocation2 + $0x38] sm:$0xff]
          %v4552 = vld [vmem:[#allocation2 + $0x40] sm:$0xff]
          %v4553 = vld [vmem:[#allocation2 + $0x48] sm:$0xff]
          %v4554 = vld [vmem:[#allocation2 + $0x50] sm:$0xff]
          %v4555 = vld [vmem:[#allocation2 + $0x58] sm:$0xff]
          %v4556 = vld [vmem:[#allocation2 + $0x60] sm:$0xff]
          %v4557 = vld [vmem:[#allocation2 + $0x68] sm:$0xff]
          %v4558 = vld [vmem:[#allocation2 + $0x70] sm:$0xff]
          %v4559 = vld [vmem:[#allocation2 + $0x78] sm:$0xff]
          %v4560 = vld [vmem:[#allocation2 + $0x80] sm:$0xff]
          %v4561 = vld [vmem:[#allocation2 + $0x88] sm:$0xff]
          %v4562 = vld [vmem:[#allocation2 + $0x90] sm:$0xff]
          %v4563 = vld [vmem:[#allocation2 + $0x98] sm:$0xff]
          %v4564 = vld [vmem:[#allocation2 + $0xa0] sm:$0xff]
          %v4565 = vld [vmem:[#allocation2 + $0xa8] sm:$0xff]
          %v4566 = vld [vmem:[#allocation2 + $0xb0] sm:$0xff]
          %v4567 = vld [vmem:[#allocation2 + $0xb8] sm:$0xff]
          %v4568 = vld [vmem:[#allocation2 + $0xc0] sm:$0xff]
          %v4569 = vld [vmem:[#allocation2 + $0xc8] sm:$0xff]
          %v4570 = vld [vmem:[#allocation2 + $0xd0] sm:$0xff]
          %v4571 = vld [vmem:[#allocation2 + $0xd8] sm:$0xff]
          %v4572 = vld [vmem:[#allocation2 + $0xe0] sm:$0xff]
          %v4573 = vld [vmem:[#allocation2 + $0xe8] sm:$0xff]
          %v4574 = vld [vmem:[#allocation2 + $0xf0] sm:$0xff]
          %v4575 = vld [vmem:[#allocation2 + $0xf8] sm:$0xff]
          %v4576 = vld [vmem:[#allocation2 + $0x100] sm:$0xff]
          %v4577 = vld [vmem:[#allocation2 + $0x108] sm:$0xff]
          %v4578 = vld [vmem:[#allocation2 + $0x110] sm:$0xff]
          %v4579 = vld [vmem:[#allocation2 + $0x118] sm:$0xff]
          %v4580 = vld [vmem:[#allocation2 + $0x120] sm:$0xff]
          %v4581 = vld [vmem:[#allocation2 + $0x128] sm:$0xff]
          %v4582 = vld [vmem:[#allocation2 + $0x130] sm:$0xff]
          %v4583 = vld [vmem:[#allocation2 + $0x138] sm:$0xff]
          %v4584 = vld [vmem:[#allocation2 + $0x140] sm:$0xff]
          %v4585 = vld [vmem:[#allocation2 + $0x148] sm:$0xff]
          %v4586 = vld [vmem:[#allocation2 + $0x150] sm:$0xff]
          %v4587 = vld [vmem:[#allocation2 + $0x158] sm:$0xff]
          %v4588 = vld [vmem:[#allocation2 + $0x160] sm:$0xff]
          %v4589 = vld [vmem:[#allocation2 + $0x168] sm:$0xff]
          %v4590 = vld [vmem:[#allocation2 + $0x170] sm:$0xff]
          %v4591 = vld [vmem:[#allocation2 + $0x178] sm:$0xff]
          %v4592 = vld [vmem:[#allocation2 + $0x180] sm:$0xff]
          %v4593 = vld [vmem:[#allocation2 + $0x188] sm:$0xff]
          %v4594 = vld [vmem:[#allocation2 + $0x190] sm:$0xff]
          %v4595 = vld [vmem:[#allocation2 + $0x198] sm:$0xff]
          %v4596 = vld [vmem:[#allocation2 + $0x1a0] sm:$0xff]
          %v4597 = vld [vmem:[#allocation2 + $0x1a8] sm:$0xff]
          %v4598 = vld [vmem:[#allocation2 + $0x1b0] sm:$0xff]
          %v4599 = vld [vmem:[#allocation2 + $0x1b8] sm:$0xff]
          %v4600 = vld [vmem:[#allocation2 + $0x1c0] sm:$0xff]
          %v4601 = vld [vmem:[#allocation2 + $0x1c8] sm:$0xff]
          %v4602 = vld [vmem:[#allocation2 + $0x1d0] sm:$0xff]
          %v4603 = vld [vmem:[#allocation2 + $0x1d8] sm:$0xff]
          %v4604 = vld [vmem:[#allocation2 + $0x1e0] sm:$0xff]
          %v4605 = vld [vmem:[#allocation2 + $0x1e8] sm:$0xff]
          %v4606 = vld [vmem:[#allocation2 + $0x1f0] sm:$0xff]
          %v4607 = vld [vmem:[#allocation2 + $0x1f8] sm:$0xff]
          %v4608 = vld [vmem:[#allocation3] sm:$0xff]
          %v4609 = vld [vmem:[#allocation3 + $0x8] sm:$0xff]
          %v4610 = vld [vmem:[#allocation3 + $0x10] sm:$0xff]
          %v4611 = vld [vmem:[#allocation3 + $0x18] sm:$0xff]
          %v4612 = vld [vmem:[#allocation3 + $0x20] sm:$0xff]
          %v4613 = vld [vmem:[#allocation3 + $0x28] sm:$0xff]
          %v4614 = vld [vmem:[#allocation3 + $0x30] sm:$0xff]
          %v4615 = vld [vmem:[#allocation3 + $0x38] sm:$0xff]
          %v4616 = vld [vmem:[#allocation3 + $0x40] sm:$0xff]
          %v4617 = vld [vmem:[#allocation3 + $0x48] sm:$0xff]
          %v4618 = vld [vmem:[#allocation3 + $0x50] sm:$0xff]
          %v4619 = vld [vmem:[#allocation3 + $0x58] sm:$0xff]
          %v4620 = vld [vmem:[#allocation3 + $0x60] sm:$0xff]
          %v4621 = vld [vmem:[#allocation3 + $0x68] sm:$0xff]
          %v4622 = vld [vmem:[#allocation3 + $0x70] sm:$0xff]
          %v4623 = vld [vmem:[#allocation3 + $0x78] sm:$0xff]
          %v4624 = vld [vmem:[#allocation3 + $0x80] sm:$0xff]
          %v4625 = vld [vmem:[#allocation3 + $0x88] sm:$0xff]
          %v4626 = vld [vmem:[#allocation3 + $0x90] sm:$0xff]
          %v4627 = vld [vmem:[#allocation3 + $0x98] sm:$0xff]
          %v4628 = vld [vmem:[#allocation3 + $0xa0] sm:$0xff]
          %v4629 = vld [vmem:[#allocation3 + $0xa8] sm:$0xff]
          %v4630 = vld [vmem:[#allocation3 + $0xb0] sm:$0xff]
          %v4631 = vld [vmem:[#allocation3 + $0xb8] sm:$0xff]
          %v4632 = vld [vmem:[#allocation3 + $0xc0] sm:$0xff]
          %v4633 = vld [vmem:[#allocation3 + $0xc8] sm:$0xff]
          %v4634 = vld [vmem:[#allocation3 + $0xd0] sm:$0xff]
          %v4635 = vld [vmem:[#allocation3 + $0xd8] sm:$0xff]
          %v4636 = vld [vmem:[#allocation3 + $0xe0] sm:$0xff]
          %v4637 = vld [vmem:[#allocation3 + $0xe8] sm:$0xff]
          %v4638 = vld [vmem:[#allocation3 + $0xf0] sm:$0xff]
          %v4639 = vld [vmem:[#allocation3 + $0xf8] sm:$0xff]
          %v4640 = vld [vmem:[#allocation3 + $0x100] sm:$0xff]
          %v4641 = vld [vmem:[#allocation3 + $0x108] sm:$0xff]
          %v4642 = vld [vmem:[#allocation3 + $0x110] sm:$0xff]
          %v4643 = vld [vmem:[#allocation3 + $0x118] sm:$0xff]
          %v4644 = vld [vmem:[#allocation3 + $0x120] sm:$0xff]
          %v4645 = vld [vmem:[#allocation3 + $0x128] sm:$0xff]
          %v4646 = vld [vmem:[#allocation3 + $0x130] sm:$0xff]
          %v4647 = vld [vmem:[#allocation3 + $0x138] sm:$0xff]
          %v4648 = vld [vmem:[#allocation3 + $0x140] sm:$0xff]
          %v4649 = vld [vmem:[#allocation3 + $0x148] sm:$0xff]
          %v4650 = vld [vmem:[#allocation3 + $0x150] sm:$0xff]
          %v4651 = vld [vmem:[#allocation3 + $0x158] sm:$0xff]
          %v4652 = vld [vmem:[#allocation3 + $0x160] sm:$0xff]
          %v4653 = vld [vmem:[#allocation3 + $0x168] sm:$0xff]
          %v4654 = vld [vmem:[#allocation3 + $0x170] sm:$0xff]
          %v4655 = vld [vmem:[#allocation3 + $0x178] sm:$0xff]
          %v4656 = vld [vmem:[#allocation3 + $0x180] sm:$0xff]
          %v4657 = vld [vmem:[#allocation3 + $0x188] sm:$0xff]
          %v4658 = vld [vmem:[#allocation3 + $0x190] sm:$0xff]
          %v4659 = vld [vmem:[#allocation3 + $0x198] sm:$0xff]
          %v4660 = vld [vmem:[#allocation3 + $0x1a0] sm:$0xff]
          %v4661 = vld [vmem:[#allocation3 + $0x1a8] sm:$0xff]
          %v4662 = vld [vmem:[#allocation3 + $0x1b0] sm:$0xff]
          %v4663 = vld [vmem:[#allocation3 + $0x1b8] sm:$0xff]
          %v4664 = vld [vmem:[#allocation3 + $0x1c0] sm:$0xff]
          %v4665 = vld [vmem:[#allocation3 + $0x1c8] sm:$0xff]
          %v4666 = vld [vmem:[#allocation3 + $0x1d0] sm:$0xff]
          %v4667 = vld [vmem:[#allocation3 + $0x1d8] sm:$0xff]
          %v4668 = vld [vmem:[#allocation3 + $0x1e0] sm:$0xff]
          %v4669 = vld [vmem:[#allocation3 + $0x1e8] sm:$0xff]
          %v4670 = vld [vmem:[#allocation3 + $0x1f0] sm:$0xff]
          %v4671 = vld [vmem:[#allocation3 + $0x1f8] sm:$0xff]
          %v4672 = vld [vmem:[#allocation4] sm:$0xff]
          %v4673 = vld [vmem:[#allocation4 + $0x8] sm:$0xff]
          %v4674 = vld [vmem:[#allocation4 + $0x10] sm:$0xff]
          %v4675 = vld [vmem:[#allocation4 + $0x18] sm:$0xff]
          %v4676 = vld [vmem:[#allocation4 + $0x20] sm:$0xff]
          %v4677 = vld [vmem:[#allocation4 + $0x28] sm:$0xff]
          %v4678 = vld [vmem:[#allocation4 + $0x30] sm:$0xff]
          %v4679 = vld [vmem:[#allocation4 + $0x38] sm:$0xff]
          %v4680 = vld [vmem:[#allocation4 + $0x40] sm:$0xff]
          %v4681 = vld [vmem:[#allocation4 + $0x48] sm:$0xff]
          %v4682 = vld [vmem:[#allocation4 + $0x50] sm:$0xff]
          %v4683 = vld [vmem:[#allocation4 + $0x58] sm:$0xff]
          %v4684 = vld [vmem:[#allocation4 + $0x60] sm:$0xff]
          %v4685 = vld [vmem:[#allocation4 + $0x68] sm:$0xff]
          %v4686 = vld [vmem:[#allocation4 + $0x70] sm:$0xff]
          %v4687 = vld [vmem:[#allocation4 + $0x78] sm:$0xff]
          %v4688 = vld [vmem:[#allocation4 + $0x80] sm:$0xff]
          %v4689 = vld [vmem:[#allocation4 + $0x88] sm:$0xff]
          %v4690 = vld [vmem:[#allocation4 + $0x90] sm:$0xff]
          %v4691 = vld [vmem:[#allocation4 + $0x98] sm:$0xff]
          %v4692 = vld [vmem:[#allocation4 + $0xa0] sm:$0xff]
          %v4693 = vld [vmem:[#allocation4 + $0xa8] sm:$0xff]
          %v4694 = vld [vmem:[#allocation4 + $0xb0] sm:$0xff]
          %v4695 = vld [vmem:[#allocation4 + $0xb8] sm:$0xff]
          %v4696 = vld [vmem:[#allocation4 + $0xc0] sm:$0xff]
          %v4697 = vld [vmem:[#allocation4 + $0xc8] sm:$0xff]
          %v4698 = vld [vmem:[#allocation4 + $0xd0] sm:$0xff]
          %v4699 = vld [vmem:[#allocation4 + $0xd8] sm:$0xff]
          %v4700 = vld [vmem:[#allocation4 + $0xe0] sm:$0xff]
          %v4701 = vld [vmem:[#allocation4 + $0xe8] sm:$0xff]
          %v4702 = vld [vmem:[#allocation4 + $0xf0] sm:$0xff]
          %v4703 = vld [vmem:[#allocation4 + $0xf8] sm:$0xff]
          %v4704 = vld [vmem:[#allocation4 + $0x100] sm:$0xff]
          %v4705 = vld [vmem:[#allocation4 + $0x108] sm:$0xff]
          %v4706 = vld [vmem:[#allocation4 + $0x110] sm:$0xff]
          %v4707 = vld [vmem:[#allocation4 + $0x118] sm:$0xff]
          %v4708 = vld [vmem:[#allocation4 + $0x120] sm:$0xff]
          %v4709 = vld [vmem:[#allocation4 + $0x128] sm:$0xff]
          %v4710 = vld [vmem:[#allocation4 + $0x130] sm:$0xff]
          %v4711 = vld [vmem:[#allocation4 + $0x138] sm:$0xff]
          %v4712 = vld [vmem:[#allocation4 + $0x140] sm:$0xff]
          %v4713 = vld [vmem:[#allocation4 + $0x148] sm:$0xff]
          %v4714 = vld [vmem:[#allocation4 + $0x150] sm:$0xff]
          %v4715 = vld [vmem:[#allocation4 + $0x158] sm:$0xff]
          %v4716 = vld [vmem:[#allocation4 + $0x160] sm:$0xff]
          %v4717 = vld [vmem:[#allocation4 + $0x168] sm:$0xff]
          %v4718 = vld [vmem:[#allocation4 + $0x170] sm:$0xff]
          %v4719 = vld [vmem:[#allocation4 + $0x178] sm:$0xff]
          %v4720 = vld [vmem:[#allocation4 + $0x180] sm:$0xff]
          %v4721 = vld [vmem:[#allocation4 + $0x188] sm:$0xff]
          %v4722 = vld [vmem:[#allocation4 + $0x190] sm:$0xff]
          %v4723 = vld [vmem:[#allocation4 + $0x198] sm:$0xff]
          %v4724 = vld [vmem:[#allocation4 + $0x1a0] sm:$0xff]
          %v4725 = vld [vmem:[#allocation4 + $0x1a8] sm:$0xff]
          %v4726 = vld [vmem:[#allocation4 + $0x1b0] sm:$0xff]
          %v4727 = vld [vmem:[#allocation4 + $0x1b8] sm:$0xff]
          %v4728 = vld [vmem:[#allocation4 + $0x1c0] sm:$0xff]
          %v4729 = vld [vmem:[#allocation4 + $0x1c8] sm:$0xff]
          %v4730 = vld [vmem:[#allocation4 + $0x1d0] sm:$0xff]
          %v4731 = vld [vmem:[#allocation4 + $0x1d8] sm:$0xff]
          %v4732 = vld [vmem:[#allocation4 + $0x1e0] sm:$0xff]
          %v4733 = vld [vmem:[#allocation4 + $0x1e8] sm:$0xff]
          %v4734 = vld [vmem:[#allocation4 + $0x1f0] sm:$0xff]
          %v4735 = vld [vmem:[#allocation4 + $0x1f8] sm:$0xff]
          %v4736 = vld [vmem:[#allocation2 + $0x200] sm:$0xff]
          %v4737 = vld [vmem:[#allocation2 + $0x208] sm:$0xff]
          %v4738 = vld [vmem:[#allocation2 + $0x210] sm:$0xff]
          %v4739 = vld [vmem:[#allocation2 + $0x218] sm:$0xff]
          %v4740 = vld [vmem:[#allocation2 + $0x220] sm:$0xff]
          %v4741 = vld [vmem:[#allocation2 + $0x228] sm:$0xff]
          %v4742 = vld [vmem:[#allocation2 + $0x230] sm:$0xff]
          %v4743 = vld [vmem:[#allocation2 + $0x238] sm:$0xff]
          %v4744 = vld [vmem:[#allocation2 + $0x240] sm:$0xff]
          %v4745 = vld [vmem:[#allocation2 + $0x248] sm:$0xff]
          %v4746 = vld [vmem:[#allocation2 + $0x250] sm:$0xff]
          %v4747 = vld [vmem:[#allocation2 + $0x258] sm:$0xff]
          %v4748 = vld [vmem:[#allocation2 + $0x260] sm:$0xff]
          %v4749 = vld [vmem:[#allocation2 + $0x268] sm:$0xff]
          %v4750 = vld [vmem:[#allocation2 + $0x270] sm:$0xff]
          %v4751 = vld [vmem:[#allocation2 + $0x278] sm:$0xff]
          %v4752 = vld [vmem:[#allocation2 + $0x280] sm:$0xff]
          %v4753 = vld [vmem:[#allocation2 + $0x288] sm:$0xff]
          %v4754 = vld [vmem:[#allocation2 + $0x290] sm:$0xff]
          %v4755 = vld [vmem:[#allocation2 + $0x298] sm:$0xff]
          %v4756 = vld [vmem:[#allocation2 + $0x2a0] sm:$0xff]
          %v4757 = vld [vmem:[#allocation2 + $0x2a8] sm:$0xff]
          %v4758 = vld [vmem:[#allocation2 + $0x2b0] sm:$0xff]
          %v4759 = vld [vmem:[#allocation2 + $0x2b8] sm:$0xff]
          %v4760 = vld [vmem:[#allocation2 + $0x2c0] sm:$0xff]
          %v4761 = vld [vmem:[#allocation2 + $0x2c8] sm:$0xff]
          %v4762 = vld [vmem:[#allocation2 + $0x2d0] sm:$0xff]
          %v4763 = vld [vmem:[#allocation2 + $0x2d8] sm:$0xff]
          %v4764 = vld [vmem:[#allocation2 + $0x2e0] sm:$0xff]
          %v4765 = vld [vmem:[#allocation2 + $0x2e8] sm:$0xff]
          %v4766 = vld [vmem:[#allocation2 + $0x2f0] sm:$0xff]
          %v4767 = vld [vmem:[#allocation2 + $0x2f8] sm:$0xff]
          %v4768 = vld [vmem:[#allocation2 + $0x300] sm:$0xff]
          %v4769 = vld [vmem:[#allocation2 + $0x308] sm:$0xff]
          %v4770 = vld [vmem:[#allocation2 + $0x310] sm:$0xff]
          %v4771 = vld [vmem:[#allocation2 + $0x318] sm:$0xff]
          %v4772 = vld [vmem:[#allocation2 + $0x320] sm:$0xff]
          %v4773 = vld [vmem:[#allocation2 + $0x328] sm:$0xff]
          %v4774 = vld [vmem:[#allocation2 + $0x330] sm:$0xff]
          %v4775 = vld [vmem:[#allocation2 + $0x338] sm:$0xff]
          %v4776 = vld [vmem:[#allocation2 + $0x340] sm:$0xff]
          %v4777 = vld [vmem:[#allocation2 + $0x348] sm:$0xff]
          %v4778 = vld [vmem:[#allocation2 + $0x350] sm:$0xff]
          %v4779 = vld [vmem:[#allocation2 + $0x358] sm:$0xff]
          %v4780 = vld [vmem:[#allocation2 + $0x360] sm:$0xff]
          %v4781 = vld [vmem:[#allocation2 + $0x368] sm:$0xff]
          %v4782 = vld [vmem:[#allocation2 + $0x370] sm:$0xff]
          %v4783 = vld [vmem:[#allocation2 + $0x378] sm:$0xff]
          %v4784 = vld [vmem:[#allocation2 + $0x380] sm:$0xff]
          %v4785 = vld [vmem:[#allocation2 + $0x388] sm:$0xff]
          %v4786 = vld [vmem:[#allocation2 + $0x390] sm:$0xff]
          %v4787 = vld [vmem:[#allocation2 + $0x398] sm:$0xff]
          %v4788 = vld [vmem:[#allocation2 + $0x3a0] sm:$0xff]
          %v4789 = vld [vmem:[#allocation2 + $0x3a8] sm:$0xff]
          %v4790 = vld [vmem:[#allocation2 + $0x3b0] sm:$0xff]
          %v4791 = vld [vmem:[#allocation2 + $0x3b8] sm:$0xff]
          %v4792 = vld [vmem:[#allocation2 + $0x3c0] sm:$0xff]
          %v4793 = vld [vmem:[#allocation2 + $0x3c8] sm:$0xff]
          %v4794 = vld [vmem:[#allocation2 + $0x3d0] sm:$0xff]
          %v4795 = vld [vmem:[#allocation2 + $0x3d8] sm:$0xff]
          %v4796 = vld [vmem:[#allocation2 + $0x3e0] sm:$0xff]
          %v4797 = vld [vmem:[#allocation2 + $0x3e8] sm:$0xff]
          %v4798 = vld [vmem:[#allocation2 + $0x3f0] sm:$0xff]
          %v4799 = vld [vmem:[#allocation2 + $0x3f8] sm:$0xff]
          %v4800 = vld [vmem:[#allocation3 + $0x200] sm:$0xff]
          %v4801 = vld [vmem:[#allocation3 + $0x208] sm:$0xff]
          %v4802 = vld [vmem:[#allocation3 + $0x210] sm:$0xff]
          %v4803 = vld [vmem:[#allocation3 + $0x218] sm:$0xff]
          %v4804 = vld [vmem:[#allocation3 + $0x220] sm:$0xff]
          %v4805 = vld [vmem:[#allocation3 + $0x228] sm:$0xff]
          %v4806 = vld [vmem:[#allocation3 + $0x230] sm:$0xff]
          %v4807 = vld [vmem:[#allocation3 + $0x238] sm:$0xff]
          %v4808 = vld [vmem:[#allocation3 + $0x240] sm:$0xff]
          %v4809 = vld [vmem:[#allocation3 + $0x248] sm:$0xff]
          %v4810 = vld [vmem:[#allocation3 + $0x250] sm:$0xff]
          %v4811 = vld [vmem:[#allocation3 + $0x258] sm:$0xff]
          %v4812 = vld [vmem:[#allocation3 + $0x260] sm:$0xff]
          %v4813 = vld [vmem:[#allocation3 + $0x268] sm:$0xff]
          %v4814 = vld [vmem:[#allocation3 + $0x270] sm:$0xff]
          %v4815 = vld [vmem:[#allocation3 + $0x278] sm:$0xff]
          %v4816 = vld [vmem:[#allocation3 + $0x280] sm:$0xff]
          %v4817 = vld [vmem:[#allocation3 + $0x288] sm:$0xff]
          %v4818 = vld [vmem:[#allocation3 + $0x290] sm:$0xff]
          %v4819 = vld [vmem:[#allocation3 + $0x298] sm:$0xff]
          %v4820 = vld [vmem:[#allocation3 + $0x2a0] sm:$0xff]
          %v4821 = vld [vmem:[#allocation3 + $0x2a8] sm:$0xff]
          %v4822 = vld [vmem:[#allocation3 + $0x2b0] sm:$0xff]
          %v4823 = vld [vmem:[#allocation3 + $0x2b8] sm:$0xff]
          %v4824 = vld [vmem:[#allocation3 + $0x2c0] sm:$0xff]
          %v4825 = vld [vmem:[#allocation3 + $0x2c8] sm:$0xff]
          %v4826 = vld [vmem:[#allocation3 + $0x2d0] sm:$0xff]
          %v4827 = vld [vmem:[#allocation3 + $0x2d8] sm:$0xff]
          %v4828 = vld [vmem:[#allocation3 + $0x2e0] sm:$0xff]
          %v4829 = vld [vmem:[#allocation3 + $0x2e8] sm:$0xff]
          %v4830 = vld [vmem:[#allocation3 + $0x2f0] sm:$0xff]
          %v4831 = vld [vmem:[#allocation3 + $0x2f8] sm:$0xff]
          %v4832 = vld [vmem:[#allocation3 + $0x300] sm:$0xff]
          %v4833 = vld [vmem:[#allocation3 + $0x308] sm:$0xff]
          %v4834 = vld [vmem:[#allocation3 + $0x310] sm:$0xff]
          %v4835 = vld [vmem:[#allocation3 + $0x318] sm:$0xff]
          %v4836 = vld [vmem:[#allocation3 + $0x320] sm:$0xff]
          %v4837 = vld [vmem:[#allocation3 + $0x328] sm:$0xff]
          %v4838 = vld [vmem:[#allocation3 + $0x330] sm:$0xff]
          %v4839 = vld [vmem:[#allocation3 + $0x338] sm:$0xff]
          %v4840 = vld [vmem:[#allocation3 + $0x340] sm:$0xff]
          %v4841 = vld [vmem:[#allocation3 + $0x348] sm:$0xff]
          %v4842 = vld [vmem:[#allocation3 + $0x350] sm:$0xff]
          %v4843 = vld [vmem:[#allocation3 + $0x358] sm:$0xff]
          %v4844 = vld [vmem:[#allocation3 + $0x360] sm:$0xff]
          %v4845 = vld [vmem:[#allocation3 + $0x368] sm:$0xff]
          %v4846 = vld [vmem:[#allocation3 + $0x370] sm:$0xff]
          %v4847 = vld [vmem:[#allocation3 + $0x378] sm:$0xff]
          %v4848 = vld [vmem:[#allocation3 + $0x380] sm:$0xff]
          %v4849 = vld [vmem:[#allocation3 + $0x388] sm:$0xff]
          %v4850 = vld [vmem:[#allocation3 + $0x390] sm:$0xff]
          %v4851 = vld [vmem:[#allocation3 + $0x398] sm:$0xff]
          %v4852 = vld [vmem:[#allocation3 + $0x3a0] sm:$0xff]
          %v4853 = vld [vmem:[#allocation3 + $0x3a8] sm:$0xff]
          %v4854 = vld [vmem:[#allocation3 + $0x3b0] sm:$0xff]
          %v4855 = vld [vmem:[#allocation3 + $0x3b8] sm:$0xff]
          %v4856 = vld [vmem:[#allocation3 + $0x3c0] sm:$0xff]
          %v4857 = vld [vmem:[#allocation3 + $0x3c8] sm:$0xff]
          %v4858 = vld [vmem:[#allocation3 + $0x3d0] sm:$0xff]
          %v4859 = vld [vmem:[#allocation3 + $0x3d8] sm:$0xff]
          %v4860 = vld [vmem:[#allocation3 + $0x3e0] sm:$0xff]
          %v4861 = vld [vmem:[#allocation3 + $0x3e8] sm:$0xff]
          %v4862 = vld [vmem:[#allocation3 + $0x3f0] sm:$0xff]
          %v4863 = vld [vmem:[#allocation3 + $0x3f8] sm:$0xff]
          %v4864 = vld [vmem:[#allocation4 + $0x200] sm:$0xff]
          %v4865 = vld [vmem:[#allocation4 + $0x208] sm:$0xff]
          %v4866 = vld [vmem:[#allocation4 + $0x210] sm:$0xff]
          %v4867 = vld [vmem:[#allocation4 + $0x218] sm:$0xff]
          %v4868 = vld [vmem:[#allocation4 + $0x220] sm:$0xff]
          %v4869 = vld [vmem:[#allocation4 + $0x228] sm:$0xff]
          %v4870 = vld [vmem:[#allocation4 + $0x230] sm:$0xff]
          %v4871 = vld [vmem:[#allocation4 + $0x238] sm:$0xff]
          %v4872 = vld [vmem:[#allocation4 + $0x240] sm:$0xff]
          %v4873 = vld [vmem:[#allocation4 + $0x248] sm:$0xff]
          %v4874 = vld [vmem:[#allocation4 + $0x250] sm:$0xff]
          %v4875 = vld [vmem:[#allocation4 + $0x258] sm:$0xff]
          %v4876 = vld [vmem:[#allocation4 + $0x260] sm:$0xff]
          %v4877 = vld [vmem:[#allocation4 + $0x268] sm:$0xff]
          %v4878 = vld [vmem:[#allocation4 + $0x270] sm:$0xff]
          %v4879 = vld [vmem:[#allocation4 + $0x278] sm:$0xff]
          %v4880 = vld [vmem:[#allocation4 + $0x280] sm:$0xff]
          %v4881 = vld [vmem:[#allocation4 + $0x288] sm:$0xff]
          %v4882 = vld [vmem:[#allocation4 + $0x290] sm:$0xff]
          %v4883 = vld [vmem:[#allocation4 + $0x298] sm:$0xff]
          %v4884 = vld [vmem:[#allocation4 + $0x2a0] sm:$0xff]
          %v4885 = vld [vmem:[#allocation4 + $0x2a8] sm:$0xff]
          %v4886 = vld [vmem:[#allocation4 + $0x2b0] sm:$0xff]
          %v4887 = vld [vmem:[#allocation4 + $0x2b8] sm:$0xff]
          %v4888 = vld [vmem:[#allocation4 + $0x2c0] sm:$0xff]
          %v4889 = vld [vmem:[#allocation4 + $0x2c8] sm:$0xff]
          %v4890 = vld [vmem:[#allocation4 + $0x2d0] sm:$0xff]
          %v4891 = vld [vmem:[#allocation4 + $0x2d8] sm:$0xff]
          %v4892 = vld [vmem:[#allocation4 + $0x2e0] sm:$0xff]
          %v4893 = vld [vmem:[#allocation4 + $0x2e8] sm:$0xff]
          %v4894 = vld [vmem:[#allocation4 + $0x2f0] sm:$0xff]
          %v4895 = vld [vmem:[#allocation4 + $0x2f8] sm:$0xff]
          %v4896 = vld [vmem:[#allocation4 + $0x300] sm:$0xff]
          %v4897 = vld [vmem:[#allocation4 + $0x308] sm:$0xff]
          %v4898 = vld [vmem:[#allocation4 + $0x310] sm:$0xff]
          %v4899 = vld [vmem:[#allocation4 + $0x318] sm:$0xff]
          %v4900 = vld [vmem:[#allocation4 + $0x320] sm:$0xff]
          %v4901 = vld [vmem:[#allocation4 + $0x328] sm:$0xff]
          %v4902 = vld [vmem:[#allocation4 + $0x330] sm:$0xff]
          %v4903 = vld [vmem:[#allocation4 + $0x338] sm:$0xff]
          %v4904 = vld [vmem:[#allocation4 + $0x340] sm:$0xff]
          %v4905 = vld [vmem:[#allocation4 + $0x348] sm:$0xff]
          %v4906 = vld [vmem:[#allocation4 + $0x350] sm:$0xff]
          %v4907 = vld [vmem:[#allocation4 + $0x358] sm:$0xff]
          %v4908 = vld [vmem:[#allocation4 + $0x360] sm:$0xff]
          %v4909 = vld [vmem:[#allocation4 + $0x368] sm:$0xff]
          %v4910 = vld [vmem:[#allocation4 + $0x370] sm:$0xff]
          %v4911 = vld [vmem:[#allocation4 + $0x378] sm:$0xff]
          %v4912 = vld [vmem:[#allocation4 + $0x380] sm:$0xff]
          %v4913 = vld [vmem:[#allocation4 + $0x388] sm:$0xff]
          %v4914 = vld [vmem:[#allocation4 + $0x390] sm:$0xff]
          %v4915 = vld [vmem:[#allocation4 + $0x398] sm:$0xff]
          %v4916 = vld [vmem:[#allocation4 + $0x3a0] sm:$0xff]
          %v4917 = vld [vmem:[#allocation4 + $0x3a8] sm:$0xff]
          %v4918 = vld [vmem:[#allocation4 + $0x3b0] sm:$0xff]
          %v4919 = vld [vmem:[#allocation4 + $0x3b8] sm:$0xff]
          %v4920 = vld [vmem:[#allocation4 + $0x3c0] sm:$0xff]
          %v4921 = vld [vmem:[#allocation4 + $0x3c8] sm:$0xff]
          %v4922 = vld [vmem:[#allocation4 + $0x3d0] sm:$0xff]
          %v4923 = vld [vmem:[#allocation4 + $0x3d8] sm:$0xff]
          %v4924 = vld [vmem:[#allocation4 + $0x3e0] sm:$0xff]
          %v4925 = vld [vmem:[#allocation4 + $0x3e8] sm:$0xff]
          %v4926 = vld [vmem:[#allocation4 + $0x3f0] sm:$0xff]
          %v4927 = vld [vmem:[#allocation4 + $0x3f8] sm:$0xff]
          %v4928 = vmin.f32 %v4544, %v4736
          %v4929 = vmin.f32 %v4545, %v4737
          %v4930 = vmin.f32 %v4546, %v4738
          %v4931 = vmin.f32 %v4547, %v4739
          %v4932 = vmin.f32 %v4548, %v4740
          %v4933 = vmin.f32 %v4549, %v4741
          %v4934 = vmin.f32 %v4550, %v4742
          %v4935 = vmin.f32 %v4551, %v4743
          %v4936 = vmin.f32 %v4552, %v4744
          %v4937 = vmin.f32 %v4553, %v4745
          %v4938 = vmin.f32 %v4554, %v4746
          %v4939 = vmin.f32 %v4555, %v4747
          %v4940 = vmin.f32 %v4556, %v4748
          %v4941 = vmin.f32 %v4557, %v4749
          %v4942 = vmin.f32 %v4558, %v4750
          %v4943 = vmin.f32 %v4559, %v4751
          %v4944 = vmin.f32 %v4560, %v4752
          %v4945 = vmin.f32 %v4561, %v4753
          %v4946 = vmin.f32 %v4562, %v4754
          %v4947 = vmin.f32 %v4563, %v4755
          %v4948 = vmin.f32 %v4564, %v4756
          %v4949 = vmin.f32 %v4565, %v4757
          %v4950 = vmin.f32 %v4566, %v4758
          %v4951 = vmin.f32 %v4567, %v4759
          %v4952 = vmin.f32 %v4568, %v4760
          %v4953 = vmin.f32 %v4569, %v4761
          %v4954 = vmin.f32 %v4570, %v4762
          %v4955 = vmin.f32 %v4571, %v4763
          %v4956 = vmin.f32 %v4572, %v4764
          %v4957 = vmin.f32 %v4573, %v4765
          %v4958 = vmin.f32 %v4574, %v4766
          %v4959 = vmin.f32 %v4575, %v4767
          %v4960 = vmin.f32 %v4576, %v4768
          %v4961 = vmin.f32 %v4577, %v4769
          %v4962 = vmin.f32 %v4578, %v4770
          %v4963 = vmin.f32 %v4579, %v4771
          %v4964 = vmin.f32 %v4580, %v4772
          %v4965 = vmin.f32 %v4581, %v4773
          %v4966 = vmin.f32 %v4582, %v4774
          %v4967 = vmin.f32 %v4583, %v4775
          %v4968 = vmin.f32 %v4584, %v4776
          %v4969 = vmin.f32 %v4585, %v4777
          %v4970 = vmin.f32 %v4586, %v4778
          %v4971 = vmin.f32 %v4587, %v4779
          %v4972 = vmin.f32 %v4588, %v4780
          %v4973 = vmin.f32 %v4589, %v4781
          %v4974 = vmin.f32 %v4590, %v4782
          %v4975 = vmin.f32 %v4591, %v4783
          %v4976 = vmin.f32 %v4592, %v4784
          %v4977 = vmin.f32 %v4593, %v4785
          %v4978 = vmin.f32 %v4594, %v4786
          %v4979 = vmin.f32 %v4595, %v4787
          %v4980 = vmin.f32 %v4596, %v4788
          %v4981 = vmin.f32 %v4597, %v4789
          %v4982 = vmin.f32 %v4598, %v4790
          %v4983 = vmin.f32 %v4599, %v4791
          %v4984 = vmin.f32 %v4600, %v4792
          %v4985 = vmin.f32 %v4601, %v4793
          %v4986 = vmin.f32 %v4602, %v4794
          %v4987 = vmin.f32 %v4603, %v4795
          %v4988 = vmin.f32 %v4604, %v4796
          %v4989 = vmin.f32 %v4605, %v4797
          %v4990 = vmin.f32 %v4606, %v4798
          %v4991 = vmin.f32 %v4607, %v4799
          %v4992 = vmax.f32 %v4544, %v4736
          %v4993 = vmax.f32 %v4545, %v4737
          %v4994 = vmax.f32 %v4546, %v4738
          %v4995 = vmax.f32 %v4547, %v4739
          %v4996 = vmax.f32 %v4548, %v4740
          %v4997 = vmax.f32 %v4549, %v4741
          %v4998 = vmax.f32 %v4550, %v4742
          %v4999 = vmax.f32 %v4551, %v4743
          %v5000 = vmax.f32 %v4552, %v4744
          %v5001 = vmax.f32 %v4553, %v4745
          %v5002 = vmax.f32 %v4554, %v4746
          %v5003 = vmax.f32 %v4555, %v4747
          %v5004 = vmax.f32 %v4556, %v4748
          %v5005 = vmax.f32 %v4557, %v4749
          %v5006 = vmax.f32 %v4558, %v4750
          %v5007 = vmax.f32 %v4559, %v4751
          %v5008 = vmax.f32 %v4560, %v4752
          %v5009 = vmax.f32 %v4561, %v4753
          %v5010 = vmax.f32 %v4562, %v4754
          %v5011 = vmax.f32 %v4563, %v4755
          %v5012 = vmax.f32 %v4564, %v4756
          %v5013 = vmax.f32 %v4565, %v4757
          %v5014 = vmax.f32 %v4566, %v4758
          %v5015 = vmax.f32 %v4567, %v4759
          %v5016 = vmax.f32 %v4568, %v4760
          %v5017 = vmax.f32 %v4569, %v4761
          %v5018 = vmax.f32 %v4570, %v4762
          %v5019 = vmax.f32 %v4571, %v4763
          %v5020 = vmax.f32 %v4572, %v4764
          %v5021 = vmax.f32 %v4573, %v4765
          %v5022 = vmax.f32 %v4574, %v4766
          %v5023 = vmax.f32 %v4575, %v4767
          %v5024 = vmax.f32 %v4576, %v4768
          %v5025 = vmax.f32 %v4577, %v4769
          %v5026 = vmax.f32 %v4578, %v4770
          %v5027 = vmax.f32 %v4579, %v4771
          %v5028 = vmax.f32 %v4580, %v4772
          %v5029 = vmax.f32 %v4581, %v4773
          %v5030 = vmax.f32 %v4582, %v4774
          %v5031 = vmax.f32 %v4583, %v4775
          %v5032 = vmax.f32 %v4584, %v4776
          %v5033 = vmax.f32 %v4585, %v4777
          %v5034 = vmax.f32 %v4586, %v4778
          %v5035 = vmax.f32 %v4587, %v4779
          %v5036 = vmax.f32 %v4588, %v4780
          %v5037 = vmax.f32 %v4589, %v4781
          %v5038 = vmax.f32 %v4590, %v4782
          %v5039 = vmax.f32 %v4591, %v4783
          %v5040 = vmax.f32 %v4592, %v4784
          %v5041 = vmax.f32 %v4593, %v4785
          %v5042 = vmax.f32 %v4594, %v4786
          %v5043 = vmax.f32 %v4595, %v4787
          %v5044 = vmax.f32 %v4596, %v4788
          %v5045 = vmax.f32 %v4597, %v4789
          %v5046 = vmax.f32 %v4598, %v4790
          %v5047 = vmax.f32 %v4599, %v4791
          %v5048 = vmax.f32 %v4600, %v4792
          %v5049 = vmax.f32 %v4601, %v4793
          %v5050 = vmax.f32 %v4602, %v4794
          %v5051 = vmax.f32 %v4603, %v4795
          %v5052 = vmax.f32 %v4604, %v4796
          %v5053 = vmax.f32 %v4605, %v4797
          %v5054 = vmax.f32 %v4606, %v4798
          %v5055 = vmax.f32 %v4607, %v4799
          %v5056 = vmin.f32 %v4608, %v4992
          %v5057 = vmin.f32 %v4609, %v4993
          %v5058 = vmin.f32 %v4610, %v4994
          %v5059 = vmin.f32 %v4611, %v4995
          %v5060 = vmin.f32 %v4612, %v4996
          %v5061 = vmin.f32 %v4613, %v4997
          %v5062 = vmin.f32 %v4614, %v4998
          %v5063 = vmin.f32 %v4615, %v4999
          %v5064 = vmin.f32 %v4616, %v5000
          %v5065 = vmin.f32 %v4617, %v5001
          %v5066 = vmin.f32 %v4618, %v5002
          %v5067 = vmin.f32 %v4619, %v5003
          %v5068 = vmin.f32 %v4620, %v5004
          %v5069 = vmin.f32 %v4621, %v5005
          %v5070 = vmin.f32 %v4622, %v5006
          %v5071 = vmin.f32 %v4623, %v5007
          %v5072 = vmin.f32 %v4624, %v5008
          %v5073 = vmin.f32 %v4625, %v5009
          %v5074 = vmin.f32 %v4626, %v5010
          %v5075 = vmin.f32 %v4627, %v5011
          %v5076 = vmin.f32 %v4628, %v5012
          %v5077 = vmin.f32 %v4629, %v5013
          %v5078 = vmin.f32 %v4630, %v5014
          %v5079 = vmin.f32 %v4631, %v5015
          %v5080 = vmin.f32 %v4632, %v5016
          %v5081 = vmin.f32 %v4633, %v5017
          %v5082 = vmin.f32 %v4634, %v5018
          %v5083 = vmin.f32 %v4635, %v5019
          %v5084 = vmin.f32 %v4636, %v5020
          %v5085 = vmin.f32 %v4637, %v5021
          %v5086 = vmin.f32 %v4638, %v5022
          %v5087 = vmin.f32 %v4639, %v5023
          %v5088 = vmin.f32 %v4640, %v5024
          %v5089 = vmin.f32 %v4641, %v5025
          %v5090 = vmin.f32 %v4642, %v5026
          %v5091 = vmin.f32 %v4643, %v5027
          %v5092 = vmin.f32 %v4644, %v5028
          %v5093 = vmin.f32 %v4645, %v5029
          %v5094 = vmin.f32 %v4646, %v5030
          %v5095 = vmin.f32 %v4647, %v5031
          %v5096 = vmin.f32 %v4648, %v5032
          %v5097 = vmin.f32 %v4649, %v5033
          %v5098 = vmin.f32 %v4650, %v5034
          %v5099 = vmin.f32 %v4651, %v5035
          %v5100 = vmin.f32 %v4652, %v5036
          %v5101 = vmin.f32 %v4653, %v5037
          %v5102 = vmin.f32 %v4654, %v5038
          %v5103 = vmin.f32 %v4655, %v5039
          %v5104 = vmin.f32 %v4656, %v5040
          %v5105 = vmin.f32 %v4657, %v5041
          %v5106 = vmin.f32 %v4658, %v5042
          %v5107 = vmin.f32 %v4659, %v5043
          %v5108 = vmin.f32 %v4660, %v5044
          %v5109 = vmin.f32 %v4661, %v5045
          %v5110 = vmin.f32 %v4662, %v5046
          %v5111 = vmin.f32 %v4663, %v5047
          %v5112 = vmin.f32 %v4664, %v5048
          %v5113 = vmin.f32 %v4665, %v5049
          %v5114 = vmin.f32 %v4666, %v5050
          %v5115 = vmin.f32 %v4667, %v5051
          %v5116 = vmin.f32 %v4668, %v5052
          %v5117 = vmin.f32 %v4669, %v5053
          %v5118 = vmin.f32 %v4670, %v5054
          %v5119 = vmin.f32 %v4671, %v5055
          %v5120 = vmax.f32 %v4608, %v4736
          %v5121 = vmax.f32 %v4609, %v4737
          %v5122 = vmax.f32 %v4610, %v4738
          %v5123 = vmax.f32 %v4611, %v4739
          %v5124 = vmax.f32 %v4612, %v4740
          %v5125 = vmax.f32 %v4613, %v4741
          %v5126 = vmax.f32 %v4614, %v4742
          %v5127 = vmax.f32 %v4615, %v4743
          %v5128 = vmax.f32 %v4616, %v4744
          %v5129 = vmax.f32 %v4617, %v4745
          %v5130 = vmax.f32 %v4618, %v4746
          %v5131 = vmax.f32 %v4619, %v4747
          %v5132 = vmax.f32 %v4620, %v4748
          %v5133 = vmax.f32 %v4621, %v4749
          %v5134 = vmax.f32 %v4622, %v4750
          %v5135 = vmax.f32 %v4623, %v4751
          %v5136 = vmax.f32 %v4624, %v4752
          %v5137 = vmax.f32 %v4625, %v4753
          %v5138 = vmax.f32 %v4626, %v4754
          %v5139 = vmax.f32 %v4627, %v4755
          %v5140 = vmax.f32 %v4628, %v4756
          %v5141 = vmax.f32 %v4629, %v4757
          %v5142 = vmax.f32 %v4630, %v4758
          %v5143 = vmax.f32 %v4631, %v4759
          %v5144 = vmax.f32 %v4632, %v4760
          %v5145 = vmax.f32 %v4633, %v4761
          %v5146 = vmax.f32 %v4634, %v4762
          %v5147 = vmax.f32 %v4635, %v4763
          %v5148 = vmax.f32 %v4636, %v4764
          %v5149 = vmax.f32 %v4637, %v4765
          %v5150 = vmax.f32 %v4638, %v4766
          %v5151 = vmax.f32 %v4639, %v4767
          %v5152 = vmax.f32 %v4640, %v4768
          %v5153 = vmax.f32 %v4641, %v4769
          %v5154 = vmax.f32 %v4642, %v4770
          %v5155 = vmax.f32 %v4643, %v4771
          %v5156 = vmax.f32 %v4644, %v4772
          %v5157 = vmax.f32 %v4645, %v4773
          %v5158 = vmax.f32 %v4646, %v4774
          %v5159 = vmax.f32 %v4647, %v4775
          %v5160 = vmax.f32 %v4648, %v4776
          %v5161 = vmax.f32 %v4649, %v4777
          %v5162 = vmax.f32 %v4650, %v4778
          %v5163 = vmax.f32 %v4651, %v4779
          %v5164 = vmax.f32 %v4652, %v4780
          %v5165 = vmax.f32 %v4653, %v4781
          %v5166 = vmax.f32 %v4654, %v4782
          %v5167 = vmax.f32 %v4655, %v4783
          %v5168 = vmax.f32 %v4656, %v4784
          %v5169 = vmax.f32 %v4657, %v4785
          %v5170 = vmax.f32 %v4658, %v4786
          %v5171 = vmax.f32 %v4659, %v4787
          %v5172 = vmax.f32 %v4660, %v4788
          %v5173 = vmax.f32 %v4661, %v4789
          %v5174 = vmax.f32 %v4662, %v4790
          %v5175 = vmax.f32 %v4663, %v4791
          %v5176 = vmax.f32 %v4664, %v4792
          %v5177 = vmax.f32 %v4665, %v4793
          %v5178 = vmax.f32 %v4666, %v4794
          %v5179 = vmax.f32 %v4667, %v4795
          %v5180 = vmax.f32 %v4668, %v4796
          %v5181 = vmax.f32 %v4669, %v4797
          %v5182 = vmax.f32 %v4670, %v4798
          %v5183 = vmax.f32 %v4671, %v4799
          %v5184 = vmin.f32 %v4672, %v5120
          %v5185 = vmin.f32 %v4673, %v5121
          %v5186 = vmin.f32 %v4674, %v5122
          %v5187 = vmin.f32 %v4675, %v5123
          %v5188 = vmin.f32 %v4676, %v5124
          %v5189 = vmin.f32 %v4677, %v5125
          %v5190 = vmin.f32 %v4678, %v5126
          %v5191 = vmin.f32 %v4679, %v5127
          %v5192 = vmin.f32 %v4680, %v5128
          %v5193 = vmin.f32 %v4681, %v5129
          %v5194 = vmin.f32 %v4682, %v5130
          %v5195 = vmin.f32 %v4683, %v5131
          %v5196 = vmin.f32 %v4684, %v5132
          %v5197 = vmin.f32 %v4685, %v5133
          %v5198 = vmin.f32 %v4686, %v5134
          %v5199 = vmin.f32 %v4687, %v5135
          %v5200 = vmin.f32 %v4688, %v5136
          %v5201 = vmin.f32 %v4689, %v5137
          %v5202 = vmin.f32 %v4690, %v5138
          %v5203 = vmin.f32 %v4691, %v5139
          %v5204 = vmin.f32 %v4692, %v5140
          %v5205 = vmin.f32 %v4693, %v5141
          %v5206 = vmin.f32 %v4694, %v5142
          %v5207 = vmin.f32 %v4695, %v5143
          %v5208 = vmin.f32 %v4696, %v5144
          %v5209 = vmin.f32 %v4697, %v5145
          %v5210 = vmin.f32 %v4698, %v5146
          %v5211 = vmin.f32 %v4699, %v5147
          %v5212 = vmin.f32 %v4700, %v5148
          %v5213 = vmin.f32 %v4701, %v5149
          %v5214 = vmin.f32 %v4702, %v5150
          %v5215 = vmin.f32 %v4703, %v5151
          %v5216 = vmin.f32 %v4704, %v5152
          %v5217 = vmin.f32 %v4705, %v5153
          %v5218 = vmin.f32 %v4706, %v5154
          %v5219 = vmin.f32 %v4707, %v5155
          %v5220 = vmin.f32 %v4708, %v5156
          %v5221 = vmin.f32 %v4709, %v5157
          %v5222 = vmin.f32 %v4710, %v5158
          %v5223 = vmin.f32 %v4711, %v5159
          %v5224 = vmin.f32 %v4712, %v5160
          %v5225 = vmin.f32 %v4713, %v5161
          %v5226 = vmin.f32 %v4714, %v5162
          %v5227 = vmin.f32 %v4715, %v5163
          %v5228 = vmin.f32 %v4716, %v5164
          %v5229 = vmin.f32 %v4717, %v5165
          %v5230 = vmin.f32 %v4718, %v5166
          %v5231 = vmin.f32 %v4719, %v5167
          %v5232 = vmin.f32 %v4720, %v5168
          %v5233 = vmin.f32 %v4721, %v5169
          %v5234 = vmin.f32 %v4722, %v5170
          %v5235 = vmin.f32 %v4723, %v5171
          %v5236 = vmin.f32 %v4724, %v5172
          %v5237 = vmin.f32 %v4725, %v5173
          %v5238 = vmin.f32 %v4726, %v5174
          %v5239 = vmin.f32 %v4727, %v5175
          %v5240 = vmin.f32 %v4728, %v5176
          %v5241 = vmin.f32 %v4729, %v5177
          %v5242 = vmin.f32 %v4730, %v5178
          %v5243 = vmin.f32 %v4731, %v5179
          %v5244 = vmin.f32 %v4732, %v5180
          %v5245 = vmin.f32 %v4733, %v5181
          %v5246 = vmin.f32 %v4734, %v5182
          %v5247 = vmin.f32 %v4735, %v5183
          %v5248 = vmin.f32 %v4928, %v4800
          %v5249 = vmin.f32 %v4929, %v4801
          %v5250 = vmin.f32 %v4930, %v4802
          %v5251 = vmin.f32 %v4931, %v4803
          %v5252 = vmin.f32 %v4932, %v4804
          %v5253 = vmin.f32 %v4933, %v4805
          %v5254 = vmin.f32 %v4934, %v4806
          %v5255 = vmin.f32 %v4935, %v4807
          %v5256 = vmin.f32 %v4936, %v4808
          %v5257 = vmin.f32 %v4937, %v4809
          %v5258 = vmin.f32 %v4938, %v4810
          %v5259 = vmin.f32 %v4939, %v4811
          %v5260 = vmin.f32 %v4940, %v4812
          %v5261 = vmin.f32 %v4941, %v4813
          %v5262 = vmin.f32 %v4942, %v4814
          %v5263 = vmin.f32 %v4943, %v4815
          %v5264 = vmin.f32 %v4944, %v4816
          %v5265 = vmin.f32 %v4945, %v4817
          %v5266 = vmin.f32 %v4946, %v4818
          %v5267 = vmin.f32 %v4947, %v4819
          %v5268 = vmin.f32 %v4948, %v4820
          %v5269 = vmin.f32 %v4949, %v4821
          %v5270 = vmin.f32 %v4950, %v4822
          %v5271 = vmin.f32 %v4951, %v4823
          %v5272 = vmin.f32 %v4952, %v4824
          %v5273 = vmin.f32 %v4953, %v4825
          %v5274 = vmin.f32 %v4954, %v4826
          %v5275 = vmin.f32 %v4955, %v4827
          %v5276 = vmin.f32 %v4956, %v4828
          %v5277 = vmin.f32 %v4957, %v4829
          %v5278 = vmin.f32 %v4958, %v4830
          %v5279 = vmin.f32 %v4959, %v4831
          %v5280 = vmin.f32 %v4960, %v4832
          %v5281 = vmin.f32 %v4961, %v4833
          %v5282 = vmin.f32 %v4962, %v4834
          %v5283 = vmin.f32 %v4963, %v4835
          %v5284 = vmin.f32 %v4964, %v4836
          %v5285 = vmin.f32 %v4965, %v4837
          %v5286 = vmin.f32 %v4966, %v4838
          %v5287 = vmin.f32 %v4967, %v4839
          %v5288 = vmin.f32 %v4968, %v4840
          %v5289 = vmin.f32 %v4969, %v4841
          %v5290 = vmin.f32 %v4970, %v4842
          %v5291 = vmin.f32 %v4971, %v4843
          %v5292 = vmin.f32 %v4972, %v4844
          %v5293 = vmin.f32 %v4973, %v4845
          %v5294 = vmin.f32 %v4974, %v4846
          %v5295 = vmin.f32 %v4975, %v4847
          %v5296 = vmin.f32 %v4976, %v4848
          %v5297 = vmin.f32 %v4977, %v4849
          %v5298 = vmin.f32 %v4978, %v4850
          %v5299 = vmin.f32 %v4979, %v4851
          %v5300 = vmin.f32 %v4980, %v4852
          %v5301 = vmin.f32 %v4981, %v4853
          %v5302 = vmin.f32 %v4982, %v4854
          %v5303 = vmin.f32 %v4983, %v4855
          %v5304 = vmin.f32 %v4984, %v4856
          %v5305 = vmin.f32 %v4985, %v4857
          %v5306 = vmin.f32 %v4986, %v4858
          %v5307 = vmin.f32 %v4987, %v4859
          %v5308 = vmin.f32 %v4988, %v4860
          %v5309 = vmin.f32 %v4989, %v4861
          %v5310 = vmin.f32 %v4990, %v4862
          %v5311 = vmin.f32 %v4991, %v4863
          %v5312 = vmax.f32 %v4928, %v4800
          %v5313 = vmax.f32 %v4929, %v4801
          %v5314 = vmax.f32 %v4930, %v4802
          %v5315 = vmax.f32 %v4931, %v4803
          %v5316 = vmax.f32 %v4932, %v4804
          %v5317 = vmax.f32 %v4933, %v4805
          %v5318 = vmax.f32 %v4934, %v4806
          %v5319 = vmax.f32 %v4935, %v4807
          %v5320 = vmax.f32 %v4936, %v4808
          %v5321 = vmax.f32 %v4937, %v4809
          %v5322 = vmax.f32 %v4938, %v4810
          %v5323 = vmax.f32 %v4939, %v4811
          %v5324 = vmax.f32 %v4940, %v4812
          %v5325 = vmax.f32 %v4941, %v4813
          %v5326 = vmax.f32 %v4942, %v4814
          %v5327 = vmax.f32 %v4943, %v4815
          %v5328 = vmax.f32 %v4944, %v4816
          %v5329 = vmax.f32 %v4945, %v4817
          %v5330 = vmax.f32 %v4946, %v4818
          %v5331 = vmax.f32 %v4947, %v4819
          %v5332 = vmax.f32 %v4948, %v4820
          %v5333 = vmax.f32 %v4949, %v4821
          %v5334 = vmax.f32 %v4950, %v4822
          %v5335 = vmax.f32 %v4951, %v4823
          %v5336 = vmax.f32 %v4952, %v4824
          %v5337 = vmax.f32 %v4953, %v4825
          %v5338 = vmax.f32 %v4954, %v4826
          %v5339 = vmax.f32 %v4955, %v4827
          %v5340 = vmax.f32 %v4956, %v4828
          %v5341 = vmax.f32 %v4957, %v4829
          %v5342 = vmax.f32 %v4958, %v4830
          %v5343 = vmax.f32 %v4959, %v4831
          %v5344 = vmax.f32 %v4960, %v4832
          %v5345 = vmax.f32 %v4961, %v4833
          %v5346 = vmax.f32 %v4962, %v4834
          %v5347 = vmax.f32 %v4963, %v4835
          %v5348 = vmax.f32 %v4964, %v4836
          %v5349 = vmax.f32 %v4965, %v4837
          %v5350 = vmax.f32 %v4966, %v4838
          %v5351 = vmax.f32 %v4967, %v4839
          %v5352 = vmax.f32 %v4968, %v4840
          %v5353 = vmax.f32 %v4969, %v4841
          %v5354 = vmax.f32 %v4970, %v4842
          %v5355 = vmax.f32 %v4971, %v4843
          %v5356 = vmax.f32 %v4972, %v4844
          %v5357 = vmax.f32 %v4973, %v4845
          %v5358 = vmax.f32 %v4974, %v4846
          %v5359 = vmax.f32 %v4975, %v4847
          %v5360 = vmax.f32 %v4976, %v4848
          %v5361 = vmax.f32 %v4977, %v4849
          %v5362 = vmax.f32 %v4978, %v4850
          %v5363 = vmax.f32 %v4979, %v4851
          %v5364 = vmax.f32 %v4980, %v4852
          %v5365 = vmax.f32 %v4981, %v4853
          %v5366 = vmax.f32 %v4982, %v4854
          %v5367 = vmax.f32 %v4983, %v4855
          %v5368 = vmax.f32 %v4984, %v4856
          %v5369 = vmax.f32 %v4985, %v4857
          %v5370 = vmax.f32 %v4986, %v4858
          %v5371 = vmax.f32 %v4987, %v4859
          %v5372 = vmax.f32 %v4988, %v4860
          %v5373 = vmax.f32 %v4989, %v4861
          %v5374 = vmax.f32 %v4990, %v4862
          %v5375 = vmax.f32 %v4991, %v4863
          %v5376 = vmin.f32 %v5056, %v5312
          %v5377 = vmin.f32 %v5057, %v5313
          %v5378 = vmin.f32 %v5058, %v5314
          %v5379 = vmin.f32 %v5059, %v5315
          %v5380 = vmin.f32 %v5060, %v5316
          %v5381 = vmin.f32 %v5061, %v5317
          %v5382 = vmin.f32 %v5062, %v5318
          %v5383 = vmin.f32 %v5063, %v5319
          %v5384 = vmin.f32 %v5064, %v5320
          %v5385 = vmin.f32 %v5065, %v5321
          %v5386 = vmin.f32 %v5066, %v5322
          %v5387 = vmin.f32 %v5067, %v5323
          %v5388 = vmin.f32 %v5068, %v5324
          %v5389 = vmin.f32 %v5069, %v5325
          %v5390 = vmin.f32 %v5070, %v5326
          %v5391 = vmin.f32 %v5071, %v5327
          %v5392 = vmin.f32 %v5072, %v5328
          %v5393 = vmin.f32 %v5073, %v5329
          %v5394 = vmin.f32 %v5074, %v5330
          %v5395 = vmin.f32 %v5075, %v5331
          %v5396 = vmin.f32 %v5076, %v5332
          %v5397 = vmin.f32 %v5077, %v5333
          %v5398 = vmin.f32 %v5078, %v5334
          %v5399 = vmin.f32 %v5079, %v5335
          %v5400 = vmin.f32 %v5080, %v5336
          %v5401 = vmin.f32 %v5081, %v5337
          %v5402 = vmin.f32 %v5082, %v5338
          %v5403 = vmin.f32 %v5083, %v5339
          %v5404 = vmin.f32 %v5084, %v5340
          %v5405 = vmin.f32 %v5085, %v5341
          %v5406 = vmin.f32 %v5086, %v5342
          %v5407 = vmin.f32 %v5087, %v5343
          %v5408 = vmin.f32 %v5088, %v5344
          %v5409 = vmin.f32 %v5089, %v5345
          %v5410 = vmin.f32 %v5090, %v5346
          %v5411 = vmin.f32 %v5091, %v5347
          %v5412 = vmin.f32 %v5092, %v5348
          %v5413 = vmin.f32 %v5093, %v5349
          %v5414 = vmin.f32 %v5094, %v5350
          %v5415 = vmin.f32 %v5095, %v5351
          %v5416 = vmin.f32 %v5096, %v5352
          %v5417 = vmin.f32 %v5097, %v5353
          %v5418 = vmin.f32 %v5098, %v5354
          %v5419 = vmin.f32 %v5099, %v5355
          %v5420 = vmin.f32 %v5100, %v5356
          %v5421 = vmin.f32 %v5101, %v5357
          %v5422 = vmin.f32 %v5102, %v5358
          %v5423 = vmin.f32 %v5103, %v5359
          %v5424 = vmin.f32 %v5104, %v5360
          %v5425 = vmin.f32 %v5105, %v5361
          %v5426 = vmin.f32 %v5106, %v5362
          %v5427 = vmin.f32 %v5107, %v5363
          %v5428 = vmin.f32 %v5108, %v5364
          %v5429 = vmin.f32 %v5109, %v5365
          %v5430 = vmin.f32 %v5110, %v5366
          %v5431 = vmin.f32 %v5111, %v5367
          %v5432 = vmin.f32 %v5112, %v5368
          %v5433 = vmin.f32 %v5113, %v5369
          %v5434 = vmin.f32 %v5114, %v5370
          %v5435 = vmin.f32 %v5115, %v5371
          %v5436 = vmin.f32 %v5116, %v5372
          %v5437 = vmin.f32 %v5117, %v5373
          %v5438 = vmin.f32 %v5118, %v5374
          %v5439 = vmin.f32 %v5119, %v5375
          %v5440 = vmax.f32 %v5056, %v4800
          %v5441 = vmax.f32 %v5057, %v4801
          %v5442 = vmax.f32 %v5058, %v4802
          %v5443 = vmax.f32 %v5059, %v4803
          %v5444 = vmax.f32 %v5060, %v4804
          %v5445 = vmax.f32 %v5061, %v4805
          %v5446 = vmax.f32 %v5062, %v4806
          %v5447 = vmax.f32 %v5063, %v4807
          %v5448 = vmax.f32 %v5064, %v4808
          %v5449 = vmax.f32 %v5065, %v4809
          %v5450 = vmax.f32 %v5066, %v4810
          %v5451 = vmax.f32 %v5067, %v4811
          %v5452 = vmax.f32 %v5068, %v4812
          %v5453 = vmax.f32 %v5069, %v4813
          %v5454 = vmax.f32 %v5070, %v4814
          %v5455 = vmax.f32 %v5071, %v4815
          %v5456 = vmax.f32 %v5072, %v4816
          %v5457 = vmax.f32 %v5073, %v4817
          %v5458 = vmax.f32 %v5074, %v4818
          %v5459 = vmax.f32 %v5075, %v4819
          %v5460 = vmax.f32 %v5076, %v4820
          %v5461 = vmax.f32 %v5077, %v4821
          %v5462 = vmax.f32 %v5078, %v4822
          %v5463 = vmax.f32 %v5079, %v4823
          %v5464 = vmax.f32 %v5080, %v4824
          %v5465 = vmax.f32 %v5081, %v4825
          %v5466 = vmax.f32 %v5082, %v4826
          %v5467 = vmax.f32 %v5083, %v4827
          %v5468 = vmax.f32 %v5084, %v4828
          %v5469 = vmax.f32 %v5085, %v4829
          %v5470 = vmax.f32 %v5086, %v4830
          %v5471 = vmax.f32 %v5087, %v4831
          %v5472 = vmax.f32 %v5088, %v4832
          %v5473 = vmax.f32 %v5089, %v4833
          %v5474 = vmax.f32 %v5090, %v4834
          %v5475 = vmax.f32 %v5091, %v4835
          %v5476 = vmax.f32 %v5092, %v4836
          %v5477 = vmax.f32 %v5093, %v4837
          %v5478 = vmax.f32 %v5094, %v4838
          %v5479 = vmax.f32 %v5095, %v4839
          %v5480 = vmax.f32 %v5096, %v4840
          %v5481 = vmax.f32 %v5097, %v4841
          %v5482 = vmax.f32 %v5098, %v4842
          %v5483 = vmax.f32 %v5099, %v4843
          %v5484 = vmax.f32 %v5100, %v4844
          %v5485 = vmax.f32 %v5101, %v4845
          %v5486 = vmax.f32 %v5102, %v4846
          %v5487 = vmax.f32 %v5103, %v4847
          %v5488 = vmax.f32 %v5104, %v4848
          %v5489 = vmax.f32 %v5105, %v4849
          %v5490 = vmax.f32 %v5106, %v4850
          %v5491 = vmax.f32 %v5107, %v4851
          %v5492 = vmax.f32 %v5108, %v4852
          %v5493 = vmax.f32 %v5109, %v4853
          %v5494 = vmax.f32 %v5110, %v4854
          %v5495 = vmax.f32 %v5111, %v4855
          %v5496 = vmax.f32 %v5112, %v4856
          %v5497 = vmax.f32 %v5113, %v4857
          %v5498 = vmax.f32 %v5114, %v4858
          %v5499 = vmax.f32 %v5115, %v4859
          %v5500 = vmax.f32 %v5116, %v4860
          %v5501 = vmax.f32 %v5117, %v4861
          %v5502 = vmax.f32 %v5118, %v4862
          %v5503 = vmax.f32 %v5119, %v4863
          %v5504 = vmin.f32 %v5184, %v5440
          %v5505 = vmin.f32 %v5185, %v5441
          %v5506 = vmin.f32 %v5186, %v5442
          %v5507 = vmin.f32 %v5187, %v5443
          %v5508 = vmin.f32 %v5188, %v5444
          %v5509 = vmin.f32 %v5189, %v5445
          %v5510 = vmin.f32 %v5190, %v5446
          %v5511 = vmin.f32 %v5191, %v5447
          %v5512 = vmin.f32 %v5192, %v5448
          %v5513 = vmin.f32 %v5193, %v5449
          %v5514 = vmin.f32 %v5194, %v5450
          %v5515 = vmin.f32 %v5195, %v5451
          %v5516 = vmin.f32 %v5196, %v5452
          %v5517 = vmin.f32 %v5197, %v5453
          %v5518 = vmin.f32 %v5198, %v5454
          %v5519 = vmin.f32 %v5199, %v5455
          %v5520 = vmin.f32 %v5200, %v5456
          %v5521 = vmin.f32 %v5201, %v5457
          %v5522 = vmin.f32 %v5202, %v5458
          %v5523 = vmin.f32 %v5203, %v5459
          %v5524 = vmin.f32 %v5204, %v5460
          %v5525 = vmin.f32 %v5205, %v5461
          %v5526 = vmin.f32 %v5206, %v5462
          %v5527 = vmin.f32 %v5207, %v5463
          %v5528 = vmin.f32 %v5208, %v5464
          %v5529 = vmin.f32 %v5209, %v5465
          %v5530 = vmin.f32 %v5210, %v5466
          %v5531 = vmin.f32 %v5211, %v5467
          %v5532 = vmin.f32 %v5212, %v5468
          %v5533 = vmin.f32 %v5213, %v5469
          %v5534 = vmin.f32 %v5214, %v5470
          %v5535 = vmin.f32 %v5215, %v5471
          %v5536 = vmin.f32 %v5216, %v5472
          %v5537 = vmin.f32 %v5217, %v5473
          %v5538 = vmin.f32 %v5218, %v5474
          %v5539 = vmin.f32 %v5219, %v5475
          %v5540 = vmin.f32 %v5220, %v5476
          %v5541 = vmin.f32 %v5221, %v5477
          %v5542 = vmin.f32 %v5222, %v5478
          %v5543 = vmin.f32 %v5223, %v5479
          %v5544 = vmin.f32 %v5224, %v5480
          %v5545 = vmin.f32 %v5225, %v5481
          %v5546 = vmin.f32 %v5226, %v5482
          %v5547 = vmin.f32 %v5227, %v5483
          %v5548 = vmin.f32 %v5228, %v5484
          %v5549 = vmin.f32 %v5229, %v5485
          %v5550 = vmin.f32 %v5230, %v5486
          %v5551 = vmin.f32 %v5231, %v5487
          %v5552 = vmin.f32 %v5232, %v5488
          %v5553 = vmin.f32 %v5233, %v5489
          %v5554 = vmin.f32 %v5234, %v5490
          %v5555 = vmin.f32 %v5235, %v5491
          %v5556 = vmin.f32 %v5236, %v5492
          %v5557 = vmin.f32 %v5237, %v5493
          %v5558 = vmin.f32 %v5238, %v5494
          %v5559 = vmin.f32 %v5239, %v5495
          %v5560 = vmin.f32 %v5240, %v5496
          %v5561 = vmin.f32 %v5241, %v5497
          %v5562 = vmin.f32 %v5242, %v5498
          %v5563 = vmin.f32 %v5243, %v5499
          %v5564 = vmin.f32 %v5244, %v5500
          %v5565 = vmin.f32 %v5245, %v5501
          %v5566 = vmin.f32 %v5246, %v5502
          %v5567 = vmin.f32 %v5247, %v5503
          %v5568 = vmin.f32 %v5248, %v4864
          %v5569 = vmin.f32 %v5249, %v4865
          %v5570 = vmin.f32 %v5250, %v4866
          %v5571 = vmin.f32 %v5251, %v4867
          %v5572 = vmin.f32 %v5252, %v4868
          %v5573 = vmin.f32 %v5253, %v4869
          %v5574 = vmin.f32 %v5254, %v4870
          %v5575 = vmin.f32 %v5255, %v4871
          %v5576 = vmin.f32 %v5256, %v4872
          %v5577 = vmin.f32 %v5257, %v4873
          %v5578 = vmin.f32 %v5258, %v4874
          %v5579 = vmin.f32 %v5259, %v4875
          %v5580 = vmin.f32 %v5260, %v4876
          %v5581 = vmin.f32 %v5261, %v4877
          %v5582 = vmin.f32 %v5262, %v4878
          %v5583 = vmin.f32 %v5263, %v4879
          %v5584 = vmin.f32 %v5264, %v4880
          %v5585 = vmin.f32 %v5265, %v4881
          %v5586 = vmin.f32 %v5266, %v4882
          %v5587 = vmin.f32 %v5267, %v4883
          %v5588 = vmin.f32 %v5268, %v4884
          %v5589 = vmin.f32 %v5269, %v4885
          %v5590 = vmin.f32 %v5270, %v4886
          %v5591 = vmin.f32 %v5271, %v4887
          %v5592 = vmin.f32 %v5272, %v4888
          %v5593 = vmin.f32 %v5273, %v4889
          %v5594 = vmin.f32 %v5274, %v4890
          %v5595 = vmin.f32 %v5275, %v4891
          %v5596 = vmin.f32 %v5276, %v4892
          %v5597 = vmin.f32 %v5277, %v4893
          %v5598 = vmin.f32 %v5278, %v4894
          %v5599 = vmin.f32 %v5279, %v4895
          %v5600 = vmin.f32 %v5280, %v4896
          %v5601 = vmin.f32 %v5281, %v4897
          %v5602 = vmin.f32 %v5282, %v4898
          %v5603 = vmin.f32 %v5283, %v4899
          %v5604 = vmin.f32 %v5284, %v4900
          %v5605 = vmin.f32 %v5285, %v4901
          %v5606 = vmin.f32 %v5286, %v4902
          %v5607 = vmin.f32 %v5287, %v4903
          %v5608 = vmin.f32 %v5288, %v4904
          %v5609 = vmin.f32 %v5289, %v4905
          %v5610 = vmin.f32 %v5290, %v4906
          %v5611 = vmin.f32 %v5291, %v4907
          %v5612 = vmin.f32 %v5292, %v4908
          %v5613 = vmin.f32 %v5293, %v4909
          %v5614 = vmin.f32 %v5294, %v4910
          %v5615 = vmin.f32 %v5295, %v4911
          %v5616 = vmin.f32 %v5296, %v4912
          %v5617 = vmin.f32 %v5297, %v4913
          %v5618 = vmin.f32 %v5298, %v4914
          %v5619 = vmin.f32 %v5299, %v4915
          %v5620 = vmin.f32 %v5300, %v4916
          %v5621 = vmin.f32 %v5301, %v4917
          %v5622 = vmin.f32 %v5302, %v4918
          %v5623 = vmin.f32 %v5303, %v4919
          %v5624 = vmin.f32 %v5304, %v4920
          %v5625 = vmin.f32 %v5305, %v4921
          %v5626 = vmin.f32 %v5306, %v4922
          %v5627 = vmin.f32 %v5307, %v4923
          %v5628 = vmin.f32 %v5308, %v4924
          %v5629 = vmin.f32 %v5309, %v4925
          %v5630 = vmin.f32 %v5310, %v4926
          %v5631 = vmin.f32 %v5311, %v4927
          %v5632 = vmax.f32 %v5248, %v4864
          %v5633 = vmax.f32 %v5249, %v4865
          %v5634 = vmax.f32 %v5250, %v4866
          %v5635 = vmax.f32 %v5251, %v4867
          %v5636 = vmax.f32 %v5252, %v4868
          %v5637 = vmax.f32 %v5253, %v4869
          %v5638 = vmax.f32 %v5254, %v4870
          %v5639 = vmax.f32 %v5255, %v4871
          %v5640 = vmax.f32 %v5256, %v4872
          %v5641 = vmax.f32 %v5257, %v4873
          %v5642 = vmax.f32 %v5258, %v4874
          %v5643 = vmax.f32 %v5259, %v4875
          %v5644 = vmax.f32 %v5260, %v4876
          %v5645 = vmax.f32 %v5261, %v4877
          %v5646 = vmax.f32 %v5262, %v4878
          %v5647 = vmax.f32 %v5263, %v4879
          %v5648 = vmax.f32 %v5264, %v4880
          %v5649 = vmax.f32 %v5265, %v4881
          %v5650 = vmax.f32 %v5266, %v4882
          %v5651 = vmax.f32 %v5267, %v4883
          %v5652 = vmax.f32 %v5268, %v4884
          %v5653 = vmax.f32 %v5269, %v4885
          %v5654 = vmax.f32 %v5270, %v4886
          %v5655 = vmax.f32 %v5271, %v4887
          %v5656 = vmax.f32 %v5272, %v4888
          %v5657 = vmax.f32 %v5273, %v4889
          %v5658 = vmax.f32 %v5274, %v4890
          %v5659 = vmax.f32 %v5275, %v4891
          %v5660 = vmax.f32 %v5276, %v4892
          %v5661 = vmax.f32 %v5277, %v4893
          %v5662 = vmax.f32 %v5278, %v4894
          %v5663 = vmax.f32 %v5279, %v4895
          %v5664 = vmax.f32 %v5280, %v4896
          %v5665 = vmax.f32 %v5281, %v4897
          %v5666 = vmax.f32 %v5282, %v4898
          %v5667 = vmax.f32 %v5283, %v4899
          %v5668 = vmax.f32 %v5284, %v4900
          %v5669 = vmax.f32 %v5285, %v4901
          %v5670 = vmax.f32 %v5286, %v4902
          %v5671 = vmax.f32 %v5287, %v4903
          %v5672 = vmax.f32 %v5288, %v4904
          %v5673 = vmax.f32 %v5289, %v4905
          %v5674 = vmax.f32 %v5290, %v4906
          %v5675 = vmax.f32 %v5291, %v4907
          %v5676 = vmax.f32 %v5292, %v4908
          %v5677 = vmax.f32 %v5293, %v4909
          %v5678 = vmax.f32 %v5294, %v4910
          %v5679 = vmax.f32 %v5295, %v4911
          %v5680 = vmax.f32 %v5296, %v4912
          %v5681 = vmax.f32 %v5297, %v4913
          %v5682 = vmax.f32 %v5298, %v4914
          %v5683 = vmax.f32 %v5299, %v4915
          %v5684 = vmax.f32 %v5300, %v4916
          %v5685 = vmax.f32 %v5301, %v4917
          %v5686 = vmax.f32 %v5302, %v4918
          %v5687 = vmax.f32 %v5303, %v4919
          %v5688 = vmax.f32 %v5304, %v4920
          %v5689 = vmax.f32 %v5305, %v4921
          %v5690 = vmax.f32 %v5306, %v4922
          %v5691 = vmax.f32 %v5307, %v4923
          %v5692 = vmax.f32 %v5308, %v4924
          %v5693 = vmax.f32 %v5309, %v4925
          %v5694 = vmax.f32 %v5310, %v4926
          %v5695 = vmax.f32 %v5311, %v4927
          %v5696 = vmin.f32 %v5376, %v5632
          %v5697 = vmin.f32 %v5377, %v5633
          %v5698 = vmin.f32 %v5378, %v5634
          %v5699 = vmin.f32 %v5379, %v5635
          %v5700 = vmin.f32 %v5380, %v5636
          %v5701 = vmin.f32 %v5381, %v5637
          %v5702 = vmin.f32 %v5382, %v5638
          %v5703 = vmin.f32 %v5383, %v5639
          %v5704 = vmin.f32 %v5384, %v5640
          %v5705 = vmin.f32 %v5385, %v5641
          %v5706 = vmin.f32 %v5386, %v5642
          %v5707 = vmin.f32 %v5387, %v5643
          %v5708 = vmin.f32 %v5388, %v5644
          %v5709 = vmin.f32 %v5389, %v5645
          %v5710 = vmin.f32 %v5390, %v5646
          %v5711 = vmin.f32 %v5391, %v5647
          %v5712 = vmin.f32 %v5392, %v5648
          %v5713 = vmin.f32 %v5393, %v5649
          %v5714 = vmin.f32 %v5394, %v5650
          %v5715 = vmin.f32 %v5395, %v5651
          %v5716 = vmin.f32 %v5396, %v5652
          %v5717 = vmin.f32 %v5397, %v5653
          %v5718 = vmin.f32 %v5398, %v5654
          %v5719 = vmin.f32 %v5399, %v5655
          %v5720 = vmin.f32 %v5400, %v5656
          %v5721 = vmin.f32 %v5401, %v5657
          %v5722 = vmin.f32 %v5402, %v5658
          %v5723 = vmin.f32 %v5403, %v5659
          %v5724 = vmin.f32 %v5404, %v5660
          %v5725 = vmin.f32 %v5405, %v5661
          %v5726 = vmin.f32 %v5406, %v5662
          %v5727 = vmin.f32 %v5407, %v5663
          %v5728 = vmin.f32 %v5408, %v5664
          %v5729 = vmin.f32 %v5409, %v5665
          %v5730 = vmin.f32 %v5410, %v5666
          %v5731 = vmin.f32 %v5411, %v5667
          %v5732 = vmin.f32 %v5412, %v5668
          %v5733 = vmin.f32 %v5413, %v5669
          %v5734 = vmin.f32 %v5414, %v5670
          %v5735 = vmin.f32 %v5415, %v5671
          %v5736 = vmin.f32 %v5416, %v5672
          %v5737 = vmin.f32 %v5417, %v5673
          %v5738 = vmin.f32 %v5418, %v5674
          %v5739 = vmin.f32 %v5419, %v5675
          %v5740 = vmin.f32 %v5420, %v5676
          %v5741 = vmin.f32 %v5421, %v5677
          %v5742 = vmin.f32 %v5422, %v5678
          %v5743 = vmin.f32 %v5423, %v5679
          %v5744 = vmin.f32 %v5424, %v5680
          %v5745 = vmin.f32 %v5425, %v5681
          %v5746 = vmin.f32 %v5426, %v5682
          %v5747 = vmin.f32 %v5427, %v5683
          %v5748 = vmin.f32 %v5428, %v5684
          %v5749 = vmin.f32 %v5429, %v5685
          %v5750 = vmin.f32 %v5430, %v5686
          %v5751 = vmin.f32 %v5431, %v5687
          %v5752 = vmin.f32 %v5432, %v5688
          %v5753 = vmin.f32 %v5433, %v5689
          %v5754 = vmin.f32 %v5434, %v5690
          %v5755 = vmin.f32 %v5435, %v5691
          %v5756 = vmin.f32 %v5436, %v5692
          %v5757 = vmin.f32 %v5437, %v5693
          %v5758 = vmin.f32 %v5438, %v5694
          %v5759 = vmin.f32 %v5439, %v5695
          %v5760 = vmax.f32 %v5376, %v4864
          %v5761 = vmax.f32 %v5377, %v4865
          %v5762 = vmax.f32 %v5378, %v4866
          %v5763 = vmax.f32 %v5379, %v4867
          %v5764 = vmax.f32 %v5380, %v4868
          %v5765 = vmax.f32 %v5381, %v4869
          %v5766 = vmax.f32 %v5382, %v4870
          %v5767 = vmax.f32 %v5383, %v4871
          %v5768 = vmax.f32 %v5384, %v4872
          %v5769 = vmax.f32 %v5385, %v4873
          %v5770 = vmax.f32 %v5386, %v4874
          %v5771 = vmax.f32 %v5387, %v4875
          %v5772 = vmax.f32 %v5388, %v4876
          %v5773 = vmax.f32 %v5389, %v4877
          %v5774 = vmax.f32 %v5390, %v4878
          %v5775 = vmax.f32 %v5391, %v4879
          %v5776 = vmax.f32 %v5392, %v4880
          %v5777 = vmax.f32 %v5393, %v4881
          %v5778 = vmax.f32 %v5394, %v4882
          %v5779 = vmax.f32 %v5395, %v4883
          %v5780 = vmax.f32 %v5396, %v4884
          %v5781 = vmax.f32 %v5397, %v4885
          %v5782 = vmax.f32 %v5398, %v4886
          %v5783 = vmax.f32 %v5399, %v4887
          %v5784 = vmax.f32 %v5400, %v4888
          %v5785 = vmax.f32 %v5401, %v4889
          %v5786 = vmax.f32 %v5402, %v4890
          %v5787 = vmax.f32 %v5403, %v4891
          %v5788 = vmax.f32 %v5404, %v4892
          %v5789 = vmax.f32 %v5405, %v4893
          %v5790 = vmax.f32 %v5406, %v4894
          %v5791 = vmax.f32 %v5407, %v4895
          %v5792 = vmax.f32 %v5408, %v4896
          %v5793 = vmax.f32 %v5409, %v4897
          %v5794 = vmax.f32 %v5410, %v4898
          %v5795 = vmax.f32 %v5411, %v4899
          %v5796 = vmax.f32 %v5412, %v4900
          %v5797 = vmax.f32 %v5413, %v4901
          %v5798 = vmax.f32 %v5414, %v4902
          %v5799 = vmax.f32 %v5415, %v4903
          %v5800 = vmax.f32 %v5416, %v4904
          %v5801 = vmax.f32 %v5417, %v4905
          %v5802 = vmax.f32 %v5418, %v4906
          %v5803 = vmax.f32 %v5419, %v4907
          %v5804 = vmax.f32 %v5420, %v4908
          %v5805 = vmax.f32 %v5421, %v4909
          %v5806 = vmax.f32 %v5422, %v4910
          %v5807 = vmax.f32 %v5423, %v4911
          %v5808 = vmax.f32 %v5424, %v4912
          %v5809 = vmax.f32 %v5425, %v4913
          %v5810 = vmax.f32 %v5426, %v4914
          %v5811 = vmax.f32 %v5427, %v4915
          %v5812 = vmax.f32 %v5428, %v4916
          %v5813 = vmax.f32 %v5429, %v4917
          %v5814 = vmax.f32 %v5430, %v4918
          %v5815 = vmax.f32 %v5431, %v4919
          %v5816 = vmax.f32 %v5432, %v4920
          %v5817 = vmax.f32 %v5433, %v4921
          %v5818 = vmax.f32 %v5434, %v4922
          %v5819 = vmax.f32 %v5435, %v4923
          %v5820 = vmax.f32 %v5436, %v4924
          %v5821 = vmax.f32 %v5437, %v4925
          %v5822 = vmax.f32 %v5438, %v4926
          %v5823 = vmax.f32 %v5439, %v4927
          %v5824 = vmin.f32 %v5504, %v5760
          %v5825 = vmin.f32 %v5505, %v5761
          %v5826 = vmin.f32 %v5506, %v5762
          %v5827 = vmin.f32 %v5507, %v5763
          %v5828 = vmin.f32 %v5508, %v5764
          %v5829 = vmin.f32 %v5509, %v5765
          %v5830 = vmin.f32 %v5510, %v5766
          %v5831 = vmin.f32 %v5511, %v5767
          %v5832 = vmin.f32 %v5512, %v5768
          %v5833 = vmin.f32 %v5513, %v5769
          %v5834 = vmin.f32 %v5514, %v5770
          %v5835 = vmin.f32 %v5515, %v5771
          %v5836 = vmin.f32 %v5516, %v5772
          %v5837 = vmin.f32 %v5517, %v5773
          %v5838 = vmin.f32 %v5518, %v5774
          %v5839 = vmin.f32 %v5519, %v5775
          %v5840 = vmin.f32 %v5520, %v5776
          %v5841 = vmin.f32 %v5521, %v5777
          %v5842 = vmin.f32 %v5522, %v5778
          %v5843 = vmin.f32 %v5523, %v5779
          %v5844 = vmin.f32 %v5524, %v5780
          %v5845 = vmin.f32 %v5525, %v5781
          %v5846 = vmin.f32 %v5526, %v5782
          %v5847 = vmin.f32 %v5527, %v5783
          %v5848 = vmin.f32 %v5528, %v5784
          %v5849 = vmin.f32 %v5529, %v5785
          %v5850 = vmin.f32 %v5530, %v5786
          %v5851 = vmin.f32 %v5531, %v5787
          %v5852 = vmin.f32 %v5532, %v5788
          %v5853 = vmin.f32 %v5533, %v5789
          %v5854 = vmin.f32 %v5534, %v5790
          %v5855 = vmin.f32 %v5535, %v5791
          %v5856 = vmin.f32 %v5536, %v5792
          %v5857 = vmin.f32 %v5537, %v5793
          %v5858 = vmin.f32 %v5538, %v5794
          %v5859 = vmin.f32 %v5539, %v5795
          %v5860 = vmin.f32 %v5540, %v5796
          %v5861 = vmin.f32 %v5541, %v5797
          %v5862 = vmin.f32 %v5542, %v5798
          %v5863 = vmin.f32 %v5543, %v5799
          %v5864 = vmin.f32 %v5544, %v5800
          %v5865 = vmin.f32 %v5545, %v5801
          %v5866 = vmin.f32 %v5546, %v5802
          %v5867 = vmin.f32 %v5547, %v5803
          %v5868 = vmin.f32 %v5548, %v5804
          %v5869 = vmin.f32 %v5549, %v5805
          %v5870 = vmin.f32 %v5550, %v5806
          %v5871 = vmin.f32 %v5551, %v5807
          %v5872 = vmin.f32 %v5552, %v5808
          %v5873 = vmin.f32 %v5553, %v5809
          %v5874 = vmin.f32 %v5554, %v5810
          %v5875 = vmin.f32 %v5555, %v5811
          %v5876 = vmin.f32 %v5556, %v5812
          %v5877 = vmin.f32 %v5557, %v5813
          %v5878 = vmin.f32 %v5558, %v5814
          %v5879 = vmin.f32 %v5559, %v5815
          %v5880 = vmin.f32 %v5560, %v5816
          %v5881 = vmin.f32 %v5561, %v5817
          %v5882 = vmin.f32 %v5562, %v5818
          %v5883 = vmin.f32 %v5563, %v5819
          %v5884 = vmin.f32 %v5564, %v5820
          %v5885 = vmin.f32 %v5565, %v5821
          %v5886 = vmin.f32 %v5566, %v5822
          %v5887 = vmin.f32 %v5567, %v5823
          %5888 = vst [vmem:[#allocation2] sm:$0xff] %v5568
          %5889 = vst [vmem:[#allocation2 + $0x8] sm:$0xff] %v5569
          %5890 = vst [vmem:[#allocation2 + $0x10] sm:$0xff] %v5570
          %5891 = vst [vmem:[#allocation2 + $0x18] sm:$0xff] %v5571
          %5892 = vst [vmem:[#allocation2 + $0x20] sm:$0xff] %v5572
          %5893 = vst [vmem:[#allocation2 + $0x28] sm:$0xff] %v5573
          %5894 = vst [vmem:[#allocation2 + $0x30] sm:$0xff] %v5574
          %5895 = vst [vmem:[#allocation2 + $0x38] sm:$0xff] %v5575
          %5896 = vst [vmem:[#allocation2 + $0x40] sm:$0xff] %v5576
          %5897 = vst [vmem:[#allocation2 + $0x48] sm:$0xff] %v5577
          %5898 = vst [vmem:[#allocation2 + $0x50] sm:$0xff] %v5578
          %5899 = vst [vmem:[#allocation2 + $0x58] sm:$0xff] %v5579
          %5900 = vst [vmem:[#allocation2 + $0x60] sm:$0xff] %v5580
          %5901 = vst [vmem:[#allocation2 + $0x68] sm:$0xff] %v5581
          %5902 = vst [vmem:[#allocation2 + $0x70] sm:$0xff] %v5582
          %5903 = vst [vmem:[#allocation2 + $0x78] sm:$0xff] %v5583
          %5904 = vst [vmem:[#allocation2 + $0x80] sm:$0xff] %v5584
          %5905 = vst [vmem:[#allocation2 + $0x88] sm:$0xff] %v5585
          %5906 = vst [vmem:[#allocation2 + $0x90] sm:$0xff] %v5586
          %5907 = vst [vmem:[#allocation2 + $0x98] sm:$0xff] %v5587
          %5908 = vst [vmem:[#allocation2 + $0xa0] sm:$0xff] %v5588
          %5909 = vst [vmem:[#allocation2 + $0xa8] sm:$0xff] %v5589
          %5910 = vst [vmem:[#allocation2 + $0xb0] sm:$0xff] %v5590
          %5911 = vst [vmem:[#allocation2 + $0xb8] sm:$0xff] %v5591
          %5912 = vst [vmem:[#allocation2 + $0xc0] sm:$0xff] %v5592
          %5913 = vst [vmem:[#allocation2 + $0xc8] sm:$0xff] %v5593
          %5914 = vst [vmem:[#allocation2 + $0xd0] sm:$0xff] %v5594
          %5915 = vst [vmem:[#allocation2 + $0xd8] sm:$0xff] %v5595
          %5916 = vst [vmem:[#allocation2 + $0xe0] sm:$0xff] %v5596
          %5917 = vst [vmem:[#allocation2 + $0xe8] sm:$0xff] %v5597
          %5918 = vst [vmem:[#allocation2 + $0xf0] sm:$0xff] %v5598
          %5919 = vst [vmem:[#allocation2 + $0xf8] sm:$0xff] %v5599
          %5920 = vst [vmem:[#allocation2 + $0x100] sm:$0xff] %v5600
          %5921 = vst [vmem:[#allocation2 + $0x108] sm:$0xff] %v5601
          %5922 = vst [vmem:[#allocation2 + $0x110] sm:$0xff] %v5602
          %5923 = vst [vmem:[#allocation2 + $0x118] sm:$0xff] %v5603
          %5924 = vst [vmem:[#allocation2 + $0x120] sm:$0xff] %v5604
          %5925 = vst [vmem:[#allocation2 + $0x128] sm:$0xff] %v5605
          %5926 = vst [vmem:[#allocation2 + $0x130] sm:$0xff] %v5606
          %5927 = vst [vmem:[#allocation2 + $0x138] sm:$0xff] %v5607
          %5928 = vst [vmem:[#allocation2 + $0x140] sm:$0xff] %v5608
          %5929 = vst [vmem:[#allocation2 + $0x148] sm:$0xff] %v5609
          %5930 = vst [vmem:[#allocation2 + $0x150] sm:$0xff] %v5610
          %5931 = vst [vmem:[#allocation2 + $0x158] sm:$0xff] %v5611
          %5932 = vst [vmem:[#allocation2 + $0x160] sm:$0xff] %v5612
          %5933 = vst [vmem:[#allocation2 + $0x168] sm:$0xff] %v5613
          %5934 = vst [vmem:[#allocation2 + $0x170] sm:$0xff] %v5614
          %5935 = vst [vmem:[#allocation2 + $0x178] sm:$0xff] %v5615
          %5936 = vst [vmem:[#allocation2 + $0x180] sm:$0xff] %v5616
          %5937 = vst [vmem:[#allocation2 + $0x188] sm:$0xff] %v5617
          %5938 = vst [vmem:[#allocation2 + $0x190] sm:$0xff] %v5618
          %5939 = vst [vmem:[#allocation2 + $0x198] sm:$0xff] %v5619
          %5940 = vst [vmem:[#allocation2 + $0x1a0] sm:$0xff] %v5620
          %5941 = vst [vmem:[#allocation2 + $0x1a8] sm:$0xff] %v5621
          %5942 = vst [vmem:[#allocation2 + $0x1b0] sm:$0xff] %v5622
          %5943 = vst [vmem:[#allocation2 + $0x1b8] sm:$0xff] %v5623
          %5944 = vst [vmem:[#allocation2 + $0x1c0] sm:$0xff] %v5624
          %5945 = vst [vmem:[#allocation2 + $0x1c8] sm:$0xff] %v5625
          %5946 = vst [vmem:[#allocation2 + $0x1d0] sm:$0xff] %v5626
          %5947 = vst [vmem:[#allocation2 + $0x1d8] sm:$0xff] %v5627
          %5948 = vst [vmem:[#allocation2 + $0x1e0] sm:$0xff] %v5628
          %5949 = vst [vmem:[#allocation2 + $0x1e8] sm:$0xff] %v5629
          %5950 = vst [vmem:[#allocation2 + $0x1f0] sm:$0xff] %v5630
          %5951 = vst [vmem:[#allocation2 + $0x1f8] sm:$0xff] %v5631
          %5952 = vst [vmem:[#allocation3] sm:$0xff] %v5696
          %5953 = vst [vmem:[#allocation3 + $0x8] sm:$0xff] %v5697
          %5954 = vst [vmem:[#allocation3 + $0x10] sm:$0xff] %v5698
          %5955 = vst [vmem:[#allocation3 + $0x18] sm:$0xff] %v5699
          %5956 = vst [vmem:[#allocation3 + $0x20] sm:$0xff] %v5700
          %5957 = vst [vmem:[#allocation3 + $0x28] sm:$0xff] %v5701
          %5958 = vst [vmem:[#allocation3 + $0x30] sm:$0xff] %v5702
          %5959 = vst [vmem:[#allocation3 + $0x38] sm:$0xff] %v5703
          %5960 = vst [vmem:[#allocation3 + $0x40] sm:$0xff] %v5704
          %5961 = vst [vmem:[#allocation3 + $0x48] sm:$0xff] %v5705
          %5962 = vst [vmem:[#allocation3 + $0x50] sm:$0xff] %v5706
          %5963 = vst [vmem:[#allocation3 + $0x58] sm:$0xff] %v5707
          %5964 = vst [vmem:[#allocation3 + $0x60] sm:$0xff] %v5708
          %5965 = vst [vmem:[#allocation3 + $0x68] sm:$0xff] %v5709
          %5966 = vst [vmem:[#allocation3 + $0x70] sm:$0xff] %v5710
          %5967 = vst [vmem:[#allocation3 + $0x78] sm:$0xff] %v5711
          %5968 = vst [vmem:[#allocation3 + $0x80] sm:$0xff] %v5712
          %5969 = vst [vmem:[#allocation3 + $0x88] sm:$0xff] %v5713
          %5970 = vst [vmem:[#allocation3 + $0x90] sm:$0xff] %v5714
          %5971 = vst [vmem:[#allocation3 + $0x98] sm:$0xff] %v5715
          %5972 = vst [vmem:[#allocation3 + $0xa0] sm:$0xff] %v5716
          %5973 = vst [vmem:[#allocation3 + $0xa8] sm:$0xff] %v5717
          %5974 = vst [vmem:[#allocation3 + $0xb0] sm:$0xff] %v5718
          %5975 = vst [vmem:[#allocation3 + $0xb8] sm:$0xff] %v5719
          %5976 = vst [vmem:[#allocation3 + $0xc0] sm:$0xff] %v5720
          %5977 = vst [vmem:[#allocation3 + $0xc8] sm:$0xff] %v5721
          %5978 = vst [vmem:[#allocation3 + $0xd0] sm:$0xff] %v5722
          %5979 = vst [vmem:[#allocation3 + $0xd8] sm:$0xff] %v5723
          %5980 = vst [vmem:[#allocation3 + $0xe0] sm:$0xff] %v5724
          %5981 = vst [vmem:[#allocation3 + $0xe8] sm:$0xff] %v5725
          %5982 = vst [vmem:[#allocation3 + $0xf0] sm:$0xff] %v5726
          %5983 = vst [vmem:[#allocation3 + $0xf8] sm:$0xff] %v5727
          %5984 = vst [vmem:[#allocation3 + $0x100] sm:$0xff] %v5728
          %5985 = vst [vmem:[#allocation3 + $0x108] sm:$0xff] %v5729
          %5986 = vst [vmem:[#allocation3 + $0x110] sm:$0xff] %v5730
          %5987 = vst [vmem:[#allocation3 + $0x118] sm:$0xff] %v5731
          %5988 = vst [vmem:[#allocation3 + $0x120] sm:$0xff] %v5732
          %5989 = vst [vmem:[#allocation3 + $0x128] sm:$0xff] %v5733
          %5990 = vst [vmem:[#allocation3 + $0x130] sm:$0xff] %v5734
          %5991 = vst [vmem:[#allocation3 + $0x138] sm:$0xff] %v5735
          %5992 = vst [vmem:[#allocation3 + $0x140] sm:$0xff] %v5736
          %5993 = vst [vmem:[#allocation3 + $0x148] sm:$0xff] %v5737
          %5994 = vst [vmem:[#allocation3 + $0x150] sm:$0xff] %v5738
          %5995 = vst [vmem:[#allocation3 + $0x158] sm:$0xff] %v5739
          %5996 = vst [vmem:[#allocation3 + $0x160] sm:$0xff] %v5740
          %5997 = vst [vmem:[#allocation3 + $0x168] sm:$0xff] %v5741
          %5998 = vst [vmem:[#allocation3 + $0x170] sm:$0xff] %v5742
          %5999 = vst [vmem:[#allocation3 + $0x178] sm:$0xff] %v5743
          %6000 = vst [vmem:[#allocation3 + $0x180] sm:$0xff] %v5744
          %6001 = vst [vmem:[#allocation3 + $0x188] sm:$0xff] %v5745
          %6002 = vst [vmem:[#allocation3 + $0x190] sm:$0xff] %v5746
          %6003 = vst [vmem:[#allocation3 + $0x198] sm:$0xff] %v5747
          %6004 = vst [vmem:[#allocation3 + $0x1a0] sm:$0xff] %v5748
          %6005 = vst [vmem:[#allocation3 + $0x1a8] sm:$0xff] %v5749
          %6006 = vst [vmem:[#allocation3 + $0x1b0] sm:$0xff] %v5750
          %6007 = vst [vmem:[#allocation3 + $0x1b8] sm:$0xff] %v5751
          %6008 = vst [vmem:[#allocation3 + $0x1c0] sm:$0xff] %v5752
          %6009 = vst [vmem:[#allocation3 + $0x1c8] sm:$0xff] %v5753
          %6010 = vst [vmem:[#allocation3 + $0x1d0] sm:$0xff] %v5754
          %6011 = vst [vmem:[#allocation3 + $0x1d8] sm:$0xff] %v5755
          %6012 = vst [vmem:[#allocation3 + $0x1e0] sm:$0xff] %v5756
          %6013 = vst [vmem:[#allocation3 + $0x1e8] sm:$0xff] %v5757
          %6014 = vst [vmem:[#allocation3 + $0x1f0] sm:$0xff] %v5758
          %6015 = vst [vmem:[#allocation3 + $0x1f8] sm:$0xff] %v5759
          %6016 = vst [vmem:[#allocation4] sm:$0xff] %v5824
          %6017 = vst [vmem:[#allocation4 + $0x8] sm:$0xff] %v5825
          %6018 = vst [vmem:[#allocation4 + $0x10] sm:$0xff] %v5826
          %6019 = vst [vmem:[#allocation4 + $0x18] sm:$0xff] %v5827
          %6020 = vst [vmem:[#allocation4 + $0x20] sm:$0xff] %v5828
          %6021 = vst [vmem:[#allocation4 + $0x28] sm:$0xff] %v5829
          %6022 = vst [vmem:[#allocation4 + $0x30] sm:$0xff] %v5830
          %6023 = vst [vmem:[#allocation4 + $0x38] sm:$0xff] %v5831
          %6024 = vst [vmem:[#allocation4 + $0x40] sm:$0xff] %v5832
          %6025 = vst [vmem:[#allocation4 + $0x48] sm:$0xff] %v5833
          %6026 = vst [vmem:[#allocation4 + $0x50] sm:$0xff] %v5834
          %6027 = vst [vmem:[#allocation4 + $0x58] sm:$0xff] %v5835
          %6028 = vst [vmem:[#allocation4 + $0x60] sm:$0xff] %v5836
          %6029 = vst [vmem:[#allocation4 + $0x68] sm:$0xff] %v5837
          %6030 = vst [vmem:[#allocation4 + $0x70] sm:$0xff] %v5838
          %6031 = vst [vmem:[#allocation4 + $0x78] sm:$0xff] %v5839
          %6032 = vst [vmem:[#allocation4 + $0x80] sm:$0xff] %v5840
          %6033 = vst [vmem:[#allocation4 + $0x88] sm:$0xff] %v5841
          %6034 = vst [vmem:[#allocation4 + $0x90] sm:$0xff] %v5842
          %6035 = vst [vmem:[#allocation4 + $0x98] sm:$0xff] %v5843
          %6036 = vst [vmem:[#allocation4 + $0xa0] sm:$0xff] %v5844
          %6037 = vst [vmem:[#allocation4 + $0xa8] sm:$0xff] %v5845
          %6038 = vst [vmem:[#allocation4 + $0xb0] sm:$0xff] %v5846
          %6039 = vst [vmem:[#allocation4 + $0xb8] sm:$0xff] %v5847
          %6040 = vst [vmem:[#allocation4 + $0xc0] sm:$0xff] %v5848
          %6041 = vst [vmem:[#allocation4 + $0xc8] sm:$0xff] %v5849
          %6042 = vst [vmem:[#allocation4 + $0xd0] sm:$0xff] %v5850
          %6043 = vst [vmem:[#allocation4 + $0xd8] sm:$0xff] %v5851
          %6044 = vst [vmem:[#allocation4 + $0xe0] sm:$0xff] %v5852
          %6045 = vst [vmem:[#allocation4 + $0xe8] sm:$0xff] %v5853
          %6046 = vst [vmem:[#allocation4 + $0xf0] sm:$0xff] %v5854
          %6047 = vst [vmem:[#allocation4 + $0xf8] sm:$0xff] %v5855
          %6048 = vst [vmem:[#allocation4 + $0x100] sm:$0xff] %v5856
          %6049 = vst [vmem:[#allocation4 + $0x108] sm:$0xff] %v5857
          %6050 = vst [vmem:[#allocation4 + $0x110] sm:$0xff] %v5858
          %6051 = vst [vmem:[#allocation4 + $0x118] sm:$0xff] %v5859
          %6052 = vst [vmem:[#allocation4 + $0x120] sm:$0xff] %v5860
          %6053 = vst [vmem:[#allocation4 + $0x128] sm:$0xff] %v5861
          %6054 = vst [vmem:[#allocation4 + $0x130] sm:$0xff] %v5862
          %6055 = vst [vmem:[#allocation4 + $0x138] sm:$0xff] %v5863
          %6056 = vst [vmem:[#allocation4 + $0x140] sm:$0xff] %v5864
          %6057 = vst [vmem:[#allocation4 + $0x148] sm:$0xff] %v5865
          %6058 = vst [vmem:[#allocation4 + $0x150] sm:$0xff] %v5866
          %6059 = vst [vmem:[#allocation4 + $0x158] sm:$0xff] %v5867
          %6060 = vst [vmem:[#allocation4 + $0x160] sm:$0xff] %v5868
          %6061 = vst [vmem:[#allocation4 + $0x168] sm:$0xff] %v5869
          %6062 = vst [vmem:[#allocation4 + $0x170] sm:$0xff] %v5870
          %6063 = vst [vmem:[#allocation4 + $0x178] sm:$0xff] %v5871
          %6064 = vst [vmem:[#allocation4 + $0x180] sm:$0xff] %v5872
          %6065 = vst [vmem:[#allocation4 + $0x188] sm:$0xff] %v5873
          %6066 = vst [vmem:[#allocation4 + $0x190] sm:$0xff] %v5874
          %6067 = vst [vmem:[#allocation4 + $0x198] sm:$0xff] %v5875
          %6068 = vst [vmem:[#allocation4 + $0x1a0] sm:$0xff] %v5876
          %6069 = vst [vmem:[#allocation4 + $0x1a8] sm:$0xff] %v5877
          %6070 = vst [vmem:[#allocation4 + $0x1b0] sm:$0xff] %v5878
          %6071 = vst [vmem:[#allocation4 + $0x1b8] sm:$0xff] %v5879
          %6072 = vst [vmem:[#allocation4 + $0x1c0] sm:$0xff] %v5880
          %6073 = vst [vmem:[#allocation4 + $0x1c8] sm:$0xff] %v5881
          %6074 = vst [vmem:[#allocation4 + $0x1d0] sm:$0xff] %v5882
          %6075 = vst [vmem:[#allocation4 + $0x1d8] sm:$0xff] %v5883
          %6076 = vst [vmem:[#allocation4 + $0x1e0] sm:$0xff] %v5884
          %6077 = vst [vmem:[#allocation4 + $0x1e8] sm:$0xff] %v5885
          %6078 = vst [vmem:[#allocation4 + $0x1f0] sm:$0xff] %v5886
          %6079 = vst [vmem:[#allocation4 + $0x1f8] sm:$0xff] %v5887
          %v6080 = vld [vmem:[#allocation2] sm:$0xff]
          %v6081 = vld [vmem:[#allocation2 + $0x8] sm:$0xff]
          %v6082 = vld [vmem:[#allocation2 + $0x10] sm:$0xff]
          %v6083 = vld [vmem:[#allocation2 + $0x18] sm:$0xff]
          %v6084 = vld [vmem:[#allocation2 + $0x20] sm:$0xff]
          %v6085 = vld [vmem:[#allocation2 + $0x28] sm:$0xff]
          %v6086 = vld [vmem:[#allocation2 + $0x30] sm:$0xff]
          %v6087 = vld [vmem:[#allocation2 + $0x38] sm:$0xff]
          %v6088 = vld [vmem:[#allocation2 + $0x40] sm:$0xff]
          %v6089 = vld [vmem:[#allocation2 + $0x48] sm:$0xff]
          %v6090 = vld [vmem:[#allocation2 + $0x50] sm:$0xff]
          %v6091 = vld [vmem:[#allocation2 + $0x58] sm:$0xff]
          %v6092 = vld [vmem:[#allocation2 + $0x60] sm:$0xff]
          %v6093 = vld [vmem:[#allocation2 + $0x68] sm:$0xff]
          %v6094 = vld [vmem:[#allocation2 + $0x70] sm:$0xff]
          %v6095 = vld [vmem:[#allocation2 + $0x78] sm:$0xff]
          %v6096 = vld [vmem:[#allocation2 + $0x80] sm:$0xff]
          %v6097 = vld [vmem:[#allocation2 + $0x88] sm:$0xff]
          %v6098 = vld [vmem:[#allocation2 + $0x90] sm:$0xff]
          %v6099 = vld [vmem:[#allocation2 + $0x98] sm:$0xff]
          %v6100 = vld [vmem:[#allocation2 + $0xa0] sm:$0xff]
          %v6101 = vld [vmem:[#allocation2 + $0xa8] sm:$0xff]
          %v6102 = vld [vmem:[#allocation2 + $0xb0] sm:$0xff]
          %v6103 = vld [vmem:[#allocation2 + $0xb8] sm:$0xff]
          %v6104 = vld [vmem:[#allocation2 + $0xc0] sm:$0xff]
          %v6105 = vld [vmem:[#allocation2 + $0xc8] sm:$0xff]
          %v6106 = vld [vmem:[#allocation2 + $0xd0] sm:$0xff]
          %v6107 = vld [vmem:[#allocation2 + $0xd8] sm:$0xff]
          %v6108 = vld [vmem:[#allocation2 + $0xe0] sm:$0xff]
          %v6109 = vld [vmem:[#allocation2 + $0xe8] sm:$0xff]
          %v6110 = vld [vmem:[#allocation2 + $0xf0] sm:$0xff]
          %v6111 = vld [vmem:[#allocation2 + $0xf8] sm:$0xff]
          %v6112 = vld [vmem:[#allocation3] sm:$0xff]
          %v6113 = vld [vmem:[#allocation3 + $0x8] sm:$0xff]
          %v6114 = vld [vmem:[#allocation3 + $0x10] sm:$0xff]
          %v6115 = vld [vmem:[#allocation3 + $0x18] sm:$0xff]
          %v6116 = vld [vmem:[#allocation3 + $0x20] sm:$0xff]
          %v6117 = vld [vmem:[#allocation3 + $0x28] sm:$0xff]
          %v6118 = vld [vmem:[#allocation3 + $0x30] sm:$0xff]
          %v6119 = vld [vmem:[#allocation3 + $0x38] sm:$0xff]
          %v6120 = vld [vmem:[#allocation3 + $0x40] sm:$0xff]
          %v6121 = vld [vmem:[#allocation3 + $0x48] sm:$0xff]
          %v6122 = vld [vmem:[#allocation3 + $0x50] sm:$0xff]
          %v6123 = vld [vmem:[#allocation3 + $0x58] sm:$0xff]
          %v6124 = vld [vmem:[#allocation3 + $0x60] sm:$0xff]
          %v6125 = vld [vmem:[#allocation3 + $0x68] sm:$0xff]
          %v6126 = vld [vmem:[#allocation3 + $0x70] sm:$0xff]
          %v6127 = vld [vmem:[#allocation3 + $0x78] sm:$0xff]
          %v6128 = vld [vmem:[#allocation3 + $0x80] sm:$0xff]
          %v6129 = vld [vmem:[#allocation3 + $0x88] sm:$0xff]
          %v6130 = vld [vmem:[#allocation3 + $0x90] sm:$0xff]
          %v6131 = vld [vmem:[#allocation3 + $0x98] sm:$0xff]
          %v6132 = vld [vmem:[#allocation3 + $0xa0] sm:$0xff]
          %v6133 = vld [vmem:[#allocation3 + $0xa8] sm:$0xff]
          %v6134 = vld [vmem:[#allocation3 + $0xb0] sm:$0xff]
          %v6135 = vld [vmem:[#allocation3 + $0xb8] sm:$0xff]
          %v6136 = vld [vmem:[#allocation3 + $0xc0] sm:$0xff]
          %v6137 = vld [vmem:[#allocation3 + $0xc8] sm:$0xff]
          %v6138 = vld [vmem:[#allocation3 + $0xd0] sm:$0xff]
          %v6139 = vld [vmem:[#allocation3 + $0xd8] sm:$0xff]
          %v6140 = vld [vmem:[#allocation3 + $0xe0] sm:$0xff]
          %v6141 = vld [vmem:[#allocation3 + $0xe8] sm:$0xff]
          %v6142 = vld [vmem:[#allocation3 + $0xf0] sm:$0xff]
          %v6143 = vld [vmem:[#allocation3 + $0xf8] sm:$0xff]
          %v6144 = vld [vmem:[#allocation4] sm:$0xff]
          %v6145 = vld [vmem:[#allocation4 + $0x8] sm:$0xff]
          %v6146 = vld [vmem:[#allocation4 + $0x10] sm:$0xff]
          %v6147 = vld [vmem:[#allocation4 + $0x18] sm:$0xff]
          %v6148 = vld [vmem:[#allocation4 + $0x20] sm:$0xff]
          %v6149 = vld [vmem:[#allocation4 + $0x28] sm:$0xff]
          %v6150 = vld [vmem:[#allocation4 + $0x30] sm:$0xff]
          %v6151 = vld [vmem:[#allocation4 + $0x38] sm:$0xff]
          %v6152 = vld [vmem:[#allocation4 + $0x40] sm:$0xff]
          %v6153 = vld [vmem:[#allocation4 + $0x48] sm:$0xff]
          %v6154 = vld [vmem:[#allocation4 + $0x50] sm:$0xff]
          %v6155 = vld [vmem:[#allocation4 + $0x58] sm:$0xff]
          %v6156 = vld [vmem:[#allocation4 + $0x60] sm:$0xff]
          %v6157 = vld [vmem:[#allocation4 + $0x68] sm:$0xff]
          %v6158 = vld [vmem:[#allocation4 + $0x70] sm:$0xff]
          %v6159 = vld [vmem:[#allocation4 + $0x78] sm:$0xff]
          %v6160 = vld [vmem:[#allocation4 + $0x80] sm:$0xff]
          %v6161 = vld [vmem:[#allocation4 + $0x88] sm:$0xff]
          %v6162 = vld [vmem:[#allocation4 + $0x90] sm:$0xff]
          %v6163 = vld [vmem:[#allocation4 + $0x98] sm:$0xff]
          %v6164 = vld [vmem:[#allocation4 + $0xa0] sm:$0xff]
          %v6165 = vld [vmem:[#allocation4 + $0xa8] sm:$0xff]
          %v6166 = vld [vmem:[#allocation4 + $0xb0] sm:$0xff]
          %v6167 = vld [vmem:[#allocation4 + $0xb8] sm:$0xff]
          %v6168 = vld [vmem:[#allocation4 + $0xc0] sm:$0xff]
          %v6169 = vld [vmem:[#allocation4 + $0xc8] sm:$0xff]
          %v6170 = vld [vmem:[#allocation4 + $0xd0] sm:$0xff]
          %v6171 = vld [vmem:[#allocation4 + $0xd8] sm:$0xff]
          %v6172 = vld [vmem:[#allocation4 + $0xe0] sm:$0xff]
          %v6173 = vld [vmem:[#allocation4 + $0xe8] sm:$0xff]
          %v6174 = vld [vmem:[#allocation4 + $0xf0] sm:$0xff]
          %v6175 = vld [vmem:[#allocation4 + $0xf8] sm:$0xff]
          %v6176 = vld [vmem:[#allocation2 + $0x100] sm:$0xff]
          %v6177 = vld [vmem:[#allocation2 + $0x108] sm:$0xff]
          %v6178 = vld [vmem:[#allocation2 + $0x110] sm:$0xff]
          %v6179 = vld [vmem:[#allocation2 + $0x118] sm:$0xff]
          %v6180 = vld [vmem:[#allocation2 + $0x120] sm:$0xff]
          %v6181 = vld [vmem:[#allocation2 + $0x128] sm:$0xff]
          %v6182 = vld [vmem:[#allocation2 + $0x130] sm:$0xff]
          %v6183 = vld [vmem:[#allocation2 + $0x138] sm:$0xff]
          %v6184 = vld [vmem:[#allocation2 + $0x140] sm:$0xff]
          %v6185 = vld [vmem:[#allocation2 + $0x148] sm:$0xff]
          %v6186 = vld [vmem:[#allocation2 + $0x150] sm:$0xff]
          %v6187 = vld [vmem:[#allocation2 + $0x158] sm:$0xff]
          %v6188 = vld [vmem:[#allocation2 + $0x160] sm:$0xff]
          %v6189 = vld [vmem:[#allocation2 + $0x168] sm:$0xff]
          %v6190 = vld [vmem:[#allocation2 + $0x170] sm:$0xff]
          %v6191 = vld [vmem:[#allocation2 + $0x178] sm:$0xff]
          %v6192 = vld [vmem:[#allocation2 + $0x180] sm:$0xff]
          %v6193 = vld [vmem:[#allocation2 + $0x188] sm:$0xff]
          %v6194 = vld [vmem:[#allocation2 + $0x190] sm:$0xff]
          %v6195 = vld [vmem:[#allocation2 + $0x198] sm:$0xff]
          %v6196 = vld [vmem:[#allocation2 + $0x1a0] sm:$0xff]
          %v6197 = vld [vmem:[#allocation2 + $0x1a8] sm:$0xff]
          %v6198 = vld [vmem:[#allocation2 + $0x1b0] sm:$0xff]
          %v6199 = vld [vmem:[#allocation2 + $0x1b8] sm:$0xff]
          %v6200 = vld [vmem:[#allocation2 + $0x1c0] sm:$0xff]
          %v6201 = vld [vmem:[#allocation2 + $0x1c8] sm:$0xff]
          %v6202 = vld [vmem:[#allocation2 + $0x1d0] sm:$0xff]
          %v6203 = vld [vmem:[#allocation2 + $0x1d8] sm:$0xff]
          %v6204 = vld [vmem:[#allocation2 + $0x1e0] sm:$0xff]
          %v6205 = vld [vmem:[#allocation2 + $0x1e8] sm:$0xff]
          %v6206 = vld [vmem:[#allocation2 + $0x1f0] sm:$0xff]
          %v6207 = vld [vmem:[#allocation2 + $0x1f8] sm:$0xff]
          %v6208 = vld [vmem:[#allocation3 + $0x100] sm:$0xff]
          %v6209 = vld [vmem:[#allocation3 + $0x108] sm:$0xff]
          %v6210 = vld [vmem:[#allocation3 + $0x110] sm:$0xff]
          %v6211 = vld [vmem:[#allocation3 + $0x118] sm:$0xff]
          %v6212 = vld [vmem:[#allocation3 + $0x120] sm:$0xff]
          %v6213 = vld [vmem:[#allocation3 + $0x128] sm:$0xff]
          %v6214 = vld [vmem:[#allocation3 + $0x130] sm:$0xff]
          %v6215 = vld [vmem:[#allocation3 + $0x138] sm:$0xff]
          %v6216 = vld [vmem:[#allocation3 + $0x140] sm:$0xff]
          %v6217 = vld [vmem:[#allocation3 + $0x148] sm:$0xff]
          %v6218 = vld [vmem:[#allocation3 + $0x150] sm:$0xff]
          %v6219 = vld [vmem:[#allocation3 + $0x158] sm:$0xff]
          %v6220 = vld [vmem:[#allocation3 + $0x160] sm:$0xff]
          %v6221 = vld [vmem:[#allocation3 + $0x168] sm:$0xff]
          %v6222 = vld [vmem:[#allocation3 + $0x170] sm:$0xff]
          %v6223 = vld [vmem:[#allocation3 + $0x178] sm:$0xff]
          %v6224 = vld [vmem:[#allocation3 + $0x180] sm:$0xff]
          %v6225 = vld [vmem:[#allocation3 + $0x188] sm:$0xff]
          %v6226 = vld [vmem:[#allocation3 + $0x190] sm:$0xff]
          %v6227 = vld [vmem:[#allocation3 + $0x198] sm:$0xff]
          %v6228 = vld [vmem:[#allocation3 + $0x1a0] sm:$0xff]
          %v6229 = vld [vmem:[#allocation3 + $0x1a8] sm:$0xff]
          %v6230 = vld [vmem:[#allocation3 + $0x1b0] sm:$0xff]
          %v6231 = vld [vmem:[#allocation3 + $0x1b8] sm:$0xff]
          %v6232 = vld [vmem:[#allocation3 + $0x1c0] sm:$0xff]
          %v6233 = vld [vmem:[#allocation3 + $0x1c8] sm:$0xff]
          %v6234 = vld [vmem:[#allocation3 + $0x1d0] sm:$0xff]
          %v6235 = vld [vmem:[#allocation3 + $0x1d8] sm:$0xff]
          %v6236 = vld [vmem:[#allocation3 + $0x1e0] sm:$0xff]
          %v6237 = vld [vmem:[#allocation3 + $0x1e8] sm:$0xff]
          %v6238 = vld [vmem:[#allocation3 + $0x1f0] sm:$0xff]
          %v6239 = vld [vmem:[#allocation3 + $0x1f8] sm:$0xff]
          %v6240 = vld [vmem:[#allocation4 + $0x100] sm:$0xff]
          %v6241 = vld [vmem:[#allocation4 + $0x108] sm:$0xff]
          %v6242 = vld [vmem:[#allocation4 + $0x110] sm:$0xff]
          %v6243 = vld [vmem:[#allocation4 + $0x118] sm:$0xff]
          %v6244 = vld [vmem:[#allocation4 + $0x120] sm:$0xff]
          %v6245 = vld [vmem:[#allocation4 + $0x128] sm:$0xff]
          %v6246 = vld [vmem:[#allocation4 + $0x130] sm:$0xff]
          %v6247 = vld [vmem:[#allocation4 + $0x138] sm:$0xff]
          %v6248 = vld [vmem:[#allocation4 + $0x140] sm:$0xff]
          %v6249 = vld [vmem:[#allocation4 + $0x148] sm:$0xff]
          %v6250 = vld [vmem:[#allocation4 + $0x150] sm:$0xff]
          %v6251 = vld [vmem:[#allocation4 + $0x158] sm:$0xff]
          %v6252 = vld [vmem:[#allocation4 + $0x160] sm:$0xff]
          %v6253 = vld [vmem:[#allocation4 + $0x168] sm:$0xff]
          %v6254 = vld [vmem:[#allocation4 + $0x170] sm:$0xff]
          %v6255 = vld [vmem:[#allocation4 + $0x178] sm:$0xff]
          %v6256 = vld [vmem:[#allocation4 + $0x180] sm:$0xff]
          %v6257 = vld [vmem:[#allocation4 + $0x188] sm:$0xff]
          %v6258 = vld [vmem:[#allocation4 + $0x190] sm:$0xff]
          %v6259 = vld [vmem:[#allocation4 + $0x198] sm:$0xff]
          %v6260 = vld [vmem:[#allocation4 + $0x1a0] sm:$0xff]
          %v6261 = vld [vmem:[#allocation4 + $0x1a8] sm:$0xff]
          %v6262 = vld [vmem:[#allocation4 + $0x1b0] sm:$0xff]
          %v6263 = vld [vmem:[#allocation4 + $0x1b8] sm:$0xff]
          %v6264 = vld [vmem:[#allocation4 + $0x1c0] sm:$0xff]
          %v6265 = vld [vmem:[#allocation4 + $0x1c8] sm:$0xff]
          %v6266 = vld [vmem:[#allocation4 + $0x1d0] sm:$0xff]
          %v6267 = vld [vmem:[#allocation4 + $0x1d8] sm:$0xff]
          %v6268 = vld [vmem:[#allocation4 + $0x1e0] sm:$0xff]
          %v6269 = vld [vmem:[#allocation4 + $0x1e8] sm:$0xff]
          %v6270 = vld [vmem:[#allocation4 + $0x1f0] sm:$0xff]
          %v6271 = vld [vmem:[#allocation4 + $0x1f8] sm:$0xff]
          %v6272 = vmin.f32 %v6080, %v6176
          %v6273 = vmin.f32 %v6081, %v6177
          %v6274 = vmin.f32 %v6082, %v6178
          %v6275 = vmin.f32 %v6083, %v6179
          %v6276 = vmin.f32 %v6084, %v6180
          %v6277 = vmin.f32 %v6085, %v6181
          %v6278 = vmin.f32 %v6086, %v6182
          %v6279 = vmin.f32 %v6087, %v6183
          %v6280 = vmin.f32 %v6088, %v6184
          %v6281 = vmin.f32 %v6089, %v6185
          %v6282 = vmin.f32 %v6090, %v6186
          %v6283 = vmin.f32 %v6091, %v6187
          %v6284 = vmin.f32 %v6092, %v6188
          %v6285 = vmin.f32 %v6093, %v6189
          %v6286 = vmin.f32 %v6094, %v6190
          %v6287 = vmin.f32 %v6095, %v6191
          %v6288 = vmin.f32 %v6096, %v6192
          %v6289 = vmin.f32 %v6097, %v6193
          %v6290 = vmin.f32 %v6098, %v6194
          %v6291 = vmin.f32 %v6099, %v6195
          %v6292 = vmin.f32 %v6100, %v6196
          %v6293 = vmin.f32 %v6101, %v6197
          %v6294 = vmin.f32 %v6102, %v6198
          %v6295 = vmin.f32 %v6103, %v6199
          %v6296 = vmin.f32 %v6104, %v6200
          %v6297 = vmin.f32 %v6105, %v6201
          %v6298 = vmin.f32 %v6106, %v6202
          %v6299 = vmin.f32 %v6107, %v6203
          %v6300 = vmin.f32 %v6108, %v6204
          %v6301 = vmin.f32 %v6109, %v6205
          %v6302 = vmin.f32 %v6110, %v6206
          %v6303 = vmin.f32 %v6111, %v6207
          %v6304 = vmax.f32 %v6080, %v6176
          %v6305 = vmax.f32 %v6081, %v6177
          %v6306 = vmax.f32 %v6082, %v6178
          %v6307 = vmax.f32 %v6083, %v6179
          %v6308 = vmax.f32 %v6084, %v6180
          %v6309 = vmax.f32 %v6085, %v6181
          %v6310 = vmax.f32 %v6086, %v6182
          %v6311 = vmax.f32 %v6087, %v6183
          %v6312 = vmax.f32 %v6088, %v6184
          %v6313 = vmax.f32 %v6089, %v6185
          %v6314 = vmax.f32 %v6090, %v6186
          %v6315 = vmax.f32 %v6091, %v6187
          %v6316 = vmax.f32 %v6092, %v6188
          %v6317 = vmax.f32 %v6093, %v6189
          %v6318 = vmax.f32 %v6094, %v6190
          %v6319 = vmax.f32 %v6095, %v6191
          %v6320 = vmax.f32 %v6096, %v6192
          %v6321 = vmax.f32 %v6097, %v6193
          %v6322 = vmax.f32 %v6098, %v6194
          %v6323 = vmax.f32 %v6099, %v6195
          %v6324 = vmax.f32 %v6100, %v6196
          %v6325 = vmax.f32 %v6101, %v6197
          %v6326 = vmax.f32 %v6102, %v6198
          %v6327 = vmax.f32 %v6103, %v6199
          %v6328 = vmax.f32 %v6104, %v6200
          %v6329 = vmax.f32 %v6105, %v6201
          %v6330 = vmax.f32 %v6106, %v6202
          %v6331 = vmax.f32 %v6107, %v6203
          %v6332 = vmax.f32 %v6108, %v6204
          %v6333 = vmax.f32 %v6109, %v6205
          %v6334 = vmax.f32 %v6110, %v6206
          %v6335 = vmax.f32 %v6111, %v6207
          %v6336 = vmin.f32 %v6112, %v6304
          %v6337 = vmin.f32 %v6113, %v6305
          %v6338 = vmin.f32 %v6114, %v6306
          %v6339 = vmin.f32 %v6115, %v6307
          %v6340 = vmin.f32 %v6116, %v6308
          %v6341 = vmin.f32 %v6117, %v6309
          %v6342 = vmin.f32 %v6118, %v6310
          %v6343 = vmin.f32 %v6119, %v6311
          %v6344 = vmin.f32 %v6120, %v6312
          %v6345 = vmin.f32 %v6121, %v6313
          %v6346 = vmin.f32 %v6122, %v6314
          %v6347 = vmin.f32 %v6123, %v6315
          %v6348 = vmin.f32 %v6124, %v6316
          %v6349 = vmin.f32 %v6125, %v6317
          %v6350 = vmin.f32 %v6126, %v6318
          %v6351 = vmin.f32 %v6127, %v6319
          %v6352 = vmin.f32 %v6128, %v6320
          %v6353 = vmin.f32 %v6129, %v6321
          %v6354 = vmin.f32 %v6130, %v6322
          %v6355 = vmin.f32 %v6131, %v6323
          %v6356 = vmin.f32 %v6132, %v6324
          %v6357 = vmin.f32 %v6133, %v6325
          %v6358 = vmin.f32 %v6134, %v6326
          %v6359 = vmin.f32 %v6135, %v6327
          %v6360 = vmin.f32 %v6136, %v6328
          %v6361 = vmin.f32 %v6137, %v6329
          %v6362 = vmin.f32 %v6138, %v6330
          %v6363 = vmin.f32 %v6139, %v6331
          %v6364 = vmin.f32 %v6140, %v6332
          %v6365 = vmin.f32 %v6141, %v6333
          %v6366 = vmin.f32 %v6142, %v6334
          %v6367 = vmin.f32 %v6143, %v6335
          %v6368 = vmax.f32 %v6112, %v6176
          %v6369 = vmax.f32 %v6113, %v6177
          %v6370 = vmax.f32 %v6114, %v6178
          %v6371 = vmax.f32 %v6115, %v6179
          %v6372 = vmax.f32 %v6116, %v6180
          %v6373 = vmax.f32 %v6117, %v6181
          %v6374 = vmax.f32 %v6118, %v6182
          %v6375 = vmax.f32 %v6119, %v6183
          %v6376 = vmax.f32 %v6120, %v6184
          %v6377 = vmax.f32 %v6121, %v6185
          %v6378 = vmax.f32 %v6122, %v6186
          %v6379 = vmax.f32 %v6123, %v6187
          %v6380 = vmax.f32 %v6124, %v6188
          %v6381 = vmax.f32 %v6125, %v6189
          %v6382 = vmax.f32 %v6126, %v6190
          %v6383 = vmax.f32 %v6127, %v6191
          %v6384 = vmax.f32 %v6128, %v6192
          %v6385 = vmax.f32 %v6129, %v6193
          %v6386 = vmax.f32 %v6130, %v6194
          %v6387 = vmax.f32 %v6131, %v6195
          %v6388 = vmax.f32 %v6132, %v6196
          %v6389 = vmax.f32 %v6133, %v6197
          %v6390 = vmax.f32 %v6134, %v6198
          %v6391 = vmax.f32 %v6135, %v6199
          %v6392 = vmax.f32 %v6136, %v6200
          %v6393 = vmax.f32 %v6137, %v6201
          %v6394 = vmax.f32 %v6138, %v6202
          %v6395 = vmax.f32 %v6139, %v6203
          %v6396 = vmax.f32 %v6140, %v6204
          %v6397 = vmax.f32 %v6141, %v6205
          %v6398 = vmax.f32 %v6142, %v6206
          %v6399 = vmax.f32 %v6143, %v6207
          %v6400 = vmin.f32 %v6144, %v6368
          %v6401 = vmin.f32 %v6145, %v6369
          %v6402 = vmin.f32 %v6146, %v6370
          %v6403 = vmin.f32 %v6147, %v6371
          %v6404 = vmin.f32 %v6148, %v6372
          %v6405 = vmin.f32 %v6149, %v6373
          %v6406 = vmin.f32 %v6150, %v6374
          %v6407 = vmin.f32 %v6151, %v6375
          %v6408 = vmin.f32 %v6152, %v6376
          %v6409 = vmin.f32 %v6153, %v6377
          %v6410 = vmin.f32 %v6154, %v6378
          %v6411 = vmin.f32 %v6155, %v6379
          %v6412 = vmin.f32 %v6156, %v6380
          %v6413 = vmin.f32 %v6157, %v6381
          %v6414 = vmin.f32 %v6158, %v6382
          %v6415 = vmin.f32 %v6159, %v6383
          %v6416 = vmin.f32 %v6160, %v6384
          %v6417 = vmin.f32 %v6161, %v6385
          %v6418 = vmin.f32 %v6162, %v6386
          %v6419 = vmin.f32 %v6163, %v6387
          %v6420 = vmin.f32 %v6164, %v6388
          %v6421 = vmin.f32 %v6165, %v6389
          %v6422 = vmin.f32 %v6166, %v6390
          %v6423 = vmin.f32 %v6167, %v6391
          %v6424 = vmin.f32 %v6168, %v6392
          %v6425 = vmin.f32 %v6169, %v6393
          %v6426 = vmin.f32 %v6170, %v6394
          %v6427 = vmin.f32 %v6171, %v6395
          %v6428 = vmin.f32 %v6172, %v6396
          %v6429 = vmin.f32 %v6173, %v6397
          %v6430 = vmin.f32 %v6174, %v6398
          %v6431 = vmin.f32 %v6175, %v6399
          %v6432 = vmin.f32 %v6272, %v6208
          %v6433 = vmin.f32 %v6273, %v6209
          %v6434 = vmin.f32 %v6274, %v6210
          %v6435 = vmin.f32 %v6275, %v6211
          %v6436 = vmin.f32 %v6276, %v6212
          %v6437 = vmin.f32 %v6277, %v6213
          %v6438 = vmin.f32 %v6278, %v6214
          %v6439 = vmin.f32 %v6279, %v6215
          %v6440 = vmin.f32 %v6280, %v6216
          %v6441 = vmin.f32 %v6281, %v6217
          %v6442 = vmin.f32 %v6282, %v6218
          %v6443 = vmin.f32 %v6283, %v6219
          %v6444 = vmin.f32 %v6284, %v6220
          %v6445 = vmin.f32 %v6285, %v6221
          %v6446 = vmin.f32 %v6286, %v6222
          %v6447 = vmin.f32 %v6287, %v6223
          %v6448 = vmin.f32 %v6288, %v6224
          %v6449 = vmin.f32 %v6289, %v6225
          %v6450 = vmin.f32 %v6290, %v6226
          %v6451 = vmin.f32 %v6291, %v6227
          %v6452 = vmin.f32 %v6292, %v6228
          %v6453 = vmin.f32 %v6293, %v6229
          %v6454 = vmin.f32 %v6294, %v6230
          %v6455 = vmin.f32 %v6295, %v6231
          %v6456 = vmin.f32 %v6296, %v6232
          %v6457 = vmin.f32 %v6297, %v6233
          %v6458 = vmin.f32 %v6298, %v6234
          %v6459 = vmin.f32 %v6299, %v6235
          %v6460 = vmin.f32 %v6300, %v6236
          %v6461 = vmin.f32 %v6301, %v6237
          %v6462 = vmin.f32 %v6302, %v6238
          %v6463 = vmin.f32 %v6303, %v6239
          %v6464 = vmax.f32 %v6272, %v6208
          %v6465 = vmax.f32 %v6273, %v6209
          %v6466 = vmax.f32 %v6274, %v6210
          %v6467 = vmax.f32 %v6275, %v6211
          %v6468 = vmax.f32 %v6276, %v6212
          %v6469 = vmax.f32 %v6277, %v6213
          %v6470 = vmax.f32 %v6278, %v6214
          %v6471 = vmax.f32 %v6279, %v6215
          %v6472 = vmax.f32 %v6280, %v6216
          %v6473 = vmax.f32 %v6281, %v6217
          %v6474 = vmax.f32 %v6282, %v6218
          %v6475 = vmax.f32 %v6283, %v6219
          %v6476 = vmax.f32 %v6284, %v6220
          %v6477 = vmax.f32 %v6285, %v6221
          %v6478 = vmax.f32 %v6286, %v6222
          %v6479 = vmax.f32 %v6287, %v6223
          %v6480 = vmax.f32 %v6288, %v6224
          %v6481 = vmax.f32 %v6289, %v6225
          %v6482 = vmax.f32 %v6290, %v6226
          %v6483 = vmax.f32 %v6291, %v6227
          %v6484 = vmax.f32 %v6292, %v6228
          %v6485 = vmax.f32 %v6293, %v6229
          %v6486 = vmax.f32 %v6294, %v6230
          %v6487 = vmax.f32 %v6295, %v6231
          %v6488 = vmax.f32 %v6296, %v6232
          %v6489 = vmax.f32 %v6297, %v6233
          %v6490 = vmax.f32 %v6298, %v6234
          %v6491 = vmax.f32 %v6299, %v6235
          %v6492 = vmax.f32 %v6300, %v6236
          %v6493 = vmax.f32 %v6301, %v6237
          %v6494 = vmax.f32 %v6302, %v6238
          %v6495 = vmax.f32 %v6303, %v6239
          %v6496 = vmin.f32 %v6336, %v6464
          %v6497 = vmin.f32 %v6337, %v6465
          %v6498 = vmin.f32 %v6338, %v6466
          %v6499 = vmin.f32 %v6339, %v6467
          %v6500 = vmin.f32 %v6340, %v6468
          %v6501 = vmin.f32 %v6341, %v6469
          %v6502 = vmin.f32 %v6342, %v6470
          %v6503 = vmin.f32 %v6343, %v6471
          %v6504 = vmin.f32 %v6344, %v6472
          %v6505 = vmin.f32 %v6345, %v6473
          %v6506 = vmin.f32 %v6346, %v6474
          %v6507 = vmin.f32 %v6347, %v6475
          %v6508 = vmin.f32 %v6348, %v6476
          %v6509 = vmin.f32 %v6349, %v6477
          %v6510 = vmin.f32 %v6350, %v6478
          %v6511 = vmin.f32 %v6351, %v6479
          %v6512 = vmin.f32 %v6352, %v6480
          %v6513 = vmin.f32 %v6353, %v6481
          %v6514 = vmin.f32 %v6354, %v6482
          %v6515 = vmin.f32 %v6355, %v6483
          %v6516 = vmin.f32 %v6356, %v6484
          %v6517 = vmin.f32 %v6357, %v6485
          %v6518 = vmin.f32 %v6358, %v6486
          %v6519 = vmin.f32 %v6359, %v6487
          %v6520 = vmin.f32 %v6360, %v6488
          %v6521 = vmin.f32 %v6361, %v6489
          %v6522 = vmin.f32 %v6362, %v6490
          %v6523 = vmin.f32 %v6363, %v6491
          %v6524 = vmin.f32 %v6364, %v6492
          %v6525 = vmin.f32 %v6365, %v6493
          %v6526 = vmin.f32 %v6366, %v6494
          %v6527 = vmin.f32 %v6367, %v6495
          %v6528 = vmax.f32 %v6336, %v6208
          %v6529 = vmax.f32 %v6337, %v6209
          %v6530 = vmax.f32 %v6338, %v6210
          %v6531 = vmax.f32 %v6339, %v6211
          %v6532 = vmax.f32 %v6340, %v6212
          %v6533 = vmax.f32 %v6341, %v6213
          %v6534 = vmax.f32 %v6342, %v6214
          %v6535 = vmax.f32 %v6343, %v6215
          %v6536 = vmax.f32 %v6344, %v6216
          %v6537 = vmax.f32 %v6345, %v6217
          %v6538 = vmax.f32 %v6346, %v6218
          %v6539 = vmax.f32 %v6347, %v6219
          %v6540 = vmax.f32 %v6348, %v6220
          %v6541 = vmax.f32 %v6349, %v6221
          %v6542 = vmax.f32 %v6350, %v6222
          %v6543 = vmax.f32 %v6351, %v6223
          %v6544 = vmax.f32 %v6352, %v6224
          %v6545 = vmax.f32 %v6353, %v6225
          %v6546 = vmax.f32 %v6354, %v6226
          %v6547 = vmax.f32 %v6355, %v6227
          %v6548 = vmax.f32 %v6356, %v6228
          %v6549 = vmax.f32 %v6357, %v6229
          %v6550 = vmax.f32 %v6358, %v6230
          %v6551 = vmax.f32 %v6359, %v6231
          %v6552 = vmax.f32 %v6360, %v6232
          %v6553 = vmax.f32 %v6361, %v6233
          %v6554 = vmax.f32 %v6362, %v6234
          %v6555 = vmax.f32 %v6363, %v6235
          %v6556 = vmax.f32 %v6364, %v6236
          %v6557 = vmax.f32 %v6365, %v6237
          %v6558 = vmax.f32 %v6366, %v6238
          %v6559 = vmax.f32 %v6367, %v6239
          %v6560 = vmin.f32 %v6400, %v6528
          %v6561 = vmin.f32 %v6401, %v6529
          %v6562 = vmin.f32 %v6402, %v6530
          %v6563 = vmin.f32 %v6403, %v6531
          %v6564 = vmin.f32 %v6404, %v6532
          %v6565 = vmin.f32 %v6405, %v6533
          %v6566 = vmin.f32 %v6406, %v6534
          %v6567 = vmin.f32 %v6407, %v6535
          %v6568 = vmin.f32 %v6408, %v6536
          %v6569 = vmin.f32 %v6409, %v6537
          %v6570 = vmin.f32 %v6410, %v6538
          %v6571 = vmin.f32 %v6411, %v6539
          %v6572 = vmin.f32 %v6412, %v6540
          %v6573 = vmin.f32 %v6413, %v6541
          %v6574 = vmin.f32 %v6414, %v6542
          %v6575 = vmin.f32 %v6415, %v6543
          %v6576 = vmin.f32 %v6416, %v6544
          %v6577 = vmin.f32 %v6417, %v6545
          %v6578 = vmin.f32 %v6418, %v6546
          %v6579 = vmin.f32 %v6419, %v6547
          %v6580 = vmin.f32 %v6420, %v6548
          %v6581 = vmin.f32 %v6421, %v6549
          %v6582 = vmin.f32 %v6422, %v6550
          %v6583 = vmin.f32 %v6423, %v6551
          %v6584 = vmin.f32 %v6424, %v6552
          %v6585 = vmin.f32 %v6425, %v6553
          %v6586 = vmin.f32 %v6426, %v6554
          %v6587 = vmin.f32 %v6427, %v6555
          %v6588 = vmin.f32 %v6428, %v6556
          %v6589 = vmin.f32 %v6429, %v6557
          %v6590 = vmin.f32 %v6430, %v6558
          %v6591 = vmin.f32 %v6431, %v6559
          %v6592 = vmin.f32 %v6432, %v6240
          %v6593 = vmin.f32 %v6433, %v6241
          %v6594 = vmin.f32 %v6434, %v6242
          %v6595 = vmin.f32 %v6435, %v6243
          %v6596 = vmin.f32 %v6436, %v6244
          %v6597 = vmin.f32 %v6437, %v6245
          %v6598 = vmin.f32 %v6438, %v6246
          %v6599 = vmin.f32 %v6439, %v6247
          %v6600 = vmin.f32 %v6440, %v6248
          %v6601 = vmin.f32 %v6441, %v6249
          %v6602 = vmin.f32 %v6442, %v6250
          %v6603 = vmin.f32 %v6443, %v6251
          %v6604 = vmin.f32 %v6444, %v6252
          %v6605 = vmin.f32 %v6445, %v6253
          %v6606 = vmin.f32 %v6446, %v6254
          %v6607 = vmin.f32 %v6447, %v6255
          %v6608 = vmin.f32 %v6448, %v6256
          %v6609 = vmin.f32 %v6449, %v6257
          %v6610 = vmin.f32 %v6450, %v6258
          %v6611 = vmin.f32 %v6451, %v6259
          %v6612 = vmin.f32 %v6452, %v6260
          %v6613 = vmin.f32 %v6453, %v6261
          %v6614 = vmin.f32 %v6454, %v6262
          %v6615 = vmin.f32 %v6455, %v6263
          %v6616 = vmin.f32 %v6456, %v6264
          %v6617 = vmin.f32 %v6457, %v6265
          %v6618 = vmin.f32 %v6458, %v6266
          %v6619 = vmin.f32 %v6459, %v6267
          %v6620 = vmin.f32 %v6460, %v6268
          %v6621 = vmin.f32 %v6461, %v6269
          %v6622 = vmin.f32 %v6462, %v6270
          %v6623 = vmin.f32 %v6463, %v6271
          %v6624 = vmax.f32 %v6432, %v6240
          %v6625 = vmax.f32 %v6433, %v6241
          %v6626 = vmax.f32 %v6434, %v6242
          %v6627 = vmax.f32 %v6435, %v6243
          %v6628 = vmax.f32 %v6436, %v6244
          %v6629 = vmax.f32 %v6437, %v6245
          %v6630 = vmax.f32 %v6438, %v6246
          %v6631 = vmax.f32 %v6439, %v6247
          %v6632 = vmax.f32 %v6440, %v6248
          %v6633 = vmax.f32 %v6441, %v6249
          %v6634 = vmax.f32 %v6442, %v6250
          %v6635 = vmax.f32 %v6443, %v6251
          %v6636 = vmax.f32 %v6444, %v6252
          %v6637 = vmax.f32 %v6445, %v6253
          %v6638 = vmax.f32 %v6446, %v6254
          %v6639 = vmax.f32 %v6447, %v6255
          %v6640 = vmax.f32 %v6448, %v6256
          %v6641 = vmax.f32 %v6449, %v6257
          %v6642 = vmax.f32 %v6450, %v6258
          %v6643 = vmax.f32 %v6451, %v6259
          %v6644 = vmax.f32 %v6452, %v6260
          %v6645 = vmax.f32 %v6453, %v6261
          %v6646 = vmax.f32 %v6454, %v6262
          %v6647 = vmax.f32 %v6455, %v6263
          %v6648 = vmax.f32 %v6456, %v6264
          %v6649 = vmax.f32 %v6457, %v6265
          %v6650 = vmax.f32 %v6458, %v6266
          %v6651 = vmax.f32 %v6459, %v6267
          %v6652 = vmax.f32 %v6460, %v6268
          %v6653 = vmax.f32 %v6461, %v6269
          %v6654 = vmax.f32 %v6462, %v6270
          %v6655 = vmax.f32 %v6463, %v6271
          %v6656 = vmin.f32 %v6496, %v6624
          %v6657 = vmin.f32 %v6497, %v6625
          %v6658 = vmin.f32 %v6498, %v6626
          %v6659 = vmin.f32 %v6499, %v6627
          %v6660 = vmin.f32 %v6500, %v6628
          %v6661 = vmin.f32 %v6501, %v6629
          %v6662 = vmin.f32 %v6502, %v6630
          %v6663 = vmin.f32 %v6503, %v6631
          %v6664 = vmin.f32 %v6504, %v6632
          %v6665 = vmin.f32 %v6505, %v6633
          %v6666 = vmin.f32 %v6506, %v6634
          %v6667 = vmin.f32 %v6507, %v6635
          %v6668 = vmin.f32 %v6508, %v6636
          %v6669 = vmin.f32 %v6509, %v6637
          %v6670 = vmin.f32 %v6510, %v6638
          %v6671 = vmin.f32 %v6511, %v6639
          %v6672 = vmin.f32 %v6512, %v6640
          %v6673 = vmin.f32 %v6513, %v6641
          %v6674 = vmin.f32 %v6514, %v6642
          %v6675 = vmin.f32 %v6515, %v6643
          %v6676 = vmin.f32 %v6516, %v6644
          %v6677 = vmin.f32 %v6517, %v6645
          %v6678 = vmin.f32 %v6518, %v6646
          %v6679 = vmin.f32 %v6519, %v6647
          %v6680 = vmin.f32 %v6520, %v6648
          %v6681 = vmin.f32 %v6521, %v6649
          %v6682 = vmin.f32 %v6522, %v6650
          %v6683 = vmin.f32 %v6523, %v6651
          %v6684 = vmin.f32 %v6524, %v6652
          %v6685 = vmin.f32 %v6525, %v6653
          %v6686 = vmin.f32 %v6526, %v6654
          %v6687 = vmin.f32 %v6527, %v6655
          %v6688 = vmax.f32 %v6496, %v6240
          %v6689 = vmax.f32 %v6497, %v6241
          %v6690 = vmax.f32 %v6498, %v6242
          %v6691 = vmax.f32 %v6499, %v6243
          %v6692 = vmax.f32 %v6500, %v6244
          %v6693 = vmax.f32 %v6501, %v6245
          %v6694 = vmax.f32 %v6502, %v6246
          %v6695 = vmax.f32 %v6503, %v6247
          %v6696 = vmax.f32 %v6504, %v6248
          %v6697 = vmax.f32 %v6505, %v6249
          %v6698 = vmax.f32 %v6506, %v6250
          %v6699 = vmax.f32 %v6507, %v6251
          %v6700 = vmax.f32 %v6508, %v6252
          %v6701 = vmax.f32 %v6509, %v6253
          %v6702 = vmax.f32 %v6510, %v6254
          %v6703 = vmax.f32 %v6511, %v6255
          %v6704 = vmax.f32 %v6512, %v6256
          %v6705 = vmax.f32 %v6513, %v6257
          %v6706 = vmax.f32 %v6514, %v6258
          %v6707 = vmax.f32 %v6515, %v6259
          %v6708 = vmax.f32 %v6516, %v6260
          %v6709 = vmax.f32 %v6517, %v6261
          %v6710 = vmax.f32 %v6518, %v6262
          %v6711 = vmax.f32 %v6519, %v6263
          %v6712 = vmax.f32 %v6520, %v6264
          %v6713 = vmax.f32 %v6521, %v6265
          %v6714 = vmax.f32 %v6522, %v6266
          %v6715 = vmax.f32 %v6523, %v6267
          %v6716 = vmax.f32 %v6524, %v6268
          %v6717 = vmax.f32 %v6525, %v6269
          %v6718 = vmax.f32 %v6526, %v6270
          %v6719 = vmax.f32 %v6527, %v6271
          %v6720 = vmin.f32 %v6560, %v6688
          %v6721 = vmin.f32 %v6561, %v6689
          %v6722 = vmin.f32 %v6562, %v6690
          %v6723 = vmin.f32 %v6563, %v6691
          %v6724 = vmin.f32 %v6564, %v6692
          %v6725 = vmin.f32 %v6565, %v6693
          %v6726 = vmin.f32 %v6566, %v6694
          %v6727 = vmin.f32 %v6567, %v6695
          %v6728 = vmin.f32 %v6568, %v6696
          %v6729 = vmin.f32 %v6569, %v6697
          %v6730 = vmin.f32 %v6570, %v6698
          %v6731 = vmin.f32 %v6571, %v6699
          %v6732 = vmin.f32 %v6572, %v6700
          %v6733 = vmin.f32 %v6573, %v6701
          %v6734 = vmin.f32 %v6574, %v6702
          %v6735 = vmin.f32 %v6575, %v6703
          %v6736 = vmin.f32 %v6576, %v6704
          %v6737 = vmin.f32 %v6577, %v6705
          %v6738 = vmin.f32 %v6578, %v6706
          %v6739 = vmin.f32 %v6579, %v6707
          %v6740 = vmin.f32 %v6580, %v6708
          %v6741 = vmin.f32 %v6581, %v6709
          %v6742 = vmin.f32 %v6582, %v6710
          %v6743 = vmin.f32 %v6583, %v6711
          %v6744 = vmin.f32 %v6584, %v6712
          %v6745 = vmin.f32 %v6585, %v6713
          %v6746 = vmin.f32 %v6586, %v6714
          %v6747 = vmin.f32 %v6587, %v6715
          %v6748 = vmin.f32 %v6588, %v6716
          %v6749 = vmin.f32 %v6589, %v6717
          %v6750 = vmin.f32 %v6590, %v6718
          %v6751 = vmin.f32 %v6591, %v6719
          %6752 = vst [vmem:[#allocation2] sm:$0xff] %v6592
          %6753 = vst [vmem:[#allocation2 + $0x8] sm:$0xff] %v6593
          %6754 = vst [vmem:[#allocation2 + $0x10] sm:$0xff] %v6594
          %6755 = vst [vmem:[#allocation2 + $0x18] sm:$0xff] %v6595
          %6756 = vst [vmem:[#allocation2 + $0x20] sm:$0xff] %v6596
          %6757 = vst [vmem:[#allocation2 + $0x28] sm:$0xff] %v6597
          %6758 = vst [vmem:[#allocation2 + $0x30] sm:$0xff] %v6598
          %6759 = vst [vmem:[#allocation2 + $0x38] sm:$0xff] %v6599
          %6760 = vst [vmem:[#allocation2 + $0x40] sm:$0xff] %v6600
          %6761 = vst [vmem:[#allocation2 + $0x48] sm:$0xff] %v6601
          %6762 = vst [vmem:[#allocation2 + $0x50] sm:$0xff] %v6602
          %6763 = vst [vmem:[#allocation2 + $0x58] sm:$0xff] %v6603
          %6764 = vst [vmem:[#allocation2 + $0x60] sm:$0xff] %v6604
          %6765 = vst [vmem:[#allocation2 + $0x68] sm:$0xff] %v6605
          %6766 = vst [vmem:[#allocation2 + $0x70] sm:$0xff] %v6606
          %6767 = vst [vmem:[#allocation2 + $0x78] sm:$0xff] %v6607
          %6768 = vst [vmem:[#allocation2 + $0x80] sm:$0xff] %v6608
          %6769 = vst [vmem:[#allocation2 + $0x88] sm:$0xff] %v6609
          %6770 = vst [vmem:[#allocation2 + $0x90] sm:$0xff] %v6610
          %6771 = vst [vmem:[#allocation2 + $0x98] sm:$0xff] %v6611
          %6772 = vst [vmem:[#allocation2 + $0xa0] sm:$0xff] %v6612
          %6773 = vst [vmem:[#allocation2 + $0xa8] sm:$0xff] %v6613
          %6774 = vst [vmem:[#allocation2 + $0xb0] sm:$0xff] %v6614
          %6775 = vst [vmem:[#allocation2 + $0xb8] sm:$0xff] %v6615
          %6776 = vst [vmem:[#allocation2 + $0xc0] sm:$0xff] %v6616
          %6777 = vst [vmem:[#allocation2 + $0xc8] sm:$0xff] %v6617
          %6778 = vst [vmem:[#allocation2 + $0xd0] sm:$0xff] %v6618
          %6779 = vst [vmem:[#allocation2 + $0xd8] sm:$0xff] %v6619
          %6780 = vst [vmem:[#allocation2 + $0xe0] sm:$0xff] %v6620
          %6781 = vst [vmem:[#allocation2 + $0xe8] sm:$0xff] %v6621
          %6782 = vst [vmem:[#allocation2 + $0xf0] sm:$0xff] %v6622
          %6783 = vst [vmem:[#allocation2 + $0xf8] sm:$0xff] %v6623
          %6784 = vst [vmem:[#allocation3] sm:$0xff] %v6656
          %6785 = vst [vmem:[#allocation3 + $0x8] sm:$0xff] %v6657
          %6786 = vst [vmem:[#allocation3 + $0x10] sm:$0xff] %v6658
          %6787 = vst [vmem:[#allocation3 + $0x18] sm:$0xff] %v6659
          %6788 = vst [vmem:[#allocation3 + $0x20] sm:$0xff] %v6660
          %6789 = vst [vmem:[#allocation3 + $0x28] sm:$0xff] %v6661
          %6790 = vst [vmem:[#allocation3 + $0x30] sm:$0xff] %v6662
          %6791 = vst [vmem:[#allocation3 + $0x38] sm:$0xff] %v6663
          %6792 = vst [vmem:[#allocation3 + $0x40] sm:$0xff] %v6664
          %6793 = vst [vmem:[#allocation3 + $0x48] sm:$0xff] %v6665
          %6794 = vst [vmem:[#allocation3 + $0x50] sm:$0xff] %v6666
          %6795 = vst [vmem:[#allocation3 + $0x58] sm:$0xff] %v6667
          %6796 = vst [vmem:[#allocation3 + $0x60] sm:$0xff] %v6668
          %6797 = vst [vmem:[#allocation3 + $0x68] sm:$0xff] %v6669
          %6798 = vst [vmem:[#allocation3 + $0x70] sm:$0xff] %v6670
          %6799 = vst [vmem:[#allocation3 + $0x78] sm:$0xff] %v6671
          %6800 = vst [vmem:[#allocation3 + $0x80] sm:$0xff] %v6672
          %6801 = vst [vmem:[#allocation3 + $0x88] sm:$0xff] %v6673
          %6802 = vst [vmem:[#allocation3 + $0x90] sm:$0xff] %v6674
          %6803 = vst [vmem:[#allocation3 + $0x98] sm:$0xff] %v6675
          %6804 = vst [vmem:[#allocation3 + $0xa0] sm:$0xff] %v6676
          %6805 = vst [vmem:[#allocation3 + $0xa8] sm:$0xff] %v6677
          %6806 = vst [vmem:[#allocation3 + $0xb0] sm:$0xff] %v6678
          %6807 = vst [vmem:[#allocation3 + $0xb8] sm:$0xff] %v6679
          %6808 = vst [vmem:[#allocation3 + $0xc0] sm:$0xff] %v6680
          %6809 = vst [vmem:[#allocation3 + $0xc8] sm:$0xff] %v6681
          %6810 = vst [vmem:[#allocation3 + $0xd0] sm:$0xff] %v6682
          %6811 = vst [vmem:[#allocation3 + $0xd8] sm:$0xff] %v6683
          %6812 = vst [vmem:[#allocation3 + $0xe0] sm:$0xff] %v6684
          %6813 = vst [vmem:[#allocation3 + $0xe8] sm:$0xff] %v6685
          %6814 = vst [vmem:[#allocation3 + $0xf0] sm:$0xff] %v6686
          %6815 = vst [vmem:[#allocation3 + $0xf8] sm:$0xff] %v6687
          %6816 = vst [vmem:[#allocation4] sm:$0xff] %v6720
          %6817 = vst [vmem:[#allocation4 + $0x8] sm:$0xff] %v6721
          %6818 = vst [vmem:[#allocation4 + $0x10] sm:$0xff] %v6722
          %6819 = vst [vmem:[#allocation4 + $0x18] sm:$0xff] %v6723
          %6820 = vst [vmem:[#allocation4 + $0x20] sm:$0xff] %v6724
          %6821 = vst [vmem:[#allocation4 + $0x28] sm:$0xff] %v6725
          %6822 = vst [vmem:[#allocation4 + $0x30] sm:$0xff] %v6726
          %6823 = vst [vmem:[#allocation4 + $0x38] sm:$0xff] %v6727
          %6824 = vst [vmem:[#allocation4 + $0x40] sm:$0xff] %v6728
          %6825 = vst [vmem:[#allocation4 + $0x48] sm:$0xff] %v6729
          %6826 = vst [vmem:[#allocation4 + $0x50] sm:$0xff] %v6730
          %6827 = vst [vmem:[#allocation4 + $0x58] sm:$0xff] %v6731
          %6828 = vst [vmem:[#allocation4 + $0x60] sm:$0xff] %v6732
          %6829 = vst [vmem:[#allocation4 + $0x68] sm:$0xff] %v6733
          %6830 = vst [vmem:[#allocation4 + $0x70] sm:$0xff] %v6734
          %6831 = vst [vmem:[#allocation4 + $0x78] sm:$0xff] %v6735
          %6832 = vst [vmem:[#allocation4 + $0x80] sm:$0xff] %v6736
          %6833 = vst [vmem:[#allocation4 + $0x88] sm:$0xff] %v6737
          %6834 = vst [vmem:[#allocation4 + $0x90] sm:$0xff] %v6738
          %6835 = vst [vmem:[#allocation4 + $0x98] sm:$0xff] %v6739
          %6836 = vst [vmem:[#allocation4 + $0xa0] sm:$0xff] %v6740
          %6837 = vst [vmem:[#allocation4 + $0xa8] sm:$0xff] %v6741
          %6838 = vst [vmem:[#allocation4 + $0xb0] sm:$0xff] %v6742
          %6839 = vst [vmem:[#allocation4 + $0xb8] sm:$0xff] %v6743
          %6840 = vst [vmem:[#allocation4 + $0xc0] sm:$0xff] %v6744
          %6841 = vst [vmem:[#allocation4 + $0xc8] sm:$0xff] %v6745
          %6842 = vst [vmem:[#allocation4 + $0xd0] sm:$0xff] %v6746
          %6843 = vst [vmem:[#allocation4 + $0xd8] sm:$0xff] %v6747
          %6844 = vst [vmem:[#allocation4 + $0xe0] sm:$0xff] %v6748
          %6845 = vst [vmem:[#allocation4 + $0xe8] sm:$0xff] %v6749
          %6846 = vst [vmem:[#allocation4 + $0xf0] sm:$0xff] %v6750
          %6847 = vst [vmem:[#allocation4 + $0xf8] sm:$0xff] %v6751
          %v6848 = vld [vmem:[#allocation2] sm:$0xff]
          %v6849 = vld [vmem:[#allocation2 + $0x8] sm:$0xff]
          %v6850 = vld [vmem:[#allocation2 + $0x10] sm:$0xff]
          %v6851 = vld [vmem:[#allocation2 + $0x18] sm:$0xff]
          %v6852 = vld [vmem:[#allocation2 + $0x20] sm:$0xff]
          %v6853 = vld [vmem:[#allocation2 + $0x28] sm:$0xff]
          %v6854 = vld [vmem:[#allocation2 + $0x30] sm:$0xff]
          %v6855 = vld [vmem:[#allocation2 + $0x38] sm:$0xff]
          %v6856 = vld [vmem:[#allocation2 + $0x40] sm:$0xff]
          %v6857 = vld [vmem:[#allocation2 + $0x48] sm:$0xff]
          %v6858 = vld [vmem:[#allocation2 + $0x50] sm:$0xff]
          %v6859 = vld [vmem:[#allocation2 + $0x58] sm:$0xff]
          %v6860 = vld [vmem:[#allocation2 + $0x60] sm:$0xff]
          %v6861 = vld [vmem:[#allocation2 + $0x68] sm:$0xff]
          %v6862 = vld [vmem:[#allocation2 + $0x70] sm:$0xff]
          %v6863 = vld [vmem:[#allocation2 + $0x78] sm:$0xff]
          %v6864 = vld [vmem:[#allocation3] sm:$0xff]
          %v6865 = vld [vmem:[#allocation3 + $0x8] sm:$0xff]
          %v6866 = vld [vmem:[#allocation3 + $0x10] sm:$0xff]
          %v6867 = vld [vmem:[#allocation3 + $0x18] sm:$0xff]
          %v6868 = vld [vmem:[#allocation3 + $0x20] sm:$0xff]
          %v6869 = vld [vmem:[#allocation3 + $0x28] sm:$0xff]
          %v6870 = vld [vmem:[#allocation3 + $0x30] sm:$0xff]
          %v6871 = vld [vmem:[#allocation3 + $0x38] sm:$0xff]
          %v6872 = vld [vmem:[#allocation3 + $0x40] sm:$0xff]
          %v6873 = vld [vmem:[#allocation3 + $0x48] sm:$0xff]
          %v6874 = vld [vmem:[#allocation3 + $0x50] sm:$0xff]
          %v6875 = vld [vmem:[#allocation3 + $0x58] sm:$0xff]
          %v6876 = vld [vmem:[#allocation3 + $0x60] sm:$0xff]
          %v6877 = vld [vmem:[#allocation3 + $0x68] sm:$0xff]
          %v6878 = vld [vmem:[#allocation3 + $0x70] sm:$0xff]
          %v6879 = vld [vmem:[#allocation3 + $0x78] sm:$0xff]
          %v6880 = vld [vmem:[#allocation4] sm:$0xff]
          %v6881 = vld [vmem:[#allocation4 + $0x8] sm:$0xff]
          %v6882 = vld [vmem:[#allocation4 + $0x10] sm:$0xff]
          %v6883 = vld [vmem:[#allocation4 + $0x18] sm:$0xff]
          %v6884 = vld [vmem:[#allocation4 + $0x20] sm:$0xff]
          %v6885 = vld [vmem:[#allocation4 + $0x28] sm:$0xff]
          %v6886 = vld [vmem:[#allocation4 + $0x30] sm:$0xff]
          %v6887 = vld [vmem:[#allocation4 + $0x38] sm:$0xff]
          %v6888 = vld [vmem:[#allocation4 + $0x40] sm:$0xff]
          %v6889 = vld [vmem:[#allocation4 + $0x48] sm:$0xff]
          %v6890 = vld [vmem:[#allocation4 + $0x50] sm:$0xff]
          %v6891 = vld [vmem:[#allocation4 + $0x58] sm:$0xff]
          %v6892 = vld [vmem:[#allocation4 + $0x60] sm:$0xff]
          %v6893 = vld [vmem:[#allocation4 + $0x68] sm:$0xff]
          %v6894 = vld [vmem:[#allocation4 + $0x70] sm:$0xff]
          %v6895 = vld [vmem:[#allocation4 + $0x78] sm:$0xff]
          %v6896 = vld [vmem:[#allocation2 + $0x80] sm:$0xff]
          %v6897 = vld [vmem:[#allocation2 + $0x88] sm:$0xff]
          %v6898 = vld [vmem:[#allocation2 + $0x90] sm:$0xff]
          %v6899 = vld [vmem:[#allocation2 + $0x98] sm:$0xff]
          %v6900 = vld [vmem:[#allocation2 + $0xa0] sm:$0xff]
          %v6901 = vld [vmem:[#allocation2 + $0xa8] sm:$0xff]
          %v6902 = vld [vmem:[#allocation2 + $0xb0] sm:$0xff]
          %v6903 = vld [vmem:[#allocation2 + $0xb8] sm:$0xff]
          %v6904 = vld [vmem:[#allocation2 + $0xc0] sm:$0xff]
          %v6905 = vld [vmem:[#allocation2 + $0xc8] sm:$0xff]
          %v6906 = vld [vmem:[#allocation2 + $0xd0] sm:$0xff]
          %v6907 = vld [vmem:[#allocation2 + $0xd8] sm:$0xff]
          %v6908 = vld [vmem:[#allocation2 + $0xe0] sm:$0xff]
          %v6909 = vld [vmem:[#allocation2 + $0xe8] sm:$0xff]
          %v6910 = vld [vmem:[#allocation2 + $0xf0] sm:$0xff]
          %v6911 = vld [vmem:[#allocation2 + $0xf8] sm:$0xff]
          %v6912 = vld [vmem:[#allocation3 + $0x80] sm:$0xff]
          %v6913 = vld [vmem:[#allocation3 + $0x88] sm:$0xff]
          %v6914 = vld [vmem:[#allocation3 + $0x90] sm:$0xff]
          %v6915 = vld [vmem:[#allocation3 + $0x98] sm:$0xff]
          %v6916 = vld [vmem:[#allocation3 + $0xa0] sm:$0xff]
          %v6917 = vld [vmem:[#allocation3 + $0xa8] sm:$0xff]
          %v6918 = vld [vmem:[#allocation3 + $0xb0] sm:$0xff]
          %v6919 = vld [vmem:[#allocation3 + $0xb8] sm:$0xff]
          %v6920 = vld [vmem:[#allocation3 + $0xc0] sm:$0xff]
          %v6921 = vld [vmem:[#allocation3 + $0xc8] sm:$0xff]
          %v6922 = vld [vmem:[#allocation3 + $0xd0] sm:$0xff]
          %v6923 = vld [vmem:[#allocation3 + $0xd8] sm:$0xff]
          %v6924 = vld [vmem:[#allocation3 + $0xe0] sm:$0xff]
          %v6925 = vld [vmem:[#allocation3 + $0xe8] sm:$0xff]
          %v6926 = vld [vmem:[#allocation3 + $0xf0] sm:$0xff]
          %v6927 = vld [vmem:[#allocation3 + $0xf8] sm:$0xff]
          %v6928 = vld [vmem:[#allocation4 + $0x80] sm:$0xff]
          %v6929 = vld [vmem:[#allocation4 + $0x88] sm:$0xff]
          %v6930 = vld [vmem:[#allocation4 + $0x90] sm:$0xff]
          %v6931 = vld [vmem:[#allocation4 + $0x98] sm:$0xff]
          %v6932 = vld [vmem:[#allocation4 + $0xa0] sm:$0xff]
          %v6933 = vld [vmem:[#allocation4 + $0xa8] sm:$0xff]
          %v6934 = vld [vmem:[#allocation4 + $0xb0] sm:$0xff]
          %v6935 = vld [vmem:[#allocation4 + $0xb8] sm:$0xff]
          %v6936 = vld [vmem:[#allocation4 + $0xc0] sm:$0xff]
          %v6937 = vld [vmem:[#allocation4 + $0xc8] sm:$0xff]
          %v6938 = vld [vmem:[#allocation4 + $0xd0] sm:$0xff]
          %v6939 = vld [vmem:[#allocation4 + $0xd8] sm:$0xff]
          %v6940 = vld [vmem:[#allocation4 + $0xe0] sm:$0xff]
          %v6941 = vld [vmem:[#allocation4 + $0xe8] sm:$0xff]
          %v6942 = vld [vmem:[#allocation4 + $0xf0] sm:$0xff]
          %v6943 = vld [vmem:[#allocation4 + $0xf8] sm:$0xff]
          %v6944 = vmin.f32 %v6848, %v6896
          %v6945 = vmin.f32 %v6849, %v6897
          %v6946 = vmin.f32 %v6850, %v6898
          %v6947 = vmin.f32 %v6851, %v6899
          %v6948 = vmin.f32 %v6852, %v6900
          %v6949 = vmin.f32 %v6853, %v6901
          %v6950 = vmin.f32 %v6854, %v6902
          %v6951 = vmin.f32 %v6855, %v6903
          %v6952 = vmin.f32 %v6856, %v6904
          %v6953 = vmin.f32 %v6857, %v6905
          %v6954 = vmin.f32 %v6858, %v6906
          %v6955 = vmin.f32 %v6859, %v6907
          %v6956 = vmin.f32 %v6860, %v6908
          %v6957 = vmin.f32 %v6861, %v6909
          %v6958 = vmin.f32 %v6862, %v6910
          %v6959 = vmin.f32 %v6863, %v6911
          %v6960 = vmax.f32 %v6848, %v6896
          %v6961 = vmax.f32 %v6849, %v6897
          %v6962 = vmax.f32 %v6850, %v6898
          %v6963 = vmax.f32 %v6851, %v6899
          %v6964 = vmax.f32 %v6852, %v6900
          %v6965 = vmax.f32 %v6853, %v6901
          %v6966 = vmax.f32 %v6854, %v6902
          %v6967 = vmax.f32 %v6855, %v6903
          %v6968 = vmax.f32 %v6856, %v6904
          %v6969 = vmax.f32 %v6857, %v6905
          %v6970 = vmax.f32 %v6858, %v6906
          %v6971 = vmax.f32 %v6859, %v6907
          %v6972 = vmax.f32 %v6860, %v6908
          %v6973 = vmax.f32 %v6861, %v6909
          %v6974 = vmax.f32 %v6862, %v6910
          %v6975 = vmax.f32 %v6863, %v6911
          %v6976 = vmin.f32 %v6864, %v6960
          %v6977 = vmin.f32 %v6865, %v6961
          %v6978 = vmin.f32 %v6866, %v6962
          %v6979 = vmin.f32 %v6867, %v6963
          %v6980 = vmin.f32 %v6868, %v6964
          %v6981 = vmin.f32 %v6869, %v6965
          %v6982 = vmin.f32 %v6870, %v6966
          %v6983 = vmin.f32 %v6871, %v6967
          %v6984 = vmin.f32 %v6872, %v6968
          %v6985 = vmin.f32 %v6873, %v6969
          %v6986 = vmin.f32 %v6874, %v6970
          %v6987 = vmin.f32 %v6875, %v6971
          %v6988 = vmin.f32 %v6876, %v6972
          %v6989 = vmin.f32 %v6877, %v6973
          %v6990 = vmin.f32 %v6878, %v6974
          %v6991 = vmin.f32 %v6879, %v6975
          %v6992 = vmax.f32 %v6864, %v6896
          %v6993 = vmax.f32 %v6865, %v6897
          %v6994 = vmax.f32 %v6866, %v6898
          %v6995 = vmax.f32 %v6867, %v6899
          %v6996 = vmax.f32 %v6868, %v6900
          %v6997 = vmax.f32 %v6869, %v6901
          %v6998 = vmax.f32 %v6870, %v6902
          %v6999 = vmax.f32 %v6871, %v6903
          %v7000 = vmax.f32 %v6872, %v6904
          %v7001 = vmax.f32 %v6873, %v6905
          %v7002 = vmax.f32 %v6874, %v6906
          %v7003 = vmax.f32 %v6875, %v6907
          %v7004 = vmax.f32 %v6876, %v6908
          %v7005 = vmax.f32 %v6877, %v6909
          %v7006 = vmax.f32 %v6878, %v6910
          %v7007 = vmax.f32 %v6879, %v6911
          %v7008 = vmin.f32 %v6880, %v6992
          %v7009 = vmin.f32 %v6881, %v6993
          %v7010 = vmin.f32 %v6882, %v6994
          %v7011 = vmin.f32 %v6883, %v6995
          %v7012 = vmin.f32 %v6884, %v6996
          %v7013 = vmin.f32 %v6885, %v6997
          %v7014 = vmin.f32 %v6886, %v6998
          %v7015 = vmin.f32 %v6887, %v6999
          %v7016 = vmin.f32 %v6888, %v7000
          %v7017 = vmin.f32 %v6889, %v7001
          %v7018 = vmin.f32 %v6890, %v7002
          %v7019 = vmin.f32 %v6891, %v7003
          %v7020 = vmin.f32 %v6892, %v7004
          %v7021 = vmin.f32 %v6893, %v7005
          %v7022 = vmin.f32 %v6894, %v7006
          %v7023 = vmin.f32 %v6895, %v7007
          %v7024 = vmin.f32 %v6944, %v6912
          %v7025 = vmin.f32 %v6945, %v6913
          %v7026 = vmin.f32 %v6946, %v6914
          %v7027 = vmin.f32 %v6947, %v6915
          %v7028 = vmin.f32 %v6948, %v6916
          %v7029 = vmin.f32 %v6949, %v6917
          %v7030 = vmin.f32 %v6950, %v6918
          %v7031 = vmin.f32 %v6951, %v6919
          %v7032 = vmin.f32 %v6952, %v6920
          %v7033 = vmin.f32 %v6953, %v6921
          %v7034 = vmin.f32 %v6954, %v6922
          %v7035 = vmin.f32 %v6955, %v6923
          %v7036 = vmin.f32 %v6956, %v6924
          %v7037 = vmin.f32 %v6957, %v6925
          %v7038 = vmin.f32 %v6958, %v6926
          %v7039 = vmin.f32 %v6959, %v6927
          %v7040 = vmax.f32 %v6944, %v6912
          %v7041 = vmax.f32 %v6945, %v6913
          %v7042 = vmax.f32 %v6946, %v6914
          %v7043 = vmax.f32 %v6947, %v6915
          %v7044 = vmax.f32 %v6948, %v6916
          %v7045 = vmax.f32 %v6949, %v6917
          %v7046 = vmax.f32 %v6950, %v6918
          %v7047 = vmax.f32 %v6951, %v6919
          %v7048 = vmax.f32 %v6952, %v6920
          %v7049 = vmax.f32 %v6953, %v6921
          %v7050 = vmax.f32 %v6954, %v6922
          %v7051 = vmax.f32 %v6955, %v6923
          %v7052 = vmax.f32 %v6956, %v6924
          %v7053 = vmax.f32 %v6957, %v6925
          %v7054 = vmax.f32 %v6958, %v6926
          %v7055 = vmax.f32 %v6959, %v6927
          %v7056 = vmin.f32 %v6976, %v7040
          %v7057 = vmin.f32 %v6977, %v7041
          %v7058 = vmin.f32 %v6978, %v7042
          %v7059 = vmin.f32 %v6979, %v7043
          %v7060 = vmin.f32 %v6980, %v7044
          %v7061 = vmin.f32 %v6981, %v7045
          %v7062 = vmin.f32 %v6982, %v7046
          %v7063 = vmin.f32 %v6983, %v7047
          %v7064 = vmin.f32 %v6984, %v7048
          %v7065 = vmin.f32 %v6985, %v7049
          %v7066 = vmin.f32 %v6986, %v7050
          %v7067 = vmin.f32 %v6987, %v7051
          %v7068 = vmin.f32 %v6988, %v7052
          %v7069 = vmin.f32 %v6989, %v7053
          %v7070 = vmin.f32 %v6990, %v7054
          %v7071 = vmin.f32 %v6991, %v7055
          %v7072 = vmax.f32 %v6976, %v6912
          %v7073 = vmax.f32 %v6977, %v6913
          %v7074 = vmax.f32 %v6978, %v6914
          %v7075 = vmax.f32 %v6979, %v6915
          %v7076 = vmax.f32 %v6980, %v6916
          %v7077 = vmax.f32 %v6981, %v6917
          %v7078 = vmax.f32 %v6982, %v6918
          %v7079 = vmax.f32 %v6983, %v6919
          %v7080 = vmax.f32 %v6984, %v6920
          %v7081 = vmax.f32 %v6985, %v6921
          %v7082 = vmax.f32 %v6986, %v6922
          %v7083 = vmax.f32 %v6987, %v6923
          %v7084 = vmax.f32 %v6988, %v6924
          %v7085 = vmax.f32 %v6989, %v6925
          %v7086 = vmax.f32 %v6990, %v6926
          %v7087 = vmax.f32 %v6991, %v6927
          %v7088 = vmin.f32 %v7008, %v7072
          %v7089 = vmin.f32 %v7009, %v7073
          %v7090 = vmin.f32 %v7010, %v7074
          %v7091 = vmin.f32 %v7011, %v7075
          %v7092 = vmin.f32 %v7012, %v7076
          %v7093 = vmin.f32 %v7013, %v7077
          %v7094 = vmin.f32 %v7014, %v7078
          %v7095 = vmin.f32 %v7015, %v7079
          %v7096 = vmin.f32 %v7016, %v7080
          %v7097 = vmin.f32 %v7017, %v7081
          %v7098 = vmin.f32 %v7018, %v7082
          %v7099 = vmin.f32 %v7019, %v7083
          %v7100 = vmin.f32 %v7020, %v7084
          %v7101 = vmin.f32 %v7021, %v7085
          %v7102 = vmin.f32 %v7022, %v7086
          %v7103 = vmin.f32 %v7023, %v7087
          %v7104 = vmin.f32 %v7024, %v6928
          %v7105 = vmin.f32 %v7025, %v6929
          %v7106 = vmin.f32 %v7026, %v6930
          %v7107 = vmin.f32 %v7027, %v6931
          %v7108 = vmin.f32 %v7028, %v6932
          %v7109 = vmin.f32 %v7029, %v6933
          %v7110 = vmin.f32 %v7030, %v6934
          %v7111 = vmin.f32 %v7031, %v6935
          %v7112 = vmin.f32 %v7032, %v6936
          %v7113 = vmin.f32 %v7033, %v6937
          %v7114 = vmin.f32 %v7034, %v6938
          %v7115 = vmin.f32 %v7035, %v6939
          %v7116 = vmin.f32 %v7036, %v6940
          %v7117 = vmin.f32 %v7037, %v6941
          %v7118 = vmin.f32 %v7038, %v6942
          %v7119 = vmin.f32 %v7039, %v6943
          %v7120 = vmax.f32 %v7024, %v6928
          %v7121 = vmax.f32 %v7025, %v6929
          %v7122 = vmax.f32 %v7026, %v6930
          %v7123 = vmax.f32 %v7027, %v6931
          %v7124 = vmax.f32 %v7028, %v6932
          %v7125 = vmax.f32 %v7029, %v6933
          %v7126 = vmax.f32 %v7030, %v6934
          %v7127 = vmax.f32 %v7031, %v6935
          %v7128 = vmax.f32 %v7032, %v6936
          %v7129 = vmax.f32 %v7033, %v6937
          %v7130 = vmax.f32 %v7034, %v6938
          %v7131 = vmax.f32 %v7035, %v6939
          %v7132 = vmax.f32 %v7036, %v6940
          %v7133 = vmax.f32 %v7037, %v6941
          %v7134 = vmax.f32 %v7038, %v6942
          %v7135 = vmax.f32 %v7039, %v6943
          %v7136 = vmin.f32 %v7056, %v7120
          %v7137 = vmin.f32 %v7057, %v7121
          %v7138 = vmin.f32 %v7058, %v7122
          %v7139 = vmin.f32 %v7059, %v7123
          %v7140 = vmin.f32 %v7060, %v7124
          %v7141 = vmin.f32 %v7061, %v7125
          %v7142 = vmin.f32 %v7062, %v7126
          %v7143 = vmin.f32 %v7063, %v7127
          %v7144 = vmin.f32 %v7064, %v7128
          %v7145 = vmin.f32 %v7065, %v7129
          %v7146 = vmin.f32 %v7066, %v7130
          %v7147 = vmin.f32 %v7067, %v7131
          %v7148 = vmin.f32 %v7068, %v7132
          %v7149 = vmin.f32 %v7069, %v7133
          %v7150 = vmin.f32 %v7070, %v7134
          %v7151 = vmin.f32 %v7071, %v7135
          %v7152 = vmax.f32 %v7056, %v6928
          %v7153 = vmax.f32 %v7057, %v6929
          %v7154 = vmax.f32 %v7058, %v6930
          %v7155 = vmax.f32 %v7059, %v6931
          %v7156 = vmax.f32 %v7060, %v6932
          %v7157 = vmax.f32 %v7061, %v6933
          %v7158 = vmax.f32 %v7062, %v6934
          %v7159 = vmax.f32 %v7063, %v6935
          %v7160 = vmax.f32 %v7064, %v6936
          %v7161 = vmax.f32 %v7065, %v6937
          %v7162 = vmax.f32 %v7066, %v6938
          %v7163 = vmax.f32 %v7067, %v6939
          %v7164 = vmax.f32 %v7068, %v6940
          %v7165 = vmax.f32 %v7069, %v6941
          %v7166 = vmax.f32 %v7070, %v6942
          %v7167 = vmax.f32 %v7071, %v6943
          %v7168 = vmin.f32 %v7088, %v7152
          %v7169 = vmin.f32 %v7089, %v7153
          %v7170 = vmin.f32 %v7090, %v7154
          %v7171 = vmin.f32 %v7091, %v7155
          %v7172 = vmin.f32 %v7092, %v7156
          %v7173 = vmin.f32 %v7093, %v7157
          %v7174 = vmin.f32 %v7094, %v7158
          %v7175 = vmin.f32 %v7095, %v7159
          %v7176 = vmin.f32 %v7096, %v7160
          %v7177 = vmin.f32 %v7097, %v7161
          %v7178 = vmin.f32 %v7098, %v7162
          %v7179 = vmin.f32 %v7099, %v7163
          %v7180 = vmin.f32 %v7100, %v7164
          %v7181 = vmin.f32 %v7101, %v7165
          %v7182 = vmin.f32 %v7102, %v7166
          %v7183 = vmin.f32 %v7103, %v7167
          %7184 = vst [vmem:[#allocation2] sm:$0xff] %v7104
          %7185 = vst [vmem:[#allocation2 + $0x8] sm:$0xff] %v7105
          %7186 = vst [vmem:[#allocation2 + $0x10] sm:$0xff] %v7106
          %7187 = vst [vmem:[#allocation2 + $0x18] sm:$0xff] %v7107
          %7188 = vst [vmem:[#allocation2 + $0x20] sm:$0xff] %v7108
          %7189 = vst [vmem:[#allocation2 + $0x28] sm:$0xff] %v7109
          %7190 = vst [vmem:[#allocation2 + $0x30] sm:$0xff] %v7110
          %7191 = vst [vmem:[#allocation2 + $0x38] sm:$0xff] %v7111
          %7192 = vst [vmem:[#allocation2 + $0x40] sm:$0xff] %v7112
          %7193 = vst [vmem:[#allocation2 + $0x48] sm:$0xff] %v7113
          %7194 = vst [vmem:[#allocation2 + $0x50] sm:$0xff] %v7114
          %7195 = vst [vmem:[#allocation2 + $0x58] sm:$0xff] %v7115
          %7196 = vst [vmem:[#allocation2 + $0x60] sm:$0xff] %v7116
          %7197 = vst [vmem:[#allocation2 + $0x68] sm:$0xff] %v7117
          %7198 = vst [vmem:[#allocation2 + $0x70] sm:$0xff] %v7118
          %7199 = vst [vmem:[#allocation2 + $0x78] sm:$0xff] %v7119
          %7200 = vst [vmem:[#allocation3] sm:$0xff] %v7136
          %7201 = vst [vmem:[#allocation3 + $0x8] sm:$0xff] %v7137
          %7202 = vst [vmem:[#allocation3 + $0x10] sm:$0xff] %v7138
          %7203 = vst [vmem:[#allocation3 + $0x18] sm:$0xff] %v7139
          %7204 = vst [vmem:[#allocation3 + $0x20] sm:$0xff] %v7140
          %7205 = vst [vmem:[#allocation3 + $0x28] sm:$0xff] %v7141
          %7206 = vst [vmem:[#allocation3 + $0x30] sm:$0xff] %v7142
          %7207 = vst [vmem:[#allocation3 + $0x38] sm:$0xff] %v7143
          %7208 = vst [vmem:[#allocation3 + $0x40] sm:$0xff] %v7144
          %7209 = vst [vmem:[#allocation3 + $0x48] sm:$0xff] %v7145
          %7210 = vst [vmem:[#allocation3 + $0x50] sm:$0xff] %v7146
          %7211 = vst [vmem:[#allocation3 + $0x58] sm:$0xff] %v7147
          %7212 = vst [vmem:[#allocation3 + $0x60] sm:$0xff] %v7148
          %7213 = vst [vmem:[#allocation3 + $0x68] sm:$0xff] %v7149
          %7214 = vst [vmem:[#allocation3 + $0x70] sm:$0xff] %v7150
          %7215 = vst [vmem:[#allocation3 + $0x78] sm:$0xff] %v7151
          %7216 = vst [vmem:[#allocation4] sm:$0xff] %v7168
          %7217 = vst [vmem:[#allocation4 + $0x8] sm:$0xff] %v7169
          %7218 = vst [vmem:[#allocation4 + $0x10] sm:$0xff] %v7170
          %7219 = vst [vmem:[#allocation4 + $0x18] sm:$0xff] %v7171
          %7220 = vst [vmem:[#allocation4 + $0x20] sm:$0xff] %v7172
          %7221 = vst [vmem:[#allocation4 + $0x28] sm:$0xff] %v7173
          %7222 = vst [vmem:[#allocation4 + $0x30] sm:$0xff] %v7174
          %7223 = vst [vmem:[#allocation4 + $0x38] sm:$0xff] %v7175
          %7224 = vst [vmem:[#allocation4 + $0x40] sm:$0xff] %v7176
          %7225 = vst [vmem:[#allocation4 + $0x48] sm:$0xff] %v7177
          %7226 = vst [vmem:[#allocation4 + $0x50] sm:$0xff] %v7178
          %7227 = vst [vmem:[#allocation4 + $0x58] sm:$0xff] %v7179
          %7228 = vst [vmem:[#allocation4 + $0x60] sm:$0xff] %v7180
          %7229 = vst [vmem:[#allocation4 + $0x68] sm:$0xff] %v7181
          %7230 = vst [vmem:[#allocation4 + $0x70] sm:$0xff] %v7182
          %7231 = vst [vmem:[#allocation4 + $0x78] sm:$0xff] %v7183
          %v7232 = vld [vmem:[#allocation2] sm:$0xff]
          %v7233 = vld [vmem:[#allocation2 + $0x8] sm:$0xff]
          %v7234 = vld [vmem:[#allocation2 + $0x10] sm:$0xff]
          %v7235 = vld [vmem:[#allocation2 + $0x18] sm:$0xff]
          %v7236 = vld [vmem:[#allocation2 + $0x20] sm:$0xff]
          %v7237 = vld [vmem:[#allocation2 + $0x28] sm:$0xff]
          %v7238 = vld [vmem:[#allocation2 + $0x30] sm:$0xff]
          %v7239 = vld [vmem:[#allocation2 + $0x38] sm:$0xff]
          %v7240 = vld [vmem:[#allocation3] sm:$0xff]
          %v7241 = vld [vmem:[#allocation3 + $0x8] sm:$0xff]
          %v7242 = vld [vmem:[#allocation3 + $0x10] sm:$0xff]
          %v7243 = vld [vmem:[#allocation3 + $0x18] sm:$0xff]
          %v7244 = vld [vmem:[#allocation3 + $0x20] sm:$0xff]
          %v7245 = vld [vmem:[#allocation3 + $0x28] sm:$0xff]
          %v7246 = vld [vmem:[#allocation3 + $0x30] sm:$0xff]
          %v7247 = vld [vmem:[#allocation3 + $0x38] sm:$0xff]
          %v7248 = vld [vmem:[#allocation4] sm:$0xff]
          %v7249 = vld [vmem:[#allocation4 + $0x8] sm:$0xff]
          %v7250 = vld [vmem:[#allocation4 + $0x10] sm:$0xff]
          %v7251 = vld [vmem:[#allocation4 + $0x18] sm:$0xff]
          %v7252 = vld [vmem:[#allocation4 + $0x20] sm:$0xff]
          %v7253 = vld [vmem:[#allocation4 + $0x28] sm:$0xff]
          %v7254 = vld [vmem:[#allocation4 + $0x30] sm:$0xff]
          %v7255 = vld [vmem:[#allocation4 + $0x38] sm:$0xff]
          %v7256 = vld [vmem:[#allocation2 + $0x40] sm:$0xff]
          %v7257 = vld [vmem:[#allocation2 + $0x48] sm:$0xff]
          %v7258 = vld [vmem:[#allocation2 + $0x50] sm:$0xff]
          %v7259 = vld [vmem:[#allocation2 + $0x58] sm:$0xff]
          %v7260 = vld [vmem:[#allocation2 + $0x60] sm:$0xff]
          %v7261 = vld [vmem:[#allocation2 + $0x68] sm:$0xff]
          %v7262 = vld [vmem:[#allocation2 + $0x70] sm:$0xff]
          %v7263 = vld [vmem:[#allocation2 + $0x78] sm:$0xff]
          %v7264 = vld [vmem:[#allocation3 + $0x40] sm:$0xff]
          %v7265 = vld [vmem:[#allocation3 + $0x48] sm:$0xff]
          %v7266 = vld [vmem:[#allocation3 + $0x50] sm:$0xff]
          %v7267 = vld [vmem:[#allocation3 + $0x58] sm:$0xff]
          %v7268 = vld [vmem:[#allocation3 + $0x60] sm:$0xff]
          %v7269 = vld [vmem:[#allocation3 + $0x68] sm:$0xff]
          %v7270 = vld [vmem:[#allocation3 + $0x70] sm:$0xff]
          %v7271 = vld [vmem:[#allocation3 + $0x78] sm:$0xff]
          %v7272 = vld [vmem:[#allocation4 + $0x40] sm:$0xff]
          %v7273 = vld [vmem:[#allocation4 + $0x48] sm:$0xff]
          %v7274 = vld [vmem:[#allocation4 + $0x50] sm:$0xff]
          %v7275 = vld [vmem:[#allocation4 + $0x58] sm:$0xff]
          %v7276 = vld [vmem:[#allocation4 + $0x60] sm:$0xff]
          %v7277 = vld [vmem:[#allocation4 + $0x68] sm:$0xff]
          %v7278 = vld [vmem:[#allocation4 + $0x70] sm:$0xff]
          %v7279 = vld [vmem:[#allocation4 + $0x78] sm:$0xff]
          %v7280 = vmin.f32 %v7232, %v7256
          %v7281 = vmin.f32 %v7233, %v7257
          %v7282 = vmin.f32 %v7234, %v7258
          %v7283 = vmin.f32 %v7235, %v7259
          %v7284 = vmin.f32 %v7236, %v7260
          %v7285 = vmin.f32 %v7237, %v7261
          %v7286 = vmin.f32 %v7238, %v7262
          %v7287 = vmin.f32 %v7239, %v7263
          %v7288 = vmax.f32 %v7232, %v7256
          %v7289 = vmax.f32 %v7233, %v7257
          %v7290 = vmax.f32 %v7234, %v7258
          %v7291 = vmax.f32 %v7235, %v7259
          %v7292 = vmax.f32 %v7236, %v7260
          %v7293 = vmax.f32 %v7237, %v7261
          %v7294 = vmax.f32 %v7238, %v7262
          %v7295 = vmax.f32 %v7239, %v7263
          %v7296 = vmin.f32 %v7240, %v7288
          %v7297 = vmin.f32 %v7241, %v7289
          %v7298 = vmin.f32 %v7242, %v7290
          %v7299 = vmin.f32 %v7243, %v7291
          %v7300 = vmin.f32 %v7244, %v7292
          %v7301 = vmin.f32 %v7245, %v7293
          %v7302 = vmin.f32 %v7246, %v7294
          %v7303 = vmin.f32 %v7247, %v7295
          %v7304 = vmax.f32 %v7240, %v7256
          %v7305 = vmax.f32 %v7241, %v7257
          %v7306 = vmax.f32 %v7242, %v7258
          %v7307 = vmax.f32 %v7243, %v7259
          %v7308 = vmax.f32 %v7244, %v7260
          %v7309 = vmax.f32 %v7245, %v7261
          %v7310 = vmax.f32 %v7246, %v7262
          %v7311 = vmax.f32 %v7247, %v7263
          %v7312 = vmin.f32 %v7248, %v7304
          %v7313 = vmin.f32 %v7249, %v7305
          %v7314 = vmin.f32 %v7250, %v7306
          %v7315 = vmin.f32 %v7251, %v7307
          %v7316 = vmin.f32 %v7252, %v7308
          %v7317 = vmin.f32 %v7253, %v7309
          %v7318 = vmin.f32 %v7254, %v7310
          %v7319 = vmin.f32 %v7255, %v7311
          %v7320 = vmin.f32 %v7280, %v7264
          %v7321 = vmin.f32 %v7281, %v7265
          %v7322 = vmin.f32 %v7282, %v7266
          %v7323 = vmin.f32 %v7283, %v7267
          %v7324 = vmin.f32 %v7284, %v7268
          %v7325 = vmin.f32 %v7285, %v7269
          %v7326 = vmin.f32 %v7286, %v7270
          %v7327 = vmin.f32 %v7287, %v7271
          %v7328 = vmax.f32 %v7280, %v7264
          %v7329 = vmax.f32 %v7281, %v7265
          %v7330 = vmax.f32 %v7282, %v7266
          %v7331 = vmax.f32 %v7283, %v7267
          %v7332 = vmax.f32 %v7284, %v7268
          %v7333 = vmax.f32 %v7285, %v7269
          %v7334 = vmax.f32 %v7286, %v7270
          %v7335 = vmax.f32 %v7287, %v7271
          %v7336 = vmin.f32 %v7296, %v7328
          %v7337 = vmin.f32 %v7297, %v7329
          %v7338 = vmin.f32 %v7298, %v7330
          %v7339 = vmin.f32 %v7299, %v7331
          %v7340 = vmin.f32 %v7300, %v7332
          %v7341 = vmin.f32 %v7301, %v7333
          %v7342 = vmin.f32 %v7302, %v7334
          %v7343 = vmin.f32 %v7303, %v7335
          %v7344 = vmax.f32 %v7296, %v7264
          %v7345 = vmax.f32 %v7297, %v7265
          %v7346 = vmax.f32 %v7298, %v7266
          %v7347 = vmax.f32 %v7299, %v7267
          %v7348 = vmax.f32 %v7300, %v7268
          %v7349 = vmax.f32 %v7301, %v7269
          %v7350 = vmax.f32 %v7302, %v7270
          %v7351 = vmax.f32 %v7303, %v7271
          %v7352 = vmin.f32 %v7312, %v7344
          %v7353 = vmin.f32 %v7313, %v7345
          %v7354 = vmin.f32 %v7314, %v7346
          %v7355 = vmin.f32 %v7315, %v7347
          %v7356 = vmin.f32 %v7316, %v7348
          %v7357 = vmin.f32 %v7317, %v7349
          %v7358 = vmin.f32 %v7318, %v7350
          %v7359 = vmin.f32 %v7319, %v7351
          %v7360 = vmin.f32 %v7320, %v7272
          %v7361 = vmin.f32 %v7321, %v7273
          %v7362 = vmin.f32 %v7322, %v7274
          %v7363 = vmin.f32 %v7323, %v7275
          %v7364 = vmin.f32 %v7324, %v7276
          %v7365 = vmin.f32 %v7325, %v7277
          %v7366 = vmin.f32 %v7326, %v7278
          %v7367 = vmin.f32 %v7327, %v7279
          %v7368 = vmax.f32 %v7320, %v7272
          %v7369 = vmax.f32 %v7321, %v7273
          %v7370 = vmax.f32 %v7322, %v7274
          %v7371 = vmax.f32 %v7323, %v7275
          %v7372 = vmax.f32 %v7324, %v7276
          %v7373 = vmax.f32 %v7325, %v7277
          %v7374 = vmax.f32 %v7326, %v7278
          %v7375 = vmax.f32 %v7327, %v7279
          %v7376 = vmin.f32 %v7336, %v7368
          %v7377 = vmin.f32 %v7337, %v7369
          %v7378 = vmin.f32 %v7338, %v7370
          %v7379 = vmin.f32 %v7339, %v7371
          %v7380 = vmin.f32 %v7340, %v7372
          %v7381 = vmin.f32 %v7341, %v7373
          %v7382 = vmin.f32 %v7342, %v7374
          %v7383 = vmin.f32 %v7343, %v7375
          %v7384 = vmax.f32 %v7336, %v7272
          %v7385 = vmax.f32 %v7337, %v7273
          %v7386 = vmax.f32 %v7338, %v7274
          %v7387 = vmax.f32 %v7339, %v7275
          %v7388 = vmax.f32 %v7340, %v7276
          %v7389 = vmax.f32 %v7341, %v7277
          %v7390 = vmax.f32 %v7342, %v7278
          %v7391 = vmax.f32 %v7343, %v7279
          %v7392 = vmin.f32 %v7352, %v7384
          %v7393 = vmin.f32 %v7353, %v7385
          %v7394 = vmin.f32 %v7354, %v7386
          %v7395 = vmin.f32 %v7355, %v7387
          %v7396 = vmin.f32 %v7356, %v7388
          %v7397 = vmin.f32 %v7357, %v7389
          %v7398 = vmin.f32 %v7358, %v7390
          %v7399 = vmin.f32 %v7359, %v7391
          %7400 = vst [vmem:[#allocation2] sm:$0xff] %v7360
          %7401 = vst [vmem:[#allocation2 + $0x8] sm:$0xff] %v7361
          %7402 = vst [vmem:[#allocation2 + $0x10] sm:$0xff] %v7362
          %7403 = vst [vmem:[#allocation2 + $0x18] sm:$0xff] %v7363
          %7404 = vst [vmem:[#allocation2 + $0x20] sm:$0xff] %v7364
          %7405 = vst [vmem:[#allocation2 + $0x28] sm:$0xff] %v7365
          %7406 = vst [vmem:[#allocation2 + $0x30] sm:$0xff] %v7366
          %7407 = vst [vmem:[#allocation2 + $0x38] sm:$0xff] %v7367
          %7408 = vst [vmem:[#allocation3] sm:$0xff] %v7376
          %7409 = vst [vmem:[#allocation3 + $0x8] sm:$0xff] %v7377
          %7410 = vst [vmem:[#allocation3 + $0x10] sm:$0xff] %v7378
          %7411 = vst [vmem:[#allocation3 + $0x18] sm:$0xff] %v7379
          %7412 = vst [vmem:[#allocation3 + $0x20] sm:$0xff] %v7380
          %7413 = vst [vmem:[#allocation3 + $0x28] sm:$0xff] %v7381
          %7414 = vst [vmem:[#allocation3 + $0x30] sm:$0xff] %v7382
          %7415 = vst [vmem:[#allocation3 + $0x38] sm:$0xff] %v7383
          %7416 = vst [vmem:[#allocation4] sm:$0xff] %v7392
          %7417 = vst [vmem:[#allocation4 + $0x8] sm:$0xff] %v7393
          %7418 = vst [vmem:[#allocation4 + $0x10] sm:$0xff] %v7394
          %7419 = vst [vmem:[#allocation4 + $0x18] sm:$0xff] %v7395
          %7420 = vst [vmem:[#allocation4 + $0x20] sm:$0xff] %v7396
          %7421 = vst [vmem:[#allocation4 + $0x28] sm:$0xff] %v7397
          %7422 = vst [vmem:[#allocation4 + $0x30] sm:$0xff] %v7398
          %7423 = vst [vmem:[#allocation4 + $0x38] sm:$0xff] %v7399
          %v7424 = vld [vmem:[#allocation2] sm:$0xff]
          %v7425 = vld [vmem:[#allocation2 + $0x8] sm:$0xff]
          %v7426 = vld [vmem:[#allocation2 + $0x10] sm:$0xff]
          %v7427 = vld [vmem:[#allocation2 + $0x18] sm:$0xff]
          %v7428 = vld [vmem:[#allocation3] sm:$0xff]
          %v7429 = vld [vmem:[#allocation3 + $0x8] sm:$0xff]
          %v7430 = vld [vmem:[#allocation3 + $0x10] sm:$0xff]
          %v7431 = vld [vmem:[#allocation3 + $0x18] sm:$0xff]
          %v7432 = vld [vmem:[#allocation4] sm:$0xff]
          %v7433 = vld [vmem:[#allocation4 + $0x8] sm:$0xff]
          %v7434 = vld [vmem:[#allocation4 + $0x10] sm:$0xff]
          %v7435 = vld [vmem:[#allocation4 + $0x18] sm:$0xff]
          %v7436 = vld [vmem:[#allocation2 + $0x20] sm:$0xff]
          %v7437 = vld [vmem:[#allocation2 + $0x28] sm:$0xff]
          %v7438 = vld [vmem:[#allocation2 + $0x30] sm:$0xff]
          %v7439 = vld [vmem:[#allocation2 + $0x38] sm:$0xff]
          %v7440 = vld [vmem:[#allocation3 + $0x20] sm:$0xff]
          %v7441 = vld [vmem:[#allocation3 + $0x28] sm:$0xff]
          %v7442 = vld [vmem:[#allocation3 + $0x30] sm:$0xff]
          %v7443 = vld [vmem:[#allocation3 + $0x38] sm:$0xff]
          %v7444 = vld [vmem:[#allocation4 + $0x20] sm:$0xff]
          %v7445 = vld [vmem:[#allocation4 + $0x28] sm:$0xff]
          %v7446 = vld [vmem:[#allocation4 + $0x30] sm:$0xff]
          %v7447 = vld [vmem:[#allocation4 + $0x38] sm:$0xff]
          %v7448 = vmin.f32 %v7424, %v7436
          %v7449 = vmin.f32 %v7425, %v7437
          %v7450 = vmin.f32 %v7426, %v7438
          %v7451 = vmin.f32 %v7427, %v7439
          %v7452 = vmax.f32 %v7424, %v7436
          %v7453 = vmax.f32 %v7425, %v7437
          %v7454 = vmax.f32 %v7426, %v7438
          %v7455 = vmax.f32 %v7427, %v7439
          %v7456 = vmin.f32 %v7428, %v7452
          %v7457 = vmin.f32 %v7429, %v7453
          %v7458 = vmin.f32 %v7430, %v7454
          %v7459 = vmin.f32 %v7431, %v7455
          %v7460 = vmax.f32 %v7428, %v7436
          %v7461 = vmax.f32 %v7429, %v7437
          %v7462 = vmax.f32 %v7430, %v7438
          %v7463 = vmax.f32 %v7431, %v7439
          %v7464 = vmin.f32 %v7432, %v7460
          %v7465 = vmin.f32 %v7433, %v7461
          %v7466 = vmin.f32 %v7434, %v7462
          %v7467 = vmin.f32 %v7435, %v7463
          %v7468 = vmin.f32 %v7448, %v7440
          %v7469 = vmin.f32 %v7449, %v7441
          %v7470 = vmin.f32 %v7450, %v7442
          %v7471 = vmin.f32 %v7451, %v7443
          %v7472 = vmax.f32 %v7448, %v7440
          %v7473 = vmax.f32 %v7449, %v7441
          %v7474 = vmax.f32 %v7450, %v7442
          %v7475 = vmax.f32 %v7451, %v7443
          %v7476 = vmin.f32 %v7456, %v7472
          %v7477 = vmin.f32 %v7457, %v7473
          %v7478 = vmin.f32 %v7458, %v7474
          %v7479 = vmin.f32 %v7459, %v7475
          %v7480 = vmax.f32 %v7456, %v7440
          %v7481 = vmax.f32 %v7457, %v7441
          %v7482 = vmax.f32 %v7458, %v7442
          %v7483 = vmax.f32 %v7459, %v7443
          %v7484 = vmin.f32 %v7464, %v7480
          %v7485 = vmin.f32 %v7465, %v7481
          %v7486 = vmin.f32 %v7466, %v7482
          %v7487 = vmin.f32 %v7467, %v7483
          %v7488 = vmin.f32 %v7468, %v7444
          %v7489 = vmin.f32 %v7469, %v7445
          %v7490 = vmin.f32 %v7470, %v7446
          %v7491 = vmin.f32 %v7471, %v7447
          %v7492 = vmax.f32 %v7468, %v7444
          %v7493 = vmax.f32 %v7469, %v7445
          %v7494 = vmax.f32 %v7470, %v7446
          %v7495 = vmax.f32 %v7471, %v7447
          %v7496 = vmin.f32 %v7476, %v7492
          %v7497 = vmin.f32 %v7477, %v7493
          %v7498 = vmin.f32 %v7478, %v7494
          %v7499 = vmin.f32 %v7479, %v7495
          %v7500 = vmax.f32 %v7476, %v7444
          %v7501 = vmax.f32 %v7477, %v7445
          %v7502 = vmax.f32 %v7478, %v7446
          %v7503 = vmax.f32 %v7479, %v7447
          %v7504 = vmin.f32 %v7484, %v7500
          %v7505 = vmin.f32 %v7485, %v7501
          %v7506 = vmin.f32 %v7486, %v7502
          %v7507 = vmin.f32 %v7487, %v7503
          %7508 = vst [vmem:[#allocation2] sm:$0xff] %v7488
          %7509 = vst [vmem:[#allocation2 + $0x8] sm:$0xff] %v7489
          %7510 = vst [vmem:[#allocation2 + $0x10] sm:$0xff] %v7490
          %7511 = vst [vmem:[#allocation2 + $0x18] sm:$0xff] %v7491
          %7512 = vst [vmem:[#allocation3] sm:$0xff] %v7496
          %7513 = vst [vmem:[#allocation3 + $0x8] sm:$0xff] %v7497
          %7514 = vst [vmem:[#allocation3 + $0x10] sm:$0xff] %v7498
          %7515 = vst [vmem:[#allocation3 + $0x18] sm:$0xff] %v7499
          %7516 = vst [vmem:[#allocation4] sm:$0xff] %v7504
          %7517 = vst [vmem:[#allocation4 + $0x8] sm:$0xff] %v7505
          %7518 = vst [vmem:[#allocation4 + $0x10] sm:$0xff] %v7506
          %7519 = vst [vmem:[#allocation4 + $0x18] sm:$0xff] %v7507
          %v7520 = vld [vmem:[#allocation2] sm:$0xf]
          %v7521 = vld [vmem:[#allocation2 + $0x8] sm:$0xf]
          %v7522 = vld [vmem:[#allocation2 + $0x10] sm:$0xf]
          %v7523 = vld [vmem:[#allocation2 + $0x18] sm:$0xf]
          %v7524 = vld [vmem:[#allocation3] sm:$0xf]
          %v7525 = vld [vmem:[#allocation3 + $0x8] sm:$0xf]
          %v7526 = vld [vmem:[#allocation3 + $0x10] sm:$0xf]
          %v7527 = vld [vmem:[#allocation3 + $0x18] sm:$0xf]
          %v7528 = vld [vmem:[#allocation4] sm:$0xf]
          %v7529 = vld [vmem:[#allocation4 + $0x8] sm:$0xf]
          %v7530 = vld [vmem:[#allocation4 + $0x10] sm:$0xf]
          %v7531 = vld [vmem:[#allocation4 + $0x18] sm:$0xf]
          %v7532 = vld [vmem:[#allocation2] sm:$0xf0]
          %v7533 = vld [vmem:[#allocation2 + $0x8] sm:$0xf0]
          %v7534 = vld [vmem:[#allocation2 + $0x10] sm:$0xf0]
          %v7535 = vld [vmem:[#allocation2 + $0x18] sm:$0xf0]
          %v7536 = vld [vmem:[#allocation3] sm:$0xf0]
          %v7537 = vld [vmem:[#allocation3 + $0x8] sm:$0xf0]
          %v7538 = vld [vmem:[#allocation3 + $0x10] sm:$0xf0]
          %v7539 = vld [vmem:[#allocation3 + $0x18] sm:$0xf0]
          %v7540 = vld [vmem:[#allocation4] sm:$0xf0]
          %v7541 = vld [vmem:[#allocation4 + $0x8] sm:$0xf0]
          %v7542 = vld [vmem:[#allocation4 + $0x10] sm:$0xf0]
          %v7543 = vld [vmem:[#allocation4 + $0x18] sm:$0xf0]
          %v7548 = vrot.slane %v7532, 4
          %v7549 = vrot.slane %v7533, 4
          %v7550 = vrot.slane %v7534, 4
          %v7551 = vrot.slane %v7535, 4
          %v7556 = vmin.f32 %v7520, %v7548
          %v7557 = vmin.f32 %v7521, %v7549
          %v7558 = vmin.f32 %v7522, %v7550
          %v7559 = vmin.f32 %v7523, %v7551
          %v7560 = vmax.f32 %v7520, %v7548
          %v7561 = vmax.f32 %v7521, %v7549
          %v7562 = vmax.f32 %v7522, %v7550
          %v7563 = vmax.f32 %v7523, %v7551
          %v7564 = vmin.f32 %v7524, %v7560
          %v7565 = vmin.f32 %v7525, %v7561
          %v7566 = vmin.f32 %v7526, %v7562
          %v7567 = vmin.f32 %v7527, %v7563
          %v7568 = vmax.f32 %v7524, %v7548
          %v7569 = vmax.f32 %v7525, %v7549
          %v7570 = vmax.f32 %v7526, %v7550
          %v7571 = vmax.f32 %v7527, %v7551
          %v7572 = vmin.f32 %v7528, %v7568
          %v7573 = vmin.f32 %v7529, %v7569
          %v7574 = vmin.f32 %v7530, %v7570
          %v7575 = vmin.f32 %v7531, %v7571
          %v7580 = vrot.slane %v7536, 4
          %v7581 = vrot.slane %v7537, 4
          %v7582 = vrot.slane %v7538, 4
          %v7583 = vrot.slane %v7539, 4
          %v7588 = vmin.f32 %v7556, %v7580
          %v7589 = vmin.f32 %v7557, %v7581
          %v7590 = vmin.f32 %v7558, %v7582
          %v7591 = vmin.f32 %v7559, %v7583
          %v7592 = vmax.f32 %v7556, %v7580
          %v7593 = vmax.f32 %v7557, %v7581
          %v7594 = vmax.f32 %v7558, %v7582
          %v7595 = vmax.f32 %v7559, %v7583
          %v7596 = vmin.f32 %v7564, %v7592
          %v7597 = vmin.f32 %v7565, %v7593
          %v7598 = vmin.f32 %v7566, %v7594
          %v7599 = vmin.f32 %v7567, %v7595
          %v7600 = vmax.f32 %v7564, %v7580
          %v7601 = vmax.f32 %v7565, %v7581
          %v7602 = vmax.f32 %v7566, %v7582
          %v7603 = vmax.f32 %v7567, %v7583
          %v7604 = vmin.f32 %v7572, %v7600
          %v7605 = vmin.f32 %v7573, %v7601
          %v7606 = vmin.f32 %v7574, %v7602
          %v7607 = vmin.f32 %v7575, %v7603
          %v7612 = vrot.slane %v7540, 4
          %v7613 = vrot.slane %v7541, 4
          %v7614 = vrot.slane %v7542, 4
          %v7615 = vrot.slane %v7543, 4
          %v7620 = vmin.f32 %v7588, %v7612
          %v7621 = vmin.f32 %v7589, %v7613
          %v7622 = vmin.f32 %v7590, %v7614
          %v7623 = vmin.f32 %v7591, %v7615
          %v7624 = vmax.f32 %v7588, %v7612
          %v7625 = vmax.f32 %v7589, %v7613
          %v7626 = vmax.f32 %v7590, %v7614
          %v7627 = vmax.f32 %v7591, %v7615
          %v7628 = vmin.f32 %v7596, %v7624
          %v7629 = vmin.f32 %v7597, %v7625
          %v7630 = vmin.f32 %v7598, %v7626
          %v7631 = vmin.f32 %v7599, %v7627
          %v7632 = vmax.f32 %v7596, %v7612
          %v7633 = vmax.f32 %v7597, %v7613
          %v7634 = vmax.f32 %v7598, %v7614
          %v7635 = vmax.f32 %v7599, %v7615
          %v7636 = vmin.f32 %v7604, %v7632
          %v7637 = vmin.f32 %v7605, %v7633
          %v7638 = vmin.f32 %v7606, %v7634
          %v7639 = vmin.f32 %v7607, %v7635
          %7640 = vst [vmem:[#allocation2] sm:$0xf] %v7620
          %7641 = vst [vmem:[#allocation2 + $0x8] sm:$0xf] %v7621
          %7642 = vst [vmem:[#allocation2 + $0x10] sm:$0xf] %v7622
          %7643 = vst [vmem:[#allocation2 + $0x18] sm:$0xf] %v7623
          %7644 = vst [vmem:[#allocation3] sm:$0xf] %v7628
          %7645 = vst [vmem:[#allocation3 + $0x8] sm:$0xf] %v7629
          %7646 = vst [vmem:[#allocation3 + $0x10] sm:$0xf] %v7630
          %7647 = vst [vmem:[#allocation3 + $0x18] sm:$0xf] %v7631
          %7648 = vst [vmem:[#allocation4] sm:$0xf] %v7636
          %7649 = vst [vmem:[#allocation4 + $0x8] sm:$0xf] %v7637
          %7650 = vst [vmem:[#allocation4 + $0x10] sm:$0xf] %v7638
          %7651 = vst [vmem:[#allocation4 + $0x18] sm:$0xf] %v7639
          %v7652 = vld [vmem:[#allocation2] sm:$0x3]
          %v7653 = vld [vmem:[#allocation2 + $0x8] sm:$0x3]
          %v7654 = vld [vmem:[#allocation2 + $0x10] sm:$0x3]
          %v7655 = vld [vmem:[#allocation2 + $0x18] sm:$0x3]
          %v7656 = vld [vmem:[#allocation3] sm:$0x3]
          %v7657 = vld [vmem:[#allocation3 + $0x8] sm:$0x3]
          %v7658 = vld [vmem:[#allocation3 + $0x10] sm:$0x3]
          %v7659 = vld [vmem:[#allocation3 + $0x18] sm:$0x3]
          %v7660 = vld [vmem:[#allocation4] sm:$0x3]
          %v7661 = vld [vmem:[#allocation4 + $0x8] sm:$0x3]
          %v7662 = vld [vmem:[#allocation4 + $0x10] sm:$0x3]
          %v7663 = vld [vmem:[#allocation4 + $0x18] sm:$0x3]
          %v7664 = vld [vmem:[#allocation2] sm:$0xc]
          %v7665 = vld [vmem:[#allocation2 + $0x8] sm:$0xc]
          %v7666 = vld [vmem:[#allocation2 + $0x10] sm:$0xc]
          %v7667 = vld [vmem:[#allocation2 + $0x18] sm:$0xc]
          %v7668 = vld [vmem:[#allocation3] sm:$0xc]
          %v7669 = vld [vmem:[#allocation3 + $0x8] sm:$0xc]
          %v7670 = vld [vmem:[#allocation3 + $0x10] sm:$0xc]
          %v7671 = vld [vmem:[#allocation3 + $0x18] sm:$0xc]
          %v7672 = vld [vmem:[#allocation4] sm:$0xc]
          %v7673 = vld [vmem:[#allocation4 + $0x8] sm:$0xc]
          %v7674 = vld [vmem:[#allocation4 + $0x10] sm:$0xc]
          %v7675 = vld [vmem:[#allocation4 + $0x18] sm:$0xc]
          %v7680 = vrot.slane %v7664, 2
          %v7681 = vrot.slane %v7665, 2
          %v7682 = vrot.slane %v7666, 2
          %v7683 = vrot.slane %v7667, 2
          %v7688 = vmin.f32 %v7652, %v7680
          %v7689 = vmin.f32 %v7653, %v7681
          %v7690 = vmin.f32 %v7654, %v7682
          %v7691 = vmin.f32 %v7655, %v7683
          %v7692 = vmax.f32 %v7652, %v7680
          %v7693 = vmax.f32 %v7653, %v7681
          %v7694 = vmax.f32 %v7654, %v7682
          %v7695 = vmax.f32 %v7655, %v7683
          %v7696 = vmin.f32 %v7656, %v7692
          %v7697 = vmin.f32 %v7657, %v7693
          %v7698 = vmin.f32 %v7658, %v7694
          %v7699 = vmin.f32 %v7659, %v7695
          %v7700 = vmax.f32 %v7656, %v7680
          %v7701 = vmax.f32 %v7657, %v7681
          %v7702 = vmax.f32 %v7658, %v7682
          %v7703 = vmax.f32 %v7659, %v7683
          %v7704 = vmin.f32 %v7660, %v7700
          %v7705 = vmin.f32 %v7661, %v7701
          %v7706 = vmin.f32 %v7662, %v7702
          %v7707 = vmin.f32 %v7663, %v7703
          %v7712 = vrot.slane %v7668, 2
          %v7713 = vrot.slane %v7669, 2
          %v7714 = vrot.slane %v7670, 2
          %v7715 = vrot.slane %v7671, 2
          %v7720 = vmin.f32 %v7688, %v7712
          %v7721 = vmin.f32 %v7689, %v7713
          %v7722 = vmin.f32 %v7690, %v7714
          %v7723 = vmin.f32 %v7691, %v7715
          %v7724 = vmax.f32 %v7688, %v7712
          %v7725 = vmax.f32 %v7689, %v7713
          %v7726 = vmax.f32 %v7690, %v7714
          %v7727 = vmax.f32 %v7691, %v7715
          %v7728 = vmin.f32 %v7696, %v7724
          %v7729 = vmin.f32 %v7697, %v7725
          %v7730 = vmin.f32 %v7698, %v7726
          %v7731 = vmin.f32 %v7699, %v7727
          %v7732 = vmax.f32 %v7696, %v7712
          %v7733 = vmax.f32 %v7697, %v7713
          %v7734 = vmax.f32 %v7698, %v7714
          %v7735 = vmax.f32 %v7699, %v7715
          %v7736 = vmin.f32 %v7704, %v7732
          %v7737 = vmin.f32 %v7705, %v7733
          %v7738 = vmin.f32 %v7706, %v7734
          %v7739 = vmin.f32 %v7707, %v7735
          %v7744 = vrot.slane %v7672, 2
          %v7745 = vrot.slane %v7673, 2
          %v7746 = vrot.slane %v7674, 2
          %v7747 = vrot.slane %v7675, 2
          %v7752 = vmin.f32 %v7720, %v7744
          %v7753 = vmin.f32 %v7721, %v7745
          %v7754 = vmin.f32 %v7722, %v7746
          %v7755 = vmin.f32 %v7723, %v7747
          %v7756 = vmax.f32 %v7720, %v7744
          %v7757 = vmax.f32 %v7721, %v7745
          %v7758 = vmax.f32 %v7722, %v7746
          %v7759 = vmax.f32 %v7723, %v7747
          %v7760 = vmin.f32 %v7728, %v7756
          %v7761 = vmin.f32 %v7729, %v7757
          %v7762 = vmin.f32 %v7730, %v7758
          %v7763 = vmin.f32 %v7731, %v7759
          %v7764 = vmax.f32 %v7728, %v7744
          %v7765 = vmax.f32 %v7729, %v7745
          %v7766 = vmax.f32 %v7730, %v7746
          %v7767 = vmax.f32 %v7731, %v7747
          %v7768 = vmin.f32 %v7736, %v7764
          %v7769 = vmin.f32 %v7737, %v7765
          %v7770 = vmin.f32 %v7738, %v7766
          %v7771 = vmin.f32 %v7739, %v7767
          %7772 = vst [vmem:[#allocation2] sm:$0x3] %v7752
          %7773 = vst [vmem:[#allocation2 + $0x8] sm:$0x3] %v7753
          %7774 = vst [vmem:[#allocation2 + $0x10] sm:$0x3] %v7754
          %7775 = vst [vmem:[#allocation2 + $0x18] sm:$0x3] %v7755
          %7776 = vst [vmem:[#allocation3] sm:$0x3] %v7760
          %7777 = vst [vmem:[#allocation3 + $0x8] sm:$0x3] %v7761
          %7778 = vst [vmem:[#allocation3 + $0x10] sm:$0x3] %v7762
          %7779 = vst [vmem:[#allocation3 + $0x18] sm:$0x3] %v7763
          %7780 = vst [vmem:[#allocation4] sm:$0x3] %v7768
          %7781 = vst [vmem:[#allocation4 + $0x8] sm:$0x3] %v7769
          %7782 = vst [vmem:[#allocation4 + $0x10] sm:$0x3] %v7770
          %7783 = vst [vmem:[#allocation4 + $0x18] sm:$0x3] %v7771
          %v7784 = vld [vmem:[#allocation2] ss:$8 sm:$0xf]
          %v7785 = vld [vmem:[#allocation3] ss:$8 sm:$0xf]
          %v7786 = vld [vmem:[#allocation4] ss:$8 sm:$0xf]
          %s7787 = scalar_lea.vmem [#allocation2], 1
          %v7788 = vld [vmem:[%s7787] ss:$8 sm:$0xf]
          %s7789 = scalar_lea.vmem [#allocation3], 1
          %v7790 = vld [vmem:[%s7789] ss:$8 sm:$0xf]
          %s7791 = scalar_lea.vmem [#allocation4], 1
          %v7792 = vld [vmem:[%s7791] ss:$8 sm:$0xf]
          %v7793 = vmin.f32 %v7784, %v7788
          %v7794 = vmax.f32 %v7784, %v7788
          %v7795 = vmin.f32 %v7785, %v7794
          %v7796 = vmax.f32 %v7785, %v7788
          %v7797 = vmin.f32 %v7786, %v7796
          %v7798 = vmin.f32 %v7793, %v7790
          %v7799 = vmax.f32 %v7793, %v7790
          %v7800 = vmin.f32 %v7795, %v7799
          %v7801 = vmax.f32 %v7795, %v7790
          %v7802 = vmin.f32 %v7797, %v7801
          %v7803 = vmin.f32 %v7798, %v7792
          %v7804 = vmax.f32 %v7798, %v7792
          %v7805 = vmin.f32 %v7800, %v7804
          %v7806 = vmax.f32 %v7800, %v7792
          %v7807 = vmin.f32 %v7802, %v7806
          %v7808 = vlaneseq
          %vm7809 = vcmp.ge.s32.totalorder %v7808, 0
          %vm7810 = vcmp.lt.s32.totalorder %v7808, 512
          %vm7811 = vmand %vm7809, %vm7810
          %7812 = vst.msk [vmem:[#allocation2] ss:$8 sm:$0xf] %vm7811, %v7803
          %7813 = vst.msk [vmem:[#allocation2] ss:$8 sm:$0x0] %vm7811, %v7803
          %7814 = vst.msk [vmem:[#allocation3] ss:$8 sm:$0xf] %vm7811, %v7805
          %7815 = vst.msk [vmem:[#allocation3] ss:$8 sm:$0x0] %vm7811, %v7805
          %7816 = vst.msk [vmem:[#allocation4] ss:$8 sm:$0xf] %vm7811, %v7807
          %7817 = vst.msk [vmem:[#allocation4] ss:$8 sm:$0x0] %vm7811, %v7807
          %v7818 = vld [vmem:[#allocation2] ss:$8 sm:$0xf]
          %v7819 = vld [vmem:[#allocation3] ss:$8 sm:$0xf]
          %v7820 = vadd.f32 %v7818, %v7819
          %v7821 = vld [vmem:[#allocation4] ss:$8 sm:$0xf]
          %v7822 = vadd.f32 %v7820, %v7821
          %v7823 = vmul.f32 %v7822, 0.33333334
          %v7824 = vmax.f32 %v7823, 1e-07
          %v7825 = vrsqrt.pop %v7824
          %v7826 = vmul.f32 %v7824, %v7825
          %vm7827 = vcmp.eq.f32.partialorder %v7824, inf
          %v7828 = vsel %vm7827, %v7824, %v7826
          %vm7829 = vcmp.eq.f32.partialorder %v7824, 0.0
          %v7830 = vand.u32 %v7824, 2147483648
          %v7831 = vsel %vm7829, %v7830, %v7828
          %7832 = vst.msk [vmem:[%s194] sm:$0xf] %vm7811, %v7831
        $region44: #{tpu_custom_call.1} parent=27 // pred_fallthru
          _
        %s7833 = sand.u32 %s101, 1
        %s7834 = scalar_lea.sflag [#allocation6], %s7833
        %s7835 = sand.u32 %s101, 1
        %s7836 = smul.addr %s7835, 4
        %s7837 = scalar_lea.vmem [#allocation5], %s7836
        // Predicated region
        $region45: #{tpu_custom_call.1} parent=27 // pred_check
          %p7838 = pneg %p111
        $region46: #{tpu_custom_call.1} parent=27 // pred_check_branch
          %7840 = sbr.rel (%p7838) target = $region48
        $region47: #{tpu_custom_call.1} parent=27 // pred_region
          %s7841 = smul.u32 4, %s22
          %s7843 = ssub.s32 64, 64
          %7844 = vsyncadd %s7834, %s7843
          %s7845 = smul.addr %s21, 4
          %s7846 = sadd.s32 %s7841, %s7845
          %s7847 = smul.addr %s7846, 16
          %s7848 = scalar_lea.hbm %s2, %s7847
          %s7850 = sshll.u32 %s7837, 4
          %s7851 = int_to_ptr.vmem [resolvable:$true] %s7850
          %7853 = dma.vmem_to_hbm [thread:$0]  %s7851, 64, %s7848, %s7834
        $region48: #{tpu_custom_call.1} parent=27 // pred_fallthru
          _
      $region28: #{tpu_custom_call.1} parent=5 // pred_fallthru
        _
      %p7854 = scmp.le.s32.totalorder 2, %s11
      // Predicated region
      $region49: #{tpu_custom_call.1} parent=5 // pred_check
        %p7855 = pneg %p7854
      $region50: #{tpu_custom_call.1} parent=5 // pred_check_branch
        %7857 = sbr.rel (%p7855) target = $region52
      $region51: #{tpu_custom_call.1} parent=5 // pred_region
        %s7858 = ssub.s32 %s11, 2
        // Predicated region
        $region53: #{tpu_custom_call.1} parent=51 // pred_check
          %p7859 = pneg %p117
        $region54: #{tpu_custom_call.1} parent=51 // pred_check_branch
          %7861 = sbr.rel (%p7859) target = $region56
        $region55: #{tpu_custom_call.1} parent=51 // pred_region
          %s7862 = sand.u32 %s102, 1
          %s7863 = scalar_lea.sflag [#allocation6], %s7862
          %s7864 = sand.u32 %s102, 1
          %s7865 = smul.addr %s7864, 4
          %s7866 = scalar_lea.vmem [#allocation5], %s7865
          %7867 = dma.done %s7863, 64
        $region56: #{tpu_custom_call.1} parent=51 // pred_fallthru
          _
      $region52: #{tpu_custom_call.1} parent=5 // pred_fallthru
        _
    $region6: #{tpu_custom_call.1} parent=1 // loop_footer
      %s15 = sadd.s32 1, %s11
    $region7: #{tpu_custom_call.1} parent=1 // loop_footer_branch
      %10 = sbr.rel target = $region3
    $region8: #{tpu_custom_call.1} parent=1 // loop_exit
      _
    %7868 = vsyncpa [#allocation6], 1
    %s7869 = scalar_lea.sflag [#allocation6], 1
    %7870 = vsyncpa %s7869, 1

</llo_original>
